<compile_context>
chip_gen: v5e
topology: v5e:2x2
jax: 0.10.0
libtpu: 0.0.40
codegen_flags: <defaults>
</compile_context>

<pallas_src>
import functools

import jax
import jax.numpy as jnp
from jax.experimental import pallas as pl
from jax.experimental.pallas import tpu as pltpu


# ---------------------------------------------------------------------------
# Fixed geometry implied by the module (nn.Linear(3136, .) => 84x84 inputs):
#   conv1: 84x84 --(k8,s4)--> 20x20 x32
#   conv2: 20x20 --(k4,s2)-->  9x9  x64
#   conv3:  9x9  --(k3,s1)-->  7x7  x64
# In-kernel 2-D row layouts (channels on lanes):
#   a1 : row = b*400 + (i1%2)*200 + (j1%2)*100 + (i1//2)*10 + (j1//2)
#        (parity-grouped 20x20 grid -> four 10x10 half-resolution grids)
#   a2 : row = b*90 + i2*10 + j2    (the j2==9 rows are junk, ignored)
#   a3 : row = b*70 + i3*10 + j3    (j3 in 7..9 rows are junk, sliced off)
# The parity grouping + "10-wide rows with a junk tail" make every im2col
# gather for conv2/conv3 a single contiguous block of rows.
# ---------------------------------------------------------------------------
_ROW1 = 400     # conv1 rows per image (2*2*10*10)
_ROW2 = 90      # conv2 rows per image (9*10, incl. 9 junk rows)
_ROW3 = 70      # conv3 rows per image (7*10, incl. 21 junk rows)
_PAD = 8        # scratch tail pad so batched gathers never index out of bounds


# ------------------------------ Pallas kernels ----------------------------- #

def _conv_stack_kernel(p1_ref, w1_ref, b1_ref, w2_ref, b2_ref, w3_ref, b3_ref,
                       out_ref, a1_ref, p2_ref, a2_ref, p3_ref, *, batch):
    f32 = jnp.float32

    # conv1: one MXU matmul on the pre-built patch matrix (B*400, 64*C).
    y1 = jnp.dot(p1_ref[...], w1_ref[...], preferred_element_type=f32)
    a1_ref[pl.ds(0, batch * _ROW1), :] = jnp.maximum(y1 + b1_ref[...], 0.0)
    a1_ref[pl.ds(batch * _ROW1, _PAD), :] = jnp.zeros((_PAD, 32), f32)

    # conv2 (k=4, s=2): in-VMEM im2col.  Parity-grouped a1 rows make each
    # (b, ki, kj) a single contiguous 90-row copy into its 32-lane column block.
    for b in range(batch):
        for ki in range(4):
            for kj in range(4):
                src = (b * _ROW1 + (ki % 2) * 200 + (kj % 2) * 100
                       + (ki // 2) * 10 + (kj // 2))
                col = (ki * 4 + kj) * 32
                p2_ref[pl.ds(b * _ROW2, _ROW2), pl.ds(col, 32)] = (
                    a1_ref[pl.ds(src, _ROW2), :])
    y2 = jnp.dot(p2_ref[...], w2_ref[...], preferred_element_type=f32)
    a2_ref[pl.ds(0, batch * _ROW2), :] = jnp.maximum(y2 + b2_ref[...], 0.0)
    a2_ref[pl.ds(batch * _ROW2, _PAD), :] = jnp.zeros((_PAD, 64), f32)

    # conv3 (k=3, s=1): one contiguous 70-row copy per (b, ki, kj).
    for b in range(batch):
        for ki in range(3):
            for kj in range(3):
                src = b * _ROW2 + ki * 10 + kj
                col = (ki * 3 + kj) * 64
                p3_ref[pl.ds(b * _ROW3, _ROW3), pl.ds(col, 64)] = (
                    a2_ref[pl.ds(src, _ROW3), :])
    y3 = jnp.dot(p3_ref[...], w3_ref[...], preferred_element_type=f32)
    out_ref[...] = jnp.maximum(y3 + b3_ref[...], 0.0)


def _fc_kernel(x_ref, w1_ref, b1_ref, w2_ref, b2_ref, out_ref):
    h = jnp.dot(x_ref[...], w1_ref[...], preferred_element_type=jnp.float32)
    h = jnp.maximum(h + b1_ref[...], 0.0)
    out_ref[...] = (jnp.dot(h, w2_ref[...], preferred_element_type=jnp.float32)
                    + b2_ref[...])


def _full_spec(arr):
    # Whole-array VMEM block (block shape == array shape, single grid step).
    return pl.BlockSpec(arr.shape, lambda i: (0, 0))


def _conv_stack(patches1, w1, b1, w2, b2, w3, b3, *, batch):
    return pl.pallas_call(
        functools.partial(_conv_stack_kernel, batch=batch),
        out_shape=jax.ShapeDtypeStruct((batch * _ROW3, 64), jnp.float32),
        grid=(1,),
        in_specs=[_full_spec(a) for a in (patches1, w1, b1, w2, b2, w3, b3)],
        out_specs=pl.BlockSpec((batch * _ROW3, 64), lambda i: (0, 0)),
        scratch_shapes=[
            pltpu.VMEM((batch * _ROW1 + _PAD, 32), jnp.float32),   # a1
            pltpu.VMEM((batch * _ROW2, 512), jnp.float32),         # patches2
            pltpu.VMEM((batch * _ROW2 + _PAD, 64), jnp.float32),   # a2
            pltpu.VMEM((batch * _ROW3, 576), jnp.float32),         # patches3
        ],
        compiler_params=pltpu.CompilerParams(
            dimension_semantics=("arbitrary",),
            vmem_limit_bytes=32 * 1024 * 1024),
    )(patches1, w1, b1, w2, b2, w3, b3)


def _fc_stack(x, w1, b1, w2, b2):
    return pl.pallas_call(
        _fc_kernel,
        out_shape=jax.ShapeDtypeStruct((x.shape[0], w2.shape[1]), jnp.float32),
        grid=(1,),
        in_specs=[_full_spec(a) for a in (x, w1, b1, w2, b2)],
        out_specs=pl.BlockSpec((x.shape[0], w2.shape[1]), lambda i: (0, 0)),
        compiler_params=pltpu.CompilerParams(
            dimension_semantics=("arbitrary",),
            vmem_limit_bytes=32 * 1024 * 1024),
    )(x, w1, b1, w2, b2)


# ------------------------- host-side glue (jitted) ------------------------- #

def _conv1_patches(x):
    """x: (B, C, 84, 84) NCHW -> (B*400, 64*C) im2col matrix for conv1.

    Rows are ordered (b, i1%2, j1%2, i1//2, j1//2) (parity-grouped) so that the
    stride-2 conv2 gather inside the fused kernel only needs contiguous copies.
    Columns are ordered (ki, kj, c) to match the packed conv1 weight.
    """
    B, C, _, _ = x.shape
    xh = x.transpose(0, 2, 3, 1)                           # NHWC
    cols = []
    for ki in range(8):
        for kj in range(8):
            cols.append(xh[:, ki:ki + 77:4, kj:kj + 77:4, :])   # (B,20,20,C)
    p = jnp.stack(cols, axis=3)                            # (B,20,20,64,C)
    p = p.reshape(B, 10, 2, 10, 2, 64, C)                  # (b, ih, pi, jh, pj, k, c)
    p = p.transpose(0, 2, 4, 1, 3, 5, 6)                   # (b, pi, pj, ih, jh, k, c)
    return p.reshape(B * _ROW1, 64 * C)


def pack_params(p):
    """Pack PyTorch-layout params into matmul-ready (K, N) matrices, once."""
    def conv_w(w):                       # (O, C, KH, KW) -> (KH*KW*C, O)
        O, C, KH, KW = w.shape
        return w.transpose(2, 3, 1, 0).reshape(KH * KW * C, O).astype(jnp.float32)

    # fc1 columns reordered from PyTorch's (c, h, w) flatten to our (h, w, c).
    fc1 = (p["fc1_w"].reshape(512, 64, 7, 7).transpose(2, 3, 1, 0)
           .reshape(3136, 512).astype(jnp.float32))
    return {
        "w1": conv_w(p["c1_w"]), "b1": p["c1_b"].reshape(1, -1).astype(jnp.float32),
        "w2": conv_w(p["c2_w"]), "b2": p["c2_b"].reshape(1, -1).astype(jnp.float32),
        "w3": conv_w(p["c3_w"]), "b3": p["c3_b"].reshape(1, -1).astype(jnp.float32),
        "fc1_w": fc1,            "fc1_b": p["fc1_b"].reshape(1, -1).astype(jnp.float32),
        "fc2_w": p["fc2_w"].T.astype(jnp.float32),
        "fc2_b": p["fc2_b"].reshape(1, -1).astype(jnp.float32),
    }


@jax.jit
def mario_net_forward(packed, x):
    """MarioNet trunk. x: (B, c, 84, 84) NCHW float32 -> (B, output_dim)."""
    B = x.shape[0]
    patches1 = _conv1_patches(x.astype(jnp.float32))
    a3 = _conv_stack(patches1, packed["w1"], packed["b1"], packed["w2"],
                     packed["b2"], packed["w3"], packed["b3"], batch=B)
    # Drop junk (j3 >= 7) rows and flatten channels-last: (B, 7*7*64) = (B, 3136)
    xfc = a3.reshape(B, 7, 10, 64)[:, :, :7, :].reshape(B, 7 * 7 * 64)
    return _fc_stack(xfc, packed["fc1_w"], packed["fc1_b"],
                     packed["fc2_w"], packed["fc2_b"])


# ------------------------------- MarioNet ---------------------------------- #

def init_params(key, c, output_dim):
    """Deterministic PyTorch-style uniform(-1/sqrt(fan_in), 1/sqrt(fan_in)) init."""
    ks = jax.random.split(key, 10)

    def u(k, shape, fan_in):
        bound = 1.0 / jnp.sqrt(jnp.float32(fan_in))
        return jax.random.uniform(k, shape, jnp.float32, -bound, bound)

    return {
        "c1_w": u(ks[0], (32, c, 8, 8), c * 8 * 8),  "c1_b": u(ks[1], (32,), c * 8 * 8),
        "c2_w": u(ks[2], (64, 32, 4, 4), 32 * 4 * 4), "c2_b": u(ks[3], (64,), 32 * 4 * 4),
        "c3_w": u(ks[4], (64, 64, 3, 3), 64 * 3 * 3), "c3_b": u(ks[5], (64,), 64 * 3 * 3),
        "fc1_w": u(ks[6], (512, 3136), 3136),         "fc1_b": u(ks[7], (512,), 3136),
        "fc2_w": u(ks[8], (output_dim, 512), 512),    "fc2_b": u(ks[9], (output_dim,), 512),
    }


class MarioNetPallas:
    def __init__(self, input_dim, output_dim, key):
        c, h, w = input_dim
        assert h == 84 and w == 84, "nn.Linear(3136, ...) implies 84x84 inputs"
        self.online = init_params(key, c, output_dim)
        # target = deepcopy(online), frozen (no grads tracked here anyway)
        self.target = jax.tree_util.tree_map(jnp.array, self.online)
        # Matmul-ready weights packed once at init (no per-forward transposes).
        self._packed = {"online": pack_params(self.online),
                        "target": pack_params(self.target)}

    def __call__(self, x, model):
        if model in ("online", "target"):
            return mario_net_forward(self._packed[model], x)
        raise ValueError(model)


# ------------------------------ reference ---------------------------------- #

def _reference(params, x):
    def conv(x, w, b, s):
        y = jax.lax.conv_general_dilated(
            x, w, (s, s), "VALID", dimension_numbers=("NCHW", "OIHW", "NCHW"))
        return jax.nn.relu(y + b[None, :, None, None])
    h = conv(x, params["c1_w"], params["c1_b"], 4)
    h = conv(h, params["c2_w"], params["c2_b"], 2)
    h = conv(h, params["c3_w"], params["c3_b"], 1)
    h = h.reshape(h.shape[0], -1)
    h = jax.nn.relu(h @ params["fc1_w"].T + params["fc1_b"])
    return h @ params["fc2_w"].T + params["fc2_b"]


if __name__ == "__main__":
    key = jax.random.PRNGKey(0)
    pkey, xkey = jax.random.split(key)

    batch, channels, output_dim = 2, 4, 5          # (c,h,w)=(4,84,84), 5 actions
    net = MarioNetPallas((channels, 84, 84), output_dim, pkey)
    x = jax.random.normal(xkey, (batch, channels, 84, 84), jnp.float32)

    q_online = jax.block_until_ready(net(x, "online"))
    q_target = jax.block_until_ready(net(x, "target"))

    ref = _reference(net.online, x)
    assert q_online.shape == (batch, output_dim)
    assert jnp.allclose(q_online, ref, rtol=1e-4, atol=1e-4)
    assert jnp.allclose(q_online, q_target)        # target is a copy of online

    print("KERNEL_OK")
</pallas_src>

<mosaic_0001>
module attributes {stable_mosaic.version = 11 : i64} {
  func.func @_conv_stack_kernel(%arg0: i32, %arg1: memref<800x256xf32, #tpu.memory_space<vmem>>, %arg2: memref<256x32xf32, #tpu.memory_space<vmem>>, %arg3: memref<1x32xf32, #tpu.memory_space<vmem>>, %arg4: memref<512x64xf32, #tpu.memory_space<vmem>>, %arg5: memref<1x64xf32, #tpu.memory_space<vmem>>, %arg6: memref<576x64xf32, #tpu.memory_space<vmem>>, %arg7: memref<1x64xf32, #tpu.memory_space<vmem>>, %arg8: memref<140x64xf32, #tpu.memory_space<vmem>>, %arg9: memref<808x32xf32, #tpu.memory_space<vmem>>, %arg10: memref<180x512xf32, #tpu.memory_space<vmem>>, %arg11: memref<188x64xf32, #tpu.memory_space<vmem>>, %arg12: memref<140x576xf32, #tpu.memory_space<vmem>>) attributes {dimension_semantics = [#tpu.dimension_semantics<arbitrary>], iteration_bounds = array<i64: 1>, scalar_prefetch = 0 : i64, scratch_operands = 4 : i64, tpu.core_type = #tpu.core_type<tc>, window_params = [{pipeline_mode = #tpu.pipeline_mode<synchronous>, transform_indices = @transform_0, window_bounds = array<i64: 800, 256>}, {pipeline_mode = #tpu.pipeline_mode<synchronous>, transform_indices = @transform_1, window_bounds = array<i64: 256, 32>}, {pipeline_mode = #tpu.pipeline_mode<synchronous>, transform_indices = @transform_2, window_bounds = array<i64: 1, 32>}, {pipeline_mode = #tpu.pipeline_mode<synchronous>, transform_indices = @transform_3, window_bounds = array<i64: 512, 64>}, {pipeline_mode = #tpu.pipeline_mode<synchronous>, transform_indices = @transform_4, window_bounds = array<i64: 1, 64>}, {pipeline_mode = #tpu.pipeline_mode<synchronous>, transform_indices = @transform_5, window_bounds = array<i64: 576, 64>}, {pipeline_mode = #tpu.pipeline_mode<synchronous>, transform_indices = @transform_6, window_bounds = array<i64: 1, 64>}, {pipeline_mode = #tpu.pipeline_mode<synchronous>, transform_indices = @transform_7, window_bounds = array<i64: 140, 64>}]} {
    %c0 = arith.constant 0 : index
    %c0_0 = arith.constant 0 : index
    %0 = vector.load %arg1[%c0, %c0_0] : memref<800x256xf32, #tpu.memory_space<vmem>>, vector<800x256xf32>
    %c0_1 = arith.constant 0 : index
    %c0_2 = arith.constant 0 : index
    %1 = vector.load %arg2[%c0_1, %c0_2] : memref<256x32xf32, #tpu.memory_space<vmem>>, vector<256x32xf32>
    %cst = arith.constant dense<0.000000e+00> : vector<800x32xf32>
    %2 = tpu.matmul %0, %1, %cst {dimension_numbers = #tpu.dot_dimension_numbers<[1], [0], [0], [1], [0, 0, 1, 1], [], []>} : vector<800x256xf32>, vector<256x32xf32>, vector<800x32xf32> -> vector<800x32xf32>
    %c0_3 = arith.constant 0 : index
    %c0_4 = arith.constant 0 : index
    %3 = vector.load %arg3[%c0_3, %c0_4] : memref<1x32xf32, #tpu.memory_space<vmem>>, vector<1x32xf32>
    %4 = vector.broadcast %3 : vector<1x32xf32> to vector<800x32xf32>
    %5 = arith.addf %2, %4 : vector<800x32xf32>
    %cst_5 = arith.constant 0.000000e+00 : f32
    %6 = vector.broadcast %cst_5 : f32 to vector<800x32xf32>
    %7 = arith.maximumf %5, %6 : vector<800x32xf32>
    %c0_6 = arith.constant 0 : index
    %c0_7 = arith.constant 0 : index
    %8 = vector.load %arg9[%c0_6, %c0_7] : memref<808x32xf32, #tpu.memory_space<vmem>>, vector<800x32xf32>
    tpu.vector_store %arg9[%c0_6, %c0_7], %7 {strides = array<i32>} : memref<808x32xf32, #tpu.memory_space<vmem>>, vector<800x32xf32>,
    %cst_8 = arith.constant 0.000000e+00 : f32
    %9 = vector.broadcast %cst_8 : f32 to vector<8x32xf32>
    %c800 = arith.constant 800 : index
    %c0_9 = arith.constant 0 : index
    %10 = vector.load %arg9[%c800, %c0_9] : memref<808x32xf32, #tpu.memory_space<vmem>>, vector<8x32xf32>
    tpu.vector_store %arg9[%c800, %c0_9], %9 {strides = array<i32>} : memref<808x32xf32, #tpu.memory_space<vmem>>, vector<8x32xf32>,
    %c0_10 = arith.constant 0 : index
    %c0_11 = arith.constant 0 : index
    %11 = vector.load %arg9[%c0_10, %c0_11] : memref<808x32xf32, #tpu.memory_space<vmem>>, vector<90x32xf32>
    %c0_12 = arith.constant 0 : index
    %c0_13 = arith.constant 0 : index
    %12 = vector.load %arg10[%c0_12, %c0_13] : memref<180x512xf32, #tpu.memory_space<vmem>>, vector<90x32xf32>
    tpu.vector_store %arg10[%c0_12, %c0_13], %11 {strides = array<i32>} : memref<180x512xf32, #tpu.memory_space<vmem>>, vector<90x32xf32>,
    %c100 = arith.constant 100 : index
    %c0_14 = arith.constant 0 : index
    %13 = vector.load %arg9[%c100, %c0_14] : memref<808x32xf32, #tpu.memory_space<vmem>>, vector<90x32xf32>
    %c0_15 = arith.constant 0 : index
    %c32 = arith.constant 32 : index
    %14 = vector.load %arg10[%c0_15, %c32] : memref<180x512xf32, #tpu.memory_space<vmem>>, vector<90x32xf32>
    tpu.vector_store %arg10[%c0_15, %c32], %13 {strides = array<i32>} : memref<180x512xf32, #tpu.memory_space<vmem>>, vector<90x32xf32>,
    %c1 = arith.constant 1 : index
    %c0_16 = arith.constant 0 : index
    %15 = vector.load %arg9[%c1, %c0_16] : memref<808x32xf32, #tpu.memory_space<vmem>>, vector<90x32xf32>
    %c0_17 = arith.constant 0 : index
    %c64 = arith.constant 64 : index
    %16 = vector.load %arg10[%c0_17, %c64] : memref<180x512xf32, #tpu.memory_space<vmem>>, vector<90x32xf32>
    tpu.vector_store %arg10[%c0_17, %c64], %15 {strides = array<i32>} : memref<180x512xf32, #tpu.memory_space<vmem>>, vector<90x32xf32>,
    %c101 = arith.constant 101 : index
    %c0_18 = arith.constant 0 : index
    %17 = vector.load %arg9[%c101, %c0_18] : memref<808x32xf32, #tpu.memory_space<vmem>>, vector<90x32xf32>
    %c0_19 = arith.constant 0 : index
    %c96 = arith.constant 96 : index
    %18 = vector.load %arg10[%c0_19, %c96] : memref<180x512xf32, #tpu.memory_space<vmem>>, vector<90x32xf32>
    tpu.vector_store %arg10[%c0_19, %c96], %17 {strides = array<i32>} : memref<180x512xf32, #tpu.memory_space<vmem>>, vector<90x32xf32>,
    %c200 = arith.constant 200 : index
    %c0_20 = arith.constant 0 : index
    %19 = vector.load %arg9[%c200, %c0_20] : memref<808x32xf32, #tpu.memory_space<vmem>>, vector<90x32xf32>
    %c0_21 = arith.constant 0 : index
    %c128 = arith.constant 128 : index
    %20 = vector.load %arg10[%c0_21, %c128] : memref<180x512xf32, #tpu.memory_space<vmem>>, vector<90x32xf32>
    tpu.vector_store %arg10[%c0_21, %c128], %19 {strides = array<i32>} : memref<180x512xf32, #tpu.memory_space<vmem>>, vector<90x32xf32>,
    %c300 = arith.constant 300 : index
    %c0_22 = arith.constant 0 : index
    %21 = vector.load %arg9[%c300, %c0_22] : memref<808x32xf32, #tpu.memory_space<vmem>>, vector<90x32xf32>
    %c0_23 = arith.constant 0 : index
    %c160 = arith.constant 160 : index
    %22 = vector.load %arg10[%c0_23, %c160] : memref<180x512xf32, #tpu.memory_space<vmem>>, vector<90x32xf32>
    tpu.vector_store %arg10[%c0_23, %c160], %21 {strides = array<i32>} : memref<180x512xf32, #tpu.memory_space<vmem>>, vector<90x32xf32>,
    %c201 = arith.constant 201 : index
    %c0_24 = arith.constant 0 : index
    %23 = vector.load %arg9[%c201, %c0_24] : memref<808x32xf32, #tpu.memory_space<vmem>>, vector<90x32xf32>
    %c0_25 = arith.constant 0 : index
    %c192 = arith.constant 192 : index
    %24 = vector.load %arg10[%c0_25, %c192] : memref<180x512xf32, #tpu.memory_space<vmem>>, vector<90x32xf32>
    tpu.vector_store %arg10[%c0_25, %c192], %23 {strides = array<i32>} : memref<180x512xf32, #tpu.memory_space<vmem>>, vector<90x32xf32>,
    %c301 = arith.constant 301 : index
    %c0_26 = arith.constant 0 : index
    %25 = vector.load %arg9[%c301, %c0_26] : memref<808x32xf32, #tpu.memory_space<vmem>>, vector<90x32xf32>
    %c0_27 = arith.constant 0 : index
    %c224 = arith.constant 224 : index
    %26 = vector.load %arg10[%c0_27, %c224] : memref<180x512xf32, #tpu.memory_space<vmem>>, vector<90x32xf32>
    tpu.vector_store %arg10[%c0_27, %c224], %25 {strides = array<i32>} : memref<180x512xf32, #tpu.memory_space<vmem>>, vector<90x32xf32>,
    %c10 = arith.constant 10 : index
    %c0_28 = arith.constant 0 : index
    %27 = vector.load %arg9[%c10, %c0_28] : memref<808x32xf32, #tpu.memory_space<vmem>>, vector<90x32xf32>
    %c0_29 = arith.constant 0 : index
    %c256 = arith.constant 256 : index
    %28 = vector.load %arg10[%c0_29, %c256] : memref<180x512xf32, #tpu.memory_space<vmem>>, vector<90x32xf32>
    tpu.vector_store %arg10[%c0_29, %c256], %27 {strides = array<i32>} : memref<180x512xf32, #tpu.memory_space<vmem>>, vector<90x32xf32>,
    %c110 = arith.constant 110 : index
    %c0_30 = arith.constant 0 : index
    %29 = vector.load %arg9[%c110, %c0_30] : memref<808x32xf32, #tpu.memory_space<vmem>>, vector<90x32xf32>
    %c0_31 = arith.constant 0 : index
    %c288 = arith.constant 288 : index
    %30 = vector.load %arg10[%c0_31, %c288] : memref<180x512xf32, #tpu.memory_space<vmem>>, vector<90x32xf32>
    tpu.vector_store %arg10[%c0_31, %c288], %29 {strides = array<i32>} : memref<180x512xf32, #tpu.memory_space<vmem>>, vector<90x32xf32>,
    %c11 = arith.constant 11 : index
    %c0_32 = arith.constant 0 : index
    %31 = vector.load %arg9[%c11, %c0_32] : memref<808x32xf32, #tpu.memory_space<vmem>>, vector<90x32xf32>
    %c0_33 = arith.constant 0 : index
    %c320 = arith.constant 320 : index
    %32 = vector.load %arg10[%c0_33, %c320] : memref<180x512xf32, #tpu.memory_space<vmem>>, vector<90x32xf32>
    tpu.vector_store %arg10[%c0_33, %c320], %31 {strides = array<i32>} : memref<180x512xf32, #tpu.memory_space<vmem>>, vector<90x32xf32>,
    %c111 = arith.constant 111 : index
    %c0_34 = arith.constant 0 : index
    %33 = vector.load %arg9[%c111, %c0_34] : memref<808x32xf32, #tpu.memory_space<vmem>>, vector<90x32xf32>
    %c0_35 = arith.constant 0 : index
    %c352 = arith.constant 352 : index
    %34 = vector.load %arg10[%c0_35, %c352] : memref<180x512xf32, #tpu.memory_space<vmem>>, vector<90x32xf32>
    tpu.vector_store %arg10[%c0_35, %c352], %33 {strides = array<i32>} : memref<180x512xf32, #tpu.memory_space<vmem>>, vector<90x32xf32>,
    %c210 = arith.constant 210 : index
    %c0_36 = arith.constant 0 : index
    %35 = vector.load %arg9[%c210, %c0_36] : memref<808x32xf32, #tpu.memory_space<vmem>>, vector<90x32xf32>
    %c0_37 = arith.constant 0 : index
    %c384 = arith.constant 384 : index
    %36 = vector.load %arg10[%c0_37, %c384] : memref<180x512xf32, #tpu.memory_space<vmem>>, vector<90x32xf32>
    tpu.vector_store %arg10[%c0_37, %c384], %35 {strides = array<i32>} : memref<180x512xf32, #tpu.memory_space<vmem>>, vector<90x32xf32>,
    %c310 = arith.constant 310 : index
    %c0_38 = arith.constant 0 : index
    %37 = vector.load %arg9[%c310, %c0_38] : memref<808x32xf32, #tpu.memory_space<vmem>>, vector<90x32xf32>
    %c0_39 = arith.constant 0 : index
    %c416 = arith.constant 416 : index
    %38 = vector.load %arg10[%c0_39, %c416] : memref<180x512xf32, #tpu.memory_space<vmem>>, vector<90x32xf32>
    tpu.vector_store %arg10[%c0_39, %c416], %37 {strides = array<i32>} : memref<180x512xf32, #tpu.memory_space<vmem>>, vector<90x32xf32>,
    %c211 = arith.constant 211 : index
    %c0_40 = arith.constant 0 : index
    %39 = vector.load %arg9[%c211, %c0_40] : memref<808x32xf32, #tpu.memory_space<vmem>>, vector<90x32xf32>
    %c0_41 = arith.constant 0 : index
    %c448 = arith.constant 448 : index
    %40 = vector.load %arg10[%c0_41, %c448] : memref<180x512xf32, #tpu.memory_space<vmem>>, vector<90x32xf32>
    tpu.vector_store %arg10[%c0_41, %c448], %39 {strides = array<i32>} : memref<180x512xf32, #tpu.memory_space<vmem>>, vector<90x32xf32>,
    %c311 = arith.constant 311 : index
    %c0_42 = arith.constant 0 : index
    %41 = vector.load %arg9[%c311, %c0_42] : memref<808x32xf32, #tpu.memory_space<vmem>>, vector<90x32xf32>
    %c0_43 = arith.constant 0 : index
    %c480 = arith.constant 480 : index
    %42 = vector.load %arg10[%c0_43, %c480] : memref<180x512xf32, #tpu.memory_space<vmem>>, vector<90x32xf32>
    tpu.vector_store %arg10[%c0_43, %c480], %41 {strides = array<i32>} : memref<180x512xf32, #tpu.memory_space<vmem>>, vector<90x32xf32>,
    %c400 = arith.constant 400 : index
    %c0_44 = arith.constant 0 : index
    %43 = vector.load %arg9[%c400, %c0_44] : memref<808x32xf32, #tpu.memory_space<vmem>>, vector<90x32xf32>
    %c90 = arith.constant 90 : index
    %c0_45 = arith.constant 0 : index
    %44 = vector.load %arg10[%c90, %c0_45] : memref<180x512xf32, #tpu.memory_space<vmem>>, vector<90x32xf32>
    tpu.vector_store %arg10[%c90, %c0_45], %43 {strides = array<i32>} : memref<180x512xf32, #tpu.memory_space<vmem>>, vector<90x32xf32>,
    %c500 = arith.constant 500 : index
    %c0_46 = arith.constant 0 : index
    %45 = vector.load %arg9[%c500, %c0_46] : memref<808x32xf32, #tpu.memory_space<vmem>>, vector<90x32xf32>
    %c90_47 = arith.constant 90 : index
    %c32_48 = arith.constant 32 : index
    %46 = vector.load %arg10[%c90_47, %c32_48] : memref<180x512xf32, #tpu.memory_space<vmem>>, vector<90x32xf32>
    tpu.vector_store %arg10[%c90_47, %c32_48], %45 {strides = array<i32>} : memref<180x512xf32, #tpu.memory_space<vmem>>, vector<90x32xf32>,
    %c401 = arith.constant 401 : index
    %c0_49 = arith.constant 0 : index
    %47 = vector.load %arg9[%c401, %c0_49] : memref<808x32xf32, #tpu.memory_space<vmem>>, vector<90x32xf32>
    %c90_50 = arith.constant 90 : index
    %c64_51 = arith.constant 64 : index
    %48 = vector.load %arg10[%c90_50, %c64_51] : memref<180x512xf32, #tpu.memory_space<vmem>>, vector<90x32xf32>
    tpu.vector_store %arg10[%c90_50, %c64_51], %47 {strides = array<i32>} : memref<180x512xf32, #tpu.memory_space<vmem>>, vector<90x32xf32>,
    %c501 = arith.constant 501 : index
    %c0_52 = arith.constant 0 : index
    %49 = vector.load %arg9[%c501, %c0_52] : memref<808x32xf32, #tpu.memory_space<vmem>>, vector<90x32xf32>
    %c90_53 = arith.constant 90 : index
    %c96_54 = arith.constant 96 : index
    %50 = vector.load %arg10[%c90_53, %c96_54] : memref<180x512xf32, #tpu.memory_space<vmem>>, vector<90x32xf32>
    tpu.vector_store %arg10[%c90_53, %c96_54], %49 {strides = array<i32>} : memref<180x512xf32, #tpu.memory_space<vmem>>, vector<90x32xf32>,
    %c600 = arith.constant 600 : index
    %c0_55 = arith.constant 0 : index
    %51 = vector.load %arg9[%c600, %c0_55] : memref<808x32xf32, #tpu.memory_space<vmem>>, vector<90x32xf32>
    %c90_56 = arith.constant 90 : index
    %c128_57 = arith.constant 128 : index
    %52 = vector.load %arg10[%c90_56, %c128_57] : memref<180x512xf32, #tpu.memory_space<vmem>>, vector<90x32xf32>
    tpu.vector_store %arg10[%c90_56, %c128_57], %51 {strides = array<i32>} : memref<180x512xf32, #tpu.memory_space<vmem>>, vector<90x32xf32>,
    %c700 = arith.constant 700 : index
    %c0_58 = arith.constant 0 : index
    %53 = vector.load %arg9[%c700, %c0_58] : memref<808x32xf32, #tpu.memory_space<vmem>>, vector<90x32xf32>
    %c90_59 = arith.constant 90 : index
    %c160_60 = arith.constant 160 : index
    %54 = vector.load %arg10[%c90_59, %c160_60] : memref<180x512xf32, #tpu.memory_space<vmem>>, vector<90x32xf32>
    tpu.vector_store %arg10[%c90_59, %c160_60], %53 {strides = array<i32>} : memref<180x512xf32, #tpu.memory_space<vmem>>, vector<90x32xf32>,
    %c601 = arith.constant 601 : index
    %c0_61 = arith.constant 0 : index
    %55 = vector.load %arg9[%c601, %c0_61] : memref<808x32xf32, #tpu.memory_space<vmem>>, vector<90x32xf32>
    %c90_62 = arith.constant 90 : index
    %c192_63 = arith.constant 192 : index
    %56 = vector.load %arg10[%c90_62, %c192_63] : memref<180x512xf32, #tpu.memory_space<vmem>>, vector<90x32xf32>
    tpu.vector_store %arg10[%c90_62, %c192_63], %55 {strides = array<i32>} : memref<180x512xf32, #tpu.memory_space<vmem>>, vector<90x32xf32>,
    %c701 = arith.constant 701 : index
    %c0_64 = arith.constant 0 : index
    %57 = vector.load %arg9[%c701, %c0_64] : memref<808x32xf32, #tpu.memory_space<vmem>>, vector<90x32xf32>
    %c90_65 = arith.constant 90 : index
    %c224_66 = arith.constant 224 : index
    %58 = vector.load %arg10[%c90_65, %c224_66] : memref<180x512xf32, #tpu.memory_space<vmem>>, vector<90x32xf32>
    tpu.vector_store %arg10[%c90_65, %c224_66], %57 {strides = array<i32>} : memref<180x512xf32, #tpu.memory_space<vmem>>, vector<90x32xf32>,
    %c410 = arith.constant 410 : index
    %c0_67 = arith.constant 0 : index
    %59 = vector.load %arg9[%c410, %c0_67] : memref<808x32xf32, #tpu.memory_space<vmem>>, vector<90x32xf32>
    %c90_68 = arith.constant 90 : index
    %c256_69 = arith.constant 256 : index
    %60 = vector.load %arg10[%c90_68, %c256_69] : memref<180x512xf32, #tpu.memory_space<vmem>>, vector<90x32xf32>
    tpu.vector_store %arg10[%c90_68, %c256_69], %59 {strides = array<i32>} : memref<180x512xf32, #tpu.memory_space<vmem>>, vector<90x32xf32>,
    %c510 = arith.constant 510 : index
    %c0_70 = arith.constant 0 : index
    %61 = vector.load %arg9[%c510, %c0_70] : memref<808x32xf32, #tpu.memory_space<vmem>>, vector<90x32xf32>
    %c90_71 = arith.constant 90 : index
    %c288_72 = arith.constant 288 : index
    %62 = vector.load %arg10[%c90_71, %c288_72] : memref<180x512xf32, #tpu.memory_space<vmem>>, vector<90x32xf32>
    tpu.vector_store %arg10[%c90_71, %c288_72], %61 {strides = array<i32>} : memref<180x512xf32, #tpu.memory_space<vmem>>, vector<90x32xf32>,
    %c411 = arith.constant 411 : index
    %c0_73 = arith.constant 0 : index
    %63 = vector.load %arg9[%c411, %c0_73] : memref<808x32xf32, #tpu.memory_space<vmem>>, vector<90x32xf32>
    %c90_74 = arith.constant 90 : index
    %c320_75 = arith.constant 320 : index
    %64 = vector.load %arg10[%c90_74, %c320_75] : memref<180x512xf32, #tpu.memory_space<vmem>>, vector<90x32xf32>
    tpu.vector_store %arg10[%c90_74, %c320_75], %63 {strides = array<i32>} : memref<180x512xf32, #tpu.memory_space<vmem>>, vector<90x32xf32>,
    %c511 = arith.constant 511 : index
    %c0_76 = arith.constant 0 : index
    %65 = vector.load %arg9[%c511, %c0_76] : memref<808x32xf32, #tpu.memory_space<vmem>>, vector<90x32xf32>
    %c90_77 = arith.constant 90 : index
    %c352_78 = arith.constant 352 : index
    %66 = vector.load %arg10[%c90_77, %c352_78] : memref<180x512xf32, #tpu.memory_space<vmem>>, vector<90x32xf32>
    tpu.vector_store %arg10[%c90_77, %c352_78], %65 {strides = array<i32>} : memref<180x512xf32, #tpu.memory_space<vmem>>, vector<90x32xf32>,
    %c610 = arith.constant 610 : index
    %c0_79 = arith.constant 0 : index
    %67 = vector.load %arg9[%c610, %c0_79] : memref<808x32xf32, #tpu.memory_space<vmem>>, vector<90x32xf32>
    %c90_80 = arith.constant 90 : index
    %c384_81 = arith.constant 384 : index
    %68 = vector.load %arg10[%c90_80, %c384_81] : memref<180x512xf32, #tpu.memory_space<vmem>>, vector<90x32xf32>
    tpu.vector_store %arg10[%c90_80, %c384_81], %67 {strides = array<i32>} : memref<180x512xf32, #tpu.memory_space<vmem>>, vector<90x32xf32>,
    %c710 = arith.constant 710 : index
    %c0_82 = arith.constant 0 : index
    %69 = vector.load %arg9[%c710, %c0_82] : memref<808x32xf32, #tpu.memory_space<vmem>>, vector<90x32xf32>
    %c90_83 = arith.constant 90 : index
    %c416_84 = arith.constant 416 : index
    %70 = vector.load %arg10[%c90_83, %c416_84] : memref<180x512xf32, #tpu.memory_space<vmem>>, vector<90x32xf32>
    tpu.vector_store %arg10[%c90_83, %c416_84], %69 {strides = array<i32>} : memref<180x512xf32, #tpu.memory_space<vmem>>, vector<90x32xf32>,
    %c611 = arith.constant 611 : index
    %c0_85 = arith.constant 0 : index
    %71 = vector.load %arg9[%c611, %c0_85] : memref<808x32xf32, #tpu.memory_space<vmem>>, vector<90x32xf32>
    %c90_86 = arith.constant 90 : index
    %c448_87 = arith.constant 448 : index
    %72 = vector.load %arg10[%c90_86, %c448_87] : memref<180x512xf32, #tpu.memory_space<vmem>>, vector<90x32xf32>
    tpu.vector_store %arg10[%c90_86, %c448_87], %71 {strides = array<i32>} : memref<180x512xf32, #tpu.memory_space<vmem>>, vector<90x32xf32>,
    %c711 = arith.constant 711 : index
    %c0_88 = arith.constant 0 : index
    %73 = vector.load %arg9[%c711, %c0_88] : memref<808x32xf32, #tpu.memory_space<vmem>>, vector<90x32xf32>
    %c90_89 = arith.constant 90 : index
    %c480_90 = arith.constant 480 : index
    %74 = vector.load %arg10[%c90_89, %c480_90] : memref<180x512xf32, #tpu.memory_space<vmem>>, vector<90x32xf32>
    tpu.vector_store %arg10[%c90_89, %c480_90], %73 {strides = array<i32>} : memref<180x512xf32, #tpu.memory_space<vmem>>, vector<90x32xf32>,
    %c0_91 = arith.constant 0 : index
    %c0_92 = arith.constant 0 : index
    %75 = vector.load %arg10[%c0_91, %c0_92] : memref<180x512xf32, #tpu.memory_space<vmem>>, vector<180x512xf32>
    %c0_93 = arith.constant 0 : index
    %c0_94 = arith.constant 0 : index
    %76 = vector.load %arg4[%c0_93, %c0_94] : memref<512x64xf32, #tpu.memory_space<vmem>>, vector<512x64xf32>
    %cst_95 = arith.constant dense<0.000000e+00> : vector<180x64xf32>
    %77 = tpu.matmul %75, %76, %cst_95 {dimension_numbers = #tpu.dot_dimension_numbers<[1], [0], [0], [1], [0, 0, 1, 1], [], []>} : vector<180x512xf32>, vector<512x64xf32>, vector<180x64xf32> -> vector<180x64xf32>
    %c0_96 = arith.constant 0 : index
    %c0_97 = arith.constant 0 : index
    %78 = vector.load %arg5[%c0_96, %c0_97] : memref<1x64xf32, #tpu.memory_space<vmem>>, vector<1x64xf32>
    %79 = vector.broadcast %78 : vector<1x64xf32> to vector<180x64xf32>
    %80 = arith.addf %77, %79 : vector<180x64xf32>
    %cst_98 = arith.constant 0.000000e+00 : f32
    %81 = vector.broadcast %cst_98 : f32 to vector<180x64xf32>
    %82 = arith.maximumf %80, %81 : vector<180x64xf32>
    %c0_99 = arith.constant 0 : index
    %c0_100 = arith.constant 0 : index
    %83 = vector.load %arg11[%c0_99, %c0_100] : memref<188x64xf32, #tpu.memory_space<vmem>>, vector<180x64xf32>
    tpu.vector_store %arg11[%c0_99, %c0_100], %82 {strides = array<i32>} : memref<188x64xf32, #tpu.memory_space<vmem>>, vector<180x64xf32>,
    %cst_101 = arith.constant 0.000000e+00 : f32
    %84 = vector.broadcast %cst_101 : f32 to vector<8x64xf32>
    %c180 = arith.constant 180 : index
    %c0_102 = arith.constant 0 : index
    %85 = vector.load %arg11[%c180, %c0_102] : memref<188x64xf32, #tpu.memory_space<vmem>>, vector<8x64xf32>
    tpu.vector_store %arg11[%c180, %c0_102], %84 {strides = array<i32>} : memref<188x64xf32, #tpu.memory_space<vmem>>, vector<8x64xf32>,
    %c0_103 = arith.constant 0 : index
    %c0_104 = arith.constant 0 : index
    %86 = vector.load %arg11[%c0_103, %c0_104] : memref<188x64xf32, #tpu.memory_space<vmem>>, vector<70x64xf32>
    %c0_105 = arith.constant 0 : index
    %c0_106 = arith.constant 0 : index
    %87 = vector.load %arg12[%c0_105, %c0_106] : memref<140x576xf32, #tpu.memory_space<vmem>>, vector<70x64xf32>
    tpu.vector_store %arg12[%c0_105, %c0_106], %86 {strides = array<i32>} : memref<140x576xf32, #tpu.memory_space<vmem>>, vector<70x64xf32>,
    %c1_107 = arith.constant 1 : index
    %c0_108 = arith.constant 0 : index
    %88 = vector.load %arg11[%c1_107, %c0_108] : memref<188x64xf32, #tpu.memory_space<vmem>>, vector<70x64xf32>
    %c0_109 = arith.constant 0 : index
    %c64_110 = arith.constant 64 : index
    %89 = vector.load %arg12[%c0_109, %c64_110] : memref<140x576xf32, #tpu.memory_space<vmem>>, vector<70x64xf32>
    tpu.vector_store %arg12[%c0_109, %c64_110], %88 {strides = array<i32>} : memref<140x576xf32, #tpu.memory_space<vmem>>, vector<70x64xf32>,
    %c2 = arith.constant 2 : index
    %c0_111 = arith.constant 0 : index
    %90 = vector.load %arg11[%c2, %c0_111] : memref<188x64xf32, #tpu.memory_space<vmem>>, vector<70x64xf32>
    %c0_112 = arith.constant 0 : index
    %c128_113 = arith.constant 128 : index
    %91 = vector.load %arg12[%c0_112, %c128_113] : memref<140x576xf32, #tpu.memory_space<vmem>>, vector<70x64xf32>
    tpu.vector_store %arg12[%c0_112, %c128_113], %90 {strides = array<i32>} : memref<140x576xf32, #tpu.memory_space<vmem>>, vector<70x64xf32>,
    %c10_114 = arith.constant 10 : index
    %c0_115 = arith.constant 0 : index
    %92 = vector.load %arg11[%c10_114, %c0_115] : memref<188x64xf32, #tpu.memory_space<vmem>>, vector<70x64xf32>
    %c0_116 = arith.constant 0 : index
    %c192_117 = arith.constant 192 : index
    %93 = vector.load %arg12[%c0_116, %c192_117] : memref<140x576xf32, #tpu.memory_space<vmem>>, vector<70x64xf32>
    tpu.vector_store %arg12[%c0_116, %c192_117], %92 {strides = array<i32>} : memref<140x576xf32, #tpu.memory_space<vmem>>, vector<70x64xf32>,
    %c11_118 = arith.constant 11 : index
    %c0_119 = arith.constant 0 : index
    %94 = vector.load %arg11[%c11_118, %c0_119] : memref<188x64xf32, #tpu.memory_space<vmem>>, vector<70x64xf32>
    %c0_120 = arith.constant 0 : index
    %c256_121 = arith.constant 256 : index
    %95 = vector.load %arg12[%c0_120, %c256_121] : memref<140x576xf32, #tpu.memory_space<vmem>>, vector<70x64xf32>
    tpu.vector_store %arg12[%c0_120, %c256_121], %94 {strides = array<i32>} : memref<140x576xf32, #tpu.memory_space<vmem>>, vector<70x64xf32>,
    %c12 = arith.constant 12 : index
    %c0_122 = arith.constant 0 : index
    %96 = vector.load %arg11[%c12, %c0_122] : memref<188x64xf32, #tpu.memory_space<vmem>>, vector<70x64xf32>
    %c0_123 = arith.constant 0 : index
    %c320_124 = arith.constant 320 : index
    %97 = vector.load %arg12[%c0_123, %c320_124] : memref<140x576xf32, #tpu.memory_space<vmem>>, vector<70x64xf32>
    tpu.vector_store %arg12[%c0_123, %c320_124], %96 {strides = array<i32>} : memref<140x576xf32, #tpu.memory_space<vmem>>, vector<70x64xf32>,
    %c20 = arith.constant 20 : index
    %c0_125 = arith.constant 0 : index
    %98 = vector.load %arg11[%c20, %c0_125] : memref<188x64xf32, #tpu.memory_space<vmem>>, vector<70x64xf32>
    %c0_126 = arith.constant 0 : index
    %c384_127 = arith.constant 384 : index
    %99 = vector.load %arg12[%c0_126, %c384_127] : memref<140x576xf32, #tpu.memory_space<vmem>>, vector<70x64xf32>
    tpu.vector_store %arg12[%c0_126, %c384_127], %98 {strides = array<i32>} : memref<140x576xf32, #tpu.memory_space<vmem>>, vector<70x64xf32>,
    %c21 = arith.constant 21 : index
    %c0_128 = arith.constant 0 : index
    %100 = vector.load %arg11[%c21, %c0_128] : memref<188x64xf32, #tpu.memory_space<vmem>>, vector<70x64xf32>
    %c0_129 = arith.constant 0 : index
    %c448_130 = arith.constant 448 : index
    %101 = vector.load %arg12[%c0_129, %c448_130] : memref<140x576xf32, #tpu.memory_space<vmem>>, vector<70x64xf32>
    tpu.vector_store %arg12[%c0_129, %c448_130], %100 {strides = array<i32>} : memref<140x576xf32, #tpu.memory_space<vmem>>, vector<70x64xf32>,
    %c22 = arith.constant 22 : index
    %c0_131 = arith.constant 0 : index
    %102 = vector.load %arg11[%c22, %c0_131] : memref<188x64xf32, #tpu.memory_space<vmem>>, vector<70x64xf32>
    %c0_132 = arith.constant 0 : index
    %c512 = arith.constant 512 : index
    %103 = vector.load %arg12[%c0_132, %c512] : memref<140x576xf32, #tpu.memory_space<vmem>>, vector<70x64xf32>
    tpu.vector_store %arg12[%c0_132, %c512], %102 {strides = array<i32>} : memref<140x576xf32, #tpu.memory_space<vmem>>, vector<70x64xf32>,
    %c90_133 = arith.constant 90 : index
    %c0_134 = arith.constant 0 : index
    %104 = vector.load %arg11[%c90_133, %c0_134] : memref<188x64xf32, #tpu.memory_space<vmem>>, vector<70x64xf32>
    %c70 = arith.constant 70 : index
    %c0_135 = arith.constant 0 : index
    %105 = vector.load %arg12[%c70, %c0_135] : memref<140x576xf32, #tpu.memory_space<vmem>>, vector<70x64xf32>
    tpu.vector_store %arg12[%c70, %c0_135], %104 {strides = array<i32>} : memref<140x576xf32, #tpu.memory_space<vmem>>, vector<70x64xf32>,
    %c91 = arith.constant 91 : index
    %c0_136 = arith.constant 0 : index
    %106 = vector.load %arg11[%c91, %c0_136] : memref<188x64xf32, #tpu.memory_space<vmem>>, vector<70x64xf32>
    %c70_137 = arith.constant 70 : index
    %c64_138 = arith.constant 64 : index
    %107 = vector.load %arg12[%c70_137, %c64_138] : memref<140x576xf32, #tpu.memory_space<vmem>>, vector<70x64xf32>
    tpu.vector_store %arg12[%c70_137, %c64_138], %106 {strides = array<i32>} : memref<140x576xf32, #tpu.memory_space<vmem>>, vector<70x64xf32>,
    %c92 = arith.constant 92 : index
    %c0_139 = arith.constant 0 : index
    %108 = vector.load %arg11[%c92, %c0_139] : memref<188x64xf32, #tpu.memory_space<vmem>>, vector<70x64xf32>
    %c70_140 = arith.constant 70 : index
    %c128_141 = arith.constant 128 : index
    %109 = vector.load %arg12[%c70_140, %c128_141] : memref<140x576xf32, #tpu.memory_space<vmem>>, vector<70x64xf32>
    tpu.vector_store %arg12[%c70_140, %c128_141], %108 {strides = array<i32>} : memref<140x576xf32, #tpu.memory_space<vmem>>, vector<70x64xf32>,
    %c100_142 = arith.constant 100 : index
    %c0_143 = arith.constant 0 : index
    %110 = vector.load %arg11[%c100_142, %c0_143] : memref<188x64xf32, #tpu.memory_space<vmem>>, vector<70x64xf32>
    %c70_144 = arith.constant 70 : index
    %c192_145 = arith.constant 192 : index
    %111 = vector.load %arg12[%c70_144, %c192_145] : memref<140x576xf32, #tpu.memory_space<vmem>>, vector<70x64xf32>
    tpu.vector_store %arg12[%c70_144, %c192_145], %110 {strides = array<i32>} : memref<140x576xf32, #tpu.memory_space<vmem>>, vector<70x64xf32>,
    %c101_146 = arith.constant 101 : index
    %c0_147 = arith.constant 0 : index
    %112 = vector.load %arg11[%c101_146, %c0_147] : memref<188x64xf32, #tpu.memory_space<vmem>>, vector<70x64xf32>
    %c70_148 = arith.constant 70 : index
    %c256_149 = arith.constant 256 : index
    %113 = vector.load %arg12[%c70_148, %c256_149] : memref<140x576xf32, #tpu.memory_space<vmem>>, vector<70x64xf32>
    tpu.vector_store %arg12[%c70_148, %c256_149], %112 {strides = array<i32>} : memref<140x576xf32, #tpu.memory_space<vmem>>, vector<70x64xf32>,
    %c102 = arith.constant 102 : index
    %c0_150 = arith.constant 0 : index
    %114 = vector.load %arg11[%c102, %c0_150] : memref<188x64xf32, #tpu.memory_space<vmem>>, vector<70x64xf32>
    %c70_151 = arith.constant 70 : index
    %c320_152 = arith.constant 320 : index
    %115 = vector.load %arg12[%c70_151, %c320_152] : memref<140x576xf32, #tpu.memory_space<vmem>>, vector<70x64xf32>
    tpu.vector_store %arg12[%c70_151, %c320_152], %114 {strides = array<i32>} : memref<140x576xf32, #tpu.memory_space<vmem>>, vector<70x64xf32>,
    %c110_153 = arith.constant 110 : index
    %c0_154 = arith.constant 0 : index
    %116 = vector.load %arg11[%c110_153, %c0_154] : memref<188x64xf32, #tpu.memory_space<vmem>>, vector<70x64xf32>
    %c70_155 = arith.constant 70 : index
    %c384_156 = arith.constant 384 : index
    %117 = vector.load %arg12[%c70_155, %c384_156] : memref<140x576xf32, #tpu.memory_space<vmem>>, vector<70x64xf32>
    tpu.vector_store %arg12[%c70_155, %c384_156], %116 {strides = array<i32>} : memref<140x576xf32, #tpu.memory_space<vmem>>, vector<70x64xf32>,
    %c111_157 = arith.constant 111 : index
    %c0_158 = arith.constant 0 : index
    %118 = vector.load %arg11[%c111_157, %c0_158] : memref<188x64xf32, #tpu.memory_space<vmem>>, vector<70x64xf32>
    %c70_159 = arith.constant 70 : index
    %c448_160 = arith.constant 448 : index
    %119 = vector.load %arg12[%c70_159, %c448_160] : memref<140x576xf32, #tpu.memory_space<vmem>>, vector<70x64xf32>
    tpu.vector_store %arg12[%c70_159, %c448_160], %118 {strides = array<i32>} : memref<140x576xf32, #tpu.memory_space<vmem>>, vector<70x64xf32>,
    %c112 = arith.constant 112 : index
    %c0_161 = arith.constant 0 : index
    %120 = vector.load %arg11[%c112, %c0_161] : memref<188x64xf32, #tpu.memory_space<vmem>>, vector<70x64xf32>
    %c70_162 = arith.constant 70 : index
    %c512_163 = arith.constant 512 : index
    %121 = vector.load %arg12[%c70_162, %c512_163] : memref<140x576xf32, #tpu.memory_space<vmem>>, vector<70x64xf32>
    tpu.vector_store %arg12[%c70_162, %c512_163], %120 {strides = array<i32>} : memref<140x576xf32, #tpu.memory_space<vmem>>, vector<70x64xf32>,
    %c0_164 = arith.constant 0 : index
    %c0_165 = arith.constant 0 : index
    %122 = vector.load %arg12[%c0_164, %c0_165] : memref<140x576xf32, #tpu.memory_space<vmem>>, vector<140x576xf32>
    %c0_166 = arith.constant 0 : index
    %c0_167 = arith.constant 0 : index
    %123 = vector.load %arg6[%c0_166, %c0_167] : memref<576x64xf32, #tpu.memory_space<vmem>>, vector<576x64xf32>
    %cst_168 = arith.constant dense<0.000000e+00> : vector<140x64xf32>
    %124 = tpu.matmul %122, %123, %cst_168 {dimension_numbers = #tpu.dot_dimension_numbers<[1], [0], [0], [1], [0, 0, 1, 1], [], []>} : vector<140x576xf32>, vector<576x64xf32>, vector<140x64xf32> -> vector<140x64xf32>
    %c0_169 = arith.constant 0 : index
    %c0_170 = arith.constant 0 : index
    %125 = vector.load %arg7[%c0_169, %c0_170] : memref<1x64xf32, #tpu.memory_space<vmem>>, vector<1x64xf32>
    %126 = vector.broadcast %125 : vector<1x64xf32> to vector<140x64xf32>
    %127 = arith.addf %124, %126 : vector<140x64xf32>
    %cst_171 = arith.constant 0.000000e+00 : f32
    %128 = vector.broadcast %cst_171 : f32 to vector<140x64xf32>
    %129 = arith.maximumf %127, %128 : vector<140x64xf32>
    %c0_172 = arith.constant 0 : index
    %c0_173 = arith.constant 0 : index
    %130 = vector.load %arg8[%c0_172, %c0_173] : memref<140x64xf32, #tpu.memory_space<vmem>>, vector<140x64xf32>
    tpu.vector_store %arg8[%c0_172, %c0_173], %129 {strides = array<i32>} : memref<140x64xf32, #tpu.memory_space<vmem>>, vector<140x64xf32>,
    return
  }
  func.func @transform_0(%arg0: i32) -> (i32, i32) {
    %c0_i32 = arith.constant 0 : i32
    %c0_i32_0 = arith.constant 0 : i32
    %c0_i32_1 = arith.constant 0 : i32
    return %c0_i32, %c0_i32_0 : i32, i32
  }
  func.func @transform_1(%arg0: i32) -> (i32, i32) {
    %c0_i32 = arith.constant 0 : i32
    %c0_i32_0 = arith.constant 0 : i32
    %c0_i32_1 = arith.constant 0 : i32
    return %c0_i32, %c0_i32_0 : i32, i32
  }
  func.func @transform_2(%arg0: i32) -> (i32, i32) {
    %c0_i32 = arith.constant 0 : i32
    %c0_i32_0 = arith.constant 0 : i32
    %c0_i32_1 = arith.constant 0 : i32
    return %c0_i32, %c0_i32_0 : i32, i32
  }
  func.func @transform_3(%arg0: i32) -> (i32, i32) {
    %c0_i32 = arith.constant 0 : i32
    %c0_i32_0 = arith.constant 0 : i32
    %c0_i32_1 = arith.constant 0 : i32
    return %c0_i32, %c0_i32_0 : i32, i32
  }
  func.func @transform_4(%arg0: i32) -> (i32, i32) {
    %c0_i32 = arith.constant 0 : i32
    %c0_i32_0 = arith.constant 0 : i32
    %c0_i32_1 = arith.constant 0 : i32
    return %c0_i32, %c0_i32_0 : i32, i32
  }
  func.func @transform_5(%arg0: i32) -> (i32, i32) {
    %c0_i32 = arith.constant 0 : i32
    %c0_i32_0 = arith.constant 0 : i32
    %c0_i32_1 = arith.constant 0 : i32
    return %c0_i32, %c0_i32_0 : i32, i32
  }
  func.func @transform_6(%arg0: i32) -> (i32, i32) {
    %c0_i32 = arith.constant 0 : i32
    %c0_i32_0 = arith.constant 0 : i32
    %c0_i32_1 = arith.constant 0 : i32
    return %c0_i32, %c0_i32_0 : i32, i32
  }
  func.func @transform_7(%arg0: i32) -> (i32, i32) {
    %c0_i32 = arith.constant 0 : i32
    %c0_i32_0 = arith.constant 0 : i32
    %c0_i32_1 = arith.constant 0 : i32
    return %c0_i32, %c0_i32_0 : i32, i32
  }
}

module attributes {stable_mosaic.version = 11 : i64} {
  func.func @_fc_kernel(%arg0: i32, %arg1: memref<2x3136xf32, #tpu.memory_space<vmem>>, %arg2: memref<3136x512xf32, #tpu.memory_space<vmem>>, %arg3: memref<1x512xf32, #tpu.memory_space<vmem>>, %arg4: memref<512x5xf32, #tpu.memory_space<vmem>>, %arg5: memref<1x5xf32, #tpu.memory_space<vmem>>, %arg6: memref<2x5xf32, #tpu.memory_space<vmem>>) attributes {dimension_semantics = [#tpu.dimension_semantics<arbitrary>], iteration_bounds = array<i64: 1>, scalar_prefetch = 0 : i64, scratch_operands = 0 : i64, tpu.core_type = #tpu.core_type<tc>, window_params = [{pipeline_mode = #tpu.pipeline_mode<synchronous>, transform_indices = @transform_0, window_bounds = array<i64: 2, 3136>}, {pipeline_mode = #tpu.pipeline_mode<synchronous>, transform_indices = @transform_1, window_bounds = array<i64: 3136, 512>}, {pipeline_mode = #tpu.pipeline_mode<synchronous>, transform_indices = @transform_2, window_bounds = array<i64: 1, 512>}, {pipeline_mode = #tpu.pipeline_mode<synchronous>, transform_indices = @transform_3, window_bounds = array<i64: 512, 5>}, {pipeline_mode = #tpu.pipeline_mode<synchronous>, transform_indices = @transform_4, window_bounds = array<i64: 1, 5>}, {pipeline_mode = #tpu.pipeline_mode<synchronous>, transform_indices = @transform_5, window_bounds = array<i64: 2, 5>}]} {
    %c0 = arith.constant 0 : index
    %c0_0 = arith.constant 0 : index
    %0 = vector.load %arg1[%c0, %c0_0] : memref<2x3136xf32, #tpu.memory_space<vmem>>, vector<2x3136xf32>
    %c0_1 = arith.constant 0 : index
    %c0_2 = arith.constant 0 : index
    %1 = vector.load %arg2[%c0_1, %c0_2] : memref<3136x512xf32, #tpu.memory_space<vmem>>, vector<3136x512xf32>
    %cst = arith.constant dense<0.000000e+00> : vector<2x512xf32>
    %2 = tpu.matmul %0, %1, %cst {dimension_numbers = #tpu.dot_dimension_numbers<[1], [0], [0], [1], [0, 0, 1, 1], [], []>} : vector<2x3136xf32>, vector<3136x512xf32>, vector<2x512xf32> -> vector<2x512xf32>
    %c0_3 = arith.constant 0 : index
    %c0_4 = arith.constant 0 : index
    %3 = vector.load %arg3[%c0_3, %c0_4] : memref<1x512xf32, #tpu.memory_space<vmem>>, vector<1x512xf32>
    %4 = vector.broadcast %3 : vector<1x512xf32> to vector<2x512xf32>
    %5 = arith.addf %2, %4 : vector<2x512xf32>
    %cst_5 = arith.constant 0.000000e+00 : f32
    %6 = vector.broadcast %cst_5 : f32 to vector<2x512xf32>
    %7 = arith.maximumf %5, %6 : vector<2x512xf32>
    %c0_6 = arith.constant 0 : index
    %c0_7 = arith.constant 0 : index
    %8 = vector.load %arg4[%c0_6, %c0_7] : memref<512x5xf32, #tpu.memory_space<vmem>>, vector<512x5xf32>
    %cst_8 = arith.constant dense<0.000000e+00> : vector<2x5xf32>
    %9 = tpu.matmul %7, %8, %cst_8 {dimension_numbers = #tpu.dot_dimension_numbers<[1], [0], [0], [1], [0, 0, 1, 1], [], []>} : vector<2x512xf32>, vector<512x5xf32>, vector<2x5xf32> -> vector<2x5xf32>
    %c0_9 = arith.constant 0 : index
    %c0_10 = arith.constant 0 : index
    %10 = vector.load %arg5[%c0_9, %c0_10] : memref<1x5xf32, #tpu.memory_space<vmem>>, vector<1x5xf32>
    %11 = vector.broadcast %10 : vector<1x5xf32> to vector<2x5xf32>
    %12 = arith.addf %9, %11 : vector<2x5xf32>
    %c0_11 = arith.constant 0 : index
    %c0_12 = arith.constant 0 : index
    %13 = vector.load %arg6[%c0_11, %c0_12] : memref<2x5xf32, #tpu.memory_space<vmem>>, vector<2x5xf32>
    tpu.vector_store %arg6[%c0_11, %c0_12], %12 {strides = array<i32>} : memref<2x5xf32, #tpu.memory_space<vmem>>, vector<2x5xf32>,
    return
  }
  func.func @transform_0(%arg0: i32) -> (i32, i32) {
    %c0_i32 = arith.constant 0 : i32
    %c0_i32_0 = arith.constant 0 : i32
    %c0_i32_1 = arith.constant 0 : i32
    return %c0_i32, %c0_i32_0 : i32, i32
  }
  func.func @transform_1(%arg0: i32) -> (i32, i32) {
    %c0_i32 = arith.constant 0 : i32
    %c0_i32_0 = arith.constant 0 : i32
    %c0_i32_1 = arith.constant 0 : i32
    return %c0_i32, %c0_i32_0 : i32, i32
  }
  func.func @transform_2(%arg0: i32) -> (i32, i32) {
    %c0_i32 = arith.constant 0 : i32
    %c0_i32_0 = arith.constant 0 : i32
    %c0_i32_1 = arith.constant 0 : i32
    return %c0_i32, %c0_i32_0 : i32, i32
  }
  func.func @transform_3(%arg0: i32) -> (i32, i32) {
    %c0_i32 = arith.constant 0 : i32
    %c0_i32_0 = arith.constant 0 : i32
    %c0_i32_1 = arith.constant 0 : i32
    return %c0_i32, %c0_i32_0 : i32, i32
  }
  func.func @transform_4(%arg0: i32) -> (i32, i32) {
    %c0_i32 = arith.constant 0 : i32
    %c0_i32_0 = arith.constant 0 : i32
    %c0_i32_1 = arith.constant 0 : i32
    return %c0_i32, %c0_i32_0 : i32, i32
  }
  func.func @transform_5(%arg0: i32) -> (i32, i32) {
    %c0_i32 = arith.constant 0 : i32
    %c0_i32_0 = arith.constant 0 : i32
    %c0_i32_1 = arith.constant 0 : i32
    return %c0_i32, %c0_i32_0 : i32, i32
  }
}

</mosaic_0001>

<llo_original>
// kernel: mario_net_forward.2
$region0: #{mario_net_forward.2}
  #allocation0 [shape = 'u32[]', space=smem, size = 0x4, offset = 0x4, fixed_abs, tag = 'smem constant byte address 0x4 - core index']
  #allocation1 [shape = 'u32[72,128]{1,0:T(1,128)}', space=vmem, size = 0x9000, scoped, tag = 'internal scratch']
  #allocation2 [shape = 'f32[808,32]{1,0:T(8,128)}', space=vmem, size = 0x65000, scoped, tag = 'scratch operand']
  #allocation3 [shape = 'f32[180,512]{1,0:T(8,128)}', space=vmem, size = 0x5c000, scoped, tag = 'scratch operand']
  #allocation4 [shape = 'f32[188,64]{1,0:T(8,128)}', space=vmem, size = 0x18000, scoped, tag = 'scratch operand']
  #allocation5 [shape = 'f32[140,576]{1,0:T(8,128)}', space=vmem, size = 0x5a000, scoped, tag = 'scratch operand']
  %s0 = inlined_call_operand.vmem [shape: f32[800,256], index: 0, kind: input, shape index: {}]
  %s1 = inlined_call_operand.vmem [shape: f32[256,32], index: 1, kind: input, shape index: {}]
  %s2 = inlined_call_operand.vmem [shape: f32[1,32], index: 2, kind: input, shape index: {}]
  %s3 = inlined_call_operand.vmem [shape: f32[512,64], index: 3, kind: input, shape index: {}]
  %s4 = inlined_call_operand.vmem [shape: f32[1,64], index: 4, kind: input, shape index: {}]
  %s5 = inlined_call_operand.vmem [shape: f32[576,64], index: 5, kind: input, shape index: {}]
  %s6 = inlined_call_operand.vmem [shape: f32[1,64], index: 6, kind: input, shape index: {}]
  %s7 = inlined_call_operand.vmem [shape: f32[140,64], index: 7, kind: output, shape index: {}]
  %s8 = sld [smem:[#allocation0]]
  $region38: #{mario_net_forward.2} parent=0
    _
  %s10 = ssub.s32 1, %s8
  %s11 = scalar_select 0, %s10, %s8
  // Predicated region
  $region2: #{mario_net_forward.2} parent=0 // pred_check
    _
  $region3: #{mario_net_forward.2} parent=0 // pred_check_branch
    %13 = sbr.rel (0) target = $region5
  $region4: #{mario_net_forward.2} parent=0 // pred_region
    _
  $region5: #{mario_net_forward.2} parent=0 // pred_fallthru
    _
  // Predicated region
  $region6: #{mario_net_forward.2} parent=0 // pred_check
    _
  $region7: #{mario_net_forward.2} parent=0 // pred_check_branch
    %15 = sbr.rel (0) target = $region9
  $region8: #{mario_net_forward.2} parent=0 // pred_region
    _
  $region9: #{mario_net_forward.2} parent=0 // pred_fallthru
    _
  // Predicated region
  $region10: #{mario_net_forward.2} parent=0 // pred_check
    _
  $region11: #{mario_net_forward.2} parent=0 // pred_check_branch
    %17 = sbr.rel (0) target = $region13
  $region12: #{mario_net_forward.2} parent=0 // pred_region
    _
  $region13: #{mario_net_forward.2} parent=0 // pred_fallthru
    _
  // Predicated region
  $region14: #{mario_net_forward.2} parent=0 // pred_check
    _
  $region15: #{mario_net_forward.2} parent=0 // pred_check_branch
    %19 = sbr.rel (0) target = $region17
  $region16: #{mario_net_forward.2} parent=0 // pred_region
    _
  $region17: #{mario_net_forward.2} parent=0 // pred_fallthru
    _
  // Predicated region
  $region18: #{mario_net_forward.2} parent=0 // pred_check
    _
  $region19: #{mario_net_forward.2} parent=0 // pred_check_branch
    %21 = sbr.rel (0) target = $region21
  $region20: #{mario_net_forward.2} parent=0 // pred_region
    _
  $region21: #{mario_net_forward.2} parent=0 // pred_fallthru
    _
  // Predicated region
  $region22: #{mario_net_forward.2} parent=0 // pred_check
    _
  $region23: #{mario_net_forward.2} parent=0 // pred_check_branch
    %23 = sbr.rel (0) target = $region25
  $region24: #{mario_net_forward.2} parent=0 // pred_region
    _
  $region25: #{mario_net_forward.2} parent=0 // pred_fallthru
    _
  // Predicated region
  $region26: #{mario_net_forward.2} parent=0 // pred_check
    _
  $region27: #{mario_net_forward.2} parent=0 // pred_check_branch
    %25 = sbr.rel (0) target = $region29
  $region28: #{mario_net_forward.2} parent=0 // pred_region
    _
  $region29: #{mario_net_forward.2} parent=0 // pred_fallthru
    _
  %v26 = vld [vmem:[%s0] sm:$0xff]
  %v27 = vld [vmem:[%s0 + $0x8] sm:$0xff]
  %v28 = vld [vmem:[%s0 + $0x10] sm:$0xff]
  %v29 = vld [vmem:[%s0 + $0x18] sm:$0xff]
  %v30 = vld [vmem:[%s0 + $0x20] sm:$0xff]
  %v31 = vld [vmem:[%s0 + $0x28] sm:$0xff]
  %v32 = vld [vmem:[%s0 + $0x30] sm:$0xff]
  %v33 = vld [vmem:[%s0 + $0x38] sm:$0xff]
  %v34 = vld [vmem:[%s0 + $0x40] sm:$0xff]
  %v35 = vld [vmem:[%s0 + $0x48] sm:$0xff]
  %v36 = vld [vmem:[%s0 + $0x50] sm:$0xff]
  %v37 = vld [vmem:[%s0 + $0x58] sm:$0xff]
  %v38 = vld [vmem:[%s0 + $0x60] sm:$0xff]
  %v39 = vld [vmem:[%s0 + $0x68] sm:$0xff]
  %v40 = vld [vmem:[%s0 + $0x70] sm:$0xff]
  %v41 = vld [vmem:[%s0 + $0x78] sm:$0xff]
  %v42 = vld [vmem:[%s0 + $0x80] sm:$0xff]
  %v43 = vld [vmem:[%s0 + $0x88] sm:$0xff]
  %v44 = vld [vmem:[%s0 + $0x90] sm:$0xff]
  %v45 = vld [vmem:[%s0 + $0x98] sm:$0xff]
  %v46 = vld [vmem:[%s0 + $0xa0] sm:$0xff]
  %v47 = vld [vmem:[%s0 + $0xa8] sm:$0xff]
  %v48 = vld [vmem:[%s0 + $0xb0] sm:$0xff]
  %v49 = vld [vmem:[%s0 + $0xb8] sm:$0xff]
  %v50 = vld [vmem:[%s0 + $0xc0] sm:$0xff]
  %v51 = vld [vmem:[%s0 + $0xc8] sm:$0xff]
  %v52 = vld [vmem:[%s0 + $0xd0] sm:$0xff]
  %v53 = vld [vmem:[%s0 + $0xd8] sm:$0xff]
  %v54 = vld [vmem:[%s0 + $0xe0] sm:$0xff]
  %v55 = vld [vmem:[%s0 + $0xe8] sm:$0xff]
  %v56 = vld [vmem:[%s0 + $0xf0] sm:$0xff]
  %v57 = vld [vmem:[%s0 + $0xf8] sm:$0xff]
  %v58 = vld [vmem:[%s0 + $0x100] sm:$0xff]
  %v59 = vld [vmem:[%s0 + $0x108] sm:$0xff]
  %v60 = vld [vmem:[%s0 + $0x110] sm:$0xff]
  %v61 = vld [vmem:[%s0 + $0x118] sm:$0xff]
  %v62 = vld [vmem:[%s0 + $0x120] sm:$0xff]
  %v63 = vld [vmem:[%s0 + $0x128] sm:$0xff]
  %v64 = vld [vmem:[%s0 + $0x130] sm:$0xff]
  %v65 = vld [vmem:[%s0 + $0x138] sm:$0xff]
  %v66 = vld [vmem:[%s0 + $0x140] sm:$0xff]
  %v67 = vld [vmem:[%s0 + $0x148] sm:$0xff]
  %v68 = vld [vmem:[%s0 + $0x150] sm:$0xff]
  %v69 = vld [vmem:[%s0 + $0x158] sm:$0xff]
  %v70 = vld [vmem:[%s0 + $0x160] sm:$0xff]
  %v71 = vld [vmem:[%s0 + $0x168] sm:$0xff]
  %v72 = vld [vmem:[%s0 + $0x170] sm:$0xff]
  %v73 = vld [vmem:[%s0 + $0x178] sm:$0xff]
  %v74 = vld [vmem:[%s0 + $0x180] sm:$0xff]
  %v75 = vld [vmem:[%s0 + $0x188] sm:$0xff]
  %v76 = vld [vmem:[%s0 + $0x190] sm:$0xff]
  %v77 = vld [vmem:[%s0 + $0x198] sm:$0xff]
  %v78 = vld [vmem:[%s0 + $0x1a0] sm:$0xff]
  %v79 = vld [vmem:[%s0 + $0x1a8] sm:$0xff]
  %v80 = vld [vmem:[%s0 + $0x1b0] sm:$0xff]
  %v81 = vld [vmem:[%s0 + $0x1b8] sm:$0xff]
  %v82 = vld [vmem:[%s0 + $0x1c0] sm:$0xff]
  %v83 = vld [vmem:[%s0 + $0x1c8] sm:$0xff]
  %v84 = vld [vmem:[%s0 + $0x1d0] sm:$0xff]
  %v85 = vld [vmem:[%s0 + $0x1d8] sm:$0xff]
  %v86 = vld [vmem:[%s0 + $0x1e0] sm:$0xff]
  %v87 = vld [vmem:[%s0 + $0x1e8] sm:$0xff]
  %v88 = vld [vmem:[%s0 + $0x1f0] sm:$0xff]
  %v89 = vld [vmem:[%s0 + $0x1f8] sm:$0xff]
  %v90 = vld [vmem:[%s0 + $0x200] sm:$0xff]
  %v91 = vld [vmem:[%s0 + $0x208] sm:$0xff]
  %v92 = vld [vmem:[%s0 + $0x210] sm:$0xff]
  %v93 = vld [vmem:[%s0 + $0x218] sm:$0xff]
  %v94 = vld [vmem:[%s0 + $0x220] sm:$0xff]
  %v95 = vld [vmem:[%s0 + $0x228] sm:$0xff]
  %v96 = vld [vmem:[%s0 + $0x230] sm:$0xff]
  %v97 = vld [vmem:[%s0 + $0x238] sm:$0xff]
  %v98 = vld [vmem:[%s0 + $0x240] sm:$0xff]
  %v99 = vld [vmem:[%s0 + $0x248] sm:$0xff]
  %v100 = vld [vmem:[%s0 + $0x250] sm:$0xff]
  %v101 = vld [vmem:[%s0 + $0x258] sm:$0xff]
  %v102 = vld [vmem:[%s0 + $0x260] sm:$0xff]
  %v103 = vld [vmem:[%s0 + $0x268] sm:$0xff]
  %v104 = vld [vmem:[%s0 + $0x270] sm:$0xff]
  %v105 = vld [vmem:[%s0 + $0x278] sm:$0xff]
  %v106 = vld [vmem:[%s0 + $0x280] sm:$0xff]
  %v107 = vld [vmem:[%s0 + $0x288] sm:$0xff]
  %v108 = vld [vmem:[%s0 + $0x290] sm:$0xff]
  %v109 = vld [vmem:[%s0 + $0x298] sm:$0xff]
  %v110 = vld [vmem:[%s0 + $0x2a0] sm:$0xff]
  %v111 = vld [vmem:[%s0 + $0x2a8] sm:$0xff]
  %v112 = vld [vmem:[%s0 + $0x2b0] sm:$0xff]
  %v113 = vld [vmem:[%s0 + $0x2b8] sm:$0xff]
  %v114 = vld [vmem:[%s0 + $0x2c0] sm:$0xff]
  %v115 = vld [vmem:[%s0 + $0x2c8] sm:$0xff]
  %v116 = vld [vmem:[%s0 + $0x2d0] sm:$0xff]
  %v117 = vld [vmem:[%s0 + $0x2d8] sm:$0xff]
  %v118 = vld [vmem:[%s0 + $0x2e0] sm:$0xff]
  %v119 = vld [vmem:[%s0 + $0x2e8] sm:$0xff]
  %v120 = vld [vmem:[%s0 + $0x2f0] sm:$0xff]
  %v121 = vld [vmem:[%s0 + $0x2f8] sm:$0xff]
  %v122 = vld [vmem:[%s0 + $0x300] sm:$0xff]
  %v123 = vld [vmem:[%s0 + $0x308] sm:$0xff]
  %v124 = vld [vmem:[%s0 + $0x310] sm:$0xff]
  %v125 = vld [vmem:[%s0 + $0x318] sm:$0xff]
  %v126 = vld [vmem:[%s0 + $0x320] sm:$0xff]
  %v127 = vld [vmem:[%s0 + $0x328] sm:$0xff]
  %v128 = vld [vmem:[%s0 + $0x330] sm:$0xff]
  %v129 = vld [vmem:[%s0 + $0x338] sm:$0xff]
  %v130 = vld [vmem:[%s0 + $0x340] sm:$0xff]
  %v131 = vld [vmem:[%s0 + $0x348] sm:$0xff]
  %v132 = vld [vmem:[%s0 + $0x350] sm:$0xff]
  %v133 = vld [vmem:[%s0 + $0x358] sm:$0xff]
  %v134 = vld [vmem:[%s0 + $0x360] sm:$0xff]
  %v135 = vld [vmem:[%s0 + $0x368] sm:$0xff]
  %v136 = vld [vmem:[%s0 + $0x370] sm:$0xff]
  %v137 = vld [vmem:[%s0 + $0x378] sm:$0xff]
  %v138 = vld [vmem:[%s0 + $0x380] sm:$0xff]
  %v139 = vld [vmem:[%s0 + $0x388] sm:$0xff]
  %v140 = vld [vmem:[%s0 + $0x390] sm:$0xff]
  %v141 = vld [vmem:[%s0 + $0x398] sm:$0xff]
  %v142 = vld [vmem:[%s0 + $0x3a0] sm:$0xff]
  %v143 = vld [vmem:[%s0 + $0x3a8] sm:$0xff]
  %v144 = vld [vmem:[%s0 + $0x3b0] sm:$0xff]
  %v145 = vld [vmem:[%s0 + $0x3b8] sm:$0xff]
  %v146 = vld [vmem:[%s0 + $0x3c0] sm:$0xff]
  %v147 = vld [vmem:[%s0 + $0x3c8] sm:$0xff]
  %v148 = vld [vmem:[%s0 + $0x3d0] sm:$0xff]
  %v149 = vld [vmem:[%s0 + $0x3d8] sm:$0xff]
  %v150 = vld [vmem:[%s0 + $0x3e0] sm:$0xff]
  %v151 = vld [vmem:[%s0 + $0x3e8] sm:$0xff]
  %v152 = vld [vmem:[%s0 + $0x3f0] sm:$0xff]
  %v153 = vld [vmem:[%s0 + $0x3f8] sm:$0xff]
  %v154 = vld [vmem:[%s0 + $0x400] sm:$0xff]
  %v155 = vld [vmem:[%s0 + $0x408] sm:$0xff]
  %v156 = vld [vmem:[%s0 + $0x410] sm:$0xff]
  %v157 = vld [vmem:[%s0 + $0x418] sm:$0xff]
  %v158 = vld [vmem:[%s0 + $0x420] sm:$0xff]
  %v159 = vld [vmem:[%s0 + $0x428] sm:$0xff]
  %v160 = vld [vmem:[%s0 + $0x430] sm:$0xff]
  %v161 = vld [vmem:[%s0 + $0x438] sm:$0xff]
  %v162 = vld [vmem:[%s0 + $0x440] sm:$0xff]
  %v163 = vld [vmem:[%s0 + $0x448] sm:$0xff]
  %v164 = vld [vmem:[%s0 + $0x450] sm:$0xff]
  %v165 = vld [vmem:[%s0 + $0x458] sm:$0xff]
  %v166 = vld [vmem:[%s0 + $0x460] sm:$0xff]
  %v167 = vld [vmem:[%s0 + $0x468] sm:$0xff]
  %v168 = vld [vmem:[%s0 + $0x470] sm:$0xff]
  %v169 = vld [vmem:[%s0 + $0x478] sm:$0xff]
  %v170 = vld [vmem:[%s0 + $0x480] sm:$0xff]
  %v171 = vld [vmem:[%s0 + $0x488] sm:$0xff]
  %v172 = vld [vmem:[%s0 + $0x490] sm:$0xff]
  %v173 = vld [vmem:[%s0 + $0x498] sm:$0xff]
  %v174 = vld [vmem:[%s0 + $0x4a0] sm:$0xff]
  %v175 = vld [vmem:[%s0 + $0x4a8] sm:$0xff]
  %v176 = vld [vmem:[%s0 + $0x4b0] sm:$0xff]
  %v177 = vld [vmem:[%s0 + $0x4b8] sm:$0xff]
  %v178 = vld [vmem:[%s0 + $0x4c0] sm:$0xff]
  %v179 = vld [vmem:[%s0 + $0x4c8] sm:$0xff]
  %v180 = vld [vmem:[%s0 + $0x4d0] sm:$0xff]
  %v181 = vld [vmem:[%s0 + $0x4d8] sm:$0xff]
  %v182 = vld [vmem:[%s0 + $0x4e0] sm:$0xff]
  %v183 = vld [vmem:[%s0 + $0x4e8] sm:$0xff]
  %v184 = vld [vmem:[%s0 + $0x4f0] sm:$0xff]
  %v185 = vld [vmem:[%s0 + $0x4f8] sm:$0xff]
  %v186 = vld [vmem:[%s0 + $0x500] sm:$0xff]
  %v187 = vld [vmem:[%s0 + $0x508] sm:$0xff]
  %v188 = vld [vmem:[%s0 + $0x510] sm:$0xff]
  %v189 = vld [vmem:[%s0 + $0x518] sm:$0xff]
  %v190 = vld [vmem:[%s0 + $0x520] sm:$0xff]
  %v191 = vld [vmem:[%s0 + $0x528] sm:$0xff]
  %v192 = vld [vmem:[%s0 + $0x530] sm:$0xff]
  %v193 = vld [vmem:[%s0 + $0x538] sm:$0xff]
  %v194 = vld [vmem:[%s0 + $0x540] sm:$0xff]
  %v195 = vld [vmem:[%s0 + $0x548] sm:$0xff]
  %v196 = vld [vmem:[%s0 + $0x550] sm:$0xff]
  %v197 = vld [vmem:[%s0 + $0x558] sm:$0xff]
  %v198 = vld [vmem:[%s0 + $0x560] sm:$0xff]
  %v199 = vld [vmem:[%s0 + $0x568] sm:$0xff]
  %v200 = vld [vmem:[%s0 + $0x570] sm:$0xff]
  %v201 = vld [vmem:[%s0 + $0x578] sm:$0xff]
  %v202 = vld [vmem:[%s0 + $0x580] sm:$0xff]
  %v203 = vld [vmem:[%s0 + $0x588] sm:$0xff]
  %v204 = vld [vmem:[%s0 + $0x590] sm:$0xff]
  %v205 = vld [vmem:[%s0 + $0x598] sm:$0xff]
  %v206 = vld [vmem:[%s0 + $0x5a0] sm:$0xff]
  %v207 = vld [vmem:[%s0 + $0x5a8] sm:$0xff]
  %v208 = vld [vmem:[%s0 + $0x5b0] sm:$0xff]
  %v209 = vld [vmem:[%s0 + $0x5b8] sm:$0xff]
  %v210 = vld [vmem:[%s0 + $0x5c0] sm:$0xff]
  %v211 = vld [vmem:[%s0 + $0x5c8] sm:$0xff]
  %v212 = vld [vmem:[%s0 + $0x5d0] sm:$0xff]
  %v213 = vld [vmem:[%s0 + $0x5d8] sm:$0xff]
  %v214 = vld [vmem:[%s0 + $0x5e0] sm:$0xff]
  %v215 = vld [vmem:[%s0 + $0x5e8] sm:$0xff]
  %v216 = vld [vmem:[%s0 + $0x5f0] sm:$0xff]
  %v217 = vld [vmem:[%s0 + $0x5f8] sm:$0xff]
  %v218 = vld [vmem:[%s0 + $0x600] sm:$0xff]
  %v219 = vld [vmem:[%s0 + $0x608] sm:$0xff]
  %v220 = vld [vmem:[%s0 + $0x610] sm:$0xff]
  %v221 = vld [vmem:[%s0 + $0x618] sm:$0xff]
  %v222 = vld [vmem:[%s0 + $0x620] sm:$0xff]
  %v223 = vld [vmem:[%s0 + $0x628] sm:$0xff]
  %v224 = vld [vmem:[%s0 + $0x630] sm:$0xff]
  %v225 = vld [vmem:[%s0 + $0x638] sm:$0xff]
  %v226 = vld [vmem:[%s1] sm:$0xff]
  %v227 = vld [vmem:[%s1 + $0x8] sm:$0xff]
  %v228 = vld [vmem:[%s1 + $0x10] sm:$0xff]
  %v229 = vld [vmem:[%s1 + $0x18] sm:$0xff]
  %v230 = vld [vmem:[%s1 + $0x20] sm:$0xff]
  %v231 = vld [vmem:[%s1 + $0x28] sm:$0xff]
  %v232 = vld [vmem:[%s1 + $0x30] sm:$0xff]
  %v233 = vld [vmem:[%s1 + $0x38] sm:$0xff]
  %v234 = vld [vmem:[%s1 + $0x40] sm:$0xff]
  %v235 = vld [vmem:[%s1 + $0x48] sm:$0xff]
  %v236 = vld [vmem:[%s1 + $0x50] sm:$0xff]
  %v237 = vld [vmem:[%s1 + $0x58] sm:$0xff]
  %v238 = vld [vmem:[%s1 + $0x60] sm:$0xff]
  %v239 = vld [vmem:[%s1 + $0x68] sm:$0xff]
  %v240 = vld [vmem:[%s1 + $0x70] sm:$0xff]
  %v241 = vld [vmem:[%s1 + $0x78] sm:$0xff]
  %v242 = vld [vmem:[%s1 + $0x80] sm:$0xff]
  %v243 = vld [vmem:[%s1 + $0x88] sm:$0xff]
  %v244 = vld [vmem:[%s1 + $0x90] sm:$0xff]
  %v245 = vld [vmem:[%s1 + $0x98] sm:$0xff]
  %v246 = vld [vmem:[%s1 + $0xa0] sm:$0xff]
  %v247 = vld [vmem:[%s1 + $0xa8] sm:$0xff]
  %v248 = vld [vmem:[%s1 + $0xb0] sm:$0xff]
  %v249 = vld [vmem:[%s1 + $0xb8] sm:$0xff]
  %v250 = vld [vmem:[%s1 + $0xc0] sm:$0xff]
  %v251 = vld [vmem:[%s1 + $0xc8] sm:$0xff]
  %v252 = vld [vmem:[%s1 + $0xd0] sm:$0xff]
  %v253 = vld [vmem:[%s1 + $0xd8] sm:$0xff]
  %v254 = vld [vmem:[%s1 + $0xe0] sm:$0xff]
  %v255 = vld [vmem:[%s1 + $0xe8] sm:$0xff]
  %v256 = vld [vmem:[%s1 + $0xf0] sm:$0xff]
  %v257 = vld [vmem:[%s1 + $0xf8] sm:$0xff]
  %v258 = vld [vmem:[%s2] sm:$0x1]
  %v260 = vperm.slane %v258, 0
  %262 = vmatpush.msra.mxu0 %v241
  %263 = vmatpush.msra.mxu0 %v240
  %264 = vmatpush.msra.mxu0 %v239
  %265 = vmatpush.msra.mxu0 %v238
  %266 = vmatpush.msra.mxu0 %v237
  %267 = vmatpush.msra.mxu0 %v236
  %268 = vmatpush.msra.mxu0 %v235
  %269 = vmatpush.msra.mxu0 %v234
  %270 = vmatpush.msra.mxu0 %v233
  %271 = vmatpush.msra.mxu0 %v232
  %272 = vmatpush.msra.mxu0 %v231
  %273 = vmatpush.msra.mxu0 %v230
  %274 = vmatpush.msra.mxu0 %v229
  %275 = vmatpush.msra.mxu0 %v228
  %276 = vmatpush.msra.mxu0 %v227
  %277 = vmatpush.msra.mxu0 %v226
  %278 = vmatmul.f32.gmra.mxu0 %v26
  %v279 = vpop.f32.mrf.mxu0
  %v280 = vadd.f32 %v260, %v279
  %281 = vmatmul.f32.gmra.mxu0 %v28
  %v282 = vpop.f32.mrf.mxu0
  %v283 = vadd.f32 %v260, %v282
  %284 = vmatmul.f32.gmra.mxu0 %v30
  %v285 = vpop.f32.mrf.mxu0
  %v286 = vadd.f32 %v260, %v285
  %287 = vmatmul.f32.gmra.mxu0 %v32
  %v288 = vpop.f32.mrf.mxu0
  %v289 = vadd.f32 %v260, %v288
  %290 = vmatmul.f32.gmra.mxu0 %v34
  %v291 = vpop.f32.mrf.mxu0
  %v292 = vadd.f32 %v260, %v291
  %293 = vmatmul.f32.gmra.mxu0 %v36
  %v294 = vpop.f32.mrf.mxu0
  %v295 = vadd.f32 %v260, %v294
  %296 = vmatmul.f32.gmra.mxu0 %v38
  %v297 = vpop.f32.mrf.mxu0
  %v298 = vadd.f32 %v260, %v297
  %299 = vmatmul.f32.gmra.mxu0 %v40
  %v300 = vpop.f32.mrf.mxu0
  %v301 = vadd.f32 %v260, %v300
  %302 = vmatmul.f32.gmra.mxu0 %v42
  %v303 = vpop.f32.mrf.mxu0
  %v304 = vadd.f32 %v260, %v303
  %305 = vmatmul.f32.gmra.mxu0 %v44
  %v306 = vpop.f32.mrf.mxu0
  %v307 = vadd.f32 %v260, %v306
  %308 = vmatmul.f32.gmra.mxu0 %v46
  %v309 = vpop.f32.mrf.mxu0
  %v310 = vadd.f32 %v260, %v309
  %311 = vmatmul.f32.gmra.mxu0 %v48
  %v312 = vpop.f32.mrf.mxu0
  %v313 = vadd.f32 %v260, %v312
  %314 = vmatmul.f32.gmra.mxu0 %v50
  %v315 = vpop.f32.mrf.mxu0
  %v316 = vadd.f32 %v260, %v315
  %317 = vmatmul.f32.gmra.mxu0 %v52
  %v318 = vpop.f32.mrf.mxu0
  %v319 = vadd.f32 %v260, %v318
  %320 = vmatmul.f32.gmra.mxu0 %v54
  %v321 = vpop.f32.mrf.mxu0
  %v322 = vadd.f32 %v260, %v321
  %323 = vmatmul.f32.gmra.mxu0 %v56
  %v324 = vpop.f32.mrf.mxu0
  %v325 = vadd.f32 %v260, %v324
  %326 = vmatmul.f32.gmra.mxu0 %v58
  %v327 = vpop.f32.mrf.mxu0
  %v328 = vadd.f32 %v260, %v327
  %329 = vmatmul.f32.gmra.mxu0 %v60
  %v330 = vpop.f32.mrf.mxu0
  %v331 = vadd.f32 %v260, %v330
  %332 = vmatmul.f32.gmra.mxu0 %v62
  %v333 = vpop.f32.mrf.mxu0
  %v334 = vadd.f32 %v260, %v333
  %335 = vmatmul.f32.gmra.mxu0 %v64
  %v336 = vpop.f32.mrf.mxu0
  %v337 = vadd.f32 %v260, %v336
  %338 = vmatmul.f32.gmra.mxu0 %v66
  %v339 = vpop.f32.mrf.mxu0
  %v340 = vadd.f32 %v260, %v339
  %341 = vmatmul.f32.gmra.mxu0 %v68
  %v342 = vpop.f32.mrf.mxu0
  %v343 = vadd.f32 %v260, %v342
  %344 = vmatmul.f32.gmra.mxu0 %v70
  %v345 = vpop.f32.mrf.mxu0
  %v346 = vadd.f32 %v260, %v345
  %347 = vmatmul.f32.gmra.mxu0 %v72
  %v348 = vpop.f32.mrf.mxu0
  %v349 = vadd.f32 %v260, %v348
  %350 = vmatmul.f32.gmra.mxu0 %v74
  %v351 = vpop.f32.mrf.mxu0
  %v352 = vadd.f32 %v260, %v351
  %353 = vmatmul.f32.gmra.mxu0 %v76
  %v354 = vpop.f32.mrf.mxu0
  %v355 = vadd.f32 %v260, %v354
  %356 = vmatmul.f32.gmra.mxu0 %v78
  %v357 = vpop.f32.mrf.mxu0
  %v358 = vadd.f32 %v260, %v357
  %359 = vmatmul.f32.gmra.mxu0 %v80
  %v360 = vpop.f32.mrf.mxu0
  %v361 = vadd.f32 %v260, %v360
  %362 = vmatmul.f32.gmra.mxu0 %v82
  %v363 = vpop.f32.mrf.mxu0
  %v364 = vadd.f32 %v260, %v363
  %365 = vmatmul.f32.gmra.mxu0 %v84
  %v366 = vpop.f32.mrf.mxu0
  %v367 = vadd.f32 %v260, %v366
  %368 = vmatmul.f32.gmra.mxu0 %v86
  %v369 = vpop.f32.mrf.mxu0
  %v370 = vadd.f32 %v260, %v369
  %371 = vmatmul.f32.gmra.mxu0 %v88
  %v372 = vpop.f32.mrf.mxu0
  %v373 = vadd.f32 %v260, %v372
  %374 = vmatmul.f32.gmra.mxu0 %v90
  %v375 = vpop.f32.mrf.mxu0
  %v376 = vadd.f32 %v260, %v375
  %377 = vmatmul.f32.gmra.mxu0 %v92
  %v378 = vpop.f32.mrf.mxu0
  %v379 = vadd.f32 %v260, %v378
  %380 = vmatmul.f32.gmra.mxu0 %v94
  %v381 = vpop.f32.mrf.mxu0
  %v382 = vadd.f32 %v260, %v381
  %383 = vmatmul.f32.gmra.mxu0 %v96
  %v384 = vpop.f32.mrf.mxu0
  %v385 = vadd.f32 %v260, %v384
  %386 = vmatmul.f32.gmra.mxu0 %v98
  %v387 = vpop.f32.mrf.mxu0
  %v388 = vadd.f32 %v260, %v387
  %389 = vmatmul.f32.gmra.mxu0 %v100
  %v390 = vpop.f32.mrf.mxu0
  %v391 = vadd.f32 %v260, %v390
  %392 = vmatmul.f32.gmra.mxu0 %v102
  %v393 = vpop.f32.mrf.mxu0
  %v394 = vadd.f32 %v260, %v393
  %395 = vmatmul.f32.gmra.mxu0 %v104
  %v396 = vpop.f32.mrf.mxu0
  %v397 = vadd.f32 %v260, %v396
  %398 = vmatmul.f32.gmra.mxu0 %v106
  %v399 = vpop.f32.mrf.mxu0
  %v400 = vadd.f32 %v260, %v399
  %401 = vmatmul.f32.gmra.mxu0 %v108
  %v402 = vpop.f32.mrf.mxu0
  %v403 = vadd.f32 %v260, %v402
  %404 = vmatmul.f32.gmra.mxu0 %v110
  %v405 = vpop.f32.mrf.mxu0
  %v406 = vadd.f32 %v260, %v405
  %407 = vmatmul.f32.gmra.mxu0 %v112
  %v408 = vpop.f32.mrf.mxu0
  %v409 = vadd.f32 %v260, %v408
  %410 = vmatmul.f32.gmra.mxu0 %v114
  %v411 = vpop.f32.mrf.mxu0
  %v412 = vadd.f32 %v260, %v411
  %413 = vmatmul.f32.gmra.mxu0 %v116
  %v414 = vpop.f32.mrf.mxu0
  %v415 = vadd.f32 %v260, %v414
  %416 = vmatmul.f32.gmra.mxu0 %v118
  %v417 = vpop.f32.mrf.mxu0
  %v418 = vadd.f32 %v260, %v417
  %419 = vmatmul.f32.gmra.mxu0 %v120
  %v420 = vpop.f32.mrf.mxu0
  %v421 = vadd.f32 %v260, %v420
  %422 = vmatmul.f32.gmra.mxu0 %v122
  %v423 = vpop.f32.mrf.mxu0
  %v424 = vadd.f32 %v260, %v423
  %425 = vmatmul.f32.gmra.mxu0 %v124
  %v426 = vpop.f32.mrf.mxu0
  %v427 = vadd.f32 %v260, %v426
  %428 = vmatmul.f32.gmra.mxu0 %v126
  %v429 = vpop.f32.mrf.mxu0
  %v430 = vadd.f32 %v260, %v429
  %431 = vmatmul.f32.gmra.mxu0 %v128
  %v432 = vpop.f32.mrf.mxu0
  %v433 = vadd.f32 %v260, %v432
  %434 = vmatmul.f32.gmra.mxu0 %v130
  %v435 = vpop.f32.mrf.mxu0
  %v436 = vadd.f32 %v260, %v435
  %437 = vmatmul.f32.gmra.mxu0 %v132
  %v438 = vpop.f32.mrf.mxu0
  %v439 = vadd.f32 %v260, %v438
  %440 = vmatmul.f32.gmra.mxu0 %v134
  %v441 = vpop.f32.mrf.mxu0
  %v442 = vadd.f32 %v260, %v441
  %443 = vmatmul.f32.gmra.mxu0 %v136
  %v444 = vpop.f32.mrf.mxu0
  %v445 = vadd.f32 %v260, %v444
  %446 = vmatmul.f32.gmra.mxu0 %v138
  %v447 = vpop.f32.mrf.mxu0
  %v448 = vadd.f32 %v260, %v447
  %449 = vmatmul.f32.gmra.mxu0 %v140
  %v450 = vpop.f32.mrf.mxu0
  %v451 = vadd.f32 %v260, %v450
  %452 = vmatmul.f32.gmra.mxu0 %v142
  %v453 = vpop.f32.mrf.mxu0
  %v454 = vadd.f32 %v260, %v453
  %455 = vmatmul.f32.gmra.mxu0 %v144
  %v456 = vpop.f32.mrf.mxu0
  %v457 = vadd.f32 %v260, %v456
  %458 = vmatmul.f32.gmra.mxu0 %v146
  %v459 = vpop.f32.mrf.mxu0
  %v460 = vadd.f32 %v260, %v459
  %461 = vmatmul.f32.gmra.mxu0 %v148
  %v462 = vpop.f32.mrf.mxu0
  %v463 = vadd.f32 %v260, %v462
  %464 = vmatmul.f32.gmra.mxu0 %v150
  %v465 = vpop.f32.mrf.mxu0
  %v466 = vadd.f32 %v260, %v465
  %467 = vmatmul.f32.gmra.mxu0 %v152
  %v468 = vpop.f32.mrf.mxu0
  %v469 = vadd.f32 %v260, %v468
  %470 = vmatmul.f32.gmra.mxu0 %v154
  %v471 = vpop.f32.mrf.mxu0
  %v472 = vadd.f32 %v260, %v471
  %473 = vmatmul.f32.gmra.mxu0 %v156
  %v474 = vpop.f32.mrf.mxu0
  %v475 = vadd.f32 %v260, %v474
  %476 = vmatmul.f32.gmra.mxu0 %v158
  %v477 = vpop.f32.mrf.mxu0
  %v478 = vadd.f32 %v260, %v477
  %479 = vmatmul.f32.gmra.mxu0 %v160
  %v480 = vpop.f32.mrf.mxu0
  %v481 = vadd.f32 %v260, %v480
  %482 = vmatmul.f32.gmra.mxu0 %v162
  %v483 = vpop.f32.mrf.mxu0
  %v484 = vadd.f32 %v260, %v483
  %485 = vmatmul.f32.gmra.mxu0 %v164
  %v486 = vpop.f32.mrf.mxu0
  %v487 = vadd.f32 %v260, %v486
  %488 = vmatmul.f32.gmra.mxu0 %v166
  %v489 = vpop.f32.mrf.mxu0
  %v490 = vadd.f32 %v260, %v489
  %491 = vmatmul.f32.gmra.mxu0 %v168
  %v492 = vpop.f32.mrf.mxu0
  %v493 = vadd.f32 %v260, %v492
  %494 = vmatmul.f32.gmra.mxu0 %v170
  %v495 = vpop.f32.mrf.mxu0
  %v496 = vadd.f32 %v260, %v495
  %497 = vmatmul.f32.gmra.mxu0 %v172
  %v498 = vpop.f32.mrf.mxu0
  %v499 = vadd.f32 %v260, %v498
  %500 = vmatmul.f32.gmra.mxu0 %v174
  %v501 = vpop.f32.mrf.mxu0
  %v502 = vadd.f32 %v260, %v501
  %503 = vmatmul.f32.gmra.mxu0 %v176
  %v504 = vpop.f32.mrf.mxu0
  %v505 = vadd.f32 %v260, %v504
  %506 = vmatmul.f32.gmra.mxu0 %v178
  %v507 = vpop.f32.mrf.mxu0
  %v508 = vadd.f32 %v260, %v507
  %509 = vmatmul.f32.gmra.mxu0 %v180
  %v510 = vpop.f32.mrf.mxu0
  %v511 = vadd.f32 %v260, %v510
  %512 = vmatmul.f32.gmra.mxu0 %v182
  %v513 = vpop.f32.mrf.mxu0
  %v514 = vadd.f32 %v260, %v513
  %515 = vmatmul.f32.gmra.mxu0 %v184
  %v516 = vpop.f32.mrf.mxu0
  %v517 = vadd.f32 %v260, %v516
  %518 = vmatmul.f32.gmra.mxu0 %v186
  %v519 = vpop.f32.mrf.mxu0
  %v520 = vadd.f32 %v260, %v519
  %521 = vmatmul.f32.gmra.mxu0 %v188
  %v522 = vpop.f32.mrf.mxu0
  %v523 = vadd.f32 %v260, %v522
  %524 = vmatmul.f32.gmra.mxu0 %v190
  %v525 = vpop.f32.mrf.mxu0
  %v526 = vadd.f32 %v260, %v525
  %527 = vmatmul.f32.gmra.mxu0 %v192
  %v528 = vpop.f32.mrf.mxu0
  %v529 = vadd.f32 %v260, %v528
  %530 = vmatmul.f32.gmra.mxu0 %v194
  %v531 = vpop.f32.mrf.mxu0
  %v532 = vadd.f32 %v260, %v531
  %533 = vmatmul.f32.gmra.mxu0 %v196
  %v534 = vpop.f32.mrf.mxu0
  %v535 = vadd.f32 %v260, %v534
  %536 = vmatmul.f32.gmra.mxu0 %v198
  %v537 = vpop.f32.mrf.mxu0
  %v538 = vadd.f32 %v260, %v537
  %539 = vmatmul.f32.gmra.mxu0 %v200
  %v540 = vpop.f32.mrf.mxu0
  %v541 = vadd.f32 %v260, %v540
  %542 = vmatmul.f32.gmra.mxu0 %v202
  %v543 = vpop.f32.mrf.mxu0
  %v544 = vadd.f32 %v260, %v543
  %545 = vmatmul.f32.gmra.mxu0 %v204
  %v546 = vpop.f32.mrf.mxu0
  %v547 = vadd.f32 %v260, %v546
  %548 = vmatmul.f32.gmra.mxu0 %v206
  %v549 = vpop.f32.mrf.mxu0
  %v550 = vadd.f32 %v260, %v549
  %551 = vmatmul.f32.gmra.mxu0 %v208
  %v552 = vpop.f32.mrf.mxu0
  %v553 = vadd.f32 %v260, %v552
  %554 = vmatmul.f32.gmra.mxu0 %v210
  %v555 = vpop.f32.mrf.mxu0
  %v556 = vadd.f32 %v260, %v555
  %557 = vmatmul.f32.gmra.mxu0 %v212
  %v558 = vpop.f32.mrf.mxu0
  %v559 = vadd.f32 %v260, %v558
  %560 = vmatmul.f32.gmra.mxu0 %v214
  %v561 = vpop.f32.mrf.mxu0
  %v562 = vadd.f32 %v260, %v561
  %563 = vmatmul.f32.gmra.mxu0 %v216
  %v564 = vpop.f32.mrf.mxu0
  %v565 = vadd.f32 %v260, %v564
  %566 = vmatmul.f32.gmra.mxu0 %v218
  %v567 = vpop.f32.mrf.mxu0
  %v568 = vadd.f32 %v260, %v567
  %569 = vmatmul.f32.gmra.mxu0 %v220
  %v570 = vpop.f32.mrf.mxu0
  %v571 = vadd.f32 %v260, %v570
  %572 = vmatmul.f32.gmra.mxu0 %v222
  %v573 = vpop.f32.mrf.mxu0
  %v574 = vadd.f32 %v260, %v573
  %575 = vmatmul.f32.gmra.mxu0 %v224
  %v576 = vpop.f32.mrf.mxu0
  %v577 = vadd.f32 %v260, %v576
  %578 = vdwg.mxu0
  %579 = vmatpush.msra.mxu0 %v257
  %580 = vmatpush.msra.mxu0 %v256
  %581 = vmatpush.msra.mxu0 %v255
  %582 = vmatpush.msra.mxu0 %v254
  %583 = vmatpush.msra.mxu0 %v253
  %584 = vmatpush.msra.mxu0 %v252
  %585 = vmatpush.msra.mxu0 %v251
  %586 = vmatpush.msra.mxu0 %v250
  %587 = vmatpush.msra.mxu0 %v249
  %588 = vmatpush.msra.mxu0 %v248
  %589 = vmatpush.msra.mxu0 %v247
  %590 = vmatpush.msra.mxu0 %v246
  %591 = vmatpush.msra.mxu0 %v245
  %592 = vmatpush.msra.mxu0 %v244
  %593 = vmatpush.msra.mxu0 %v243
  %594 = vmatpush.msra.mxu0 %v242
  %595 = vmatmul.f32.gmra.mxu0 %v27
  %v596 = vpop.f32.mrf.mxu0
  %v597 = vadd.f32 %v280, %v596
  %598 = vmatmul.f32.gmra.mxu0 %v29
  %v599 = vpop.f32.mrf.mxu0
  %v600 = vadd.f32 %v283, %v599
  %601 = vmatmul.f32.gmra.mxu0 %v31
  %v602 = vpop.f32.mrf.mxu0
  %v603 = vadd.f32 %v286, %v602
  %604 = vmatmul.f32.gmra.mxu0 %v33
  %v605 = vpop.f32.mrf.mxu0
  %v606 = vadd.f32 %v289, %v605
  %607 = vmatmul.f32.gmra.mxu0 %v35
  %v608 = vpop.f32.mrf.mxu0
  %v609 = vadd.f32 %v292, %v608
  %610 = vmatmul.f32.gmra.mxu0 %v37
  %v611 = vpop.f32.mrf.mxu0
  %v612 = vadd.f32 %v295, %v611
  %613 = vmatmul.f32.gmra.mxu0 %v39
  %v614 = vpop.f32.mrf.mxu0
  %v615 = vadd.f32 %v298, %v614
  %616 = vmatmul.f32.gmra.mxu0 %v41
  %v617 = vpop.f32.mrf.mxu0
  %v618 = vadd.f32 %v301, %v617
  %619 = vmatmul.f32.gmra.mxu0 %v43
  %v620 = vpop.f32.mrf.mxu0
  %v621 = vadd.f32 %v304, %v620
  %622 = vmatmul.f32.gmra.mxu0 %v45
  %v623 = vpop.f32.mrf.mxu0
  %v624 = vadd.f32 %v307, %v623
  %625 = vmatmul.f32.gmra.mxu0 %v47
  %v626 = vpop.f32.mrf.mxu0
  %v627 = vadd.f32 %v310, %v626
  %628 = vmatmul.f32.gmra.mxu0 %v49
  %v629 = vpop.f32.mrf.mxu0
  %v630 = vadd.f32 %v313, %v629
  %631 = vmatmul.f32.gmra.mxu0 %v51
  %v632 = vpop.f32.mrf.mxu0
  %v633 = vadd.f32 %v316, %v632
  %634 = vmatmul.f32.gmra.mxu0 %v53
  %v635 = vpop.f32.mrf.mxu0
  %v636 = vadd.f32 %v319, %v635
  %637 = vmatmul.f32.gmra.mxu0 %v55
  %v638 = vpop.f32.mrf.mxu0
  %v639 = vadd.f32 %v322, %v638
  %640 = vmatmul.f32.gmra.mxu0 %v57
  %v641 = vpop.f32.mrf.mxu0
  %v642 = vadd.f32 %v325, %v641
  %643 = vmatmul.f32.gmra.mxu0 %v59
  %v644 = vpop.f32.mrf.mxu0
  %v645 = vadd.f32 %v328, %v644
  %646 = vmatmul.f32.gmra.mxu0 %v61
  %v647 = vpop.f32.mrf.mxu0
  %v648 = vadd.f32 %v331, %v647
  %649 = vmatmul.f32.gmra.mxu0 %v63
  %v650 = vpop.f32.mrf.mxu0
  %v651 = vadd.f32 %v334, %v650
  %652 = vmatmul.f32.gmra.mxu0 %v65
  %v653 = vpop.f32.mrf.mxu0
  %v654 = vadd.f32 %v337, %v653
  %655 = vmatmul.f32.gmra.mxu0 %v67
  %v656 = vpop.f32.mrf.mxu0
  %v657 = vadd.f32 %v340, %v656
  %658 = vmatmul.f32.gmra.mxu0 %v69
  %v659 = vpop.f32.mrf.mxu0
  %v660 = vadd.f32 %v343, %v659
  %661 = vmatmul.f32.gmra.mxu0 %v71
  %v662 = vpop.f32.mrf.mxu0
  %v663 = vadd.f32 %v346, %v662
  %664 = vmatmul.f32.gmra.mxu0 %v73
  %v665 = vpop.f32.mrf.mxu0
  %v666 = vadd.f32 %v349, %v665
  %667 = vmatmul.f32.gmra.mxu0 %v75
  %v668 = vpop.f32.mrf.mxu0
  %v669 = vadd.f32 %v352, %v668
  %670 = vmatmul.f32.gmra.mxu0 %v77
  %v671 = vpop.f32.mrf.mxu0
  %v672 = vadd.f32 %v355, %v671
  %673 = vmatmul.f32.gmra.mxu0 %v79
  %v674 = vpop.f32.mrf.mxu0
  %v675 = vadd.f32 %v358, %v674
  %676 = vmatmul.f32.gmra.mxu0 %v81
  %v677 = vpop.f32.mrf.mxu0
  %v678 = vadd.f32 %v361, %v677
  %679 = vmatmul.f32.gmra.mxu0 %v83
  %v680 = vpop.f32.mrf.mxu0
  %v681 = vadd.f32 %v364, %v680
  %682 = vmatmul.f32.gmra.mxu0 %v85
  %v683 = vpop.f32.mrf.mxu0
  %v684 = vadd.f32 %v367, %v683
  %685 = vmatmul.f32.gmra.mxu0 %v87
  %v686 = vpop.f32.mrf.mxu0
  %v687 = vadd.f32 %v370, %v686
  %688 = vmatmul.f32.gmra.mxu0 %v89
  %v689 = vpop.f32.mrf.mxu0
  %v690 = vadd.f32 %v373, %v689
  %691 = vmatmul.f32.gmra.mxu0 %v91
  %v692 = vpop.f32.mrf.mxu0
  %v693 = vadd.f32 %v376, %v692
  %694 = vmatmul.f32.gmra.mxu0 %v93
  %v695 = vpop.f32.mrf.mxu0
  %v696 = vadd.f32 %v379, %v695
  %697 = vmatmul.f32.gmra.mxu0 %v95
  %v698 = vpop.f32.mrf.mxu0
  %v699 = vadd.f32 %v382, %v698
  %700 = vmatmul.f32.gmra.mxu0 %v97
  %v701 = vpop.f32.mrf.mxu0
  %v702 = vadd.f32 %v385, %v701
  %703 = vmatmul.f32.gmra.mxu0 %v99
  %v704 = vpop.f32.mrf.mxu0
  %v705 = vadd.f32 %v388, %v704
  %706 = vmatmul.f32.gmra.mxu0 %v101
  %v707 = vpop.f32.mrf.mxu0
  %v708 = vadd.f32 %v391, %v707
  %709 = vmatmul.f32.gmra.mxu0 %v103
  %v710 = vpop.f32.mrf.mxu0
  %v711 = vadd.f32 %v394, %v710
  %712 = vmatmul.f32.gmra.mxu0 %v105
  %v713 = vpop.f32.mrf.mxu0
  %v714 = vadd.f32 %v397, %v713
  %715 = vmatmul.f32.gmra.mxu0 %v107
  %v716 = vpop.f32.mrf.mxu0
  %v717 = vadd.f32 %v400, %v716
  %718 = vmatmul.f32.gmra.mxu0 %v109
  %v719 = vpop.f32.mrf.mxu0
  %v720 = vadd.f32 %v403, %v719
  %721 = vmatmul.f32.gmra.mxu0 %v111
  %v722 = vpop.f32.mrf.mxu0
  %v723 = vadd.f32 %v406, %v722
  %724 = vmatmul.f32.gmra.mxu0 %v113
  %v725 = vpop.f32.mrf.mxu0
  %v726 = vadd.f32 %v409, %v725
  %727 = vmatmul.f32.gmra.mxu0 %v115
  %v728 = vpop.f32.mrf.mxu0
  %v729 = vadd.f32 %v412, %v728
  %730 = vmatmul.f32.gmra.mxu0 %v117
  %v731 = vpop.f32.mrf.mxu0
  %v732 = vadd.f32 %v415, %v731
  %733 = vmatmul.f32.gmra.mxu0 %v119
  %v734 = vpop.f32.mrf.mxu0
  %v735 = vadd.f32 %v418, %v734
  %736 = vmatmul.f32.gmra.mxu0 %v121
  %v737 = vpop.f32.mrf.mxu0
  %v738 = vadd.f32 %v421, %v737
  %739 = vmatmul.f32.gmra.mxu0 %v123
  %v740 = vpop.f32.mrf.mxu0
  %v741 = vadd.f32 %v424, %v740
  %742 = vmatmul.f32.gmra.mxu0 %v125
  %v743 = vpop.f32.mrf.mxu0
  %v744 = vadd.f32 %v427, %v743
  %745 = vmatmul.f32.gmra.mxu0 %v127
  %v746 = vpop.f32.mrf.mxu0
  %v747 = vadd.f32 %v430, %v746
  %748 = vmatmul.f32.gmra.mxu0 %v129
  %v749 = vpop.f32.mrf.mxu0
  %v750 = vadd.f32 %v433, %v749
  %751 = vmatmul.f32.gmra.mxu0 %v131
  %v752 = vpop.f32.mrf.mxu0
  %v753 = vadd.f32 %v436, %v752
  %754 = vmatmul.f32.gmra.mxu0 %v133
  %v755 = vpop.f32.mrf.mxu0
  %v756 = vadd.f32 %v439, %v755
  %757 = vmatmul.f32.gmra.mxu0 %v135
  %v758 = vpop.f32.mrf.mxu0
  %v759 = vadd.f32 %v442, %v758
  %760 = vmatmul.f32.gmra.mxu0 %v137
  %v761 = vpop.f32.mrf.mxu0
  %v762 = vadd.f32 %v445, %v761
  %763 = vmatmul.f32.gmra.mxu0 %v139
  %v764 = vpop.f32.mrf.mxu0
  %v765 = vadd.f32 %v448, %v764
  %766 = vmatmul.f32.gmra.mxu0 %v141
  %v767 = vpop.f32.mrf.mxu0
  %v768 = vadd.f32 %v451, %v767
  %769 = vmatmul.f32.gmra.mxu0 %v143
  %v770 = vpop.f32.mrf.mxu0
  %v771 = vadd.f32 %v454, %v770
  %772 = vmatmul.f32.gmra.mxu0 %v145
  %v773 = vpop.f32.mrf.mxu0
  %v774 = vadd.f32 %v457, %v773
  %775 = vmatmul.f32.gmra.mxu0 %v147
  %v776 = vpop.f32.mrf.mxu0
  %v777 = vadd.f32 %v460, %v776
  %778 = vmatmul.f32.gmra.mxu0 %v149
  %v779 = vpop.f32.mrf.mxu0
  %v780 = vadd.f32 %v463, %v779
  %781 = vmatmul.f32.gmra.mxu0 %v151
  %v782 = vpop.f32.mrf.mxu0
  %v783 = vadd.f32 %v466, %v782
  %784 = vmatmul.f32.gmra.mxu0 %v153
  %v785 = vpop.f32.mrf.mxu0
  %v786 = vadd.f32 %v469, %v785
  %787 = vmatmul.f32.gmra.mxu0 %v155
  %v788 = vpop.f32.mrf.mxu0
  %v789 = vadd.f32 %v472, %v788
  %790 = vmatmul.f32.gmra.mxu0 %v157
  %v791 = vpop.f32.mrf.mxu0
  %v792 = vadd.f32 %v475, %v791
  %793 = vmatmul.f32.gmra.mxu0 %v159
  %v794 = vpop.f32.mrf.mxu0
  %v795 = vadd.f32 %v478, %v794
  %796 = vmatmul.f32.gmra.mxu0 %v161
  %v797 = vpop.f32.mrf.mxu0
  %v798 = vadd.f32 %v481, %v797
  %799 = vmatmul.f32.gmra.mxu0 %v163
  %v800 = vpop.f32.mrf.mxu0
  %v801 = vadd.f32 %v484, %v800
  %802 = vmatmul.f32.gmra.mxu0 %v165
  %v803 = vpop.f32.mrf.mxu0
  %v804 = vadd.f32 %v487, %v803
  %805 = vmatmul.f32.gmra.mxu0 %v167
  %v806 = vpop.f32.mrf.mxu0
  %v807 = vadd.f32 %v490, %v806
  %808 = vmatmul.f32.gmra.mxu0 %v169
  %v809 = vpop.f32.mrf.mxu0
  %v810 = vadd.f32 %v493, %v809
  %811 = vmatmul.f32.gmra.mxu0 %v171
  %v812 = vpop.f32.mrf.mxu0
  %v813 = vadd.f32 %v496, %v812
  %814 = vmatmul.f32.gmra.mxu0 %v173
  %v815 = vpop.f32.mrf.mxu0
  %v816 = vadd.f32 %v499, %v815
  %817 = vmatmul.f32.gmra.mxu0 %v175
  %v818 = vpop.f32.mrf.mxu0
  %v819 = vadd.f32 %v502, %v818
  %820 = vmatmul.f32.gmra.mxu0 %v177
  %v821 = vpop.f32.mrf.mxu0
  %v822 = vadd.f32 %v505, %v821
  %823 = vmatmul.f32.gmra.mxu0 %v179
  %v824 = vpop.f32.mrf.mxu0
  %v825 = vadd.f32 %v508, %v824
  %826 = vmatmul.f32.gmra.mxu0 %v181
  %v827 = vpop.f32.mrf.mxu0
  %v828 = vadd.f32 %v511, %v827
  %829 = vmatmul.f32.gmra.mxu0 %v183
  %v830 = vpop.f32.mrf.mxu0
  %v831 = vadd.f32 %v514, %v830
  %832 = vmatmul.f32.gmra.mxu0 %v185
  %v833 = vpop.f32.mrf.mxu0
  %v834 = vadd.f32 %v517, %v833
  %835 = vmatmul.f32.gmra.mxu0 %v187
  %v836 = vpop.f32.mrf.mxu0
  %v837 = vadd.f32 %v520, %v836
  %838 = vmatmul.f32.gmra.mxu0 %v189
  %v839 = vpop.f32.mrf.mxu0
  %v840 = vadd.f32 %v523, %v839
  %841 = vmatmul.f32.gmra.mxu0 %v191
  %v842 = vpop.f32.mrf.mxu0
  %v843 = vadd.f32 %v526, %v842
  %844 = vmatmul.f32.gmra.mxu0 %v193
  %v845 = vpop.f32.mrf.mxu0
  %v846 = vadd.f32 %v529, %v845
  %847 = vmatmul.f32.gmra.mxu0 %v195
  %v848 = vpop.f32.mrf.mxu0
  %v849 = vadd.f32 %v532, %v848
  %850 = vmatmul.f32.gmra.mxu0 %v197
  %v851 = vpop.f32.mrf.mxu0
  %v852 = vadd.f32 %v535, %v851
  %853 = vmatmul.f32.gmra.mxu0 %v199
  %v854 = vpop.f32.mrf.mxu0
  %v855 = vadd.f32 %v538, %v854
  %856 = vmatmul.f32.gmra.mxu0 %v201
  %v857 = vpop.f32.mrf.mxu0
  %v858 = vadd.f32 %v541, %v857
  %859 = vmatmul.f32.gmra.mxu0 %v203
  %v860 = vpop.f32.mrf.mxu0
  %v861 = vadd.f32 %v544, %v860
  %862 = vmatmul.f32.gmra.mxu0 %v205
  %v863 = vpop.f32.mrf.mxu0
  %v864 = vadd.f32 %v547, %v863
  %865 = vmatmul.f32.gmra.mxu0 %v207
  %v866 = vpop.f32.mrf.mxu0
  %v867 = vadd.f32 %v550, %v866
  %868 = vmatmul.f32.gmra.mxu0 %v209
  %v869 = vpop.f32.mrf.mxu0
  %v870 = vadd.f32 %v553, %v869
  %871 = vmatmul.f32.gmra.mxu0 %v211
  %v872 = vpop.f32.mrf.mxu0
  %v873 = vadd.f32 %v556, %v872
  %874 = vmatmul.f32.gmra.mxu0 %v213
  %v875 = vpop.f32.mrf.mxu0
  %v876 = vadd.f32 %v559, %v875
  %877 = vmatmul.f32.gmra.mxu0 %v215
  %v878 = vpop.f32.mrf.mxu0
  %v879 = vadd.f32 %v562, %v878
  %880 = vmatmul.f32.gmra.mxu0 %v217
  %v881 = vpop.f32.mrf.mxu0
  %v882 = vadd.f32 %v565, %v881
  %883 = vmatmul.f32.gmra.mxu0 %v219
  %v884 = vpop.f32.mrf.mxu0
  %v885 = vadd.f32 %v568, %v884
  %886 = vmatmul.f32.gmra.mxu0 %v221
  %v887 = vpop.f32.mrf.mxu0
  %v888 = vadd.f32 %v571, %v887
  %889 = vmatmul.f32.gmra.mxu0 %v223
  %v890 = vpop.f32.mrf.mxu0
  %v891 = vadd.f32 %v574, %v890
  %892 = vmatmul.f32.gmra.mxu0 %v225
  %v893 = vpop.f32.mrf.mxu0
  %v894 = vadd.f32 %v577, %v893
  %895 = vdwg.mxu0
  %v896 = vmax.f32 %v597, 0.0
  %v897 = vmax.f32 %v600, 0.0
  %v898 = vmax.f32 %v603, 0.0
  %v899 = vmax.f32 %v606, 0.0
  %v900 = vmax.f32 %v609, 0.0
  %v901 = vmax.f32 %v612, 0.0
  %v902 = vmax.f32 %v615, 0.0
  %v903 = vmax.f32 %v618, 0.0
  %v904 = vmax.f32 %v621, 0.0
  %v905 = vmax.f32 %v624, 0.0
  %v906 = vmax.f32 %v627, 0.0
  %v907 = vmax.f32 %v630, 0.0
  %v908 = vmax.f32 %v633, 0.0
  %v909 = vmax.f32 %v636, 0.0
  %v910 = vmax.f32 %v639, 0.0
  %v911 = vmax.f32 %v642, 0.0
  %v912 = vmax.f32 %v645, 0.0
  %v913 = vmax.f32 %v648, 0.0
  %v914 = vmax.f32 %v651, 0.0
  %v915 = vmax.f32 %v654, 0.0
  %v916 = vmax.f32 %v657, 0.0
  %v917 = vmax.f32 %v660, 0.0
  %v918 = vmax.f32 %v663, 0.0
  %v919 = vmax.f32 %v666, 0.0
  %v920 = vmax.f32 %v669, 0.0
  %v921 = vmax.f32 %v672, 0.0
  %v922 = vmax.f32 %v675, 0.0
  %v923 = vmax.f32 %v678, 0.0
  %v924 = vmax.f32 %v681, 0.0
  %v925 = vmax.f32 %v684, 0.0
  %v926 = vmax.f32 %v687, 0.0
  %v927 = vmax.f32 %v690, 0.0
  %v928 = vmax.f32 %v693, 0.0
  %v929 = vmax.f32 %v696, 0.0
  %v930 = vmax.f32 %v699, 0.0
  %v931 = vmax.f32 %v702, 0.0
  %v932 = vmax.f32 %v705, 0.0
  %v933 = vmax.f32 %v708, 0.0
  %v934 = vmax.f32 %v711, 0.0
  %v935 = vmax.f32 %v714, 0.0
  %v936 = vmax.f32 %v717, 0.0
  %v937 = vmax.f32 %v720, 0.0
  %v938 = vmax.f32 %v723, 0.0
  %v939 = vmax.f32 %v726, 0.0
  %v940 = vmax.f32 %v729, 0.0
  %v941 = vmax.f32 %v732, 0.0
  %v942 = vmax.f32 %v735, 0.0
  %v943 = vmax.f32 %v738, 0.0
  %v944 = vmax.f32 %v741, 0.0
  %v945 = vmax.f32 %v744, 0.0
  %v946 = vmax.f32 %v747, 0.0
  %v947 = vmax.f32 %v750, 0.0
  %v948 = vmax.f32 %v753, 0.0
  %v949 = vmax.f32 %v756, 0.0
  %v950 = vmax.f32 %v759, 0.0
  %v951 = vmax.f32 %v762, 0.0
  %v952 = vmax.f32 %v765, 0.0
  %v953 = vmax.f32 %v768, 0.0
  %v954 = vmax.f32 %v771, 0.0
  %v955 = vmax.f32 %v774, 0.0
  %v956 = vmax.f32 %v777, 0.0
  %v957 = vmax.f32 %v780, 0.0
  %v958 = vmax.f32 %v783, 0.0
  %v959 = vmax.f32 %v786, 0.0
  %v960 = vmax.f32 %v789, 0.0
  %v961 = vmax.f32 %v792, 0.0
  %v962 = vmax.f32 %v795, 0.0
  %v963 = vmax.f32 %v798, 0.0
  %v964 = vmax.f32 %v801, 0.0
  %v965 = vmax.f32 %v804, 0.0
  %v966 = vmax.f32 %v807, 0.0
  %v967 = vmax.f32 %v810, 0.0
  %v968 = vmax.f32 %v813, 0.0
  %v969 = vmax.f32 %v816, 0.0
  %v970 = vmax.f32 %v819, 0.0
  %v971 = vmax.f32 %v822, 0.0
  %v972 = vmax.f32 %v825, 0.0
  %v973 = vmax.f32 %v828, 0.0
  %v974 = vmax.f32 %v831, 0.0
  %v975 = vmax.f32 %v834, 0.0
  %v976 = vmax.f32 %v837, 0.0
  %v977 = vmax.f32 %v840, 0.0
  %v978 = vmax.f32 %v843, 0.0
  %v979 = vmax.f32 %v846, 0.0
  %v980 = vmax.f32 %v849, 0.0
  %v981 = vmax.f32 %v852, 0.0
  %v982 = vmax.f32 %v855, 0.0
  %v983 = vmax.f32 %v858, 0.0
  %v984 = vmax.f32 %v861, 0.0
  %v985 = vmax.f32 %v864, 0.0
  %v986 = vmax.f32 %v867, 0.0
  %v987 = vmax.f32 %v870, 0.0
  %v988 = vmax.f32 %v873, 0.0
  %v989 = vmax.f32 %v876, 0.0
  %v990 = vmax.f32 %v879, 0.0
  %v991 = vmax.f32 %v882, 0.0
  %v992 = vmax.f32 %v885, 0.0
  %v993 = vmax.f32 %v888, 0.0
  %v994 = vmax.f32 %v891, 0.0
  %v995 = vmax.f32 %v894, 0.0
  %vm996 = vcmask 261120
  %997 = vst.msk [vmem:[#allocation2] sm:$0xff] %vm996, %v896
  %998 = vst.msk [vmem:[#allocation2 + $0x8] sm:$0xff] %vm996, %v897
  %999 = vst.msk [vmem:[#allocation2 + $0x10] sm:$0xff] %vm996, %v898
  %1000 = vst.msk [vmem:[#allocation2 + $0x18] sm:$0xff] %vm996, %v899
  %1001 = vst.msk [vmem:[#allocation2 + $0x20] sm:$0xff] %vm996, %v900
  %1002 = vst.msk [vmem:[#allocation2 + $0x28] sm:$0xff] %vm996, %v901
  %1003 = vst.msk [vmem:[#allocation2 + $0x30] sm:$0xff] %vm996, %v902
  %1004 = vst.msk [vmem:[#allocation2 + $0x38] sm:$0xff] %vm996, %v903
  %1005 = vst.msk [vmem:[#allocation2 + $0x40] sm:$0xff] %vm996, %v904
  %1006 = vst.msk [vmem:[#allocation2 + $0x48] sm:$0xff] %vm996, %v905
  %1007 = vst.msk [vmem:[#allocation2 + $0x50] sm:$0xff] %vm996, %v906
  %1008 = vst.msk [vmem:[#allocation2 + $0x58] sm:$0xff] %vm996, %v907
  %1009 = vst.msk [vmem:[#allocation2 + $0x60] sm:$0xff] %vm996, %v908
  %1010 = vst.msk [vmem:[#allocation2 + $0x68] sm:$0xff] %vm996, %v909
  %1011 = vst.msk [vmem:[#allocation2 + $0x70] sm:$0xff] %vm996, %v910
  %1012 = vst.msk [vmem:[#allocation2 + $0x78] sm:$0xff] %vm996, %v911
  %1013 = vst.msk [vmem:[#allocation2 + $0x80] sm:$0xff] %vm996, %v912
  %1014 = vst.msk [vmem:[#allocation2 + $0x88] sm:$0xff] %vm996, %v913
  %1015 = vst.msk [vmem:[#allocation2 + $0x90] sm:$0xff] %vm996, %v914
  %1016 = vst.msk [vmem:[#allocation2 + $0x98] sm:$0xff] %vm996, %v915
  %1017 = vst.msk [vmem:[#allocation2 + $0xa0] sm:$0xff] %vm996, %v916
  %1018 = vst.msk [vmem:[#allocation2 + $0xa8] sm:$0xff] %vm996, %v917
  %1019 = vst.msk [vmem:[#allocation2 + $0xb0] sm:$0xff] %vm996, %v918
  %1020 = vst.msk [vmem:[#allocation2 + $0xb8] sm:$0xff] %vm996, %v919
  %1021 = vst.msk [vmem:[#allocation2 + $0xc0] sm:$0xff] %vm996, %v920
  %1022 = vst.msk [vmem:[#allocation2 + $0xc8] sm:$0xff] %vm996, %v921
  %1023 = vst.msk [vmem:[#allocation2 + $0xd0] sm:$0xff] %vm996, %v922
  %1024 = vst.msk [vmem:[#allocation2 + $0xd8] sm:$0xff] %vm996, %v923
  %1025 = vst.msk [vmem:[#allocation2 + $0xe0] sm:$0xff] %vm996, %v924
  %1026 = vst.msk [vmem:[#allocation2 + $0xe8] sm:$0xff] %vm996, %v925
  %1027 = vst.msk [vmem:[#allocation2 + $0xf0] sm:$0xff] %vm996, %v926
  %1028 = vst.msk [vmem:[#allocation2 + $0xf8] sm:$0xff] %vm996, %v927
  %1029 = vst.msk [vmem:[#allocation2 + $0x100] sm:$0xff] %vm996, %v928
  %1030 = vst.msk [vmem:[#allocation2 + $0x108] sm:$0xff] %vm996, %v929
  %1031 = vst.msk [vmem:[#allocation2 + $0x110] sm:$0xff] %vm996, %v930
  %1032 = vst.msk [vmem:[#allocation2 + $0x118] sm:$0xff] %vm996, %v931
  %1033 = vst.msk [vmem:[#allocation2 + $0x120] sm:$0xff] %vm996, %v932
  %1034 = vst.msk [vmem:[#allocation2 + $0x128] sm:$0xff] %vm996, %v933
  %1035 = vst.msk [vmem:[#allocation2 + $0x130] sm:$0xff] %vm996, %v934
  %1036 = vst.msk [vmem:[#allocation2 + $0x138] sm:$0xff] %vm996, %v935
  %1037 = vst.msk [vmem:[#allocation2 + $0x140] sm:$0xff] %vm996, %v936
  %1038 = vst.msk [vmem:[#allocation2 + $0x148] sm:$0xff] %vm996, %v937
  %1039 = vst.msk [vmem:[#allocation2 + $0x150] sm:$0xff] %vm996, %v938
  %1040 = vst.msk [vmem:[#allocation2 + $0x158] sm:$0xff] %vm996, %v939
  %1041 = vst.msk [vmem:[#allocation2 + $0x160] sm:$0xff] %vm996, %v940
  %1042 = vst.msk [vmem:[#allocation2 + $0x168] sm:$0xff] %vm996, %v941
  %1043 = vst.msk [vmem:[#allocation2 + $0x170] sm:$0xff] %vm996, %v942
  %1044 = vst.msk [vmem:[#allocation2 + $0x178] sm:$0xff] %vm996, %v943
  %1045 = vst.msk [vmem:[#allocation2 + $0x180] sm:$0xff] %vm996, %v944
  %1046 = vst.msk [vmem:[#allocation2 + $0x188] sm:$0xff] %vm996, %v945
  %1047 = vst.msk [vmem:[#allocation2 + $0x190] sm:$0xff] %vm996, %v946
  %1048 = vst.msk [vmem:[#allocation2 + $0x198] sm:$0xff] %vm996, %v947
  %1049 = vst.msk [vmem:[#allocation2 + $0x1a0] sm:$0xff] %vm996, %v948
  %1050 = vst.msk [vmem:[#allocation2 + $0x1a8] sm:$0xff] %vm996, %v949
  %1051 = vst.msk [vmem:[#allocation2 + $0x1b0] sm:$0xff] %vm996, %v950
  %1052 = vst.msk [vmem:[#allocation2 + $0x1b8] sm:$0xff] %vm996, %v951
  %1053 = vst.msk [vmem:[#allocation2 + $0x1c0] sm:$0xff] %vm996, %v952
  %1054 = vst.msk [vmem:[#allocation2 + $0x1c8] sm:$0xff] %vm996, %v953
  %1055 = vst.msk [vmem:[#allocation2 + $0x1d0] sm:$0xff] %vm996, %v954
  %1056 = vst.msk [vmem:[#allocation2 + $0x1d8] sm:$0xff] %vm996, %v955
  %1057 = vst.msk [vmem:[#allocation2 + $0x1e0] sm:$0xff] %vm996, %v956
  %1058 = vst.msk [vmem:[#allocation2 + $0x1e8] sm:$0xff] %vm996, %v957
  %1059 = vst.msk [vmem:[#allocation2 + $0x1f0] sm:$0xff] %vm996, %v958
  %1060 = vst.msk [vmem:[#allocation2 + $0x1f8] sm:$0xff] %vm996, %v959
  %1061 = vst.msk [vmem:[#allocation2 + $0x200] sm:$0xff] %vm996, %v960
  %1062 = vst.msk [vmem:[#allocation2 + $0x208] sm:$0xff] %vm996, %v961
  %1063 = vst.msk [vmem:[#allocation2 + $0x210] sm:$0xff] %vm996, %v962
  %1064 = vst.msk [vmem:[#allocation2 + $0x218] sm:$0xff] %vm996, %v963
  %1065 = vst.msk [vmem:[#allocation2 + $0x220] sm:$0xff] %vm996, %v964
  %1066 = vst.msk [vmem:[#allocation2 + $0x228] sm:$0xff] %vm996, %v965
  %1067 = vst.msk [vmem:[#allocation2 + $0x230] sm:$0xff] %vm996, %v966
  %1068 = vst.msk [vmem:[#allocation2 + $0x238] sm:$0xff] %vm996, %v967
  %1069 = vst.msk [vmem:[#allocation2 + $0x240] sm:$0xff] %vm996, %v968
  %1070 = vst.msk [vmem:[#allocation2 + $0x248] sm:$0xff] %vm996, %v969
  %1071 = vst.msk [vmem:[#allocation2 + $0x250] sm:$0xff] %vm996, %v970
  %1072 = vst.msk [vmem:[#allocation2 + $0x258] sm:$0xff] %vm996, %v971
  %1073 = vst.msk [vmem:[#allocation2 + $0x260] sm:$0xff] %vm996, %v972
  %1074 = vst.msk [vmem:[#allocation2 + $0x268] sm:$0xff] %vm996, %v973
  %1075 = vst.msk [vmem:[#allocation2 + $0x270] sm:$0xff] %vm996, %v974
  %1076 = vst.msk [vmem:[#allocation2 + $0x278] sm:$0xff] %vm996, %v975
  %1077 = vst.msk [vmem:[#allocation2 + $0x280] sm:$0xff] %vm996, %v976
  %1078 = vst.msk [vmem:[#allocation2 + $0x288] sm:$0xff] %vm996, %v977
  %1079 = vst.msk [vmem:[#allocation2 + $0x290] sm:$0xff] %vm996, %v978
  %1080 = vst.msk [vmem:[#allocation2 + $0x298] sm:$0xff] %vm996, %v979
  %1081 = vst.msk [vmem:[#allocation2 + $0x2a0] sm:$0xff] %vm996, %v980
  %1082 = vst.msk [vmem:[#allocation2 + $0x2a8] sm:$0xff] %vm996, %v981
  %1083 = vst.msk [vmem:[#allocation2 + $0x2b0] sm:$0xff] %vm996, %v982
  %1084 = vst.msk [vmem:[#allocation2 + $0x2b8] sm:$0xff] %vm996, %v983
  %1085 = vst.msk [vmem:[#allocation2 + $0x2c0] sm:$0xff] %vm996, %v984
  %1086 = vst.msk [vmem:[#allocation2 + $0x2c8] sm:$0xff] %vm996, %v985
  %1087 = vst.msk [vmem:[#allocation2 + $0x2d0] sm:$0xff] %vm996, %v986
  %1088 = vst.msk [vmem:[#allocation2 + $0x2d8] sm:$0xff] %vm996, %v987
  %1089 = vst.msk [vmem:[#allocation2 + $0x2e0] sm:$0xff] %vm996, %v988
  %1090 = vst.msk [vmem:[#allocation2 + $0x2e8] sm:$0xff] %vm996, %v989
  %1091 = vst.msk [vmem:[#allocation2 + $0x2f0] sm:$0xff] %vm996, %v990
  %1092 = vst.msk [vmem:[#allocation2 + $0x2f8] sm:$0xff] %vm996, %v991
  %1093 = vst.msk [vmem:[#allocation2 + $0x300] sm:$0xff] %vm996, %v992
  %1094 = vst.msk [vmem:[#allocation2 + $0x308] sm:$0xff] %vm996, %v993
  %1095 = vst.msk [vmem:[#allocation2 + $0x310] sm:$0xff] %vm996, %v994
  %1096 = vst.msk [vmem:[#allocation2 + $0x318] sm:$0xff] %vm996, %v995
  %1097 = vst.msk [vmem:[#allocation2 + $0x320] sm:$0xff] %vm996, 0.0
  %v1098 = vld [vmem:[#allocation2] sm:$0xff]
  %v1099 = vld [vmem:[#allocation2 + $0x8] sm:$0xff]
  %v1100 = vld [vmem:[#allocation2 + $0x10] sm:$0xff]
  %v1101 = vld [vmem:[#allocation2 + $0x18] sm:$0xff]
  %v1102 = vld [vmem:[#allocation2 + $0x20] sm:$0xff]
  %v1103 = vld [vmem:[#allocation2 + $0x28] sm:$0xff]
  %v1104 = vld [vmem:[#allocation2 + $0x30] sm:$0xff]
  %v1105 = vld [vmem:[#allocation2 + $0x38] sm:$0xff]
  %v1106 = vld [vmem:[#allocation2 + $0x40] sm:$0xff]
  %v1107 = vld [vmem:[#allocation2 + $0x48] sm:$0xff]
  %v1108 = vld [vmem:[#allocation2 + $0x50] sm:$0xff]
  %v1109 = vld [vmem:[#allocation2 + $0x58] sm:$0x3]
  %1110 = vst.msk [vmem:[#allocation3] sm:$0xff] %vm996, %v1098
  %1111 = vst.msk [vmem:[#allocation3 + $0x20] sm:$0xff] %vm996, %v1099
  %1112 = vst.msk [vmem:[#allocation3 + $0x40] sm:$0xff] %vm996, %v1100
  %1113 = vst.msk [vmem:[#allocation3 + $0x60] sm:$0xff] %vm996, %v1101
  %1114 = vst.msk [vmem:[#allocation3 + $0x80] sm:$0xff] %vm996, %v1102
  %1115 = vst.msk [vmem:[#allocation3 + $0xa0] sm:$0xff] %vm996, %v1103
  %1116 = vst.msk [vmem:[#allocation3 + $0xc0] sm:$0xff] %vm996, %v1104
  %1117 = vst.msk [vmem:[#allocation3 + $0xe0] sm:$0xff] %vm996, %v1105
  %1118 = vst.msk [vmem:[#allocation3 + $0x100] sm:$0xff] %vm996, %v1106
  %1119 = vst.msk [vmem:[#allocation3 + $0x120] sm:$0xff] %vm996, %v1107
  %1120 = vst.msk [vmem:[#allocation3 + $0x140] sm:$0xff] %vm996, %v1108
  %vm1121 = vcmask 254976
  %1122 = vst.msk [vmem:[#allocation3 + $0x160] sm:$0x3] %vm1121, %v1109
  %v1123 = vld [vmem:[#allocation2 + $0x64] sm:$0xff]
  %v1124 = vld [vmem:[#allocation2 + $0x6c] sm:$0xff]
  %v1125 = vld [vmem:[#allocation2 + $0x74] sm:$0xff]
  %v1126 = vld [vmem:[#allocation2 + $0x7c] sm:$0xff]
  %v1127 = vld [vmem:[#allocation2 + $0x84] sm:$0xff]
  %v1128 = vld [vmem:[#allocation2 + $0x8c] sm:$0xff]
  %v1129 = vld [vmem:[#allocation2 + $0x94] sm:$0xff]
  %v1130 = vld [vmem:[#allocation2 + $0x9c] sm:$0xff]
  %v1131 = vld [vmem:[#allocation2 + $0xa4] sm:$0xff]
  %v1132 = vld [vmem:[#allocation2 + $0xac] sm:$0xff]
  %v1133 = vld [vmem:[#allocation2 + $0xb4] sm:$0xff]
  %v1134 = vld [vmem:[#allocation2 + $0xbc] sm:$0x3]
  %1147 = vrot.lane.b32.xlu0 %v1123, 32
  %v1148 = vpop.permute.xlu0 %1147
  %1149 = vrot.lane.b32.xlu0 %v1124, 32
  %v1150 = vpop.permute.xlu0 %1149
  %1151 = vrot.lane.b32.xlu0 %v1125, 32
  %v1152 = vpop.permute.xlu0 %1151
  %1153 = vrot.lane.b32.xlu0 %v1126, 32
  %v1154 = vpop.permute.xlu0 %1153
  %1155 = vrot.lane.b32.xlu0 %v1127, 32
  %v1156 = vpop.permute.xlu0 %1155
  %1157 = vrot.lane.b32.xlu0 %v1128, 32
  %v1158 = vpop.permute.xlu0 %1157
  %1159 = vrot.lane.b32.xlu0 %v1129, 32
  %v1160 = vpop.permute.xlu0 %1159
  %1161 = vrot.lane.b32.xlu0 %v1130, 32
  %v1162 = vpop.permute.xlu0 %1161
  %1163 = vrot.lane.b32.xlu0 %v1131, 32
  %v1164 = vpop.permute.xlu0 %1163
  %1165 = vrot.lane.b32.xlu0 %v1132, 32
  %v1166 = vpop.permute.xlu0 %1165
  %1167 = vrot.lane.b32.xlu0 %v1133, 32
  %v1168 = vpop.permute.xlu0 %1167
  %1169 = vrot.lane.b32.xlu0 %v1134, 32
  %v1170 = vpop.permute.xlu0 %1169
  %vm1183 = vcmask 523520
  %1184 = vst.msk [vmem:[#allocation3] sm:$0xff] %vm1183, %v1148
  %1185 = vst.msk [vmem:[#allocation3 + $0x20] sm:$0xff] %vm1183, %v1150
  %1186 = vst.msk [vmem:[#allocation3 + $0x40] sm:$0xff] %vm1183, %v1152
  %1187 = vst.msk [vmem:[#allocation3 + $0x60] sm:$0xff] %vm1183, %v1154
  %1188 = vst.msk [vmem:[#allocation3 + $0x80] sm:$0xff] %vm1183, %v1156
  %1189 = vst.msk [vmem:[#allocation3 + $0xa0] sm:$0xff] %vm1183, %v1158
  %1190 = vst.msk [vmem:[#allocation3 + $0xc0] sm:$0xff] %vm1183, %v1160
  %1191 = vst.msk [vmem:[#allocation3 + $0xe0] sm:$0xff] %vm1183, %v1162
  %1192 = vst.msk [vmem:[#allocation3 + $0x100] sm:$0xff] %vm1183, %v1164
  %1193 = vst.msk [vmem:[#allocation3 + $0x120] sm:$0xff] %vm1183, %v1166
  %1194 = vst.msk [vmem:[#allocation3 + $0x140] sm:$0xff] %vm1183, %v1168
  %vm1195 = vcmask 517376
  %1196 = vst.msk [vmem:[#allocation3 + $0x160] sm:$0x3] %vm1195, %v1170
  %v1197 = vld [vmem:[#allocation2 + $0x1] sm:$0xff]
  %v1198 = vld [vmem:[#allocation2 + $0x9] sm:$0xff]
  %v1199 = vld [vmem:[#allocation2 + $0x11] sm:$0xff]
  %v1200 = vld [vmem:[#allocation2 + $0x19] sm:$0xff]
  %v1201 = vld [vmem:[#allocation2 + $0x21] sm:$0xff]
  %v1202 = vld [vmem:[#allocation2 + $0x29] sm:$0xff]
  %v1203 = vld [vmem:[#allocation2 + $0x31] sm:$0xff]
  %v1204 = vld [vmem:[#allocation2 + $0x39] sm:$0xff]
  %v1205 = vld [vmem:[#allocation2 + $0x41] sm:$0xff]
  %v1206 = vld [vmem:[#allocation2 + $0x49] sm:$0xff]
  %v1207 = vld [vmem:[#allocation2 + $0x51] sm:$0xff]
  %v1208 = vld [vmem:[#allocation2 + $0x59] sm:$0x3]
  %1221 = vrot.lane.b32.xlu0 %v1197, 64
  %v1222 = vpop.permute.xlu0 %1221
  %1223 = vrot.lane.b32.xlu0 %v1198, 64
  %v1224 = vpop.permute.xlu0 %1223
  %1225 = vrot.lane.b32.xlu0 %v1199, 64
  %v1226 = vpop.permute.xlu0 %1225
  %1227 = vrot.lane.b32.xlu0 %v1200, 64
  %v1228 = vpop.permute.xlu0 %1227
  %1229 = vrot.lane.b32.xlu0 %v1201, 64
  %v1230 = vpop.permute.xlu0 %1229
  %1231 = vrot.lane.b32.xlu0 %v1202, 64
  %v1232 = vpop.permute.xlu0 %1231
  %1233 = vrot.lane.b32.xlu0 %v1203, 64
  %v1234 = vpop.permute.xlu0 %1233
  %1235 = vrot.lane.b32.xlu0 %v1204, 64
  %v1236 = vpop.permute.xlu0 %1235
  %1237 = vrot.lane.b32.xlu0 %v1205, 64
  %v1238 = vpop.permute.xlu0 %1237
  %1239 = vrot.lane.b32.xlu0 %v1206, 64
  %v1240 = vpop.permute.xlu0 %1239
  %1241 = vrot.lane.b32.xlu0 %v1207, 64
  %v1242 = vpop.permute.xlu0 %1241
  %1243 = vrot.lane.b32.xlu0 %v1208, 64
  %v1244 = vpop.permute.xlu0 %1243
  %vm1257 = vcmask 785920
  %1258 = vst.msk [vmem:[#allocation3] sm:$0xff] %vm1257, %v1222
  %1259 = vst.msk [vmem:[#allocation3 + $0x20] sm:$0xff] %vm1257, %v1224
  %1260 = vst.msk [vmem:[#allocation3 + $0x40] sm:$0xff] %vm1257, %v1226
  %1261 = vst.msk [vmem:[#allocation3 + $0x60] sm:$0xff] %vm1257, %v1228
  %1262 = vst.msk [vmem:[#allocation3 + $0x80] sm:$0xff] %vm1257, %v1230
  %1263 = vst.msk [vmem:[#allocation3 + $0xa0] sm:$0xff] %vm1257, %v1232
  %1264 = vst.msk [vmem:[#allocation3 + $0xc0] sm:$0xff] %vm1257, %v1234
  %1265 = vst.msk [vmem:[#allocation3 + $0xe0] sm:$0xff] %vm1257, %v1236
  %1266 = vst.msk [vmem:[#allocation3 + $0x100] sm:$0xff] %vm1257, %v1238
  %1267 = vst.msk [vmem:[#allocation3 + $0x120] sm:$0xff] %vm1257, %v1240
  %1268 = vst.msk [vmem:[#allocation3 + $0x140] sm:$0xff] %vm1257, %v1242
  %vm1269 = vcmask 779776
  %1270 = vst.msk [vmem:[#allocation3 + $0x160] sm:$0x3] %vm1269, %v1244
  %v1271 = vld [vmem:[#allocation2 + $0x65] sm:$0xff]
  %v1272 = vld [vmem:[#allocation2 + $0x6d] sm:$0xff]
  %v1273 = vld [vmem:[#allocation2 + $0x75] sm:$0xff]
  %v1274 = vld [vmem:[#allocation2 + $0x7d] sm:$0xff]
  %v1275 = vld [vmem:[#allocation2 + $0x85] sm:$0xff]
  %v1276 = vld [vmem:[#allocation2 + $0x8d] sm:$0xff]
  %v1277 = vld [vmem:[#allocation2 + $0x95] sm:$0xff]
  %v1278 = vld [vmem:[#allocation2 + $0x9d] sm:$0xff]
  %v1279 = vld [vmem:[#allocation2 + $0xa5] sm:$0xff]
  %v1280 = vld [vmem:[#allocation2 + $0xad] sm:$0xff]
  %v1281 = vld [vmem:[#allocation2 + $0xb5] sm:$0xff]
  %v1282 = vld [vmem:[#allocation2 + $0xbd] sm:$0x3]
  %1295 = vrot.lane.b32.xlu0 %v1271, 96
  %v1296 = vpop.permute.xlu0 %1295
  %1297 = vrot.lane.b32.xlu0 %v1272, 96
  %v1298 = vpop.permute.xlu0 %1297
  %1299 = vrot.lane.b32.xlu0 %v1273, 96
  %v1300 = vpop.permute.xlu0 %1299
  %1301 = vrot.lane.b32.xlu0 %v1274, 96
  %v1302 = vpop.permute.xlu0 %1301
  %1303 = vrot.lane.b32.xlu0 %v1275, 96
  %v1304 = vpop.permute.xlu0 %1303
  %1305 = vrot.lane.b32.xlu0 %v1276, 96
  %v1306 = vpop.permute.xlu0 %1305
  %1307 = vrot.lane.b32.xlu0 %v1277, 96
  %v1308 = vpop.permute.xlu0 %1307
  %1309 = vrot.lane.b32.xlu0 %v1278, 96
  %v1310 = vpop.permute.xlu0 %1309
  %1311 = vrot.lane.b32.xlu0 %v1279, 96
  %v1312 = vpop.permute.xlu0 %1311
  %1313 = vrot.lane.b32.xlu0 %v1280, 96
  %v1314 = vpop.permute.xlu0 %1313
  %1315 = vrot.lane.b32.xlu0 %v1281, 96
  %v1316 = vpop.permute.xlu0 %1315
  %1317 = vrot.lane.b32.xlu0 %v1282, 96
  %v1318 = vpop.permute.xlu0 %1317
  %vm1331 = vcmask 1048320
  %1332 = vst.msk [vmem:[#allocation3] sm:$0xff] %vm1331, %v1296
  %1333 = vst.msk [vmem:[#allocation3 + $0x20] sm:$0xff] %vm1331, %v1298
  %1334 = vst.msk [vmem:[#allocation3 + $0x40] sm:$0xff] %vm1331, %v1300
  %1335 = vst.msk [vmem:[#allocation3 + $0x60] sm:$0xff] %vm1331, %v1302
  %1336 = vst.msk [vmem:[#allocation3 + $0x80] sm:$0xff] %vm1331, %v1304
  %1337 = vst.msk [vmem:[#allocation3 + $0xa0] sm:$0xff] %vm1331, %v1306
  %1338 = vst.msk [vmem:[#allocation3 + $0xc0] sm:$0xff] %vm1331, %v1308
  %1339 = vst.msk [vmem:[#allocation3 + $0xe0] sm:$0xff] %vm1331, %v1310
  %1340 = vst.msk [vmem:[#allocation3 + $0x100] sm:$0xff] %vm1331, %v1312
  %1341 = vst.msk [vmem:[#allocation3 + $0x120] sm:$0xff] %vm1331, %v1314
  %1342 = vst.msk [vmem:[#allocation3 + $0x140] sm:$0xff] %vm1331, %v1316
  %vm1343 = vcmask 1042176
  %1344 = vst.msk [vmem:[#allocation3 + $0x160] sm:$0x3] %vm1343, %v1318
  %v1345 = vld [vmem:[#allocation2 + $0xc8] sm:$0xff]
  %v1346 = vld [vmem:[#allocation2 + $0xd0] sm:$0xff]
  %v1347 = vld [vmem:[#allocation2 + $0xd8] sm:$0xff]
  %v1348 = vld [vmem:[#allocation2 + $0xe0] sm:$0xff]
  %v1349 = vld [vmem:[#allocation2 + $0xe8] sm:$0xff]
  %v1350 = vld [vmem:[#allocation2 + $0xf0] sm:$0xff]
  %v1351 = vld [vmem:[#allocation2 + $0xf8] sm:$0xff]
  %v1352 = vld [vmem:[#allocation2 + $0x100] sm:$0xff]
  %v1353 = vld [vmem:[#allocation2 + $0x108] sm:$0xff]
  %v1354 = vld [vmem:[#allocation2 + $0x110] sm:$0xff]
  %v1355 = vld [vmem:[#allocation2 + $0x118] sm:$0xff]
  %v1356 = vld [vmem:[#allocation2 + $0x120] sm:$0x3]
  %1357 = vst.msk [vmem:[#allocation3 + $0x8] sm:$0xff] %vm996, %v1345
  %1358 = vst.msk [vmem:[#allocation3 + $0x28] sm:$0xff] %vm996, %v1346
  %1359 = vst.msk [vmem:[#allocation3 + $0x48] sm:$0xff] %vm996, %v1347
  %1360 = vst.msk [vmem:[#allocation3 + $0x68] sm:$0xff] %vm996, %v1348
  %1361 = vst.msk [vmem:[#allocation3 + $0x88] sm:$0xff] %vm996, %v1349
  %1362 = vst.msk [vmem:[#allocation3 + $0xa8] sm:$0xff] %vm996, %v1350
  %1363 = vst.msk [vmem:[#allocation3 + $0xc8] sm:$0xff] %vm996, %v1351
  %1364 = vst.msk [vmem:[#allocation3 + $0xe8] sm:$0xff] %vm996, %v1352
  %1365 = vst.msk [vmem:[#allocation3 + $0x108] sm:$0xff] %vm996, %v1353
  %1366 = vst.msk [vmem:[#allocation3 + $0x128] sm:$0xff] %vm996, %v1354
  %1367 = vst.msk [vmem:[#allocation3 + $0x148] sm:$0xff] %vm996, %v1355
  %1368 = vst.msk [vmem:[#allocation3 + $0x168] sm:$0x3] %vm1121, %v1356
  %v1369 = vld [vmem:[#allocation2 + $0x12c] sm:$0xff]
  %v1370 = vld [vmem:[#allocation2 + $0x134] sm:$0xff]
  %v1371 = vld [vmem:[#allocation2 + $0x13c] sm:$0xff]
  %v1372 = vld [vmem:[#allocation2 + $0x144] sm:$0xff]
  %v1373 = vld [vmem:[#allocation2 + $0x14c] sm:$0xff]
  %v1374 = vld [vmem:[#allocation2 + $0x154] sm:$0xff]
  %v1375 = vld [vmem:[#allocation2 + $0x15c] sm:$0xff]
  %v1376 = vld [vmem:[#allocation2 + $0x164] sm:$0xff]
  %v1377 = vld [vmem:[#allocation2 + $0x16c] sm:$0xff]
  %v1378 = vld [vmem:[#allocation2 + $0x174] sm:$0xff]
  %v1379 = vld [vmem:[#allocation2 + $0x17c] sm:$0xff]
  %v1380 = vld [vmem:[#allocation2 + $0x184] sm:$0x3]
  %1393 = vrot.lane.b32.xlu0 %v1369, 32
  %v1394 = vpop.permute.xlu0 %1393
  %1395 = vrot.lane.b32.xlu0 %v1370, 32
  %v1396 = vpop.permute.xlu0 %1395
  %1397 = vrot.lane.b32.xlu0 %v1371, 32
  %v1398 = vpop.permute.xlu0 %1397
  %1399 = vrot.lane.b32.xlu0 %v1372, 32
  %v1400 = vpop.permute.xlu0 %1399
  %1401 = vrot.lane.b32.xlu0 %v1373, 32
  %v1402 = vpop.permute.xlu0 %1401
  %1403 = vrot.lane.b32.xlu0 %v1374, 32
  %v1404 = vpop.permute.xlu0 %1403
  %1405 = vrot.lane.b32.xlu0 %v1375, 32
  %v1406 = vpop.permute.xlu0 %1405
  %1407 = vrot.lane.b32.xlu0 %v1376, 32
  %v1408 = vpop.permute.xlu0 %1407
  %1409 = vrot.lane.b32.xlu0 %v1377, 32
  %v1410 = vpop.permute.xlu0 %1409
  %1411 = vrot.lane.b32.xlu0 %v1378, 32
  %v1412 = vpop.permute.xlu0 %1411
  %1413 = vrot.lane.b32.xlu0 %v1379, 32
  %v1414 = vpop.permute.xlu0 %1413
  %1415 = vrot.lane.b32.xlu0 %v1380, 32
  %v1416 = vpop.permute.xlu0 %1415
  %1429 = vst.msk [vmem:[#allocation3 + $0x8] sm:$0xff] %vm1183, %v1394
  %1430 = vst.msk [vmem:[#allocation3 + $0x28] sm:$0xff] %vm1183, %v1396
  %1431 = vst.msk [vmem:[#allocation3 + $0x48] sm:$0xff] %vm1183, %v1398
  %1432 = vst.msk [vmem:[#allocation3 + $0x68] sm:$0xff] %vm1183, %v1400
  %1433 = vst.msk [vmem:[#allocation3 + $0x88] sm:$0xff] %vm1183, %v1402
  %1434 = vst.msk [vmem:[#allocation3 + $0xa8] sm:$0xff] %vm1183, %v1404
  %1435 = vst.msk [vmem:[#allocation3 + $0xc8] sm:$0xff] %vm1183, %v1406
  %1436 = vst.msk [vmem:[#allocation3 + $0xe8] sm:$0xff] %vm1183, %v1408
  %1437 = vst.msk [vmem:[#allocation3 + $0x108] sm:$0xff] %vm1183, %v1410
  %1438 = vst.msk [vmem:[#allocation3 + $0x128] sm:$0xff] %vm1183, %v1412
  %1439 = vst.msk [vmem:[#allocation3 + $0x148] sm:$0xff] %vm1183, %v1414
  %1440 = vst.msk [vmem:[#allocation3 + $0x168] sm:$0x3] %vm1195, %v1416
  %v1441 = vld [vmem:[#allocation2 + $0xc9] sm:$0xff]
  %v1442 = vld [vmem:[#allocation2 + $0xd1] sm:$0xff]
  %v1443 = vld [vmem:[#allocation2 + $0xd9] sm:$0xff]
  %v1444 = vld [vmem:[#allocation2 + $0xe1] sm:$0xff]
  %v1445 = vld [vmem:[#allocation2 + $0xe9] sm:$0xff]
  %v1446 = vld [vmem:[#allocation2 + $0xf1] sm:$0xff]
  %v1447 = vld [vmem:[#allocation2 + $0xf9] sm:$0xff]
  %v1448 = vld [vmem:[#allocation2 + $0x101] sm:$0xff]
  %v1449 = vld [vmem:[#allocation2 + $0x109] sm:$0xff]
  %v1450 = vld [vmem:[#allocation2 + $0x111] sm:$0xff]
  %v1451 = vld [vmem:[#allocation2 + $0x119] sm:$0xff]
  %v1452 = vld [vmem:[#allocation2 + $0x121] sm:$0x3]
  %1465 = vrot.lane.b32.xlu0 %v1441, 64
  %v1466 = vpop.permute.xlu0 %1465
  %1467 = vrot.lane.b32.xlu0 %v1442, 64
  %v1468 = vpop.permute.xlu0 %1467
  %1469 = vrot.lane.b32.xlu0 %v1443, 64
  %v1470 = vpop.permute.xlu0 %1469
  %1471 = vrot.lane.b32.xlu0 %v1444, 64
  %v1472 = vpop.permute.xlu0 %1471
  %1473 = vrot.lane.b32.xlu0 %v1445, 64
  %v1474 = vpop.permute.xlu0 %1473
  %1475 = vrot.lane.b32.xlu0 %v1446, 64
  %v1476 = vpop.permute.xlu0 %1475
  %1477 = vrot.lane.b32.xlu0 %v1447, 64
  %v1478 = vpop.permute.xlu0 %1477
  %1479 = vrot.lane.b32.xlu0 %v1448, 64
  %v1480 = vpop.permute.xlu0 %1479
  %1481 = vrot.lane.b32.xlu0 %v1449, 64
  %v1482 = vpop.permute.xlu0 %1481
  %1483 = vrot.lane.b32.xlu0 %v1450, 64
  %v1484 = vpop.permute.xlu0 %1483
  %1485 = vrot.lane.b32.xlu0 %v1451, 64
  %v1486 = vpop.permute.xlu0 %1485
  %1487 = vrot.lane.b32.xlu0 %v1452, 64
  %v1488 = vpop.permute.xlu0 %1487
  %1501 = vst.msk [vmem:[#allocation3 + $0x8] sm:$0xff] %vm1257, %v1466
  %1502 = vst.msk [vmem:[#allocation3 + $0x28] sm:$0xff] %vm1257, %v1468
  %1503 = vst.msk [vmem:[#allocation3 + $0x48] sm:$0xff] %vm1257, %v1470
  %1504 = vst.msk [vmem:[#allocation3 + $0x68] sm:$0xff] %vm1257, %v1472
  %1505 = vst.msk [vmem:[#allocation3 + $0x88] sm:$0xff] %vm1257, %v1474
  %1506 = vst.msk [vmem:[#allocation3 + $0xa8] sm:$0xff] %vm1257, %v1476
  %1507 = vst.msk [vmem:[#allocation3 + $0xc8] sm:$0xff] %vm1257, %v1478
  %1508 = vst.msk [vmem:[#allocation3 + $0xe8] sm:$0xff] %vm1257, %v1480
  %1509 = vst.msk [vmem:[#allocation3 + $0x108] sm:$0xff] %vm1257, %v1482
  %1510 = vst.msk [vmem:[#allocation3 + $0x128] sm:$0xff] %vm1257, %v1484
  %1511 = vst.msk [vmem:[#allocation3 + $0x148] sm:$0xff] %vm1257, %v1486
  %1512 = vst.msk [vmem:[#allocation3 + $0x168] sm:$0x3] %vm1269, %v1488
  %v1513 = vld [vmem:[#allocation2 + $0x12d] sm:$0xff]
  %v1514 = vld [vmem:[#allocation2 + $0x135] sm:$0xff]
  %v1515 = vld [vmem:[#allocation2 + $0x13d] sm:$0xff]
  %v1516 = vld [vmem:[#allocation2 + $0x145] sm:$0xff]
  %v1517 = vld [vmem:[#allocation2 + $0x14d] sm:$0xff]
  %v1518 = vld [vmem:[#allocation2 + $0x155] sm:$0xff]
  %v1519 = vld [vmem:[#allocation2 + $0x15d] sm:$0xff]
  %v1520 = vld [vmem:[#allocation2 + $0x165] sm:$0xff]
  %v1521 = vld [vmem:[#allocation2 + $0x16d] sm:$0xff]
  %v1522 = vld [vmem:[#allocation2 + $0x175] sm:$0xff]
  %v1523 = vld [vmem:[#allocation2 + $0x17d] sm:$0xff]
  %v1524 = vld [vmem:[#allocation2 + $0x185] sm:$0x3]
  %1537 = vrot.lane.b32.xlu0 %v1513, 96
  %v1538 = vpop.permute.xlu0 %1537
  %1539 = vrot.lane.b32.xlu0 %v1514, 96
  %v1540 = vpop.permute.xlu0 %1539
  %1541 = vrot.lane.b32.xlu0 %v1515, 96
  %v1542 = vpop.permute.xlu0 %1541
  %1543 = vrot.lane.b32.xlu0 %v1516, 96
  %v1544 = vpop.permute.xlu0 %1543
  %1545 = vrot.lane.b32.xlu0 %v1517, 96
  %v1546 = vpop.permute.xlu0 %1545
  %1547 = vrot.lane.b32.xlu0 %v1518, 96
  %v1548 = vpop.permute.xlu0 %1547
  %1549 = vrot.lane.b32.xlu0 %v1519, 96
  %v1550 = vpop.permute.xlu0 %1549
  %1551 = vrot.lane.b32.xlu0 %v1520, 96
  %v1552 = vpop.permute.xlu0 %1551
  %1553 = vrot.lane.b32.xlu0 %v1521, 96
  %v1554 = vpop.permute.xlu0 %1553
  %1555 = vrot.lane.b32.xlu0 %v1522, 96
  %v1556 = vpop.permute.xlu0 %1555
  %1557 = vrot.lane.b32.xlu0 %v1523, 96
  %v1558 = vpop.permute.xlu0 %1557
  %1559 = vrot.lane.b32.xlu0 %v1524, 96
  %v1560 = vpop.permute.xlu0 %1559
  %1573 = vst.msk [vmem:[#allocation3 + $0x8] sm:$0xff] %vm1331, %v1538
  %1574 = vst.msk [vmem:[#allocation3 + $0x28] sm:$0xff] %vm1331, %v1540
  %1575 = vst.msk [vmem:[#allocation3 + $0x48] sm:$0xff] %vm1331, %v1542
  %1576 = vst.msk [vmem:[#allocation3 + $0x68] sm:$0xff] %vm1331, %v1544
  %1577 = vst.msk [vmem:[#allocation3 + $0x88] sm:$0xff] %vm1331, %v1546
  %1578 = vst.msk [vmem:[#allocation3 + $0xa8] sm:$0xff] %vm1331, %v1548
  %1579 = vst.msk [vmem:[#allocation3 + $0xc8] sm:$0xff] %vm1331, %v1550
  %1580 = vst.msk [vmem:[#allocation3 + $0xe8] sm:$0xff] %vm1331, %v1552
  %1581 = vst.msk [vmem:[#allocation3 + $0x108] sm:$0xff] %vm1331, %v1554
  %1582 = vst.msk [vmem:[#allocation3 + $0x128] sm:$0xff] %vm1331, %v1556
  %1583 = vst.msk [vmem:[#allocation3 + $0x148] sm:$0xff] %vm1331, %v1558
  %1584 = vst.msk [vmem:[#allocation3 + $0x168] sm:$0x3] %vm1343, %v1560
  %v1585 = vld [vmem:[#allocation2 + $0xa] sm:$0xff]
  %v1586 = vld [vmem:[#allocation2 + $0x12] sm:$0xff]
  %v1587 = vld [vmem:[#allocation2 + $0x1a] sm:$0xff]
  %v1588 = vld [vmem:[#allocation2 + $0x22] sm:$0xff]
  %v1589 = vld [vmem:[#allocation2 + $0x2a] sm:$0xff]
  %v1590 = vld [vmem:[#allocation2 + $0x32] sm:$0xff]
  %v1591 = vld [vmem:[#allocation2 + $0x3a] sm:$0xff]
  %v1592 = vld [vmem:[#allocation2 + $0x42] sm:$0xff]
  %v1593 = vld [vmem:[#allocation2 + $0x4a] sm:$0xff]
  %v1594 = vld [vmem:[#allocation2 + $0x52] sm:$0xff]
  %v1595 = vld [vmem:[#allocation2 + $0x5a] sm:$0xff]
  %v1596 = vld [vmem:[#allocation2 + $0x62] sm:$0x3]
  %1597 = vst.msk [vmem:[#allocation3 + $0x10] sm:$0xff] %vm996, %v1585
  %1598 = vst.msk [vmem:[#allocation3 + $0x30] sm:$0xff] %vm996, %v1586
  %1599 = vst.msk [vmem:[#allocation3 + $0x50] sm:$0xff] %vm996, %v1587
  %1600 = vst.msk [vmem:[#allocation3 + $0x70] sm:$0xff] %vm996, %v1588
  %1601 = vst.msk [vmem:[#allocation3 + $0x90] sm:$0xff] %vm996, %v1589
  %1602 = vst.msk [vmem:[#allocation3 + $0xb0] sm:$0xff] %vm996, %v1590
  %1603 = vst.msk [vmem:[#allocation3 + $0xd0] sm:$0xff] %vm996, %v1591
  %1604 = vst.msk [vmem:[#allocation3 + $0xf0] sm:$0xff] %vm996, %v1592
  %1605 = vst.msk [vmem:[#allocation3 + $0x110] sm:$0xff] %vm996, %v1593
  %1606 = vst.msk [vmem:[#allocation3 + $0x130] sm:$0xff] %vm996, %v1594
  %1607 = vst.msk [vmem:[#allocation3 + $0x150] sm:$0xff] %vm996, %v1595
  %1608 = vst.msk [vmem:[#allocation3 + $0x170] sm:$0x3] %vm1121, %v1596
  %v1609 = vld [vmem:[#allocation2 + $0x6e] sm:$0xff]
  %v1610 = vld [vmem:[#allocation2 + $0x76] sm:$0xff]
  %v1611 = vld [vmem:[#allocation2 + $0x7e] sm:$0xff]
  %v1612 = vld [vmem:[#allocation2 + $0x86] sm:$0xff]
  %v1613 = vld [vmem:[#allocation2 + $0x8e] sm:$0xff]
  %v1614 = vld [vmem:[#allocation2 + $0x96] sm:$0xff]
  %v1615 = vld [vmem:[#allocation2 + $0x9e] sm:$0xff]
  %v1616 = vld [vmem:[#allocation2 + $0xa6] sm:$0xff]
  %v1617 = vld [vmem:[#allocation2 + $0xae] sm:$0xff]
  %v1618 = vld [vmem:[#allocation2 + $0xb6] sm:$0xff]
  %v1619 = vld [vmem:[#allocation2 + $0xbe] sm:$0xff]
  %v1620 = vld [vmem:[#allocation2 + $0xc6] sm:$0x3]
  %1633 = vrot.lane.b32.xlu0 %v1609, 32
  %v1634 = vpop.permute.xlu0 %1633
  %1635 = vrot.lane.b32.xlu0 %v1610, 32
  %v1636 = vpop.permute.xlu0 %1635
  %1637 = vrot.lane.b32.xlu0 %v1611, 32
  %v1638 = vpop.permute.xlu0 %1637
  %1639 = vrot.lane.b32.xlu0 %v1612, 32
  %v1640 = vpop.permute.xlu0 %1639
  %1641 = vrot.lane.b32.xlu0 %v1613, 32
  %v1642 = vpop.permute.xlu0 %1641
  %1643 = vrot.lane.b32.xlu0 %v1614, 32
  %v1644 = vpop.permute.xlu0 %1643
  %1645 = vrot.lane.b32.xlu0 %v1615, 32
  %v1646 = vpop.permute.xlu0 %1645
  %1647 = vrot.lane.b32.xlu0 %v1616, 32
  %v1648 = vpop.permute.xlu0 %1647
  %1649 = vrot.lane.b32.xlu0 %v1617, 32
  %v1650 = vpop.permute.xlu0 %1649
  %1651 = vrot.lane.b32.xlu0 %v1618, 32
  %v1652 = vpop.permute.xlu0 %1651
  %1653 = vrot.lane.b32.xlu0 %v1619, 32
  %v1654 = vpop.permute.xlu0 %1653
  %1655 = vrot.lane.b32.xlu0 %v1620, 32
  %v1656 = vpop.permute.xlu0 %1655
  %1669 = vst.msk [vmem:[#allocation3 + $0x10] sm:$0xff] %vm1183, %v1634
  %1670 = vst.msk [vmem:[#allocation3 + $0x30] sm:$0xff] %vm1183, %v1636
  %1671 = vst.msk [vmem:[#allocation3 + $0x50] sm:$0xff] %vm1183, %v1638
  %1672 = vst.msk [vmem:[#allocation3 + $0x70] sm:$0xff] %vm1183, %v1640
  %1673 = vst.msk [vmem:[#allocation3 + $0x90] sm:$0xff] %vm1183, %v1642
  %1674 = vst.msk [vmem:[#allocation3 + $0xb0] sm:$0xff] %vm1183, %v1644
  %1675 = vst.msk [vmem:[#allocation3 + $0xd0] sm:$0xff] %vm1183, %v1646
  %1676 = vst.msk [vmem:[#allocation3 + $0xf0] sm:$0xff] %vm1183, %v1648
  %1677 = vst.msk [vmem:[#allocation3 + $0x110] sm:$0xff] %vm1183, %v1650
  %1678 = vst.msk [vmem:[#allocation3 + $0x130] sm:$0xff] %vm1183, %v1652
  %1679 = vst.msk [vmem:[#allocation3 + $0x150] sm:$0xff] %vm1183, %v1654
  %1680 = vst.msk [vmem:[#allocation3 + $0x170] sm:$0x3] %vm1195, %v1656
  %v1681 = vld [vmem:[#allocation2 + $0xb] sm:$0xff]
  %v1682 = vld [vmem:[#allocation2 + $0x13] sm:$0xff]
  %v1683 = vld [vmem:[#allocation2 + $0x1b] sm:$0xff]
  %v1684 = vld [vmem:[#allocation2 + $0x23] sm:$0xff]
  %v1685 = vld [vmem:[#allocation2 + $0x2b] sm:$0xff]
  %v1686 = vld [vmem:[#allocation2 + $0x33] sm:$0xff]
  %v1687 = vld [vmem:[#allocation2 + $0x3b] sm:$0xff]
  %v1688 = vld [vmem:[#allocation2 + $0x43] sm:$0xff]
  %v1689 = vld [vmem:[#allocation2 + $0x4b] sm:$0xff]
  %v1690 = vld [vmem:[#allocation2 + $0x53] sm:$0xff]
  %v1691 = vld [vmem:[#allocation2 + $0x5b] sm:$0xff]
  %v1692 = vld [vmem:[#allocation2 + $0x63] sm:$0x3]
  %1705 = vrot.lane.b32.xlu0 %v1681, 64
  %v1706 = vpop.permute.xlu0 %1705
  %1707 = vrot.lane.b32.xlu0 %v1682, 64
  %v1708 = vpop.permute.xlu0 %1707
  %1709 = vrot.lane.b32.xlu0 %v1683, 64
  %v1710 = vpop.permute.xlu0 %1709
  %1711 = vrot.lane.b32.xlu0 %v1684, 64
  %v1712 = vpop.permute.xlu0 %1711
  %1713 = vrot.lane.b32.xlu0 %v1685, 64
  %v1714 = vpop.permute.xlu0 %1713
  %1715 = vrot.lane.b32.xlu0 %v1686, 64
  %v1716 = vpop.permute.xlu0 %1715
  %1717 = vrot.lane.b32.xlu0 %v1687, 64
  %v1718 = vpop.permute.xlu0 %1717
  %1719 = vrot.lane.b32.xlu0 %v1688, 64
  %v1720 = vpop.permute.xlu0 %1719
  %1721 = vrot.lane.b32.xlu0 %v1689, 64
  %v1722 = vpop.permute.xlu0 %1721
  %1723 = vrot.lane.b32.xlu0 %v1690, 64
  %v1724 = vpop.permute.xlu0 %1723
  %1725 = vrot.lane.b32.xlu0 %v1691, 64
  %v1726 = vpop.permute.xlu0 %1725
  %1727 = vrot.lane.b32.xlu0 %v1692, 64
  %v1728 = vpop.permute.xlu0 %1727
  %1741 = vst.msk [vmem:[#allocation3 + $0x10] sm:$0xff] %vm1257, %v1706
  %1742 = vst.msk [vmem:[#allocation3 + $0x30] sm:$0xff] %vm1257, %v1708
  %1743 = vst.msk [vmem:[#allocation3 + $0x50] sm:$0xff] %vm1257, %v1710
  %1744 = vst.msk [vmem:[#allocation3 + $0x70] sm:$0xff] %vm1257, %v1712
  %1745 = vst.msk [vmem:[#allocation3 + $0x90] sm:$0xff] %vm1257, %v1714
  %1746 = vst.msk [vmem:[#allocation3 + $0xb0] sm:$0xff] %vm1257, %v1716
  %1747 = vst.msk [vmem:[#allocation3 + $0xd0] sm:$0xff] %vm1257, %v1718
  %1748 = vst.msk [vmem:[#allocation3 + $0xf0] sm:$0xff] %vm1257, %v1720
  %1749 = vst.msk [vmem:[#allocation3 + $0x110] sm:$0xff] %vm1257, %v1722
  %1750 = vst.msk [vmem:[#allocation3 + $0x130] sm:$0xff] %vm1257, %v1724
  %1751 = vst.msk [vmem:[#allocation3 + $0x150] sm:$0xff] %vm1257, %v1726
  %1752 = vst.msk [vmem:[#allocation3 + $0x170] sm:$0x3] %vm1269, %v1728
  %v1753 = vld [vmem:[#allocation2 + $0x6f] sm:$0xff]
  %v1754 = vld [vmem:[#allocation2 + $0x77] sm:$0xff]
  %v1755 = vld [vmem:[#allocation2 + $0x7f] sm:$0xff]
  %v1756 = vld [vmem:[#allocation2 + $0x87] sm:$0xff]
  %v1757 = vld [vmem:[#allocation2 + $0x8f] sm:$0xff]
  %v1758 = vld [vmem:[#allocation2 + $0x97] sm:$0xff]
  %v1759 = vld [vmem:[#allocation2 + $0x9f] sm:$0xff]
  %v1760 = vld [vmem:[#allocation2 + $0xa7] sm:$0xff]
  %v1761 = vld [vmem:[#allocation2 + $0xaf] sm:$0xff]
  %v1762 = vld [vmem:[#allocation2 + $0xb7] sm:$0xff]
  %v1763 = vld [vmem:[#allocation2 + $0xbf] sm:$0xff]
  %v1764 = vld [vmem:[#allocation2 + $0xc7] sm:$0x3]
  %1777 = vrot.lane.b32.xlu0 %v1753, 96
  %v1778 = vpop.permute.xlu0 %1777
  %1779 = vrot.lane.b32.xlu0 %v1754, 96
  %v1780 = vpop.permute.xlu0 %1779
  %1781 = vrot.lane.b32.xlu0 %v1755, 96
  %v1782 = vpop.permute.xlu0 %1781
  %1783 = vrot.lane.b32.xlu0 %v1756, 96
  %v1784 = vpop.permute.xlu0 %1783
  %1785 = vrot.lane.b32.xlu0 %v1757, 96
  %v1786 = vpop.permute.xlu0 %1785
  %1787 = vrot.lane.b32.xlu0 %v1758, 96
  %v1788 = vpop.permute.xlu0 %1787
  %1789 = vrot.lane.b32.xlu0 %v1759, 96
  %v1790 = vpop.permute.xlu0 %1789
  %1791 = vrot.lane.b32.xlu0 %v1760, 96
  %v1792 = vpop.permute.xlu0 %1791
  %1793 = vrot.lane.b32.xlu0 %v1761, 96
  %v1794 = vpop.permute.xlu0 %1793
  %1795 = vrot.lane.b32.xlu0 %v1762, 96
  %v1796 = vpop.permute.xlu0 %1795
  %1797 = vrot.lane.b32.xlu0 %v1763, 96
  %v1798 = vpop.permute.xlu0 %1797
  %1799 = vrot.lane.b32.xlu0 %v1764, 96
  %v1800 = vpop.permute.xlu0 %1799
  %1813 = vst.msk [vmem:[#allocation3 + $0x10] sm:$0xff] %vm1331, %v1778
  %1814 = vst.msk [vmem:[#allocation3 + $0x30] sm:$0xff] %vm1331, %v1780
  %1815 = vst.msk [vmem:[#allocation3 + $0x50] sm:$0xff] %vm1331, %v1782
  %1816 = vst.msk [vmem:[#allocation3 + $0x70] sm:$0xff] %vm1331, %v1784
  %1817 = vst.msk [vmem:[#allocation3 + $0x90] sm:$0xff] %vm1331, %v1786
  %1818 = vst.msk [vmem:[#allocation3 + $0xb0] sm:$0xff] %vm1331, %v1788
  %1819 = vst.msk [vmem:[#allocation3 + $0xd0] sm:$0xff] %vm1331, %v1790
  %1820 = vst.msk [vmem:[#allocation3 + $0xf0] sm:$0xff] %vm1331, %v1792
  %1821 = vst.msk [vmem:[#allocation3 + $0x110] sm:$0xff] %vm1331, %v1794
  %1822 = vst.msk [vmem:[#allocation3 + $0x130] sm:$0xff] %vm1331, %v1796
  %1823 = vst.msk [vmem:[#allocation3 + $0x150] sm:$0xff] %vm1331, %v1798
  %1824 = vst.msk [vmem:[#allocation3 + $0x170] sm:$0x3] %vm1343, %v1800
  %v1825 = vld [vmem:[#allocation2 + $0xd2] sm:$0xff]
  %v1826 = vld [vmem:[#allocation2 + $0xda] sm:$0xff]
  %v1827 = vld [vmem:[#allocation2 + $0xe2] sm:$0xff]
  %v1828 = vld [vmem:[#allocation2 + $0xea] sm:$0xff]
  %v1829 = vld [vmem:[#allocation2 + $0xf2] sm:$0xff]
  %v1830 = vld [vmem:[#allocation2 + $0xfa] sm:$0xff]
  %v1831 = vld [vmem:[#allocation2 + $0x102] sm:$0xff]
  %v1832 = vld [vmem:[#allocation2 + $0x10a] sm:$0xff]
  %v1833 = vld [vmem:[#allocation2 + $0x112] sm:$0xff]
  %v1834 = vld [vmem:[#allocation2 + $0x11a] sm:$0xff]
  %v1835 = vld [vmem:[#allocation2 + $0x122] sm:$0xff]
  %v1836 = vld [vmem:[#allocation2 + $0x12a] sm:$0x3]
  %1837 = vst.msk [vmem:[#allocation3 + $0x18] sm:$0xff] %vm996, %v1825
  %1838 = vst.msk [vmem:[#allocation3 + $0x38] sm:$0xff] %vm996, %v1826
  %1839 = vst.msk [vmem:[#allocation3 + $0x58] sm:$0xff] %vm996, %v1827
  %1840 = vst.msk [vmem:[#allocation3 + $0x78] sm:$0xff] %vm996, %v1828
  %1841 = vst.msk [vmem:[#allocation3 + $0x98] sm:$0xff] %vm996, %v1829
  %1842 = vst.msk [vmem:[#allocation3 + $0xb8] sm:$0xff] %vm996, %v1830
  %1843 = vst.msk [vmem:[#allocation3 + $0xd8] sm:$0xff] %vm996, %v1831
  %1844 = vst.msk [vmem:[#allocation3 + $0xf8] sm:$0xff] %vm996, %v1832
  %1845 = vst.msk [vmem:[#allocation3 + $0x118] sm:$0xff] %vm996, %v1833
  %1846 = vst.msk [vmem:[#allocation3 + $0x138] sm:$0xff] %vm996, %v1834
  %1847 = vst.msk [vmem:[#allocation3 + $0x158] sm:$0xff] %vm996, %v1835
  %1848 = vst.msk [vmem:[#allocation3 + $0x178] sm:$0x3] %vm1121, %v1836
  %v1849 = vld [vmem:[#allocation2 + $0x136] sm:$0xff]
  %v1850 = vld [vmem:[#allocation2 + $0x13e] sm:$0xff]
  %v1851 = vld [vmem:[#allocation2 + $0x146] sm:$0xff]
  %v1852 = vld [vmem:[#allocation2 + $0x14e] sm:$0xff]
  %v1853 = vld [vmem:[#allocation2 + $0x156] sm:$0xff]
  %v1854 = vld [vmem:[#allocation2 + $0x15e] sm:$0xff]
  %v1855 = vld [vmem:[#allocation2 + $0x166] sm:$0xff]
  %v1856 = vld [vmem:[#allocation2 + $0x16e] sm:$0xff]
  %v1857 = vld [vmem:[#allocation2 + $0x176] sm:$0xff]
  %v1858 = vld [vmem:[#allocation2 + $0x17e] sm:$0xff]
  %v1859 = vld [vmem:[#allocation2 + $0x186] sm:$0xff]
  %v1860 = vld [vmem:[#allocation2 + $0x18e] sm:$0x3]
  %1873 = vrot.lane.b32.xlu0 %v1849, 32
  %v1874 = vpop.permute.xlu0 %1873
  %1875 = vrot.lane.b32.xlu0 %v1850, 32
  %v1876 = vpop.permute.xlu0 %1875
  %1877 = vrot.lane.b32.xlu0 %v1851, 32
  %v1878 = vpop.permute.xlu0 %1877
  %1879 = vrot.lane.b32.xlu0 %v1852, 32
  %v1880 = vpop.permute.xlu0 %1879
  %1881 = vrot.lane.b32.xlu0 %v1853, 32
  %v1882 = vpop.permute.xlu0 %1881
  %1883 = vrot.lane.b32.xlu0 %v1854, 32
  %v1884 = vpop.permute.xlu0 %1883
  %1885 = vrot.lane.b32.xlu0 %v1855, 32
  %v1886 = vpop.permute.xlu0 %1885
  %1887 = vrot.lane.b32.xlu0 %v1856, 32
  %v1888 = vpop.permute.xlu0 %1887
  %1889 = vrot.lane.b32.xlu0 %v1857, 32
  %v1890 = vpop.permute.xlu0 %1889
  %1891 = vrot.lane.b32.xlu0 %v1858, 32
  %v1892 = vpop.permute.xlu0 %1891
  %1893 = vrot.lane.b32.xlu0 %v1859, 32
  %v1894 = vpop.permute.xlu0 %1893
  %1895 = vrot.lane.b32.xlu0 %v1860, 32
  %v1896 = vpop.permute.xlu0 %1895
  %1909 = vst.msk [vmem:[#allocation3 + $0x18] sm:$0xff] %vm1183, %v1874
  %1910 = vst.msk [vmem:[#allocation3 + $0x38] sm:$0xff] %vm1183, %v1876
  %1911 = vst.msk [vmem:[#allocation3 + $0x58] sm:$0xff] %vm1183, %v1878
  %1912 = vst.msk [vmem:[#allocation3 + $0x78] sm:$0xff] %vm1183, %v1880
  %1913 = vst.msk [vmem:[#allocation3 + $0x98] sm:$0xff] %vm1183, %v1882
  %1914 = vst.msk [vmem:[#allocation3 + $0xb8] sm:$0xff] %vm1183, %v1884
  %1915 = vst.msk [vmem:[#allocation3 + $0xd8] sm:$0xff] %vm1183, %v1886
  %1916 = vst.msk [vmem:[#allocation3 + $0xf8] sm:$0xff] %vm1183, %v1888
  %1917 = vst.msk [vmem:[#allocation3 + $0x118] sm:$0xff] %vm1183, %v1890
  %1918 = vst.msk [vmem:[#allocation3 + $0x138] sm:$0xff] %vm1183, %v1892
  %1919 = vst.msk [vmem:[#allocation3 + $0x158] sm:$0xff] %vm1183, %v1894
  %1920 = vst.msk [vmem:[#allocation3 + $0x178] sm:$0x3] %vm1195, %v1896
  %v1921 = vld [vmem:[#allocation2 + $0xd3] sm:$0xff]
  %v1922 = vld [vmem:[#allocation2 + $0xdb] sm:$0xff]
  %v1923 = vld [vmem:[#allocation2 + $0xe3] sm:$0xff]
  %v1924 = vld [vmem:[#allocation2 + $0xeb] sm:$0xff]
  %v1925 = vld [vmem:[#allocation2 + $0xf3] sm:$0xff]
  %v1926 = vld [vmem:[#allocation2 + $0xfb] sm:$0xff]
  %v1927 = vld [vmem:[#allocation2 + $0x103] sm:$0xff]
  %v1928 = vld [vmem:[#allocation2 + $0x10b] sm:$0xff]
  %v1929 = vld [vmem:[#allocation2 + $0x113] sm:$0xff]
  %v1930 = vld [vmem:[#allocation2 + $0x11b] sm:$0xff]
  %v1931 = vld [vmem:[#allocation2 + $0x123] sm:$0xff]
  %v1932 = vld [vmem:[#allocation2 + $0x12b] sm:$0x3]
  %1945 = vrot.lane.b32.xlu0 %v1921, 64
  %v1946 = vpop.permute.xlu0 %1945
  %1947 = vrot.lane.b32.xlu0 %v1922, 64
  %v1948 = vpop.permute.xlu0 %1947
  %1949 = vrot.lane.b32.xlu0 %v1923, 64
  %v1950 = vpop.permute.xlu0 %1949
  %1951 = vrot.lane.b32.xlu0 %v1924, 64
  %v1952 = vpop.permute.xlu0 %1951
  %1953 = vrot.lane.b32.xlu0 %v1925, 64
  %v1954 = vpop.permute.xlu0 %1953
  %1955 = vrot.lane.b32.xlu0 %v1926, 64
  %v1956 = vpop.permute.xlu0 %1955
  %1957 = vrot.lane.b32.xlu0 %v1927, 64
  %v1958 = vpop.permute.xlu0 %1957
  %1959 = vrot.lane.b32.xlu0 %v1928, 64
  %v1960 = vpop.permute.xlu0 %1959
  %1961 = vrot.lane.b32.xlu0 %v1929, 64
  %v1962 = vpop.permute.xlu0 %1961
  %1963 = vrot.lane.b32.xlu0 %v1930, 64
  %v1964 = vpop.permute.xlu0 %1963
  %1965 = vrot.lane.b32.xlu0 %v1931, 64
  %v1966 = vpop.permute.xlu0 %1965
  %1967 = vrot.lane.b32.xlu0 %v1932, 64
  %v1968 = vpop.permute.xlu0 %1967
  %1981 = vst.msk [vmem:[#allocation3 + $0x18] sm:$0xff] %vm1257, %v1946
  %1982 = vst.msk [vmem:[#allocation3 + $0x38] sm:$0xff] %vm1257, %v1948
  %1983 = vst.msk [vmem:[#allocation3 + $0x58] sm:$0xff] %vm1257, %v1950
  %1984 = vst.msk [vmem:[#allocation3 + $0x78] sm:$0xff] %vm1257, %v1952
  %1985 = vst.msk [vmem:[#allocation3 + $0x98] sm:$0xff] %vm1257, %v1954
  %1986 = vst.msk [vmem:[#allocation3 + $0xb8] sm:$0xff] %vm1257, %v1956
  %1987 = vst.msk [vmem:[#allocation3 + $0xd8] sm:$0xff] %vm1257, %v1958
  %1988 = vst.msk [vmem:[#allocation3 + $0xf8] sm:$0xff] %vm1257, %v1960
  %1989 = vst.msk [vmem:[#allocation3 + $0x118] sm:$0xff] %vm1257, %v1962
  %1990 = vst.msk [vmem:[#allocation3 + $0x138] sm:$0xff] %vm1257, %v1964
  %1991 = vst.msk [vmem:[#allocation3 + $0x158] sm:$0xff] %vm1257, %v1966
  %1992 = vst.msk [vmem:[#allocation3 + $0x178] sm:$0x3] %vm1269, %v1968
  %v1993 = vld [vmem:[#allocation2 + $0x137] sm:$0xff]
  %v1994 = vld [vmem:[#allocation2 + $0x13f] sm:$0xff]
  %v1995 = vld [vmem:[#allocation2 + $0x147] sm:$0xff]
  %v1996 = vld [vmem:[#allocation2 + $0x14f] sm:$0xff]
  %v1997 = vld [vmem:[#allocation2 + $0x157] sm:$0xff]
  %v1998 = vld [vmem:[#allocation2 + $0x15f] sm:$0xff]
  %v1999 = vld [vmem:[#allocation2 + $0x167] sm:$0xff]
  %v2000 = vld [vmem:[#allocation2 + $0x16f] sm:$0xff]
  %v2001 = vld [vmem:[#allocation2 + $0x177] sm:$0xff]
  %v2002 = vld [vmem:[#allocation2 + $0x17f] sm:$0xff]
  %v2003 = vld [vmem:[#allocation2 + $0x187] sm:$0xff]
  %v2004 = vld [vmem:[#allocation2 + $0x18f] sm:$0x3]
  %2017 = vrot.lane.b32.xlu0 %v1993, 96
  %v2018 = vpop.permute.xlu0 %2017
  %2019 = vrot.lane.b32.xlu0 %v1994, 96
  %v2020 = vpop.permute.xlu0 %2019
  %2021 = vrot.lane.b32.xlu0 %v1995, 96
  %v2022 = vpop.permute.xlu0 %2021
  %2023 = vrot.lane.b32.xlu0 %v1996, 96
  %v2024 = vpop.permute.xlu0 %2023
  %2025 = vrot.lane.b32.xlu0 %v1997, 96
  %v2026 = vpop.permute.xlu0 %2025
  %2027 = vrot.lane.b32.xlu0 %v1998, 96
  %v2028 = vpop.permute.xlu0 %2027
  %2029 = vrot.lane.b32.xlu0 %v1999, 96
  %v2030 = vpop.permute.xlu0 %2029
  %2031 = vrot.lane.b32.xlu0 %v2000, 96
  %v2032 = vpop.permute.xlu0 %2031
  %2033 = vrot.lane.b32.xlu0 %v2001, 96
  %v2034 = vpop.permute.xlu0 %2033
  %2035 = vrot.lane.b32.xlu0 %v2002, 96
  %v2036 = vpop.permute.xlu0 %2035
  %2037 = vrot.lane.b32.xlu0 %v2003, 96
  %v2038 = vpop.permute.xlu0 %2037
  %2039 = vrot.lane.b32.xlu0 %v2004, 96
  %v2040 = vpop.permute.xlu0 %2039
  %2053 = vst.msk [vmem:[#allocation3 + $0x18] sm:$0xff] %vm1331, %v2018
  %2054 = vst.msk [vmem:[#allocation3 + $0x38] sm:$0xff] %vm1331, %v2020
  %2055 = vst.msk [vmem:[#allocation3 + $0x58] sm:$0xff] %vm1331, %v2022
  %2056 = vst.msk [vmem:[#allocation3 + $0x78] sm:$0xff] %vm1331, %v2024
  %2057 = vst.msk [vmem:[#allocation3 + $0x98] sm:$0xff] %vm1331, %v2026
  %2058 = vst.msk [vmem:[#allocation3 + $0xb8] sm:$0xff] %vm1331, %v2028
  %2059 = vst.msk [vmem:[#allocation3 + $0xd8] sm:$0xff] %vm1331, %v2030
  %2060 = vst.msk [vmem:[#allocation3 + $0xf8] sm:$0xff] %vm1331, %v2032
  %2061 = vst.msk [vmem:[#allocation3 + $0x118] sm:$0xff] %vm1331, %v2034
  %2062 = vst.msk [vmem:[#allocation3 + $0x138] sm:$0xff] %vm1331, %v2036
  %2063 = vst.msk [vmem:[#allocation3 + $0x158] sm:$0xff] %vm1331, %v2038
  %2064 = vst.msk [vmem:[#allocation3 + $0x178] sm:$0x3] %vm1343, %v2040
  %v2065 = vld [vmem:[#allocation2 + $0x190] sm:$0xff]
  %v2066 = vld [vmem:[#allocation2 + $0x198] sm:$0xff]
  %v2067 = vld [vmem:[#allocation2 + $0x1a0] sm:$0xff]
  %v2068 = vld [vmem:[#allocation2 + $0x1a8] sm:$0xff]
  %v2069 = vld [vmem:[#allocation2 + $0x1b0] sm:$0xff]
  %v2070 = vld [vmem:[#allocation2 + $0x1b8] sm:$0xff]
  %v2071 = vld [vmem:[#allocation2 + $0x1c0] sm:$0xff]
  %v2072 = vld [vmem:[#allocation2 + $0x1c8] sm:$0xff]
  %v2073 = vld [vmem:[#allocation2 + $0x1d0] sm:$0xff]
  %v2074 = vld [vmem:[#allocation2 + $0x1d8] sm:$0xff]
  %v2075 = vld [vmem:[#allocation2 + $0x1e0] sm:$0xff]
  %v2076 = vld [vmem:[#allocation2 + $0x1e8] sm:$0x3]
  %vm2089 = vcmask 1041408
  %v2090 = vrot.slane %v2065, 6
  %v2091 = vrot.slane %v2066, 6
  %v2092 = vsel %vm2089, %v2090, %v2091
  %v2093 = vrot.slane %v2067, 6
  %v2094 = vsel %vm2089, %v2091, %v2093
  %v2095 = vrot.slane %v2068, 6
  %v2096 = vsel %vm2089, %v2093, %v2095
  %v2097 = vrot.slane %v2069, 6
  %v2098 = vsel %vm2089, %v2095, %v2097
  %v2099 = vrot.slane %v2070, 6
  %v2100 = vsel %vm2089, %v2097, %v2099
  %v2101 = vrot.slane %v2071, 6
  %v2102 = vsel %vm2089, %v2099, %v2101
  %v2103 = vrot.slane %v2072, 6
  %v2104 = vsel %vm2089, %v2101, %v2103
  %v2105 = vrot.slane %v2073, 6
  %v2106 = vsel %vm2089, %v2103, %v2105
  %v2107 = vrot.slane %v2074, 6
  %v2108 = vsel %vm2089, %v2105, %v2107
  %v2109 = vrot.slane %v2075, 6
  %v2110 = vsel %vm2089, %v2107, %v2109
  %v2111 = vrot.slane %v2076, 6
  %v2112 = vsel %vm2089, %v2109, %v2111
  %vm2125 = vcmask 261122
  %2126 = vst.msk [vmem:[#allocation3 + $0x160] sm:$0xfc] %vm2125, %v2090
  %2127 = vst.msk [vmem:[#allocation3 + $0x180] sm:$0xff] %vm996, %v2092
  %2128 = vst.msk [vmem:[#allocation3 + $0x1a0] sm:$0xff] %vm996, %v2094
  %2129 = vst.msk [vmem:[#allocation3 + $0x1c0] sm:$0xff] %vm996, %v2096
  %2130 = vst.msk [vmem:[#allocation3 + $0x1e0] sm:$0xff] %vm996, %v2098
  %2131 = vst.msk [vmem:[#allocation3 + $0x200] sm:$0xff] %vm996, %v2100
  %2132 = vst.msk [vmem:[#allocation3 + $0x220] sm:$0xff] %vm996, %v2102
  %2133 = vst.msk [vmem:[#allocation3 + $0x240] sm:$0xff] %vm996, %v2104
  %2134 = vst.msk [vmem:[#allocation3 + $0x260] sm:$0xff] %vm996, %v2106
  %2135 = vst.msk [vmem:[#allocation3 + $0x280] sm:$0xff] %vm996, %v2108
  %2136 = vst.msk [vmem:[#allocation3 + $0x2a0] sm:$0xff] %vm996, %v2110
  %vm2137 = vcmask 257024
  %2138 = vst.msk [vmem:[#allocation3 + $0x2c0] sm:$0xf] %vm2137, %v2112
  %v2139 = vld [vmem:[#allocation2 + $0x1f4] sm:$0xff]
  %v2140 = vld [vmem:[#allocation2 + $0x1fc] sm:$0xff]
  %v2141 = vld [vmem:[#allocation2 + $0x204] sm:$0xff]
  %v2142 = vld [vmem:[#allocation2 + $0x20c] sm:$0xff]
  %v2143 = vld [vmem:[#allocation2 + $0x214] sm:$0xff]
  %v2144 = vld [vmem:[#allocation2 + $0x21c] sm:$0xff]
  %v2145 = vld [vmem:[#allocation2 + $0x224] sm:$0xff]
  %v2146 = vld [vmem:[#allocation2 + $0x22c] sm:$0xff]
  %v2147 = vld [vmem:[#allocation2 + $0x234] sm:$0xff]
  %v2148 = vld [vmem:[#allocation2 + $0x23c] sm:$0xff]
  %v2149 = vld [vmem:[#allocation2 + $0x244] sm:$0xff]
  %v2150 = vld [vmem:[#allocation2 + $0x24c] sm:$0x3]
  %v2163 = vrot.slane %v2139, 6
  %v2164 = vrot.slane %v2140, 6
  %v2165 = vsel %vm2089, %v2163, %v2164
  %v2166 = vrot.slane %v2141, 6
  %v2167 = vsel %vm2089, %v2164, %v2166
  %v2168 = vrot.slane %v2142, 6
  %v2169 = vsel %vm2089, %v2166, %v2168
  %v2170 = vrot.slane %v2143, 6
  %v2171 = vsel %vm2089, %v2168, %v2170
  %v2172 = vrot.slane %v2144, 6
  %v2173 = vsel %vm2089, %v2170, %v2172
  %v2174 = vrot.slane %v2145, 6
  %v2175 = vsel %vm2089, %v2172, %v2174
  %v2176 = vrot.slane %v2146, 6
  %v2177 = vsel %vm2089, %v2174, %v2176
  %v2178 = vrot.slane %v2147, 6
  %v2179 = vsel %vm2089, %v2176, %v2178
  %v2180 = vrot.slane %v2148, 6
  %v2181 = vsel %vm2089, %v2178, %v2180
  %v2182 = vrot.slane %v2149, 6
  %v2183 = vsel %vm2089, %v2180, %v2182
  %v2184 = vrot.slane %v2150, 6
  %v2185 = vsel %vm2089, %v2182, %v2184
  %2186 = vrot.lane.b32.xlu0 %v2163, 32
  %v2187 = vpop.permute.xlu0 %2186
  %2188 = vrot.lane.b32.xlu0 %v2165, 32
  %v2189 = vpop.permute.xlu0 %2188
  %2190 = vrot.lane.b32.xlu0 %v2167, 32
  %v2191 = vpop.permute.xlu0 %2190
  %2192 = vrot.lane.b32.xlu0 %v2169, 32
  %v2193 = vpop.permute.xlu0 %2192
  %2194 = vrot.lane.b32.xlu0 %v2171, 32
  %v2195 = vpop.permute.xlu0 %2194
  %2196 = vrot.lane.b32.xlu0 %v2173, 32
  %v2197 = vpop.permute.xlu0 %2196
  %2198 = vrot.lane.b32.xlu0 %v2175, 32
  %v2199 = vpop.permute.xlu0 %2198
  %2200 = vrot.lane.b32.xlu0 %v2177, 32
  %v2201 = vpop.permute.xlu0 %2200
  %2202 = vrot.lane.b32.xlu0 %v2179, 32
  %v2203 = vpop.permute.xlu0 %2202
  %2204 = vrot.lane.b32.xlu0 %v2181, 32
  %v2205 = vpop.permute.xlu0 %2204
  %2206 = vrot.lane.b32.xlu0 %v2183, 32
  %v2207 = vpop.permute.xlu0 %2206
  %2208 = vrot.lane.b32.xlu0 %v2185, 32
  %v2209 = vpop.permute.xlu0 %2208
  %vm2222 = vcmask 523522
  %2223 = vst.msk [vmem:[#allocation3 + $0x160] sm:$0xfc] %vm2222, %v2187
  %2224 = vst.msk [vmem:[#allocation3 + $0x180] sm:$0xff] %vm1183, %v2189
  %2225 = vst.msk [vmem:[#allocation3 + $0x1a0] sm:$0xff] %vm1183, %v2191
  %2226 = vst.msk [vmem:[#allocation3 + $0x1c0] sm:$0xff] %vm1183, %v2193
  %2227 = vst.msk [vmem:[#allocation3 + $0x1e0] sm:$0xff] %vm1183, %v2195
  %2228 = vst.msk [vmem:[#allocation3 + $0x200] sm:$0xff] %vm1183, %v2197
  %2229 = vst.msk [vmem:[#allocation3 + $0x220] sm:$0xff] %vm1183, %v2199
  %2230 = vst.msk [vmem:[#allocation3 + $0x240] sm:$0xff] %vm1183, %v2201
  %2231 = vst.msk [vmem:[#allocation3 + $0x260] sm:$0xff] %vm1183, %v2203
  %2232 = vst.msk [vmem:[#allocation3 + $0x280] sm:$0xff] %vm1183, %v2205
  %2233 = vst.msk [vmem:[#allocation3 + $0x2a0] sm:$0xff] %vm1183, %v2207
  %vm2234 = vcmask 519424
  %2235 = vst.msk [vmem:[#allocation3 + $0x2c0] sm:$0xf] %vm2234, %v2209
  %v2236 = vld [vmem:[#allocation2 + $0x191] sm:$0xff]
  %v2237 = vld [vmem:[#allocation2 + $0x199] sm:$0xff]
  %v2238 = vld [vmem:[#allocation2 + $0x1a1] sm:$0xff]
  %v2239 = vld [vmem:[#allocation2 + $0x1a9] sm:$0xff]
  %v2240 = vld [vmem:[#allocation2 + $0x1b1] sm:$0xff]
  %v2241 = vld [vmem:[#allocation2 + $0x1b9] sm:$0xff]
  %v2242 = vld [vmem:[#allocation2 + $0x1c1] sm:$0xff]
  %v2243 = vld [vmem:[#allocation2 + $0x1c9] sm:$0xff]
  %v2244 = vld [vmem:[#allocation2 + $0x1d1] sm:$0xff]
  %v2245 = vld [vmem:[#allocation2 + $0x1d9] sm:$0xff]
  %v2246 = vld [vmem:[#allocation2 + $0x1e1] sm:$0xff]
  %v2247 = vld [vmem:[#allocation2 + $0x1e9] sm:$0x3]
  %v2260 = vrot.slane %v2236, 6
  %v2261 = vrot.slane %v2237, 6
  %v2262 = vsel %vm2089, %v2260, %v2261
  %v2263 = vrot.slane %v2238, 6
  %v2264 = vsel %vm2089, %v2261, %v2263
  %v2265 = vrot.slane %v2239, 6
  %v2266 = vsel %vm2089, %v2263, %v2265
  %v2267 = vrot.slane %v2240, 6
  %v2268 = vsel %vm2089, %v2265, %v2267
  %v2269 = vrot.slane %v2241, 6
  %v2270 = vsel %vm2089, %v2267, %v2269
  %v2271 = vrot.slane %v2242, 6
  %v2272 = vsel %vm2089, %v2269, %v2271
  %v2273 = vrot.slane %v2243, 6
  %v2274 = vsel %vm2089, %v2271, %v2273
  %v2275 = vrot.slane %v2244, 6
  %v2276 = vsel %vm2089, %v2273, %v2275
  %v2277 = vrot.slane %v2245, 6
  %v2278 = vsel %vm2089, %v2275, %v2277
  %v2279 = vrot.slane %v2246, 6
  %v2280 = vsel %vm2089, %v2277, %v2279
  %v2281 = vrot.slane %v2247, 6
  %v2282 = vsel %vm2089, %v2279, %v2281
  %2283 = vrot.lane.b32.xlu0 %v2260, 64
  %v2284 = vpop.permute.xlu0 %2283
  %2285 = vrot.lane.b32.xlu0 %v2262, 64
  %v2286 = vpop.permute.xlu0 %2285
  %2287 = vrot.lane.b32.xlu0 %v2264, 64
  %v2288 = vpop.permute.xlu0 %2287
  %2289 = vrot.lane.b32.xlu0 %v2266, 64
  %v2290 = vpop.permute.xlu0 %2289
  %2291 = vrot.lane.b32.xlu0 %v2268, 64
  %v2292 = vpop.permute.xlu0 %2291
  %2293 = vrot.lane.b32.xlu0 %v2270, 64
  %v2294 = vpop.permute.xlu0 %2293
  %2295 = vrot.lane.b32.xlu0 %v2272, 64
  %v2296 = vpop.permute.xlu0 %2295
  %2297 = vrot.lane.b32.xlu0 %v2274, 64
  %v2298 = vpop.permute.xlu0 %2297
  %2299 = vrot.lane.b32.xlu0 %v2276, 64
  %v2300 = vpop.permute.xlu0 %2299
  %2301 = vrot.lane.b32.xlu0 %v2278, 64
  %v2302 = vpop.permute.xlu0 %2301
  %2303 = vrot.lane.b32.xlu0 %v2280, 64
  %v2304 = vpop.permute.xlu0 %2303
  %2305 = vrot.lane.b32.xlu0 %v2282, 64
  %v2306 = vpop.permute.xlu0 %2305
  %vm2319 = vcmask 785922
  %2320 = vst.msk [vmem:[#allocation3 + $0x160] sm:$0xfc] %vm2319, %v2284
  %2321 = vst.msk [vmem:[#allocation3 + $0x180] sm:$0xff] %vm1257, %v2286
  %2322 = vst.msk [vmem:[#allocation3 + $0x1a0] sm:$0xff] %vm1257, %v2288
  %2323 = vst.msk [vmem:[#allocation3 + $0x1c0] sm:$0xff] %vm1257, %v2290
  %2324 = vst.msk [vmem:[#allocation3 + $0x1e0] sm:$0xff] %vm1257, %v2292
  %2325 = vst.msk [vmem:[#allocation3 + $0x200] sm:$0xff] %vm1257, %v2294
  %2326 = vst.msk [vmem:[#allocation3 + $0x220] sm:$0xff] %vm1257, %v2296
  %2327 = vst.msk [vmem:[#allocation3 + $0x240] sm:$0xff] %vm1257, %v2298
  %2328 = vst.msk [vmem:[#allocation3 + $0x260] sm:$0xff] %vm1257, %v2300
  %2329 = vst.msk [vmem:[#allocation3 + $0x280] sm:$0xff] %vm1257, %v2302
  %2330 = vst.msk [vmem:[#allocation3 + $0x2a0] sm:$0xff] %vm1257, %v2304
  %vm2331 = vcmask 781824
  %2332 = vst.msk [vmem:[#allocation3 + $0x2c0] sm:$0xf] %vm2331, %v2306
  %v2333 = vld [vmem:[#allocation2 + $0x1f5] sm:$0xff]
  %v2334 = vld [vmem:[#allocation2 + $0x1fd] sm:$0xff]
  %v2335 = vld [vmem:[#allocation2 + $0x205] sm:$0xff]
  %v2336 = vld [vmem:[#allocation2 + $0x20d] sm:$0xff]
  %v2337 = vld [vmem:[#allocation2 + $0x215] sm:$0xff]
  %v2338 = vld [vmem:[#allocation2 + $0x21d] sm:$0xff]
  %v2339 = vld [vmem:[#allocation2 + $0x225] sm:$0xff]
  %v2340 = vld [vmem:[#allocation2 + $0x22d] sm:$0xff]
  %v2341 = vld [vmem:[#allocation2 + $0x235] sm:$0xff]
  %v2342 = vld [vmem:[#allocation2 + $0x23d] sm:$0xff]
  %v2343 = vld [vmem:[#allocation2 + $0x245] sm:$0xff]
  %v2344 = vld [vmem:[#allocation2 + $0x24d] sm:$0x3]
  %v2357 = vrot.slane %v2333, 6
  %v2358 = vrot.slane %v2334, 6
  %v2359 = vsel %vm2089, %v2357, %v2358
  %v2360 = vrot.slane %v2335, 6
  %v2361 = vsel %vm2089, %v2358, %v2360
  %v2362 = vrot.slane %v2336, 6
  %v2363 = vsel %vm2089, %v2360, %v2362
  %v2364 = vrot.slane %v2337, 6
  %v2365 = vsel %vm2089, %v2362, %v2364
  %v2366 = vrot.slane %v2338, 6
  %v2367 = vsel %vm2089, %v2364, %v2366
  %v2368 = vrot.slane %v2339, 6
  %v2369 = vsel %vm2089, %v2366, %v2368
  %v2370 = vrot.slane %v2340, 6
  %v2371 = vsel %vm2089, %v2368, %v2370
  %v2372 = vrot.slane %v2341, 6
  %v2373 = vsel %vm2089, %v2370, %v2372
  %v2374 = vrot.slane %v2342, 6
  %v2375 = vsel %vm2089, %v2372, %v2374
  %v2376 = vrot.slane %v2343, 6
  %v2377 = vsel %vm2089, %v2374, %v2376
  %v2378 = vrot.slane %v2344, 6
  %v2379 = vsel %vm2089, %v2376, %v2378
  %2380 = vrot.lane.b32.xlu0 %v2357, 96
  %v2381 = vpop.permute.xlu0 %2380
  %2382 = vrot.lane.b32.xlu0 %v2359, 96
  %v2383 = vpop.permute.xlu0 %2382
  %2384 = vrot.lane.b32.xlu0 %v2361, 96
  %v2385 = vpop.permute.xlu0 %2384
  %2386 = vrot.lane.b32.xlu0 %v2363, 96
  %v2387 = vpop.permute.xlu0 %2386
  %2388 = vrot.lane.b32.xlu0 %v2365, 96
  %v2389 = vpop.permute.xlu0 %2388
  %2390 = vrot.lane.b32.xlu0 %v2367, 96
  %v2391 = vpop.permute.xlu0 %2390
  %2392 = vrot.lane.b32.xlu0 %v2369, 96
  %v2393 = vpop.permute.xlu0 %2392
  %2394 = vrot.lane.b32.xlu0 %v2371, 96
  %v2395 = vpop.permute.xlu0 %2394
  %2396 = vrot.lane.b32.xlu0 %v2373, 96
  %v2397 = vpop.permute.xlu0 %2396
  %2398 = vrot.lane.b32.xlu0 %v2375, 96
  %v2399 = vpop.permute.xlu0 %2398
  %2400 = vrot.lane.b32.xlu0 %v2377, 96
  %v2401 = vpop.permute.xlu0 %2400
  %2402 = vrot.lane.b32.xlu0 %v2379, 96
  %v2403 = vpop.permute.xlu0 %2402
  %vm2416 = vcmask 1048322
  %2417 = vst.msk [vmem:[#allocation3 + $0x160] sm:$0xfc] %vm2416, %v2381
  %2418 = vst.msk [vmem:[#allocation3 + $0x180] sm:$0xff] %vm1331, %v2383
  %2419 = vst.msk [vmem:[#allocation3 + $0x1a0] sm:$0xff] %vm1331, %v2385
  %2420 = vst.msk [vmem:[#allocation3 + $0x1c0] sm:$0xff] %vm1331, %v2387
  %2421 = vst.msk [vmem:[#allocation3 + $0x1e0] sm:$0xff] %vm1331, %v2389
  %2422 = vst.msk [vmem:[#allocation3 + $0x200] sm:$0xff] %vm1331, %v2391
  %2423 = vst.msk [vmem:[#allocation3 + $0x220] sm:$0xff] %vm1331, %v2393
  %2424 = vst.msk [vmem:[#allocation3 + $0x240] sm:$0xff] %vm1331, %v2395
  %2425 = vst.msk [vmem:[#allocation3 + $0x260] sm:$0xff] %vm1331, %v2397
  %2426 = vst.msk [vmem:[#allocation3 + $0x280] sm:$0xff] %vm1331, %v2399
  %2427 = vst.msk [vmem:[#allocation3 + $0x2a0] sm:$0xff] %vm1331, %v2401
  %vm2428 = vcmask 1044224
  %2429 = vst.msk [vmem:[#allocation3 + $0x2c0] sm:$0xf] %vm2428, %v2403
  %v2430 = vld [vmem:[#allocation2 + $0x258] sm:$0xff]
  %v2431 = vld [vmem:[#allocation2 + $0x260] sm:$0xff]
  %v2432 = vld [vmem:[#allocation2 + $0x268] sm:$0xff]
  %v2433 = vld [vmem:[#allocation2 + $0x270] sm:$0xff]
  %v2434 = vld [vmem:[#allocation2 + $0x278] sm:$0xff]
  %v2435 = vld [vmem:[#allocation2 + $0x280] sm:$0xff]
  %v2436 = vld [vmem:[#allocation2 + $0x288] sm:$0xff]
  %v2437 = vld [vmem:[#allocation2 + $0x290] sm:$0xff]
  %v2438 = vld [vmem:[#allocation2 + $0x298] sm:$0xff]
  %v2439 = vld [vmem:[#allocation2 + $0x2a0] sm:$0xff]
  %v2440 = vld [vmem:[#allocation2 + $0x2a8] sm:$0xff]
  %v2441 = vld [vmem:[#allocation2 + $0x2b0] sm:$0x3]
  %v2454 = vrot.slane %v2430, 6
  %v2455 = vrot.slane %v2431, 6
  %v2456 = vsel %vm2089, %v2454, %v2455
  %v2457 = vrot.slane %v2432, 6
  %v2458 = vsel %vm2089, %v2455, %v2457
  %v2459 = vrot.slane %v2433, 6
  %v2460 = vsel %vm2089, %v2457, %v2459
  %v2461 = vrot.slane %v2434, 6
  %v2462 = vsel %vm2089, %v2459, %v2461
  %v2463 = vrot.slane %v2435, 6
  %v2464 = vsel %vm2089, %v2461, %v2463
  %v2465 = vrot.slane %v2436, 6
  %v2466 = vsel %vm2089, %v2463, %v2465
  %v2467 = vrot.slane %v2437, 6
  %v2468 = vsel %vm2089, %v2465, %v2467
  %v2469 = vrot.slane %v2438, 6
  %v2470 = vsel %vm2089, %v2467, %v2469
  %v2471 = vrot.slane %v2439, 6
  %v2472 = vsel %vm2089, %v2469, %v2471
  %v2473 = vrot.slane %v2440, 6
  %v2474 = vsel %vm2089, %v2471, %v2473
  %v2475 = vrot.slane %v2441, 6
  %v2476 = vsel %vm2089, %v2473, %v2475
  %2489 = vst.msk [vmem:[#allocation3 + $0x168] sm:$0xfc] %vm2125, %v2454
  %2490 = vst.msk [vmem:[#allocation3 + $0x188] sm:$0xff] %vm996, %v2456
  %2491 = vst.msk [vmem:[#allocation3 + $0x1a8] sm:$0xff] %vm996, %v2458
  %2492 = vst.msk [vmem:[#allocation3 + $0x1c8] sm:$0xff] %vm996, %v2460
  %2493 = vst.msk [vmem:[#allocation3 + $0x1e8] sm:$0xff] %vm996, %v2462
  %2494 = vst.msk [vmem:[#allocation3 + $0x208] sm:$0xff] %vm996, %v2464
  %2495 = vst.msk [vmem:[#allocation3 + $0x228] sm:$0xff] %vm996, %v2466
  %2496 = vst.msk [vmem:[#allocation3 + $0x248] sm:$0xff] %vm996, %v2468
  %2497 = vst.msk [vmem:[#allocation3 + $0x268] sm:$0xff] %vm996, %v2470
  %2498 = vst.msk [vmem:[#allocation3 + $0x288] sm:$0xff] %vm996, %v2472
  %2499 = vst.msk [vmem:[#allocation3 + $0x2a8] sm:$0xff] %vm996, %v2474
  %2500 = vst.msk [vmem:[#allocation3 + $0x2c8] sm:$0xf] %vm2137, %v2476
  %v2501 = vld [vmem:[#allocation2 + $0x2bc] sm:$0xff]
  %v2502 = vld [vmem:[#allocation2 + $0x2c4] sm:$0xff]
  %v2503 = vld [vmem:[#allocation2 + $0x2cc] sm:$0xff]
  %v2504 = vld [vmem:[#allocation2 + $0x2d4] sm:$0xff]
  %v2505 = vld [vmem:[#allocation2 + $0x2dc] sm:$0xff]
  %v2506 = vld [vmem:[#allocation2 + $0x2e4] sm:$0xff]
  %v2507 = vld [vmem:[#allocation2 + $0x2ec] sm:$0xff]
  %v2508 = vld [vmem:[#allocation2 + $0x2f4] sm:$0xff]
  %v2509 = vld [vmem:[#allocation2 + $0x2fc] sm:$0xff]
  %v2510 = vld [vmem:[#allocation2 + $0x304] sm:$0xff]
  %v2511 = vld [vmem:[#allocation2 + $0x30c] sm:$0xff]
  %v2512 = vld [vmem:[#allocation2 + $0x314] sm:$0x3]
  %v2525 = vrot.slane %v2501, 6
  %v2526 = vrot.slane %v2502, 6
  %v2527 = vsel %vm2089, %v2525, %v2526
  %v2528 = vrot.slane %v2503, 6
  %v2529 = vsel %vm2089, %v2526, %v2528
  %v2530 = vrot.slane %v2504, 6
  %v2531 = vsel %vm2089, %v2528, %v2530
  %v2532 = vrot.slane %v2505, 6
  %v2533 = vsel %vm2089, %v2530, %v2532
  %v2534 = vrot.slane %v2506, 6
  %v2535 = vsel %vm2089, %v2532, %v2534
  %v2536 = vrot.slane %v2507, 6
  %v2537 = vsel %vm2089, %v2534, %v2536
  %v2538 = vrot.slane %v2508, 6
  %v2539 = vsel %vm2089, %v2536, %v2538
  %v2540 = vrot.slane %v2509, 6
  %v2541 = vsel %vm2089, %v2538, %v2540
  %v2542 = vrot.slane %v2510, 6
  %v2543 = vsel %vm2089, %v2540, %v2542
  %v2544 = vrot.slane %v2511, 6
  %v2545 = vsel %vm2089, %v2542, %v2544
  %v2546 = vrot.slane %v2512, 6
  %v2547 = vsel %vm2089, %v2544, %v2546
  %2548 = vrot.lane.b32.xlu0 %v2525, 32
  %v2549 = vpop.permute.xlu0 %2548
  %2550 = vrot.lane.b32.xlu0 %v2527, 32
  %v2551 = vpop.permute.xlu0 %2550
  %2552 = vrot.lane.b32.xlu0 %v2529, 32
  %v2553 = vpop.permute.xlu0 %2552
  %2554 = vrot.lane.b32.xlu0 %v2531, 32
  %v2555 = vpop.permute.xlu0 %2554
  %2556 = vrot.lane.b32.xlu0 %v2533, 32
  %v2557 = vpop.permute.xlu0 %2556
  %2558 = vrot.lane.b32.xlu0 %v2535, 32
  %v2559 = vpop.permute.xlu0 %2558
  %2560 = vrot.lane.b32.xlu0 %v2537, 32
  %v2561 = vpop.permute.xlu0 %2560
  %2562 = vrot.lane.b32.xlu0 %v2539, 32
  %v2563 = vpop.permute.xlu0 %2562
  %2564 = vrot.lane.b32.xlu0 %v2541, 32
  %v2565 = vpop.permute.xlu0 %2564
  %2566 = vrot.lane.b32.xlu0 %v2543, 32
  %v2567 = vpop.permute.xlu0 %2566
  %2568 = vrot.lane.b32.xlu0 %v2545, 32
  %v2569 = vpop.permute.xlu0 %2568
  %2570 = vrot.lane.b32.xlu0 %v2547, 32
  %v2571 = vpop.permute.xlu0 %2570
  %2584 = vst.msk [vmem:[#allocation3 + $0x168] sm:$0xfc] %vm2222, %v2549
  %2585 = vst.msk [vmem:[#allocation3 + $0x188] sm:$0xff] %vm1183, %v2551
  %2586 = vst.msk [vmem:[#allocation3 + $0x1a8] sm:$0xff] %vm1183, %v2553
  %2587 = vst.msk [vmem:[#allocation3 + $0x1c8] sm:$0xff] %vm1183, %v2555
  %2588 = vst.msk [vmem:[#allocation3 + $0x1e8] sm:$0xff] %vm1183, %v2557
  %2589 = vst.msk [vmem:[#allocation3 + $0x208] sm:$0xff] %vm1183, %v2559
  %2590 = vst.msk [vmem:[#allocation3 + $0x228] sm:$0xff] %vm1183, %v2561
  %2591 = vst.msk [vmem:[#allocation3 + $0x248] sm:$0xff] %vm1183, %v2563
  %2592 = vst.msk [vmem:[#allocation3 + $0x268] sm:$0xff] %vm1183, %v2565
  %2593 = vst.msk [vmem:[#allocation3 + $0x288] sm:$0xff] %vm1183, %v2567
  %2594 = vst.msk [vmem:[#allocation3 + $0x2a8] sm:$0xff] %vm1183, %v2569
  %2595 = vst.msk [vmem:[#allocation3 + $0x2c8] sm:$0xf] %vm2234, %v2571
  %v2596 = vld [vmem:[#allocation2 + $0x259] sm:$0xff]
  %v2597 = vld [vmem:[#allocation2 + $0x261] sm:$0xff]
  %v2598 = vld [vmem:[#allocation2 + $0x269] sm:$0xff]
  %v2599 = vld [vmem:[#allocation2 + $0x271] sm:$0xff]
  %v2600 = vld [vmem:[#allocation2 + $0x279] sm:$0xff]
  %v2601 = vld [vmem:[#allocation2 + $0x281] sm:$0xff]
  %v2602 = vld [vmem:[#allocation2 + $0x289] sm:$0xff]
  %v2603 = vld [vmem:[#allocation2 + $0x291] sm:$0xff]
  %v2604 = vld [vmem:[#allocation2 + $0x299] sm:$0xff]
  %v2605 = vld [vmem:[#allocation2 + $0x2a1] sm:$0xff]
  %v2606 = vld [vmem:[#allocation2 + $0x2a9] sm:$0xff]
  %v2607 = vld [vmem:[#allocation2 + $0x2b1] sm:$0x3]
  %v2620 = vrot.slane %v2596, 6
  %v2621 = vrot.slane %v2597, 6
  %v2622 = vsel %vm2089, %v2620, %v2621
  %v2623 = vrot.slane %v2598, 6
  %v2624 = vsel %vm2089, %v2621, %v2623
  %v2625 = vrot.slane %v2599, 6
  %v2626 = vsel %vm2089, %v2623, %v2625
  %v2627 = vrot.slane %v2600, 6
  %v2628 = vsel %vm2089, %v2625, %v2627
  %v2629 = vrot.slane %v2601, 6
  %v2630 = vsel %vm2089, %v2627, %v2629
  %v2631 = vrot.slane %v2602, 6
  %v2632 = vsel %vm2089, %v2629, %v2631
  %v2633 = vrot.slane %v2603, 6
  %v2634 = vsel %vm2089, %v2631, %v2633
  %v2635 = vrot.slane %v2604, 6
  %v2636 = vsel %vm2089, %v2633, %v2635
  %v2637 = vrot.slane %v2605, 6
  %v2638 = vsel %vm2089, %v2635, %v2637
  %v2639 = vrot.slane %v2606, 6
  %v2640 = vsel %vm2089, %v2637, %v2639
  %v2641 = vrot.slane %v2607, 6
  %v2642 = vsel %vm2089, %v2639, %v2641
  %2643 = vrot.lane.b32.xlu0 %v2620, 64
  %v2644 = vpop.permute.xlu0 %2643
  %2645 = vrot.lane.b32.xlu0 %v2622, 64
  %v2646 = vpop.permute.xlu0 %2645
  %2647 = vrot.lane.b32.xlu0 %v2624, 64
  %v2648 = vpop.permute.xlu0 %2647
  %2649 = vrot.lane.b32.xlu0 %v2626, 64
  %v2650 = vpop.permute.xlu0 %2649
  %2651 = vrot.lane.b32.xlu0 %v2628, 64
  %v2652 = vpop.permute.xlu0 %2651
  %2653 = vrot.lane.b32.xlu0 %v2630, 64
  %v2654 = vpop.permute.xlu0 %2653
  %2655 = vrot.lane.b32.xlu0 %v2632, 64
  %v2656 = vpop.permute.xlu0 %2655
  %2657 = vrot.lane.b32.xlu0 %v2634, 64
  %v2658 = vpop.permute.xlu0 %2657
  %2659 = vrot.lane.b32.xlu0 %v2636, 64
  %v2660 = vpop.permute.xlu0 %2659
  %2661 = vrot.lane.b32.xlu0 %v2638, 64
  %v2662 = vpop.permute.xlu0 %2661
  %2663 = vrot.lane.b32.xlu0 %v2640, 64
  %v2664 = vpop.permute.xlu0 %2663
  %2665 = vrot.lane.b32.xlu0 %v2642, 64
  %v2666 = vpop.permute.xlu0 %2665
  %2679 = vst.msk [vmem:[#allocation3 + $0x168] sm:$0xfc] %vm2319, %v2644
  %2680 = vst.msk [vmem:[#allocation3 + $0x188] sm:$0xff] %vm1257, %v2646
  %2681 = vst.msk [vmem:[#allocation3 + $0x1a8] sm:$0xff] %vm1257, %v2648
  %2682 = vst.msk [vmem:[#allocation3 + $0x1c8] sm:$0xff] %vm1257, %v2650
  %2683 = vst.msk [vmem:[#allocation3 + $0x1e8] sm:$0xff] %vm1257, %v2652
  %2684 = vst.msk [vmem:[#allocation3 + $0x208] sm:$0xff] %vm1257, %v2654
  %2685 = vst.msk [vmem:[#allocation3 + $0x228] sm:$0xff] %vm1257, %v2656
  %2686 = vst.msk [vmem:[#allocation3 + $0x248] sm:$0xff] %vm1257, %v2658
  %2687 = vst.msk [vmem:[#allocation3 + $0x268] sm:$0xff] %vm1257, %v2660
  %2688 = vst.msk [vmem:[#allocation3 + $0x288] sm:$0xff] %vm1257, %v2662
  %2689 = vst.msk [vmem:[#allocation3 + $0x2a8] sm:$0xff] %vm1257, %v2664
  %2690 = vst.msk [vmem:[#allocation3 + $0x2c8] sm:$0xf] %vm2331, %v2666
  %v2691 = vld [vmem:[#allocation2 + $0x2bd] sm:$0xff]
  %v2692 = vld [vmem:[#allocation2 + $0x2c5] sm:$0xff]
  %v2693 = vld [vmem:[#allocation2 + $0x2cd] sm:$0xff]
  %v2694 = vld [vmem:[#allocation2 + $0x2d5] sm:$0xff]
  %v2695 = vld [vmem:[#allocation2 + $0x2dd] sm:$0xff]
  %v2696 = vld [vmem:[#allocation2 + $0x2e5] sm:$0xff]
  %v2697 = vld [vmem:[#allocation2 + $0x2ed] sm:$0xff]
  %v2698 = vld [vmem:[#allocation2 + $0x2f5] sm:$0xff]
  %v2699 = vld [vmem:[#allocation2 + $0x2fd] sm:$0xff]
  %v2700 = vld [vmem:[#allocation2 + $0x305] sm:$0xff]
  %v2701 = vld [vmem:[#allocation2 + $0x30d] sm:$0xff]
  %v2702 = vld [vmem:[#allocation2 + $0x315] sm:$0x3]
  %v2715 = vrot.slane %v2691, 6
  %v2716 = vrot.slane %v2692, 6
  %v2717 = vsel %vm2089, %v2715, %v2716
  %v2718 = vrot.slane %v2693, 6
  %v2719 = vsel %vm2089, %v2716, %v2718
  %v2720 = vrot.slane %v2694, 6
  %v2721 = vsel %vm2089, %v2718, %v2720
  %v2722 = vrot.slane %v2695, 6
  %v2723 = vsel %vm2089, %v2720, %v2722
  %v2724 = vrot.slane %v2696, 6
  %v2725 = vsel %vm2089, %v2722, %v2724
  %v2726 = vrot.slane %v2697, 6
  %v2727 = vsel %vm2089, %v2724, %v2726
  %v2728 = vrot.slane %v2698, 6
  %v2729 = vsel %vm2089, %v2726, %v2728
  %v2730 = vrot.slane %v2699, 6
  %v2731 = vsel %vm2089, %v2728, %v2730
  %v2732 = vrot.slane %v2700, 6
  %v2733 = vsel %vm2089, %v2730, %v2732
  %v2734 = vrot.slane %v2701, 6
  %v2735 = vsel %vm2089, %v2732, %v2734
  %v2736 = vrot.slane %v2702, 6
  %v2737 = vsel %vm2089, %v2734, %v2736
  %2738 = vrot.lane.b32.xlu0 %v2715, 96
  %v2739 = vpop.permute.xlu0 %2738
  %2740 = vrot.lane.b32.xlu0 %v2717, 96
  %v2741 = vpop.permute.xlu0 %2740
  %2742 = vrot.lane.b32.xlu0 %v2719, 96
  %v2743 = vpop.permute.xlu0 %2742
  %2744 = vrot.lane.b32.xlu0 %v2721, 96
  %v2745 = vpop.permute.xlu0 %2744
  %2746 = vrot.lane.b32.xlu0 %v2723, 96
  %v2747 = vpop.permute.xlu0 %2746
  %2748 = vrot.lane.b32.xlu0 %v2725, 96
  %v2749 = vpop.permute.xlu0 %2748
  %2750 = vrot.lane.b32.xlu0 %v2727, 96
  %v2751 = vpop.permute.xlu0 %2750
  %2752 = vrot.lane.b32.xlu0 %v2729, 96
  %v2753 = vpop.permute.xlu0 %2752
  %2754 = vrot.lane.b32.xlu0 %v2731, 96
  %v2755 = vpop.permute.xlu0 %2754
  %2756 = vrot.lane.b32.xlu0 %v2733, 96
  %v2757 = vpop.permute.xlu0 %2756
  %2758 = vrot.lane.b32.xlu0 %v2735, 96
  %v2759 = vpop.permute.xlu0 %2758
  %2760 = vrot.lane.b32.xlu0 %v2737, 96
  %v2761 = vpop.permute.xlu0 %2760
  %2774 = vst.msk [vmem:[#allocation3 + $0x168] sm:$0xfc] %vm2416, %v2739
  %2775 = vst.msk [vmem:[#allocation3 + $0x188] sm:$0xff] %vm1331, %v2741
  %2776 = vst.msk [vmem:[#allocation3 + $0x1a8] sm:$0xff] %vm1331, %v2743
  %2777 = vst.msk [vmem:[#allocation3 + $0x1c8] sm:$0xff] %vm1331, %v2745
  %2778 = vst.msk [vmem:[#allocation3 + $0x1e8] sm:$0xff] %vm1331, %v2747
  %2779 = vst.msk [vmem:[#allocation3 + $0x208] sm:$0xff] %vm1331, %v2749
  %2780 = vst.msk [vmem:[#allocation3 + $0x228] sm:$0xff] %vm1331, %v2751
  %2781 = vst.msk [vmem:[#allocation3 + $0x248] sm:$0xff] %vm1331, %v2753
  %2782 = vst.msk [vmem:[#allocation3 + $0x268] sm:$0xff] %vm1331, %v2755
  %2783 = vst.msk [vmem:[#allocation3 + $0x288] sm:$0xff] %vm1331, %v2757
  %2784 = vst.msk [vmem:[#allocation3 + $0x2a8] sm:$0xff] %vm1331, %v2759
  %2785 = vst.msk [vmem:[#allocation3 + $0x2c8] sm:$0xf] %vm2428, %v2761
  %v2786 = vld [vmem:[#allocation2 + $0x19a] sm:$0xff]
  %v2787 = vld [vmem:[#allocation2 + $0x1a2] sm:$0xff]
  %v2788 = vld [vmem:[#allocation2 + $0x1aa] sm:$0xff]
  %v2789 = vld [vmem:[#allocation2 + $0x1b2] sm:$0xff]
  %v2790 = vld [vmem:[#allocation2 + $0x1ba] sm:$0xff]
  %v2791 = vld [vmem:[#allocation2 + $0x1c2] sm:$0xff]
  %v2792 = vld [vmem:[#allocation2 + $0x1ca] sm:$0xff]
  %v2793 = vld [vmem:[#allocation2 + $0x1d2] sm:$0xff]
  %v2794 = vld [vmem:[#allocation2 + $0x1da] sm:$0xff]
  %v2795 = vld [vmem:[#allocation2 + $0x1e2] sm:$0xff]
  %v2796 = vld [vmem:[#allocation2 + $0x1ea] sm:$0xff]
  %v2797 = vld [vmem:[#allocation2 + $0x1f2] sm:$0x3]
  %v2810 = vrot.slane %v2786, 6
  %v2811 = vrot.slane %v2787, 6
  %v2812 = vsel %vm2089, %v2810, %v2811
  %v2813 = vrot.slane %v2788, 6
  %v2814 = vsel %vm2089, %v2811, %v2813
  %v2815 = vrot.slane %v2789, 6
  %v2816 = vsel %vm2089, %v2813, %v2815
  %v2817 = vrot.slane %v2790, 6
  %v2818 = vsel %vm2089, %v2815, %v2817
  %v2819 = vrot.slane %v2791, 6
  %v2820 = vsel %vm2089, %v2817, %v2819
  %v2821 = vrot.slane %v2792, 6
  %v2822 = vsel %vm2089, %v2819, %v2821
  %v2823 = vrot.slane %v2793, 6
  %v2824 = vsel %vm2089, %v2821, %v2823
  %v2825 = vrot.slane %v2794, 6
  %v2826 = vsel %vm2089, %v2823, %v2825
  %v2827 = vrot.slane %v2795, 6
  %v2828 = vsel %vm2089, %v2825, %v2827
  %v2829 = vrot.slane %v2796, 6
  %v2830 = vsel %vm2089, %v2827, %v2829
  %v2831 = vrot.slane %v2797, 6
  %v2832 = vsel %vm2089, %v2829, %v2831
  %2845 = vst.msk [vmem:[#allocation3 + $0x170] sm:$0xfc] %vm2125, %v2810
  %2846 = vst.msk [vmem:[#allocation3 + $0x190] sm:$0xff] %vm996, %v2812
  %2847 = vst.msk [vmem:[#allocation3 + $0x1b0] sm:$0xff] %vm996, %v2814
  %2848 = vst.msk [vmem:[#allocation3 + $0x1d0] sm:$0xff] %vm996, %v2816
  %2849 = vst.msk [vmem:[#allocation3 + $0x1f0] sm:$0xff] %vm996, %v2818
  %2850 = vst.msk [vmem:[#allocation3 + $0x210] sm:$0xff] %vm996, %v2820
  %2851 = vst.msk [vmem:[#allocation3 + $0x230] sm:$0xff] %vm996, %v2822
  %2852 = vst.msk [vmem:[#allocation3 + $0x250] sm:$0xff] %vm996, %v2824
  %2853 = vst.msk [vmem:[#allocation3 + $0x270] sm:$0xff] %vm996, %v2826
  %2854 = vst.msk [vmem:[#allocation3 + $0x290] sm:$0xff] %vm996, %v2828
  %2855 = vst.msk [vmem:[#allocation3 + $0x2b0] sm:$0xff] %vm996, %v2830
  %2856 = vst.msk [vmem:[#allocation3 + $0x2d0] sm:$0xf] %vm2137, %v2832
  %v2857 = vld [vmem:[#allocation2 + $0x1fe] sm:$0xff]
  %v2858 = vld [vmem:[#allocation2 + $0x206] sm:$0xff]
  %v2859 = vld [vmem:[#allocation2 + $0x20e] sm:$0xff]
  %v2860 = vld [vmem:[#allocation2 + $0x216] sm:$0xff]
  %v2861 = vld [vmem:[#allocation2 + $0x21e] sm:$0xff]
  %v2862 = vld [vmem:[#allocation2 + $0x226] sm:$0xff]
  %v2863 = vld [vmem:[#allocation2 + $0x22e] sm:$0xff]
  %v2864 = vld [vmem:[#allocation2 + $0x236] sm:$0xff]
  %v2865 = vld [vmem:[#allocation2 + $0x23e] sm:$0xff]
  %v2866 = vld [vmem:[#allocation2 + $0x246] sm:$0xff]
  %v2867 = vld [vmem:[#allocation2 + $0x24e] sm:$0xff]
  %v2868 = vld [vmem:[#allocation2 + $0x256] sm:$0x3]
  %v2881 = vrot.slane %v2857, 6
  %v2882 = vrot.slane %v2858, 6
  %v2883 = vsel %vm2089, %v2881, %v2882
  %v2884 = vrot.slane %v2859, 6
  %v2885 = vsel %vm2089, %v2882, %v2884
  %v2886 = vrot.slane %v2860, 6
  %v2887 = vsel %vm2089, %v2884, %v2886
  %v2888 = vrot.slane %v2861, 6
  %v2889 = vsel %vm2089, %v2886, %v2888
  %v2890 = vrot.slane %v2862, 6
  %v2891 = vsel %vm2089, %v2888, %v2890
  %v2892 = vrot.slane %v2863, 6
  %v2893 = vsel %vm2089, %v2890, %v2892
  %v2894 = vrot.slane %v2864, 6
  %v2895 = vsel %vm2089, %v2892, %v2894
  %v2896 = vrot.slane %v2865, 6
  %v2897 = vsel %vm2089, %v2894, %v2896
  %v2898 = vrot.slane %v2866, 6
  %v2899 = vsel %vm2089, %v2896, %v2898
  %v2900 = vrot.slane %v2867, 6
  %v2901 = vsel %vm2089, %v2898, %v2900
  %v2902 = vrot.slane %v2868, 6
  %v2903 = vsel %vm2089, %v2900, %v2902
  %2904 = vrot.lane.b32.xlu0 %v2881, 32
  %v2905 = vpop.permute.xlu0 %2904
  %2906 = vrot.lane.b32.xlu0 %v2883, 32
  %v2907 = vpop.permute.xlu0 %2906
  %2908 = vrot.lane.b32.xlu0 %v2885, 32
  %v2909 = vpop.permute.xlu0 %2908
  %2910 = vrot.lane.b32.xlu0 %v2887, 32
  %v2911 = vpop.permute.xlu0 %2910
  %2912 = vrot.lane.b32.xlu0 %v2889, 32
  %v2913 = vpop.permute.xlu0 %2912
  %2914 = vrot.lane.b32.xlu0 %v2891, 32
  %v2915 = vpop.permute.xlu0 %2914
  %2916 = vrot.lane.b32.xlu0 %v2893, 32
  %v2917 = vpop.permute.xlu0 %2916
  %2918 = vrot.lane.b32.xlu0 %v2895, 32
  %v2919 = vpop.permute.xlu0 %2918
  %2920 = vrot.lane.b32.xlu0 %v2897, 32
  %v2921 = vpop.permute.xlu0 %2920
  %2922 = vrot.lane.b32.xlu0 %v2899, 32
  %v2923 = vpop.permute.xlu0 %2922
  %2924 = vrot.lane.b32.xlu0 %v2901, 32
  %v2925 = vpop.permute.xlu0 %2924
  %2926 = vrot.lane.b32.xlu0 %v2903, 32
  %v2927 = vpop.permute.xlu0 %2926
  %2940 = vst.msk [vmem:[#allocation3 + $0x170] sm:$0xfc] %vm2222, %v2905
  %2941 = vst.msk [vmem:[#allocation3 + $0x190] sm:$0xff] %vm1183, %v2907
  %2942 = vst.msk [vmem:[#allocation3 + $0x1b0] sm:$0xff] %vm1183, %v2909
  %2943 = vst.msk [vmem:[#allocation3 + $0x1d0] sm:$0xff] %vm1183, %v2911
  %2944 = vst.msk [vmem:[#allocation3 + $0x1f0] sm:$0xff] %vm1183, %v2913
  %2945 = vst.msk [vmem:[#allocation3 + $0x210] sm:$0xff] %vm1183, %v2915
  %2946 = vst.msk [vmem:[#allocation3 + $0x230] sm:$0xff] %vm1183, %v2917
  %2947 = vst.msk [vmem:[#allocation3 + $0x250] sm:$0xff] %vm1183, %v2919
  %2948 = vst.msk [vmem:[#allocation3 + $0x270] sm:$0xff] %vm1183, %v2921
  %2949 = vst.msk [vmem:[#allocation3 + $0x290] sm:$0xff] %vm1183, %v2923
  %2950 = vst.msk [vmem:[#allocation3 + $0x2b0] sm:$0xff] %vm1183, %v2925
  %2951 = vst.msk [vmem:[#allocation3 + $0x2d0] sm:$0xf] %vm2234, %v2927
  %v2952 = vld [vmem:[#allocation2 + $0x19b] sm:$0xff]
  %v2953 = vld [vmem:[#allocation2 + $0x1a3] sm:$0xff]
  %v2954 = vld [vmem:[#allocation2 + $0x1ab] sm:$0xff]
  %v2955 = vld [vmem:[#allocation2 + $0x1b3] sm:$0xff]
  %v2956 = vld [vmem:[#allocation2 + $0x1bb] sm:$0xff]
  %v2957 = vld [vmem:[#allocation2 + $0x1c3] sm:$0xff]
  %v2958 = vld [vmem:[#allocation2 + $0x1cb] sm:$0xff]
  %v2959 = vld [vmem:[#allocation2 + $0x1d3] sm:$0xff]
  %v2960 = vld [vmem:[#allocation2 + $0x1db] sm:$0xff]
  %v2961 = vld [vmem:[#allocation2 + $0x1e3] sm:$0xff]
  %v2962 = vld [vmem:[#allocation2 + $0x1eb] sm:$0xff]
  %v2963 = vld [vmem:[#allocation2 + $0x1f3] sm:$0x3]
  %v2976 = vrot.slane %v2952, 6
  %v2977 = vrot.slane %v2953, 6
  %v2978 = vsel %vm2089, %v2976, %v2977
  %v2979 = vrot.slane %v2954, 6
  %v2980 = vsel %vm2089, %v2977, %v2979
  %v2981 = vrot.slane %v2955, 6
  %v2982 = vsel %vm2089, %v2979, %v2981
  %v2983 = vrot.slane %v2956, 6
  %v2984 = vsel %vm2089, %v2981, %v2983
  %v2985 = vrot.slane %v2957, 6
  %v2986 = vsel %vm2089, %v2983, %v2985
  %v2987 = vrot.slane %v2958, 6
  %v2988 = vsel %vm2089, %v2985, %v2987
  %v2989 = vrot.slane %v2959, 6
  %v2990 = vsel %vm2089, %v2987, %v2989
  %v2991 = vrot.slane %v2960, 6
  %v2992 = vsel %vm2089, %v2989, %v2991
  %v2993 = vrot.slane %v2961, 6
  %v2994 = vsel %vm2089, %v2991, %v2993
  %v2995 = vrot.slane %v2962, 6
  %v2996 = vsel %vm2089, %v2993, %v2995
  %v2997 = vrot.slane %v2963, 6
  %v2998 = vsel %vm2089, %v2995, %v2997
  %2999 = vrot.lane.b32.xlu0 %v2976, 64
  %v3000 = vpop.permute.xlu0 %2999
  %3001 = vrot.lane.b32.xlu0 %v2978, 64
  %v3002 = vpop.permute.xlu0 %3001
  %3003 = vrot.lane.b32.xlu0 %v2980, 64
  %v3004 = vpop.permute.xlu0 %3003
  %3005 = vrot.lane.b32.xlu0 %v2982, 64
  %v3006 = vpop.permute.xlu0 %3005
  %3007 = vrot.lane.b32.xlu0 %v2984, 64
  %v3008 = vpop.permute.xlu0 %3007
  %3009 = vrot.lane.b32.xlu0 %v2986, 64
  %v3010 = vpop.permute.xlu0 %3009
  %3011 = vrot.lane.b32.xlu0 %v2988, 64
  %v3012 = vpop.permute.xlu0 %3011
  %3013 = vrot.lane.b32.xlu0 %v2990, 64
  %v3014 = vpop.permute.xlu0 %3013
  %3015 = vrot.lane.b32.xlu0 %v2992, 64
  %v3016 = vpop.permute.xlu0 %3015
  %3017 = vrot.lane.b32.xlu0 %v2994, 64
  %v3018 = vpop.permute.xlu0 %3017
  %3019 = vrot.lane.b32.xlu0 %v2996, 64
  %v3020 = vpop.permute.xlu0 %3019
  %3021 = vrot.lane.b32.xlu0 %v2998, 64
  %v3022 = vpop.permute.xlu0 %3021
  %3035 = vst.msk [vmem:[#allocation3 + $0x170] sm:$0xfc] %vm2319, %v3000
  %3036 = vst.msk [vmem:[#allocation3 + $0x190] sm:$0xff] %vm1257, %v3002
  %3037 = vst.msk [vmem:[#allocation3 + $0x1b0] sm:$0xff] %vm1257, %v3004
  %3038 = vst.msk [vmem:[#allocation3 + $0x1d0] sm:$0xff] %vm1257, %v3006
  %3039 = vst.msk [vmem:[#allocation3 + $0x1f0] sm:$0xff] %vm1257, %v3008
  %3040 = vst.msk [vmem:[#allocation3 + $0x210] sm:$0xff] %vm1257, %v3010
  %3041 = vst.msk [vmem:[#allocation3 + $0x230] sm:$0xff] %vm1257, %v3012
  %3042 = vst.msk [vmem:[#allocation3 + $0x250] sm:$0xff] %vm1257, %v3014
  %3043 = vst.msk [vmem:[#allocation3 + $0x270] sm:$0xff] %vm1257, %v3016
  %3044 = vst.msk [vmem:[#allocation3 + $0x290] sm:$0xff] %vm1257, %v3018
  %3045 = vst.msk [vmem:[#allocation3 + $0x2b0] sm:$0xff] %vm1257, %v3020
  %3046 = vst.msk [vmem:[#allocation3 + $0x2d0] sm:$0xf] %vm2331, %v3022
  %v3047 = vld [vmem:[#allocation2 + $0x1ff] sm:$0xff]
  %v3048 = vld [vmem:[#allocation2 + $0x207] sm:$0xff]
  %v3049 = vld [vmem:[#allocation2 + $0x20f] sm:$0xff]
  %v3050 = vld [vmem:[#allocation2 + $0x217] sm:$0xff]
  %v3051 = vld [vmem:[#allocation2 + $0x21f] sm:$0xff]
  %v3052 = vld [vmem:[#allocation2 + $0x227] sm:$0xff]
  %v3053 = vld [vmem:[#allocation2 + $0x22f] sm:$0xff]
  %v3054 = vld [vmem:[#allocation2 + $0x237] sm:$0xff]
  %v3055 = vld [vmem:[#allocation2 + $0x23f] sm:$0xff]
  %v3056 = vld [vmem:[#allocation2 + $0x247] sm:$0xff]
  %v3057 = vld [vmem:[#allocation2 + $0x24f] sm:$0xff]
  %v3058 = vld [vmem:[#allocation2 + $0x257] sm:$0x3]
  %v3071 = vrot.slane %v3047, 6
  %v3072 = vrot.slane %v3048, 6
  %v3073 = vsel %vm2089, %v3071, %v3072
  %v3074 = vrot.slane %v3049, 6
  %v3075 = vsel %vm2089, %v3072, %v3074
  %v3076 = vrot.slane %v3050, 6
  %v3077 = vsel %vm2089, %v3074, %v3076
  %v3078 = vrot.slane %v3051, 6
  %v3079 = vsel %vm2089, %v3076, %v3078
  %v3080 = vrot.slane %v3052, 6
  %v3081 = vsel %vm2089, %v3078, %v3080
  %v3082 = vrot.slane %v3053, 6
  %v3083 = vsel %vm2089, %v3080, %v3082
  %v3084 = vrot.slane %v3054, 6
  %v3085 = vsel %vm2089, %v3082, %v3084
  %v3086 = vrot.slane %v3055, 6
  %v3087 = vsel %vm2089, %v3084, %v3086
  %v3088 = vrot.slane %v3056, 6
  %v3089 = vsel %vm2089, %v3086, %v3088
  %v3090 = vrot.slane %v3057, 6
  %v3091 = vsel %vm2089, %v3088, %v3090
  %v3092 = vrot.slane %v3058, 6
  %v3093 = vsel %vm2089, %v3090, %v3092
  %3094 = vrot.lane.b32.xlu0 %v3071, 96
  %v3095 = vpop.permute.xlu0 %3094
  %3096 = vrot.lane.b32.xlu0 %v3073, 96
  %v3097 = vpop.permute.xlu0 %3096
  %3098 = vrot.lane.b32.xlu0 %v3075, 96
  %v3099 = vpop.permute.xlu0 %3098
  %3100 = vrot.lane.b32.xlu0 %v3077, 96
  %v3101 = vpop.permute.xlu0 %3100
  %3102 = vrot.lane.b32.xlu0 %v3079, 96
  %v3103 = vpop.permute.xlu0 %3102
  %3104 = vrot.lane.b32.xlu0 %v3081, 96
  %v3105 = vpop.permute.xlu0 %3104
  %3106 = vrot.lane.b32.xlu0 %v3083, 96
  %v3107 = vpop.permute.xlu0 %3106
  %3108 = vrot.lane.b32.xlu0 %v3085, 96
  %v3109 = vpop.permute.xlu0 %3108
  %3110 = vrot.lane.b32.xlu0 %v3087, 96
  %v3111 = vpop.permute.xlu0 %3110
  %3112 = vrot.lane.b32.xlu0 %v3089, 96
  %v3113 = vpop.permute.xlu0 %3112
  %3114 = vrot.lane.b32.xlu0 %v3091, 96
  %v3115 = vpop.permute.xlu0 %3114
  %3116 = vrot.lane.b32.xlu0 %v3093, 96
  %v3117 = vpop.permute.xlu0 %3116
  %3130 = vst.msk [vmem:[#allocation3 + $0x170] sm:$0xfc] %vm2416, %v3095
  %3131 = vst.msk [vmem:[#allocation3 + $0x190] sm:$0xff] %vm1331, %v3097
  %3132 = vst.msk [vmem:[#allocation3 + $0x1b0] sm:$0xff] %vm1331, %v3099
  %3133 = vst.msk [vmem:[#allocation3 + $0x1d0] sm:$0xff] %vm1331, %v3101
  %3134 = vst.msk [vmem:[#allocation3 + $0x1f0] sm:$0xff] %vm1331, %v3103
  %3135 = vst.msk [vmem:[#allocation3 + $0x210] sm:$0xff] %vm1331, %v3105
  %3136 = vst.msk [vmem:[#allocation3 + $0x230] sm:$0xff] %vm1331, %v3107
  %3137 = vst.msk [vmem:[#allocation3 + $0x250] sm:$0xff] %vm1331, %v3109
  %3138 = vst.msk [vmem:[#allocation3 + $0x270] sm:$0xff] %vm1331, %v3111
  %3139 = vst.msk [vmem:[#allocation3 + $0x290] sm:$0xff] %vm1331, %v3113
  %3140 = vst.msk [vmem:[#allocation3 + $0x2b0] sm:$0xff] %vm1331, %v3115
  %3141 = vst.msk [vmem:[#allocation3 + $0x2d0] sm:$0xf] %vm2428, %v3117
  %v3142 = vld [vmem:[#allocation2 + $0x262] sm:$0xff]
  %v3143 = vld [vmem:[#allocation2 + $0x26a] sm:$0xff]
  %v3144 = vld [vmem:[#allocation2 + $0x272] sm:$0xff]
  %v3145 = vld [vmem:[#allocation2 + $0x27a] sm:$0xff]
  %v3146 = vld [vmem:[#allocation2 + $0x282] sm:$0xff]
  %v3147 = vld [vmem:[#allocation2 + $0x28a] sm:$0xff]
  %v3148 = vld [vmem:[#allocation2 + $0x292] sm:$0xff]
  %v3149 = vld [vmem:[#allocation2 + $0x29a] sm:$0xff]
  %v3150 = vld [vmem:[#allocation2 + $0x2a2] sm:$0xff]
  %v3151 = vld [vmem:[#allocation2 + $0x2aa] sm:$0xff]
  %v3152 = vld [vmem:[#allocation2 + $0x2b2] sm:$0xff]
  %v3153 = vld [vmem:[#allocation2 + $0x2ba] sm:$0x3]
  %v3166 = vrot.slane %v3142, 6
  %v3167 = vrot.slane %v3143, 6
  %v3168 = vsel %vm2089, %v3166, %v3167
  %v3169 = vrot.slane %v3144, 6
  %v3170 = vsel %vm2089, %v3167, %v3169
  %v3171 = vrot.slane %v3145, 6
  %v3172 = vsel %vm2089, %v3169, %v3171
  %v3173 = vrot.slane %v3146, 6
  %v3174 = vsel %vm2089, %v3171, %v3173
  %v3175 = vrot.slane %v3147, 6
  %v3176 = vsel %vm2089, %v3173, %v3175
  %v3177 = vrot.slane %v3148, 6
  %v3178 = vsel %vm2089, %v3175, %v3177
  %v3179 = vrot.slane %v3149, 6
  %v3180 = vsel %vm2089, %v3177, %v3179
  %v3181 = vrot.slane %v3150, 6
  %v3182 = vsel %vm2089, %v3179, %v3181
  %v3183 = vrot.slane %v3151, 6
  %v3184 = vsel %vm2089, %v3181, %v3183
  %v3185 = vrot.slane %v3152, 6
  %v3186 = vsel %vm2089, %v3183, %v3185
  %v3187 = vrot.slane %v3153, 6
  %v3188 = vsel %vm2089, %v3185, %v3187
  %3201 = vst.msk [vmem:[#allocation3 + $0x178] sm:$0xfc] %vm2125, %v3166
  %3202 = vst.msk [vmem:[#allocation3 + $0x198] sm:$0xff] %vm996, %v3168
  %3203 = vst.msk [vmem:[#allocation3 + $0x1b8] sm:$0xff] %vm996, %v3170
  %3204 = vst.msk [vmem:[#allocation3 + $0x1d8] sm:$0xff] %vm996, %v3172
  %3205 = vst.msk [vmem:[#allocation3 + $0x1f8] sm:$0xff] %vm996, %v3174
  %3206 = vst.msk [vmem:[#allocation3 + $0x218] sm:$0xff] %vm996, %v3176
  %3207 = vst.msk [vmem:[#allocation3 + $0x238] sm:$0xff] %vm996, %v3178
  %3208 = vst.msk [vmem:[#allocation3 + $0x258] sm:$0xff] %vm996, %v3180
  %3209 = vst.msk [vmem:[#allocation3 + $0x278] sm:$0xff] %vm996, %v3182
  %3210 = vst.msk [vmem:[#allocation3 + $0x298] sm:$0xff] %vm996, %v3184
  %3211 = vst.msk [vmem:[#allocation3 + $0x2b8] sm:$0xff] %vm996, %v3186
  %3212 = vst.msk [vmem:[#allocation3 + $0x2d8] sm:$0xf] %vm2137, %v3188
  %v3213 = vld [vmem:[#allocation2 + $0x2c6] sm:$0xff]
  %v3214 = vld [vmem:[#allocation2 + $0x2ce] sm:$0xff]
  %v3215 = vld [vmem:[#allocation2 + $0x2d6] sm:$0xff]
  %v3216 = vld [vmem:[#allocation2 + $0x2de] sm:$0xff]
  %v3217 = vld [vmem:[#allocation2 + $0x2e6] sm:$0xff]
  %v3218 = vld [vmem:[#allocation2 + $0x2ee] sm:$0xff]
  %v3219 = vld [vmem:[#allocation2 + $0x2f6] sm:$0xff]
  %v3220 = vld [vmem:[#allocation2 + $0x2fe] sm:$0xff]
  %v3221 = vld [vmem:[#allocation2 + $0x306] sm:$0xff]
  %v3222 = vld [vmem:[#allocation2 + $0x30e] sm:$0xff]
  %v3223 = vld [vmem:[#allocation2 + $0x316] sm:$0xff]
  %v3224 = vld [vmem:[#allocation2 + $0x31e] sm:$0x3]
  %v3237 = vrot.slane %v3213, 6
  %v3238 = vrot.slane %v3214, 6
  %v3239 = vsel %vm2089, %v3237, %v3238
  %v3240 = vrot.slane %v3215, 6
  %v3241 = vsel %vm2089, %v3238, %v3240
  %v3242 = vrot.slane %v3216, 6
  %v3243 = vsel %vm2089, %v3240, %v3242
  %v3244 = vrot.slane %v3217, 6
  %v3245 = vsel %vm2089, %v3242, %v3244
  %v3246 = vrot.slane %v3218, 6
  %v3247 = vsel %vm2089, %v3244, %v3246
  %v3248 = vrot.slane %v3219, 6
  %v3249 = vsel %vm2089, %v3246, %v3248
  %v3250 = vrot.slane %v3220, 6
  %v3251 = vsel %vm2089, %v3248, %v3250
  %v3252 = vrot.slane %v3221, 6
  %v3253 = vsel %vm2089, %v3250, %v3252
  %v3254 = vrot.slane %v3222, 6
  %v3255 = vsel %vm2089, %v3252, %v3254
  %v3256 = vrot.slane %v3223, 6
  %v3257 = vsel %vm2089, %v3254, %v3256
  %v3258 = vrot.slane %v3224, 6
  %v3259 = vsel %vm2089, %v3256, %v3258
  %3260 = vrot.lane.b32.xlu0 %v3237, 32
  %v3261 = vpop.permute.xlu0 %3260
  %3262 = vrot.lane.b32.xlu0 %v3239, 32
  %v3263 = vpop.permute.xlu0 %3262
  %3264 = vrot.lane.b32.xlu0 %v3241, 32
  %v3265 = vpop.permute.xlu0 %3264
  %3266 = vrot.lane.b32.xlu0 %v3243, 32
  %v3267 = vpop.permute.xlu0 %3266
  %3268 = vrot.lane.b32.xlu0 %v3245, 32
  %v3269 = vpop.permute.xlu0 %3268
  %3270 = vrot.lane.b32.xlu0 %v3247, 32
  %v3271 = vpop.permute.xlu0 %3270
  %3272 = vrot.lane.b32.xlu0 %v3249, 32
  %v3273 = vpop.permute.xlu0 %3272
  %3274 = vrot.lane.b32.xlu0 %v3251, 32
  %v3275 = vpop.permute.xlu0 %3274
  %3276 = vrot.lane.b32.xlu0 %v3253, 32
  %v3277 = vpop.permute.xlu0 %3276
  %3278 = vrot.lane.b32.xlu0 %v3255, 32
  %v3279 = vpop.permute.xlu0 %3278
  %3280 = vrot.lane.b32.xlu0 %v3257, 32
  %v3281 = vpop.permute.xlu0 %3280
  %3282 = vrot.lane.b32.xlu0 %v3259, 32
  %v3283 = vpop.permute.xlu0 %3282
  %3296 = vst.msk [vmem:[#allocation3 + $0x178] sm:$0xfc] %vm2222, %v3261
  %3297 = vst.msk [vmem:[#allocation3 + $0x198] sm:$0xff] %vm1183, %v3263
  %3298 = vst.msk [vmem:[#allocation3 + $0x1b8] sm:$0xff] %vm1183, %v3265
  %3299 = vst.msk [vmem:[#allocation3 + $0x1d8] sm:$0xff] %vm1183, %v3267
  %3300 = vst.msk [vmem:[#allocation3 + $0x1f8] sm:$0xff] %vm1183, %v3269
  %3301 = vst.msk [vmem:[#allocation3 + $0x218] sm:$0xff] %vm1183, %v3271
  %3302 = vst.msk [vmem:[#allocation3 + $0x238] sm:$0xff] %vm1183, %v3273
  %3303 = vst.msk [vmem:[#allocation3 + $0x258] sm:$0xff] %vm1183, %v3275
  %3304 = vst.msk [vmem:[#allocation3 + $0x278] sm:$0xff] %vm1183, %v3277
  %3305 = vst.msk [vmem:[#allocation3 + $0x298] sm:$0xff] %vm1183, %v3279
  %3306 = vst.msk [vmem:[#allocation3 + $0x2b8] sm:$0xff] %vm1183, %v3281
  %3307 = vst.msk [vmem:[#allocation3 + $0x2d8] sm:$0xf] %vm2234, %v3283
  %v3308 = vld [vmem:[#allocation2 + $0x263] sm:$0xff]
  %v3309 = vld [vmem:[#allocation2 + $0x26b] sm:$0xff]
  %v3310 = vld [vmem:[#allocation2 + $0x273] sm:$0xff]
  %v3311 = vld [vmem:[#allocation2 + $0x27b] sm:$0xff]
  %v3312 = vld [vmem:[#allocation2 + $0x283] sm:$0xff]
  %v3313 = vld [vmem:[#allocation2 + $0x28b] sm:$0xff]
  %v3314 = vld [vmem:[#allocation2 + $0x293] sm:$0xff]
  %v3315 = vld [vmem:[#allocation2 + $0x29b] sm:$0xff]
  %v3316 = vld [vmem:[#allocation2 + $0x2a3] sm:$0xff]
  %v3317 = vld [vmem:[#allocation2 + $0x2ab] sm:$0xff]
  %v3318 = vld [vmem:[#allocation2 + $0x2b3] sm:$0xff]
  %v3319 = vld [vmem:[#allocation2 + $0x2bb] sm:$0x3]
  %v3332 = vrot.slane %v3308, 6
  %v3333 = vrot.slane %v3309, 6
  %v3334 = vsel %vm2089, %v3332, %v3333
  %v3335 = vrot.slane %v3310, 6
  %v3336 = vsel %vm2089, %v3333, %v3335
  %v3337 = vrot.slane %v3311, 6
  %v3338 = vsel %vm2089, %v3335, %v3337
  %v3339 = vrot.slane %v3312, 6
  %v3340 = vsel %vm2089, %v3337, %v3339
  %v3341 = vrot.slane %v3313, 6
  %v3342 = vsel %vm2089, %v3339, %v3341
  %v3343 = vrot.slane %v3314, 6
  %v3344 = vsel %vm2089, %v3341, %v3343
  %v3345 = vrot.slane %v3315, 6
  %v3346 = vsel %vm2089, %v3343, %v3345
  %v3347 = vrot.slane %v3316, 6
  %v3348 = vsel %vm2089, %v3345, %v3347
  %v3349 = vrot.slane %v3317, 6
  %v3350 = vsel %vm2089, %v3347, %v3349
  %v3351 = vrot.slane %v3318, 6
  %v3352 = vsel %vm2089, %v3349, %v3351
  %v3353 = vrot.slane %v3319, 6
  %v3354 = vsel %vm2089, %v3351, %v3353
  %3355 = vrot.lane.b32.xlu0 %v3332, 64
  %v3356 = vpop.permute.xlu0 %3355
  %3357 = vrot.lane.b32.xlu0 %v3334, 64
  %v3358 = vpop.permute.xlu0 %3357
  %3359 = vrot.lane.b32.xlu0 %v3336, 64
  %v3360 = vpop.permute.xlu0 %3359
  %3361 = vrot.lane.b32.xlu0 %v3338, 64
  %v3362 = vpop.permute.xlu0 %3361
  %3363 = vrot.lane.b32.xlu0 %v3340, 64
  %v3364 = vpop.permute.xlu0 %3363
  %3365 = vrot.lane.b32.xlu0 %v3342, 64
  %v3366 = vpop.permute.xlu0 %3365
  %3367 = vrot.lane.b32.xlu0 %v3344, 64
  %v3368 = vpop.permute.xlu0 %3367
  %3369 = vrot.lane.b32.xlu0 %v3346, 64
  %v3370 = vpop.permute.xlu0 %3369
  %3371 = vrot.lane.b32.xlu0 %v3348, 64
  %v3372 = vpop.permute.xlu0 %3371
  %3373 = vrot.lane.b32.xlu0 %v3350, 64
  %v3374 = vpop.permute.xlu0 %3373
  %3375 = vrot.lane.b32.xlu0 %v3352, 64
  %v3376 = vpop.permute.xlu0 %3375
  %3377 = vrot.lane.b32.xlu0 %v3354, 64
  %v3378 = vpop.permute.xlu0 %3377
  %3391 = vst.msk [vmem:[#allocation3 + $0x178] sm:$0xfc] %vm2319, %v3356
  %3392 = vst.msk [vmem:[#allocation3 + $0x198] sm:$0xff] %vm1257, %v3358
  %3393 = vst.msk [vmem:[#allocation3 + $0x1b8] sm:$0xff] %vm1257, %v3360
  %3394 = vst.msk [vmem:[#allocation3 + $0x1d8] sm:$0xff] %vm1257, %v3362
  %3395 = vst.msk [vmem:[#allocation3 + $0x1f8] sm:$0xff] %vm1257, %v3364
  %3396 = vst.msk [vmem:[#allocation3 + $0x218] sm:$0xff] %vm1257, %v3366
  %3397 = vst.msk [vmem:[#allocation3 + $0x238] sm:$0xff] %vm1257, %v3368
  %3398 = vst.msk [vmem:[#allocation3 + $0x258] sm:$0xff] %vm1257, %v3370
  %3399 = vst.msk [vmem:[#allocation3 + $0x278] sm:$0xff] %vm1257, %v3372
  %3400 = vst.msk [vmem:[#allocation3 + $0x298] sm:$0xff] %vm1257, %v3374
  %3401 = vst.msk [vmem:[#allocation3 + $0x2b8] sm:$0xff] %vm1257, %v3376
  %3402 = vst.msk [vmem:[#allocation3 + $0x2d8] sm:$0xf] %vm2331, %v3378
  %v3403 = vld [vmem:[#allocation2 + $0x2c7] sm:$0xff]
  %v3404 = vld [vmem:[#allocation2 + $0x2cf] sm:$0xff]
  %v3405 = vld [vmem:[#allocation2 + $0x2d7] sm:$0xff]
  %v3406 = vld [vmem:[#allocation2 + $0x2df] sm:$0xff]
  %v3407 = vld [vmem:[#allocation2 + $0x2e7] sm:$0xff]
  %v3408 = vld [vmem:[#allocation2 + $0x2ef] sm:$0xff]
  %v3409 = vld [vmem:[#allocation2 + $0x2f7] sm:$0xff]
  %v3410 = vld [vmem:[#allocation2 + $0x2ff] sm:$0xff]
  %v3411 = vld [vmem:[#allocation2 + $0x307] sm:$0xff]
  %v3412 = vld [vmem:[#allocation2 + $0x30f] sm:$0xff]
  %v3413 = vld [vmem:[#allocation2 + $0x317] sm:$0xff]
  %v3414 = vld [vmem:[#allocation2 + $0x31f] sm:$0x3]
  %v3427 = vrot.slane %v3403, 6
  %v3428 = vrot.slane %v3404, 6
  %v3429 = vsel %vm2089, %v3427, %v3428
  %v3430 = vrot.slane %v3405, 6
  %v3431 = vsel %vm2089, %v3428, %v3430
  %v3432 = vrot.slane %v3406, 6
  %v3433 = vsel %vm2089, %v3430, %v3432
  %v3434 = vrot.slane %v3407, 6
  %v3435 = vsel %vm2089, %v3432, %v3434
  %v3436 = vrot.slane %v3408, 6
  %v3437 = vsel %vm2089, %v3434, %v3436
  %v3438 = vrot.slane %v3409, 6
  %v3439 = vsel %vm2089, %v3436, %v3438
  %v3440 = vrot.slane %v3410, 6
  %v3441 = vsel %vm2089, %v3438, %v3440
  %v3442 = vrot.slane %v3411, 6
  %v3443 = vsel %vm2089, %v3440, %v3442
  %v3444 = vrot.slane %v3412, 6
  %v3445 = vsel %vm2089, %v3442, %v3444
  %v3446 = vrot.slane %v3413, 6
  %v3447 = vsel %vm2089, %v3444, %v3446
  %v3448 = vrot.slane %v3414, 6
  %v3449 = vsel %vm2089, %v3446, %v3448
  %3450 = vrot.lane.b32.xlu0 %v3427, 96
  %v3451 = vpop.permute.xlu0 %3450
  %3452 = vrot.lane.b32.xlu0 %v3429, 96
  %v3453 = vpop.permute.xlu0 %3452
  %3454 = vrot.lane.b32.xlu0 %v3431, 96
  %v3455 = vpop.permute.xlu0 %3454
  %3456 = vrot.lane.b32.xlu0 %v3433, 96
  %v3457 = vpop.permute.xlu0 %3456
  %3458 = vrot.lane.b32.xlu0 %v3435, 96
  %v3459 = vpop.permute.xlu0 %3458
  %3460 = vrot.lane.b32.xlu0 %v3437, 96
  %v3461 = vpop.permute.xlu0 %3460
  %3462 = vrot.lane.b32.xlu0 %v3439, 96
  %v3463 = vpop.permute.xlu0 %3462
  %3464 = vrot.lane.b32.xlu0 %v3441, 96
  %v3465 = vpop.permute.xlu0 %3464
  %3466 = vrot.lane.b32.xlu0 %v3443, 96
  %v3467 = vpop.permute.xlu0 %3466
  %3468 = vrot.lane.b32.xlu0 %v3445, 96
  %v3469 = vpop.permute.xlu0 %3468
  %3470 = vrot.lane.b32.xlu0 %v3447, 96
  %v3471 = vpop.permute.xlu0 %3470
  %3472 = vrot.lane.b32.xlu0 %v3449, 96
  %v3473 = vpop.permute.xlu0 %3472
  %3486 = vst.msk [vmem:[#allocation3 + $0x178] sm:$0xfc] %vm2416, %v3451
  %3487 = vst.msk [vmem:[#allocation3 + $0x198] sm:$0xff] %vm1331, %v3453
  %3488 = vst.msk [vmem:[#allocation3 + $0x1b8] sm:$0xff] %vm1331, %v3455
  %3489 = vst.msk [vmem:[#allocation3 + $0x1d8] sm:$0xff] %vm1331, %v3457
  %3490 = vst.msk [vmem:[#allocation3 + $0x1f8] sm:$0xff] %vm1331, %v3459
  %3491 = vst.msk [vmem:[#allocation3 + $0x218] sm:$0xff] %vm1331, %v3461
  %3492 = vst.msk [vmem:[#allocation3 + $0x238] sm:$0xff] %vm1331, %v3463
  %3493 = vst.msk [vmem:[#allocation3 + $0x258] sm:$0xff] %vm1331, %v3465
  %3494 = vst.msk [vmem:[#allocation3 + $0x278] sm:$0xff] %vm1331, %v3467
  %3495 = vst.msk [vmem:[#allocation3 + $0x298] sm:$0xff] %vm1331, %v3469
  %3496 = vst.msk [vmem:[#allocation3 + $0x2b8] sm:$0xff] %vm1331, %v3471
  %3497 = vst.msk [vmem:[#allocation3 + $0x2d8] sm:$0xf] %vm2428, %v3473
  %v3498 = vld [vmem:[#allocation3] sm:$0xff]
  %v3499 = vld [vmem:[#allocation3 + $0x8] sm:$0xff]
  %v3500 = vld [vmem:[#allocation3 + $0x10] sm:$0xff]
  %v3501 = vld [vmem:[#allocation3 + $0x18] sm:$0xff]
  %v3502 = vld [vmem:[#allocation3 + $0x20] sm:$0xff]
  %v3503 = vld [vmem:[#allocation3 + $0x28] sm:$0xff]
  %v3504 = vld [vmem:[#allocation3 + $0x30] sm:$0xff]
  %v3505 = vld [vmem:[#allocation3 + $0x38] sm:$0xff]
  %v3506 = vld [vmem:[#allocation3 + $0x40] sm:$0xff]
  %v3507 = vld [vmem:[#allocation3 + $0x48] sm:$0xff]
  %v3508 = vld [vmem:[#allocation3 + $0x50] sm:$0xff]
  %v3509 = vld [vmem:[#allocation3 + $0x58] sm:$0xff]
  %v3510 = vld [vmem:[#allocation3 + $0x60] sm:$0xff]
  %v3511 = vld [vmem:[#allocation3 + $0x68] sm:$0xff]
  %v3512 = vld [vmem:[#allocation3 + $0x70] sm:$0xff]
  %v3513 = vld [vmem:[#allocation3 + $0x78] sm:$0xff]
  %v3514 = vld [vmem:[#allocation3 + $0x80] sm:$0xff]
  %v3515 = vld [vmem:[#allocation3 + $0x88] sm:$0xff]
  %v3516 = vld [vmem:[#allocation3 + $0x90] sm:$0xff]
  %v3517 = vld [vmem:[#allocation3 + $0x98] sm:$0xff]
  %v3518 = vld [vmem:[#allocation3 + $0xa0] sm:$0xff]
  %v3519 = vld [vmem:[#allocation3 + $0xa8] sm:$0xff]
  %v3520 = vld [vmem:[#allocation3 + $0xb0] sm:$0xff]
  %v3521 = vld [vmem:[#allocation3 + $0xb8] sm:$0xff]
  %v3522 = vld [vmem:[#allocation3 + $0xc0] sm:$0xff]
  %v3523 = vld [vmem:[#allocation3 + $0xc8] sm:$0xff]
  %v3524 = vld [vmem:[#allocation3 + $0xd0] sm:$0xff]
  %v3525 = vld [vmem:[#allocation3 + $0xd8] sm:$0xff]
  %v3526 = vld [vmem:[#allocation3 + $0xe0] sm:$0xff]
  %v3527 = vld [vmem:[#allocation3 + $0xe8] sm:$0xff]
  %v3528 = vld [vmem:[#allocation3 + $0xf0] sm:$0xff]
  %v3529 = vld [vmem:[#allocation3 + $0xf8] sm:$0xff]
  %v3530 = vld [vmem:[#allocation3 + $0x100] sm:$0xff]
  %v3531 = vld [vmem:[#allocation3 + $0x108] sm:$0xff]
  %v3532 = vld [vmem:[#allocation3 + $0x110] sm:$0xff]
  %v3533 = vld [vmem:[#allocation3 + $0x118] sm:$0xff]
  %v3534 = vld [vmem:[#allocation3 + $0x120] sm:$0xff]
  %v3535 = vld [vmem:[#allocation3 + $0x128] sm:$0xff]
  %v3536 = vld [vmem:[#allocation3 + $0x130] sm:$0xff]
  %v3537 = vld [vmem:[#allocation3 + $0x138] sm:$0xff]
  %v3538 = vld [vmem:[#allocation3 + $0x140] sm:$0xff]
  %v3539 = vld [vmem:[#allocation3 + $0x148] sm:$0xff]
  %v3540 = vld [vmem:[#allocation3 + $0x150] sm:$0xff]
  %v3541 = vld [vmem:[#allocation3 + $0x158] sm:$0xff]
  %v3542 = vld [vmem:[#allocation3 + $0x160] sm:$0xff]
  %v3543 = vld [vmem:[#allocation3 + $0x168] sm:$0xff]
  %v3544 = vld [vmem:[#allocation3 + $0x170] sm:$0xff]
  %v3545 = vld [vmem:[#allocation3 + $0x178] sm:$0xff]
  %v3546 = vld [vmem:[#allocation3 + $0x180] sm:$0xff]
  %v3547 = vld [vmem:[#allocation3 + $0x188] sm:$0xff]
  %v3548 = vld [vmem:[#allocation3 + $0x190] sm:$0xff]
  %v3549 = vld [vmem:[#allocation3 + $0x198] sm:$0xff]
  %v3550 = vld [vmem:[#allocation3 + $0x1a0] sm:$0xff]
  %v3551 = vld [vmem:[#allocation3 + $0x1a8] sm:$0xff]
  %v3552 = vld [vmem:[#allocation3 + $0x1b0] sm:$0xff]
  %v3553 = vld [vmem:[#allocation3 + $0x1b8] sm:$0xff]
  %v3554 = vld [vmem:[#allocation3 + $0x1c0] sm:$0xff]
  %v3555 = vld [vmem:[#allocation3 + $0x1c8] sm:$0xff]
  %v3556 = vld [vmem:[#allocation3 + $0x1d0] sm:$0xff]
  %v3557 = vld [vmem:[#allocation3 + $0x1d8] sm:$0xff]
  %v3558 = vld [vmem:[#allocation3 + $0x1e0] sm:$0xff]
  %v3559 = vld [vmem:[#allocation3 + $0x1e8] sm:$0xff]
  %v3560 = vld [vmem:[#allocation3 + $0x1f0] sm:$0xff]
  %v3561 = vld [vmem:[#allocation3 + $0x1f8] sm:$0xff]
  %v3562 = vld [vmem:[#allocation3 + $0x200] sm:$0xff]
  %v3563 = vld [vmem:[#allocation3 + $0x208] sm:$0xff]
  %v3564 = vld [vmem:[#allocation3 + $0x210] sm:$0xff]
  %v3565 = vld [vmem:[#allocation3 + $0x218] sm:$0xff]
  %v3566 = vld [vmem:[#allocation3 + $0x220] sm:$0xff]
  %v3567 = vld [vmem:[#allocation3 + $0x228] sm:$0xff]
  %v3568 = vld [vmem:[#allocation3 + $0x230] sm:$0xff]
  %v3569 = vld [vmem:[#allocation3 + $0x238] sm:$0xff]
  %v3570 = vld [vmem:[#allocation3 + $0x240] sm:$0xff]
  %v3571 = vld [vmem:[#allocation3 + $0x248] sm:$0xff]
  %v3572 = vld [vmem:[#allocation3 + $0x250] sm:$0xff]
  %v3573 = vld [vmem:[#allocation3 + $0x258] sm:$0xff]
  %v3574 = vld [vmem:[#allocation3 + $0x260] sm:$0xff]
  %v3575 = vld [vmem:[#allocation3 + $0x268] sm:$0xff]
  %v3576 = vld [vmem:[#allocation3 + $0x270] sm:$0xff]
  %v3577 = vld [vmem:[#allocation3 + $0x278] sm:$0xff]
  %v3578 = vld [vmem:[#allocation3 + $0x280] sm:$0xff]
  %v3579 = vld [vmem:[#allocation3 + $0x288] sm:$0xff]
  %v3580 = vld [vmem:[#allocation3 + $0x290] sm:$0xff]
  %v3581 = vld [vmem:[#allocation3 + $0x298] sm:$0xff]
  %v3582 = vld [vmem:[#allocation3 + $0x2a0] sm:$0xff]
  %v3583 = vld [vmem:[#allocation3 + $0x2a8] sm:$0xff]
  %v3584 = vld [vmem:[#allocation3 + $0x2b0] sm:$0xff]
  %v3585 = vld [vmem:[#allocation3 + $0x2b8] sm:$0xff]
  %v3586 = vld [vmem:[#allocation3 + $0x2c0] sm:$0xf]
  %v3587 = vld [vmem:[#allocation3 + $0x2c8] sm:$0xf]
  %v3588 = vld [vmem:[#allocation3 + $0x2d0] sm:$0xf]
  %v3589 = vld [vmem:[#allocation3 + $0x2d8] sm:$0xf]
  %v3590 = vld [vmem:[%s3] sm:$0xff]
  %v3591 = vld [vmem:[%s3 + $0x8] sm:$0xff]
  %v3592 = vld [vmem:[%s3 + $0x10] sm:$0xff]
  %v3593 = vld [vmem:[%s3 + $0x18] sm:$0xff]
  %v3594 = vld [vmem:[%s3 + $0x20] sm:$0xff]
  %v3595 = vld [vmem:[%s3 + $0x28] sm:$0xff]
  %v3596 = vld [vmem:[%s3 + $0x30] sm:$0xff]
  %v3597 = vld [vmem:[%s3 + $0x38] sm:$0xff]
  %v3598 = vld [vmem:[%s3 + $0x40] sm:$0xff]
  %v3599 = vld [vmem:[%s3 + $0x48] sm:$0xff]
  %v3600 = vld [vmem:[%s3 + $0x50] sm:$0xff]
  %v3601 = vld [vmem:[%s3 + $0x58] sm:$0xff]
  %v3602 = vld [vmem:[%s3 + $0x60] sm:$0xff]
  %v3603 = vld [vmem:[%s3 + $0x68] sm:$0xff]
  %v3604 = vld [vmem:[%s3 + $0x70] sm:$0xff]
  %v3605 = vld [vmem:[%s3 + $0x78] sm:$0xff]
  %v3606 = vld [vmem:[%s3 + $0x80] sm:$0xff]
  %v3607 = vld [vmem:[%s3 + $0x88] sm:$0xff]
  %v3608 = vld [vmem:[%s3 + $0x90] sm:$0xff]
  %v3609 = vld [vmem:[%s3 + $0x98] sm:$0xff]
  %v3610 = vld [vmem:[%s3 + $0xa0] sm:$0xff]
  %v3611 = vld [vmem:[%s3 + $0xa8] sm:$0xff]
  %v3612 = vld [vmem:[%s3 + $0xb0] sm:$0xff]
  %v3613 = vld [vmem:[%s3 + $0xb8] sm:$0xff]
  %v3614 = vld [vmem:[%s3 + $0xc0] sm:$0xff]
  %v3615 = vld [vmem:[%s3 + $0xc8] sm:$0xff]
  %v3616 = vld [vmem:[%s3 + $0xd0] sm:$0xff]
  %v3617 = vld [vmem:[%s3 + $0xd8] sm:$0xff]
  %v3618 = vld [vmem:[%s3 + $0xe0] sm:$0xff]
  %v3619 = vld [vmem:[%s3 + $0xe8] sm:$0xff]
  %v3620 = vld [vmem:[%s3 + $0xf0] sm:$0xff]
  %v3621 = vld [vmem:[%s3 + $0xf8] sm:$0xff]
  %v3622 = vld [vmem:[%s3 + $0x100] sm:$0xff]
  %v3623 = vld [vmem:[%s3 + $0x108] sm:$0xff]
  %v3624 = vld [vmem:[%s3 + $0x110] sm:$0xff]
  %v3625 = vld [vmem:[%s3 + $0x118] sm:$0xff]
  %v3626 = vld [vmem:[%s3 + $0x120] sm:$0xff]
  %v3627 = vld [vmem:[%s3 + $0x128] sm:$0xff]
  %v3628 = vld [vmem:[%s3 + $0x130] sm:$0xff]
  %v3629 = vld [vmem:[%s3 + $0x138] sm:$0xff]
  %v3630 = vld [vmem:[%s3 + $0x140] sm:$0xff]
  %v3631 = vld [vmem:[%s3 + $0x148] sm:$0xff]
  %v3632 = vld [vmem:[%s3 + $0x150] sm:$0xff]
  %v3633 = vld [vmem:[%s3 + $0x158] sm:$0xff]
  %v3634 = vld [vmem:[%s3 + $0x160] sm:$0xff]
  %v3635 = vld [vmem:[%s3 + $0x168] sm:$0xff]
  %v3636 = vld [vmem:[%s3 + $0x170] sm:$0xff]
  %v3637 = vld [vmem:[%s3 + $0x178] sm:$0xff]
  %v3638 = vld [vmem:[%s3 + $0x180] sm:$0xff]
  %v3639 = vld [vmem:[%s3 + $0x188] sm:$0xff]
  %v3640 = vld [vmem:[%s3 + $0x190] sm:$0xff]
  %v3641 = vld [vmem:[%s3 + $0x198] sm:$0xff]
  %v3642 = vld [vmem:[%s3 + $0x1a0] sm:$0xff]
  %v3643 = vld [vmem:[%s3 + $0x1a8] sm:$0xff]
  %v3644 = vld [vmem:[%s3 + $0x1b0] sm:$0xff]
  %v3645 = vld [vmem:[%s3 + $0x1b8] sm:$0xff]
  %v3646 = vld [vmem:[%s3 + $0x1c0] sm:$0xff]
  %v3647 = vld [vmem:[%s3 + $0x1c8] sm:$0xff]
  %v3648 = vld [vmem:[%s3 + $0x1d0] sm:$0xff]
  %v3649 = vld [vmem:[%s3 + $0x1d8] sm:$0xff]
  %v3650 = vld [vmem:[%s3 + $0x1e0] sm:$0xff]
  %v3651 = vld [vmem:[%s3 + $0x1e8] sm:$0xff]
  %v3652 = vld [vmem:[%s3 + $0x1f0] sm:$0xff]
  %v3653 = vld [vmem:[%s3 + $0x1f8] sm:$0xff]
  %v3654 = vld [vmem:[%s4] sm:$0x1]
  %v3656 = vperm.slane %v3654, 0
  %3658 = vmatpush.msra.mxu0 %v3605
  %3659 = vmatpush.msra.mxu0 %v3604
  %3660 = vmatpush.msra.mxu0 %v3603
  %3661 = vmatpush.msra.mxu0 %v3602
  %3662 = vmatpush.msra.mxu0 %v3601
  %3663 = vmatpush.msra.mxu0 %v3600
  %3664 = vmatpush.msra.mxu0 %v3599
  %3665 = vmatpush.msra.mxu0 %v3598
  %3666 = vmatpush.msra.mxu0 %v3597
  %3667 = vmatpush.msra.mxu0 %v3596
  %3668 = vmatpush.msra.mxu0 %v3595
  %3669 = vmatpush.msra.mxu0 %v3594
  %3670 = vmatpush.msra.mxu0 %v3593
  %3671 = vmatpush.msra.mxu0 %v3592
  %3672 = vmatpush.msra.mxu0 %v3591
  %3673 = vmatpush.msra.mxu0 %v3590
  %3674 = vmatmul.f32.gmra.mxu0 %v3498
  %v3675 = vpop.f32.mrf.mxu0
  %v3676 = vadd.f32 %v3656, %v3675
  %3677 = vmatmul.f32.gmra.mxu0 %v3502
  %v3678 = vpop.f32.mrf.mxu0
  %v3679 = vadd.f32 %v3656, %v3678
  %3680 = vmatmul.f32.gmra.mxu0 %v3506
  %v3681 = vpop.f32.mrf.mxu0
  %v3682 = vadd.f32 %v3656, %v3681
  %3683 = vmatmul.f32.gmra.mxu0 %v3510
  %v3684 = vpop.f32.mrf.mxu0
  %v3685 = vadd.f32 %v3656, %v3684
  %3686 = vmatmul.f32.gmra.mxu0 %v3514
  %v3687 = vpop.f32.mrf.mxu0
  %v3688 = vadd.f32 %v3656, %v3687
  %3689 = vmatmul.f32.gmra.mxu0 %v3518
  %v3690 = vpop.f32.mrf.mxu0
  %v3691 = vadd.f32 %v3656, %v3690
  %3692 = vmatmul.f32.gmra.mxu0 %v3522
  %v3693 = vpop.f32.mrf.mxu0
  %v3694 = vadd.f32 %v3656, %v3693
  %3695 = vmatmul.f32.gmra.mxu0 %v3526
  %v3696 = vpop.f32.mrf.mxu0
  %v3697 = vadd.f32 %v3656, %v3696
  %3698 = vmatmul.f32.gmra.mxu0 %v3530
  %v3699 = vpop.f32.mrf.mxu0
  %v3700 = vadd.f32 %v3656, %v3699
  %3701 = vmatmul.f32.gmra.mxu0 %v3534
  %v3702 = vpop.f32.mrf.mxu0
  %v3703 = vadd.f32 %v3656, %v3702
  %3704 = vmatmul.f32.gmra.mxu0 %v3538
  %v3705 = vpop.f32.mrf.mxu0
  %v3706 = vadd.f32 %v3656, %v3705
  %3707 = vmatmul.f32.gmra.mxu0 %v3542
  %v3708 = vpop.f32.mrf.mxu0
  %v3709 = vadd.f32 %v3656, %v3708
  %3710 = vmatmul.f32.gmra.mxu0 %v3546
  %v3711 = vpop.f32.mrf.mxu0
  %v3712 = vadd.f32 %v3656, %v3711
  %3713 = vmatmul.f32.gmra.mxu0 %v3550
  %v3714 = vpop.f32.mrf.mxu0
  %v3715 = vadd.f32 %v3656, %v3714
  %3716 = vmatmul.f32.gmra.mxu0 %v3554
  %v3717 = vpop.f32.mrf.mxu0
  %v3718 = vadd.f32 %v3656, %v3717
  %3719 = vmatmul.f32.gmra.mxu0 %v3558
  %v3720 = vpop.f32.mrf.mxu0
  %v3721 = vadd.f32 %v3656, %v3720
  %3722 = vmatmul.f32.gmra.mxu0 %v3562
  %v3723 = vpop.f32.mrf.mxu0
  %v3724 = vadd.f32 %v3656, %v3723
  %3725 = vmatmul.f32.gmra.mxu0 %v3566
  %v3726 = vpop.f32.mrf.mxu0
  %v3727 = vadd.f32 %v3656, %v3726
  %3728 = vmatmul.f32.gmra.mxu0 %v3570
  %v3729 = vpop.f32.mrf.mxu0
  %v3730 = vadd.f32 %v3656, %v3729
  %3731 = vmatmul.f32.gmra.mxu0 %v3574
  %v3732 = vpop.f32.mrf.mxu0
  %v3733 = vadd.f32 %v3656, %v3732
  %3734 = vmatmul.f32.gmra.mxu0 %v3578
  %v3735 = vpop.f32.mrf.mxu0
  %v3736 = vadd.f32 %v3656, %v3735
  %3737 = vmatmul.f32.gmra.mxu0 %v3582
  %v3738 = vpop.f32.mrf.mxu0
  %v3739 = vadd.f32 %v3656, %v3738
  %3740 = vmatmul.f32.gmra.mxu0 %v3586
  %v3741 = vpop.f32.mrf.mxu0
  %v3742 = vadd.f32 %v3656, %v3741
  %3743 = vdwg.mxu0
  %3744 = vmatpush.msra.mxu0 %v3621
  %3745 = vmatpush.msra.mxu0 %v3620
  %3746 = vmatpush.msra.mxu0 %v3619
  %3747 = vmatpush.msra.mxu0 %v3618
  %3748 = vmatpush.msra.mxu0 %v3617
  %3749 = vmatpush.msra.mxu0 %v3616
  %3750 = vmatpush.msra.mxu0 %v3615
  %3751 = vmatpush.msra.mxu0 %v3614
  %3752 = vmatpush.msra.mxu0 %v3613
  %3753 = vmatpush.msra.mxu0 %v3612
  %3754 = vmatpush.msra.mxu0 %v3611
  %3755 = vmatpush.msra.mxu0 %v3610
  %3756 = vmatpush.msra.mxu0 %v3609
  %3757 = vmatpush.msra.mxu0 %v3608
  %3758 = vmatpush.msra.mxu0 %v3607
  %3759 = vmatpush.msra.mxu0 %v3606
  %3760 = vmatmul.f32.gmra.mxu0 %v3499
  %v3761 = vpop.f32.mrf.mxu0
  %v3762 = vadd.f32 %v3676, %v3761
  %3763 = vmatmul.f32.gmra.mxu0 %v3503
  %v3764 = vpop.f32.mrf.mxu0
  %v3765 = vadd.f32 %v3679, %v3764
  %3766 = vmatmul.f32.gmra.mxu0 %v3507
  %v3767 = vpop.f32.mrf.mxu0
  %v3768 = vadd.f32 %v3682, %v3767
  %3769 = vmatmul.f32.gmra.mxu0 %v3511
  %v3770 = vpop.f32.mrf.mxu0
  %v3771 = vadd.f32 %v3685, %v3770
  %3772 = vmatmul.f32.gmra.mxu0 %v3515
  %v3773 = vpop.f32.mrf.mxu0
  %v3774 = vadd.f32 %v3688, %v3773
  %3775 = vmatmul.f32.gmra.mxu0 %v3519
  %v3776 = vpop.f32.mrf.mxu0
  %v3777 = vadd.f32 %v3691, %v3776
  %3778 = vmatmul.f32.gmra.mxu0 %v3523
  %v3779 = vpop.f32.mrf.mxu0
  %v3780 = vadd.f32 %v3694, %v3779
  %3781 = vmatmul.f32.gmra.mxu0 %v3527
  %v3782 = vpop.f32.mrf.mxu0
  %v3783 = vadd.f32 %v3697, %v3782
  %3784 = vmatmul.f32.gmra.mxu0 %v3531
  %v3785 = vpop.f32.mrf.mxu0
  %v3786 = vadd.f32 %v3700, %v3785
  %3787 = vmatmul.f32.gmra.mxu0 %v3535
  %v3788 = vpop.f32.mrf.mxu0
  %v3789 = vadd.f32 %v3703, %v3788
  %3790 = vmatmul.f32.gmra.mxu0 %v3539
  %v3791 = vpop.f32.mrf.mxu0
  %v3792 = vadd.f32 %v3706, %v3791
  %3793 = vmatmul.f32.gmra.mxu0 %v3543
  %v3794 = vpop.f32.mrf.mxu0
  %v3795 = vadd.f32 %v3709, %v3794
  %3796 = vmatmul.f32.gmra.mxu0 %v3547
  %v3797 = vpop.f32.mrf.mxu0
  %v3798 = vadd.f32 %v3712, %v3797
  %3799 = vmatmul.f32.gmra.mxu0 %v3551
  %v3800 = vpop.f32.mrf.mxu0
  %v3801 = vadd.f32 %v3715, %v3800
  %3802 = vmatmul.f32.gmra.mxu0 %v3555
  %v3803 = vpop.f32.mrf.mxu0
  %v3804 = vadd.f32 %v3718, %v3803
  %3805 = vmatmul.f32.gmra.mxu0 %v3559
  %v3806 = vpop.f32.mrf.mxu0
  %v3807 = vadd.f32 %v3721, %v3806
  %3808 = vmatmul.f32.gmra.mxu0 %v3563
  %v3809 = vpop.f32.mrf.mxu0
  %v3810 = vadd.f32 %v3724, %v3809
  %3811 = vmatmul.f32.gmra.mxu0 %v3567
  %v3812 = vpop.f32.mrf.mxu0
  %v3813 = vadd.f32 %v3727, %v3812
  %3814 = vmatmul.f32.gmra.mxu0 %v3571
  %v3815 = vpop.f32.mrf.mxu0
  %v3816 = vadd.f32 %v3730, %v3815
  %3817 = vmatmul.f32.gmra.mxu0 %v3575
  %v3818 = vpop.f32.mrf.mxu0
  %v3819 = vadd.f32 %v3733, %v3818
  %3820 = vmatmul.f32.gmra.mxu0 %v3579
  %v3821 = vpop.f32.mrf.mxu0
  %v3822 = vadd.f32 %v3736, %v3821
  %3823 = vmatmul.f32.gmra.mxu0 %v3583
  %v3824 = vpop.f32.mrf.mxu0
  %v3825 = vadd.f32 %v3739, %v3824
  %3826 = vmatmul.f32.gmra.mxu0 %v3587
  %v3827 = vpop.f32.mrf.mxu0
  %v3828 = vadd.f32 %v3742, %v3827
  %3829 = vdwg.mxu0
  %3830 = vmatpush.msra.mxu0 %v3637
  %3831 = vmatpush.msra.mxu0 %v3636
  %3832 = vmatpush.msra.mxu0 %v3635
  %3833 = vmatpush.msra.mxu0 %v3634
  %3834 = vmatpush.msra.mxu0 %v3633
  %3835 = vmatpush.msra.mxu0 %v3632
  %3836 = vmatpush.msra.mxu0 %v3631
  %3837 = vmatpush.msra.mxu0 %v3630
  %3838 = vmatpush.msra.mxu0 %v3629
  %3839 = vmatpush.msra.mxu0 %v3628
  %3840 = vmatpush.msra.mxu0 %v3627
  %3841 = vmatpush.msra.mxu0 %v3626
  %3842 = vmatpush.msra.mxu0 %v3625
  %3843 = vmatpush.msra.mxu0 %v3624
  %3844 = vmatpush.msra.mxu0 %v3623
  %3845 = vmatpush.msra.mxu0 %v3622
  %3846 = vmatmul.f32.gmra.mxu0 %v3500
  %v3847 = vpop.f32.mrf.mxu0
  %v3848 = vadd.f32 %v3762, %v3847
  %3849 = vmatmul.f32.gmra.mxu0 %v3504
  %v3850 = vpop.f32.mrf.mxu0
  %v3851 = vadd.f32 %v3765, %v3850
  %3852 = vmatmul.f32.gmra.mxu0 %v3508
  %v3853 = vpop.f32.mrf.mxu0
  %v3854 = vadd.f32 %v3768, %v3853
  %3855 = vmatmul.f32.gmra.mxu0 %v3512
  %v3856 = vpop.f32.mrf.mxu0
  %v3857 = vadd.f32 %v3771, %v3856
  %3858 = vmatmul.f32.gmra.mxu0 %v3516
  %v3859 = vpop.f32.mrf.mxu0
  %v3860 = vadd.f32 %v3774, %v3859
  %3861 = vmatmul.f32.gmra.mxu0 %v3520
  %v3862 = vpop.f32.mrf.mxu0
  %v3863 = vadd.f32 %v3777, %v3862
  %3864 = vmatmul.f32.gmra.mxu0 %v3524
  %v3865 = vpop.f32.mrf.mxu0
  %v3866 = vadd.f32 %v3780, %v3865
  %3867 = vmatmul.f32.gmra.mxu0 %v3528
  %v3868 = vpop.f32.mrf.mxu0
  %v3869 = vadd.f32 %v3783, %v3868
  %3870 = vmatmul.f32.gmra.mxu0 %v3532
  %v3871 = vpop.f32.mrf.mxu0
  %v3872 = vadd.f32 %v3786, %v3871
  %3873 = vmatmul.f32.gmra.mxu0 %v3536
  %v3874 = vpop.f32.mrf.mxu0
  %v3875 = vadd.f32 %v3789, %v3874
  %3876 = vmatmul.f32.gmra.mxu0 %v3540
  %v3877 = vpop.f32.mrf.mxu0
  %v3878 = vadd.f32 %v3792, %v3877
  %3879 = vmatmul.f32.gmra.mxu0 %v3544
  %v3880 = vpop.f32.mrf.mxu0
  %v3881 = vadd.f32 %v3795, %v3880
  %3882 = vmatmul.f32.gmra.mxu0 %v3548
  %v3883 = vpop.f32.mrf.mxu0
  %v3884 = vadd.f32 %v3798, %v3883
  %3885 = vmatmul.f32.gmra.mxu0 %v3552
  %v3886 = vpop.f32.mrf.mxu0
  %v3887 = vadd.f32 %v3801, %v3886
  %3888 = vmatmul.f32.gmra.mxu0 %v3556
  %v3889 = vpop.f32.mrf.mxu0
  %v3890 = vadd.f32 %v3804, %v3889
  %3891 = vmatmul.f32.gmra.mxu0 %v3560
  %v3892 = vpop.f32.mrf.mxu0
  %v3893 = vadd.f32 %v3807, %v3892
  %3894 = vmatmul.f32.gmra.mxu0 %v3564
  %v3895 = vpop.f32.mrf.mxu0
  %v3896 = vadd.f32 %v3810, %v3895
  %3897 = vmatmul.f32.gmra.mxu0 %v3568
  %v3898 = vpop.f32.mrf.mxu0
  %v3899 = vadd.f32 %v3813, %v3898
  %3900 = vmatmul.f32.gmra.mxu0 %v3572
  %v3901 = vpop.f32.mrf.mxu0
  %v3902 = vadd.f32 %v3816, %v3901
  %3903 = vmatmul.f32.gmra.mxu0 %v3576
  %v3904 = vpop.f32.mrf.mxu0
  %v3905 = vadd.f32 %v3819, %v3904
  %3906 = vmatmul.f32.gmra.mxu0 %v3580
  %v3907 = vpop.f32.mrf.mxu0
  %v3908 = vadd.f32 %v3822, %v3907
  %3909 = vmatmul.f32.gmra.mxu0 %v3584
  %v3910 = vpop.f32.mrf.mxu0
  %v3911 = vadd.f32 %v3825, %v3910
  %3912 = vmatmul.f32.gmra.mxu0 %v3588
  %v3913 = vpop.f32.mrf.mxu0
  %v3914 = vadd.f32 %v3828, %v3913
  %3915 = vdwg.mxu0
  %3916 = vmatpush.msra.mxu0 %v3653
  %3917 = vmatpush.msra.mxu0 %v3652
  %3918 = vmatpush.msra.mxu0 %v3651
  %3919 = vmatpush.msra.mxu0 %v3650
  %3920 = vmatpush.msra.mxu0 %v3649
  %3921 = vmatpush.msra.mxu0 %v3648
  %3922 = vmatpush.msra.mxu0 %v3647
  %3923 = vmatpush.msra.mxu0 %v3646
  %3924 = vmatpush.msra.mxu0 %v3645
  %3925 = vmatpush.msra.mxu0 %v3644
  %3926 = vmatpush.msra.mxu0 %v3643
  %3927 = vmatpush.msra.mxu0 %v3642
  %3928 = vmatpush.msra.mxu0 %v3641
  %3929 = vmatpush.msra.mxu0 %v3640
  %3930 = vmatpush.msra.mxu0 %v3639
  %3931 = vmatpush.msra.mxu0 %v3638
  %3932 = vmatmul.f32.gmra.mxu0 %v3501
  %v3933 = vpop.f32.mrf.mxu0
  %v3934 = vadd.f32 %v3848, %v3933
  %3935 = vmatmul.f32.gmra.mxu0 %v3505
  %v3936 = vpop.f32.mrf.mxu0
  %v3937 = vadd.f32 %v3851, %v3936
  %3938 = vmatmul.f32.gmra.mxu0 %v3509
  %v3939 = vpop.f32.mrf.mxu0
  %v3940 = vadd.f32 %v3854, %v3939
  %3941 = vmatmul.f32.gmra.mxu0 %v3513
  %v3942 = vpop.f32.mrf.mxu0
  %v3943 = vadd.f32 %v3857, %v3942
  %3944 = vmatmul.f32.gmra.mxu0 %v3517
  %v3945 = vpop.f32.mrf.mxu0
  %v3946 = vadd.f32 %v3860, %v3945
  %3947 = vmatmul.f32.gmra.mxu0 %v3521
  %v3948 = vpop.f32.mrf.mxu0
  %v3949 = vadd.f32 %v3863, %v3948
  %3950 = vmatmul.f32.gmra.mxu0 %v3525
  %v3951 = vpop.f32.mrf.mxu0
  %v3952 = vadd.f32 %v3866, %v3951
  %3953 = vmatmul.f32.gmra.mxu0 %v3529
  %v3954 = vpop.f32.mrf.mxu0
  %v3955 = vadd.f32 %v3869, %v3954
  %3956 = vmatmul.f32.gmra.mxu0 %v3533
  %v3957 = vpop.f32.mrf.mxu0
  %v3958 = vadd.f32 %v3872, %v3957
  %3959 = vmatmul.f32.gmra.mxu0 %v3537
  %v3960 = vpop.f32.mrf.mxu0
  %v3961 = vadd.f32 %v3875, %v3960
  %3962 = vmatmul.f32.gmra.mxu0 %v3541
  %v3963 = vpop.f32.mrf.mxu0
  %v3964 = vadd.f32 %v3878, %v3963
  %3965 = vmatmul.f32.gmra.mxu0 %v3545
  %v3966 = vpop.f32.mrf.mxu0
  %v3967 = vadd.f32 %v3881, %v3966
  %3968 = vmatmul.f32.gmra.mxu0 %v3549
  %v3969 = vpop.f32.mrf.mxu0
  %v3970 = vadd.f32 %v3884, %v3969
  %3971 = vmatmul.f32.gmra.mxu0 %v3553
  %v3972 = vpop.f32.mrf.mxu0
  %v3973 = vadd.f32 %v3887, %v3972
  %3974 = vmatmul.f32.gmra.mxu0 %v3557
  %v3975 = vpop.f32.mrf.mxu0
  %v3976 = vadd.f32 %v3890, %v3975
  %3977 = vmatmul.f32.gmra.mxu0 %v3561
  %v3978 = vpop.f32.mrf.mxu0
  %v3979 = vadd.f32 %v3893, %v3978
  %3980 = vmatmul.f32.gmra.mxu0 %v3565
  %v3981 = vpop.f32.mrf.mxu0
  %v3982 = vadd.f32 %v3896, %v3981
  %3983 = vmatmul.f32.gmra.mxu0 %v3569
  %v3984 = vpop.f32.mrf.mxu0
  %v3985 = vadd.f32 %v3899, %v3984
  %3986 = vmatmul.f32.gmra.mxu0 %v3573
  %v3987 = vpop.f32.mrf.mxu0
  %v3988 = vadd.f32 %v3902, %v3987
  %3989 = vmatmul.f32.gmra.mxu0 %v3577
  %v3990 = vpop.f32.mrf.mxu0
  %v3991 = vadd.f32 %v3905, %v3990
  %3992 = vmatmul.f32.gmra.mxu0 %v3581
  %v3993 = vpop.f32.mrf.mxu0
  %v3994 = vadd.f32 %v3908, %v3993
  %3995 = vmatmul.f32.gmra.mxu0 %v3585
  %v3996 = vpop.f32.mrf.mxu0
  %v3997 = vadd.f32 %v3911, %v3996
  %3998 = vmatmul.f32.gmra.mxu0 %v3589
  %v3999 = vpop.f32.mrf.mxu0
  %v4000 = vadd.f32 %v3914, %v3999
  %4001 = vdwg.mxu0
  %v4002 = vmax.f32 %v3934, 0.0
  %v4003 = vmax.f32 %v3937, 0.0
  %v4004 = vmax.f32 %v3940, 0.0
  %v4005 = vmax.f32 %v3943, 0.0
  %v4006 = vmax.f32 %v3946, 0.0
  %v4007 = vmax.f32 %v3949, 0.0
  %v4008 = vmax.f32 %v3952, 0.0
  %v4009 = vmax.f32 %v3955, 0.0
  %v4010 = vmax.f32 %v3958, 0.0
  %v4011 = vmax.f32 %v3961, 0.0
  %v4012 = vmax.f32 %v3964, 0.0
  %v4013 = vmax.f32 %v3967, 0.0
  %v4014 = vmax.f32 %v3970, 0.0
  %v4015 = vmax.f32 %v3973, 0.0
  %v4016 = vmax.f32 %v3976, 0.0
  %v4017 = vmax.f32 %v3979, 0.0
  %v4018 = vmax.f32 %v3982, 0.0
  %v4019 = vmax.f32 %v3985, 0.0
  %v4020 = vmax.f32 %v3988, 0.0
  %v4021 = vmax.f32 %v3991, 0.0
  %v4022 = vmax.f32 %v3994, 0.0
  %v4023 = vmax.f32 %v3997, 0.0
  %v4024 = vmax.f32 %v4000, 0.0
  %vm4025 = vcmask 523264
  %4026 = vst.msk [vmem:[#allocation4] sm:$0xff] %vm4025, %v4002
  %4027 = vst.msk [vmem:[#allocation4 + $0x8] sm:$0xff] %vm4025, %v4003
  %4028 = vst.msk [vmem:[#allocation4 + $0x10] sm:$0xff] %vm4025, %v4004
  %4029 = vst.msk [vmem:[#allocation4 + $0x18] sm:$0xff] %vm4025, %v4005
  %4030 = vst.msk [vmem:[#allocation4 + $0x20] sm:$0xff] %vm4025, %v4006
  %4031 = vst.msk [vmem:[#allocation4 + $0x28] sm:$0xff] %vm4025, %v4007
  %4032 = vst.msk [vmem:[#allocation4 + $0x30] sm:$0xff] %vm4025, %v4008
  %4033 = vst.msk [vmem:[#allocation4 + $0x38] sm:$0xff] %vm4025, %v4009
  %4034 = vst.msk [vmem:[#allocation4 + $0x40] sm:$0xff] %vm4025, %v4010
  %4035 = vst.msk [vmem:[#allocation4 + $0x48] sm:$0xff] %vm4025, %v4011
  %4036 = vst.msk [vmem:[#allocation4 + $0x50] sm:$0xff] %vm4025, %v4012
  %4037 = vst.msk [vmem:[#allocation4 + $0x58] sm:$0xff] %vm4025, %v4013
  %4038 = vst.msk [vmem:[#allocation4 + $0x60] sm:$0xff] %vm4025, %v4014
  %4039 = vst.msk [vmem:[#allocation4 + $0x68] sm:$0xff] %vm4025, %v4015
  %4040 = vst.msk [vmem:[#allocation4 + $0x70] sm:$0xff] %vm4025, %v4016
  %4041 = vst.msk [vmem:[#allocation4 + $0x78] sm:$0xff] %vm4025, %v4017
  %4042 = vst.msk [vmem:[#allocation4 + $0x80] sm:$0xff] %vm4025, %v4018
  %4043 = vst.msk [vmem:[#allocation4 + $0x88] sm:$0xff] %vm4025, %v4019
  %4044 = vst.msk [vmem:[#allocation4 + $0x90] sm:$0xff] %vm4025, %v4020
  %4045 = vst.msk [vmem:[#allocation4 + $0x98] sm:$0xff] %vm4025, %v4021
  %4046 = vst.msk [vmem:[#allocation4 + $0xa0] sm:$0xff] %vm4025, %v4022
  %4047 = vst.msk [vmem:[#allocation4 + $0xa8] sm:$0xff] %vm4025, %v4023
  %vm4048 = vcmask 519168
  %4049 = vst.msk [vmem:[#allocation4 + $0xb0] sm:$0xf] %vm4048, %v4024
  %4050 = vst.msk [vmem:[#allocation4 + $0xb4] sm:$0xff] %vm4025, 0.0
  %v4051 = vld [vmem:[#allocation4] sm:$0xff]
  %v4052 = vld [vmem:[#allocation4 + $0x8] sm:$0xff]
  %v4053 = vld [vmem:[#allocation4 + $0x10] sm:$0xff]
  %v4054 = vld [vmem:[#allocation4 + $0x18] sm:$0xff]
  %v4055 = vld [vmem:[#allocation4 + $0x20] sm:$0xff]
  %v4056 = vld [vmem:[#allocation4 + $0x28] sm:$0xff]
  %v4057 = vld [vmem:[#allocation4 + $0x30] sm:$0xff]
  %v4058 = vld [vmem:[#allocation4 + $0x38] sm:$0xff]
  %v4059 = vld [vmem:[#allocation4 + $0x40] sm:$0x3f]
  %4060 = vst.msk [vmem:[#allocation5] sm:$0xff] %vm4025, %v4051
  %4061 = vst.msk [vmem:[#allocation5 + $0x28] sm:$0xff] %vm4025, %v4052
  %4062 = vst.msk [vmem:[#allocation5 + $0x50] sm:$0xff] %vm4025, %v4053
  %4063 = vst.msk [vmem:[#allocation5 + $0x78] sm:$0xff] %vm4025, %v4054
  %4064 = vst.msk [vmem:[#allocation5 + $0xa0] sm:$0xff] %vm4025, %v4055
  %4065 = vst.msk [vmem:[#allocation5 + $0xc8] sm:$0xff] %vm4025, %v4056
  %4066 = vst.msk [vmem:[#allocation5 + $0xf0] sm:$0xff] %vm4025, %v4057
  %4067 = vst.msk [vmem:[#allocation5 + $0x118] sm:$0xff] %vm4025, %v4058
  %vm4068 = vcmask 521216
  %4069 = vst.msk [vmem:[#allocation5 + $0x140] sm:$0x3f] %vm4068, %v4059
  %v4070 = vld [vmem:[#allocation4 + $0x1] sm:$0xff]
  %v4071 = vld [vmem:[#allocation4 + $0x9] sm:$0xff]
  %v4072 = vld [vmem:[#allocation4 + $0x11] sm:$0xff]
  %v4073 = vld [vmem:[#allocation4 + $0x19] sm:$0xff]
  %v4074 = vld [vmem:[#allocation4 + $0x21] sm:$0xff]
  %v4075 = vld [vmem:[#allocation4 + $0x29] sm:$0xff]
  %v4076 = vld [vmem:[#allocation4 + $0x31] sm:$0xff]
  %v4077 = vld [vmem:[#allocation4 + $0x39] sm:$0xff]
  %v4078 = vld [vmem:[#allocation4 + $0x41] sm:$0x3f]
  %4088 = vrot.lane.b32.xlu0 %v4070, 64
  %v4089 = vpop.permute.xlu0 %4088
  %4090 = vrot.lane.b32.xlu0 %v4071, 64
  %v4091 = vpop.permute.xlu0 %4090
  %4092 = vrot.lane.b32.xlu0 %v4072, 64
  %v4093 = vpop.permute.xlu0 %4092
  %4094 = vrot.lane.b32.xlu0 %v4073, 64
  %v4095 = vpop.permute.xlu0 %4094
  %4096 = vrot.lane.b32.xlu0 %v4074, 64
  %v4097 = vpop.permute.xlu0 %4096
  %4098 = vrot.lane.b32.xlu0 %v4075, 64
  %v4099 = vpop.permute.xlu0 %4098
  %4100 = vrot.lane.b32.xlu0 %v4076, 64
  %v4101 = vpop.permute.xlu0 %4100
  %4102 = vrot.lane.b32.xlu0 %v4077, 64
  %v4103 = vpop.permute.xlu0 %4102
  %4104 = vrot.lane.b32.xlu0 %v4078, 64
  %v4105 = vpop.permute.xlu0 %4104
  %vm4115 = vcmask 1048064
  %4116 = vst.msk [vmem:[#allocation5] sm:$0xff] %vm4115, %v4089
  %4117 = vst.msk [vmem:[#allocation5 + $0x28] sm:$0xff] %vm4115, %v4091
  %4118 = vst.msk [vmem:[#allocation5 + $0x50] sm:$0xff] %vm4115, %v4093
  %4119 = vst.msk [vmem:[#allocation5 + $0x78] sm:$0xff] %vm4115, %v4095
  %4120 = vst.msk [vmem:[#allocation5 + $0xa0] sm:$0xff] %vm4115, %v4097
  %4121 = vst.msk [vmem:[#allocation5 + $0xc8] sm:$0xff] %vm4115, %v4099
  %4122 = vst.msk [vmem:[#allocation5 + $0xf0] sm:$0xff] %vm4115, %v4101
  %4123 = vst.msk [vmem:[#allocation5 + $0x118] sm:$0xff] %vm4115, %v4103
  %vm4124 = vcmask 1046016
  %4125 = vst.msk [vmem:[#allocation5 + $0x140] sm:$0x3f] %vm4124, %v4105
  %v4126 = vld [vmem:[#allocation4 + $0x2] sm:$0xff]
  %v4127 = vld [vmem:[#allocation4 + $0xa] sm:$0xff]
  %v4128 = vld [vmem:[#allocation4 + $0x12] sm:$0xff]
  %v4129 = vld [vmem:[#allocation4 + $0x1a] sm:$0xff]
  %v4130 = vld [vmem:[#allocation4 + $0x22] sm:$0xff]
  %v4131 = vld [vmem:[#allocation4 + $0x2a] sm:$0xff]
  %v4132 = vld [vmem:[#allocation4 + $0x32] sm:$0xff]
  %v4133 = vld [vmem:[#allocation4 + $0x3a] sm:$0xff]
  %v4134 = vld [vmem:[#allocation4 + $0x42] sm:$0x3f]
  %4135 = vst.msk [vmem:[#allocation5 + $0x8] sm:$0xff] %vm4025, %v4126
  %4136 = vst.msk [vmem:[#allocation5 + $0x30] sm:$0xff] %vm4025, %v4127
  %4137 = vst.msk [vmem:[#allocation5 + $0x58] sm:$0xff] %vm4025, %v4128
  %4138 = vst.msk [vmem:[#allocation5 + $0x80] sm:$0xff] %vm4025, %v4129
  %4139 = vst.msk [vmem:[#allocation5 + $0xa8] sm:$0xff] %vm4025, %v4130
  %4140 = vst.msk [vmem:[#allocation5 + $0xd0] sm:$0xff] %vm4025, %v4131
  %4141 = vst.msk [vmem:[#allocation5 + $0xf8] sm:$0xff] %vm4025, %v4132
  %4142 = vst.msk [vmem:[#allocation5 + $0x120] sm:$0xff] %vm4025, %v4133
  %4143 = vst.msk [vmem:[#allocation5 + $0x148] sm:$0x3f] %vm4068, %v4134
  %v4144 = vld [vmem:[#allocation4 + $0xa] sm:$0xff]
  %v4145 = vld [vmem:[#allocation4 + $0x12] sm:$0xff]
  %v4146 = vld [vmem:[#allocation4 + $0x1a] sm:$0xff]
  %v4147 = vld [vmem:[#allocation4 + $0x22] sm:$0xff]
  %v4148 = vld [vmem:[#allocation4 + $0x2a] sm:$0xff]
  %v4149 = vld [vmem:[#allocation4 + $0x32] sm:$0xff]
  %v4150 = vld [vmem:[#allocation4 + $0x3a] sm:$0xff]
  %v4151 = vld [vmem:[#allocation4 + $0x42] sm:$0xff]
  %v4152 = vld [vmem:[#allocation4 + $0x4a] sm:$0x3f]
  %4162 = vrot.lane.b32.xlu0 %v4144, 64
  %v4163 = vpop.permute.xlu0 %4162
  %4164 = vrot.lane.b32.xlu0 %v4145, 64
  %v4165 = vpop.permute.xlu0 %4164
  %4166 = vrot.lane.b32.xlu0 %v4146, 64
  %v4167 = vpop.permute.xlu0 %4166
  %4168 = vrot.lane.b32.xlu0 %v4147, 64
  %v4169 = vpop.permute.xlu0 %4168
  %4170 = vrot.lane.b32.xlu0 %v4148, 64
  %v4171 = vpop.permute.xlu0 %4170
  %4172 = vrot.lane.b32.xlu0 %v4149, 64
  %v4173 = vpop.permute.xlu0 %4172
  %4174 = vrot.lane.b32.xlu0 %v4150, 64
  %v4175 = vpop.permute.xlu0 %4174
  %4176 = vrot.lane.b32.xlu0 %v4151, 64
  %v4177 = vpop.permute.xlu0 %4176
  %4178 = vrot.lane.b32.xlu0 %v4152, 64
  %v4179 = vpop.permute.xlu0 %4178
  %4189 = vst.msk [vmem:[#allocation5 + $0x8] sm:$0xff] %vm4115, %v4163
  %4190 = vst.msk [vmem:[#allocation5 + $0x30] sm:$0xff] %vm4115, %v4165
  %4191 = vst.msk [vmem:[#allocation5 + $0x58] sm:$0xff] %vm4115, %v4167
  %4192 = vst.msk [vmem:[#allocation5 + $0x80] sm:$0xff] %vm4115, %v4169
  %4193 = vst.msk [vmem:[#allocation5 + $0xa8] sm:$0xff] %vm4115, %v4171
  %4194 = vst.msk [vmem:[#allocation5 + $0xd0] sm:$0xff] %vm4115, %v4173
  %4195 = vst.msk [vmem:[#allocation5 + $0xf8] sm:$0xff] %vm4115, %v4175
  %4196 = vst.msk [vmem:[#allocation5 + $0x120] sm:$0xff] %vm4115, %v4177
  %4197 = vst.msk [vmem:[#allocation5 + $0x148] sm:$0x3f] %vm4124, %v4179
  %v4198 = vld [vmem:[#allocation4 + $0xb] sm:$0xff]
  %v4199 = vld [vmem:[#allocation4 + $0x13] sm:$0xff]
  %v4200 = vld [vmem:[#allocation4 + $0x1b] sm:$0xff]
  %v4201 = vld [vmem:[#allocation4 + $0x23] sm:$0xff]
  %v4202 = vld [vmem:[#allocation4 + $0x2b] sm:$0xff]
  %v4203 = vld [vmem:[#allocation4 + $0x33] sm:$0xff]
  %v4204 = vld [vmem:[#allocation4 + $0x3b] sm:$0xff]
  %v4205 = vld [vmem:[#allocation4 + $0x43] sm:$0xff]
  %v4206 = vld [vmem:[#allocation4 + $0x4b] sm:$0x3f]
  %4207 = vst.msk [vmem:[#allocation5 + $0x10] sm:$0xff] %vm4025, %v4198
  %4208 = vst.msk [vmem:[#allocation5 + $0x38] sm:$0xff] %vm4025, %v4199
  %4209 = vst.msk [vmem:[#allocation5 + $0x60] sm:$0xff] %vm4025, %v4200
  %4210 = vst.msk [vmem:[#allocation5 + $0x88] sm:$0xff] %vm4025, %v4201
  %4211 = vst.msk [vmem:[#allocation5 + $0xb0] sm:$0xff] %vm4025, %v4202
  %4212 = vst.msk [vmem:[#allocation5 + $0xd8] sm:$0xff] %vm4025, %v4203
  %4213 = vst.msk [vmem:[#allocation5 + $0x100] sm:$0xff] %vm4025, %v4204
  %4214 = vst.msk [vmem:[#allocation5 + $0x128] sm:$0xff] %vm4025, %v4205
  %4215 = vst.msk [vmem:[#allocation5 + $0x150] sm:$0x3f] %vm4068, %v4206
  %v4216 = vld [vmem:[#allocation4 + $0xc] sm:$0xff]
  %v4217 = vld [vmem:[#allocation4 + $0x14] sm:$0xff]
  %v4218 = vld [vmem:[#allocation4 + $0x1c] sm:$0xff]
  %v4219 = vld [vmem:[#allocation4 + $0x24] sm:$0xff]
  %v4220 = vld [vmem:[#allocation4 + $0x2c] sm:$0xff]
  %v4221 = vld [vmem:[#allocation4 + $0x34] sm:$0xff]
  %v4222 = vld [vmem:[#allocation4 + $0x3c] sm:$0xff]
  %v4223 = vld [vmem:[#allocation4 + $0x44] sm:$0xff]
  %v4224 = vld [vmem:[#allocation4 + $0x4c] sm:$0x3f]
  %4234 = vrot.lane.b32.xlu0 %v4216, 64
  %v4235 = vpop.permute.xlu0 %4234
  %4236 = vrot.lane.b32.xlu0 %v4217, 64
  %v4237 = vpop.permute.xlu0 %4236
  %4238 = vrot.lane.b32.xlu0 %v4218, 64
  %v4239 = vpop.permute.xlu0 %4238
  %4240 = vrot.lane.b32.xlu0 %v4219, 64
  %v4241 = vpop.permute.xlu0 %4240
  %4242 = vrot.lane.b32.xlu0 %v4220, 64
  %v4243 = vpop.permute.xlu0 %4242
  %4244 = vrot.lane.b32.xlu0 %v4221, 64
  %v4245 = vpop.permute.xlu0 %4244
  %4246 = vrot.lane.b32.xlu0 %v4222, 64
  %v4247 = vpop.permute.xlu0 %4246
  %4248 = vrot.lane.b32.xlu0 %v4223, 64
  %v4249 = vpop.permute.xlu0 %4248
  %4250 = vrot.lane.b32.xlu0 %v4224, 64
  %v4251 = vpop.permute.xlu0 %4250
  %4261 = vst.msk [vmem:[#allocation5 + $0x10] sm:$0xff] %vm4115, %v4235
  %4262 = vst.msk [vmem:[#allocation5 + $0x38] sm:$0xff] %vm4115, %v4237
  %4263 = vst.msk [vmem:[#allocation5 + $0x60] sm:$0xff] %vm4115, %v4239
  %4264 = vst.msk [vmem:[#allocation5 + $0x88] sm:$0xff] %vm4115, %v4241
  %4265 = vst.msk [vmem:[#allocation5 + $0xb0] sm:$0xff] %vm4115, %v4243
  %4266 = vst.msk [vmem:[#allocation5 + $0xd8] sm:$0xff] %vm4115, %v4245
  %4267 = vst.msk [vmem:[#allocation5 + $0x100] sm:$0xff] %vm4115, %v4247
  %4268 = vst.msk [vmem:[#allocation5 + $0x128] sm:$0xff] %vm4115, %v4249
  %4269 = vst.msk [vmem:[#allocation5 + $0x150] sm:$0x3f] %vm4124, %v4251
  %v4270 = vld [vmem:[#allocation4 + $0x14] sm:$0xff]
  %v4271 = vld [vmem:[#allocation4 + $0x1c] sm:$0xff]
  %v4272 = vld [vmem:[#allocation4 + $0x24] sm:$0xff]
  %v4273 = vld [vmem:[#allocation4 + $0x2c] sm:$0xff]
  %v4274 = vld [vmem:[#allocation4 + $0x34] sm:$0xff]
  %v4275 = vld [vmem:[#allocation4 + $0x3c] sm:$0xff]
  %v4276 = vld [vmem:[#allocation4 + $0x44] sm:$0xff]
  %v4277 = vld [vmem:[#allocation4 + $0x4c] sm:$0xff]
  %v4278 = vld [vmem:[#allocation4 + $0x54] sm:$0x3f]
  %4279 = vst.msk [vmem:[#allocation5 + $0x18] sm:$0xff] %vm4025, %v4270
  %4280 = vst.msk [vmem:[#allocation5 + $0x40] sm:$0xff] %vm4025, %v4271
  %4281 = vst.msk [vmem:[#allocation5 + $0x68] sm:$0xff] %vm4025, %v4272
  %4282 = vst.msk [vmem:[#allocation5 + $0x90] sm:$0xff] %vm4025, %v4273
  %4283 = vst.msk [vmem:[#allocation5 + $0xb8] sm:$0xff] %vm4025, %v4274
  %4284 = vst.msk [vmem:[#allocation5 + $0xe0] sm:$0xff] %vm4025, %v4275
  %4285 = vst.msk [vmem:[#allocation5 + $0x108] sm:$0xff] %vm4025, %v4276
  %4286 = vst.msk [vmem:[#allocation5 + $0x130] sm:$0xff] %vm4025, %v4277
  %4287 = vst.msk [vmem:[#allocation5 + $0x158] sm:$0x3f] %vm4068, %v4278
  %v4288 = vld [vmem:[#allocation4 + $0x15] sm:$0xff]
  %v4289 = vld [vmem:[#allocation4 + $0x1d] sm:$0xff]
  %v4290 = vld [vmem:[#allocation4 + $0x25] sm:$0xff]
  %v4291 = vld [vmem:[#allocation4 + $0x2d] sm:$0xff]
  %v4292 = vld [vmem:[#allocation4 + $0x35] sm:$0xff]
  %v4293 = vld [vmem:[#allocation4 + $0x3d] sm:$0xff]
  %v4294 = vld [vmem:[#allocation4 + $0x45] sm:$0xff]
  %v4295 = vld [vmem:[#allocation4 + $0x4d] sm:$0xff]
  %v4296 = vld [vmem:[#allocation4 + $0x55] sm:$0x3f]
  %4306 = vrot.lane.b32.xlu0 %v4288, 64
  %v4307 = vpop.permute.xlu0 %4306
  %4308 = vrot.lane.b32.xlu0 %v4289, 64
  %v4309 = vpop.permute.xlu0 %4308
  %4310 = vrot.lane.b32.xlu0 %v4290, 64
  %v4311 = vpop.permute.xlu0 %4310
  %4312 = vrot.lane.b32.xlu0 %v4291, 64
  %v4313 = vpop.permute.xlu0 %4312
  %4314 = vrot.lane.b32.xlu0 %v4292, 64
  %v4315 = vpop.permute.xlu0 %4314
  %4316 = vrot.lane.b32.xlu0 %v4293, 64
  %v4317 = vpop.permute.xlu0 %4316
  %4318 = vrot.lane.b32.xlu0 %v4294, 64
  %v4319 = vpop.permute.xlu0 %4318
  %4320 = vrot.lane.b32.xlu0 %v4295, 64
  %v4321 = vpop.permute.xlu0 %4320
  %4322 = vrot.lane.b32.xlu0 %v4296, 64
  %v4323 = vpop.permute.xlu0 %4322
  %4333 = vst.msk [vmem:[#allocation5 + $0x18] sm:$0xff] %vm4115, %v4307
  %4334 = vst.msk [vmem:[#allocation5 + $0x40] sm:$0xff] %vm4115, %v4309
  %4335 = vst.msk [vmem:[#allocation5 + $0x68] sm:$0xff] %vm4115, %v4311
  %4336 = vst.msk [vmem:[#allocation5 + $0x90] sm:$0xff] %vm4115, %v4313
  %4337 = vst.msk [vmem:[#allocation5 + $0xb8] sm:$0xff] %vm4115, %v4315
  %4338 = vst.msk [vmem:[#allocation5 + $0xe0] sm:$0xff] %vm4115, %v4317
  %4339 = vst.msk [vmem:[#allocation5 + $0x108] sm:$0xff] %vm4115, %v4319
  %4340 = vst.msk [vmem:[#allocation5 + $0x130] sm:$0xff] %vm4115, %v4321
  %4341 = vst.msk [vmem:[#allocation5 + $0x158] sm:$0x3f] %vm4124, %v4323
  %v4342 = vld [vmem:[#allocation4 + $0x16] sm:$0xff]
  %v4343 = vld [vmem:[#allocation4 + $0x1e] sm:$0xff]
  %v4344 = vld [vmem:[#allocation4 + $0x26] sm:$0xff]
  %v4345 = vld [vmem:[#allocation4 + $0x2e] sm:$0xff]
  %v4346 = vld [vmem:[#allocation4 + $0x36] sm:$0xff]
  %v4347 = vld [vmem:[#allocation4 + $0x3e] sm:$0xff]
  %v4348 = vld [vmem:[#allocation4 + $0x46] sm:$0xff]
  %v4349 = vld [vmem:[#allocation4 + $0x4e] sm:$0xff]
  %v4350 = vld [vmem:[#allocation4 + $0x56] sm:$0x3f]
  %4351 = vst.msk [vmem:[#allocation5 + $0x20] sm:$0xff] %vm4025, %v4342
  %4352 = vst.msk [vmem:[#allocation5 + $0x48] sm:$0xff] %vm4025, %v4343
  %4353 = vst.msk [vmem:[#allocation5 + $0x70] sm:$0xff] %vm4025, %v4344
  %4354 = vst.msk [vmem:[#allocation5 + $0x98] sm:$0xff] %vm4025, %v4345
  %4355 = vst.msk [vmem:[#allocation5 + $0xc0] sm:$0xff] %vm4025, %v4346
  %4356 = vst.msk [vmem:[#allocation5 + $0xe8] sm:$0xff] %vm4025, %v4347
  %4357 = vst.msk [vmem:[#allocation5 + $0x110] sm:$0xff] %vm4025, %v4348
  %4358 = vst.msk [vmem:[#allocation5 + $0x138] sm:$0xff] %vm4025, %v4349
  %4359 = vst.msk [vmem:[#allocation5 + $0x160] sm:$0x3f] %vm4068, %v4350
  %v4360 = vld [vmem:[#allocation4 + $0x5a] sm:$0xff]
  %v4361 = vld [vmem:[#allocation4 + $0x62] sm:$0xff]
  %v4362 = vld [vmem:[#allocation4 + $0x6a] sm:$0xff]
  %v4363 = vld [vmem:[#allocation4 + $0x72] sm:$0xff]
  %v4364 = vld [vmem:[#allocation4 + $0x7a] sm:$0xff]
  %v4365 = vld [vmem:[#allocation4 + $0x82] sm:$0xff]
  %v4366 = vld [vmem:[#allocation4 + $0x8a] sm:$0xff]
  %v4367 = vld [vmem:[#allocation4 + $0x92] sm:$0xff]
  %v4368 = vld [vmem:[#allocation4 + $0x9a] sm:$0x3f]
  %vm4378 = vcmask 1045504
  %v4379 = vrot.slane %v4360, 2
  %v4380 = vrot.slane %v4361, 2
  %v4381 = vsel %vm4378, %v4379, %v4380
  %v4382 = vrot.slane %v4362, 2
  %v4383 = vsel %vm4378, %v4380, %v4382
  %v4384 = vrot.slane %v4363, 2
  %v4385 = vsel %vm4378, %v4382, %v4384
  %v4386 = vrot.slane %v4364, 2
  %v4387 = vsel %vm4378, %v4384, %v4386
  %v4388 = vrot.slane %v4365, 2
  %v4389 = vsel %vm4378, %v4386, %v4388
  %v4390 = vrot.slane %v4366, 2
  %v4391 = vsel %vm4378, %v4388, %v4390
  %v4392 = vrot.slane %v4367, 2
  %v4393 = vsel %vm4378, %v4390, %v4392
  %v4394 = vrot.slane %v4368, 2
  %v4395 = vsel %vm4378, %v4392, %v4394
  %vm4406 = vcmask 523270
  %4407 = vst.msk [vmem:[#allocation5 + $0x140] sm:$0xc0] %vm4406, %v4379
  %4408 = vst.msk [vmem:[#allocation5 + $0x168] sm:$0xff] %vm4025, %v4381
  %4409 = vst.msk [vmem:[#allocation5 + $0x190] sm:$0xff] %vm4025, %v4383
  %4410 = vst.msk [vmem:[#allocation5 + $0x1b8] sm:$0xff] %vm4025, %v4385
  %4411 = vst.msk [vmem:[#allocation5 + $0x1e0] sm:$0xff] %vm4025, %v4387
  %4412 = vst.msk [vmem:[#allocation5 + $0x208] sm:$0xff] %vm4025, %v4389
  %4413 = vst.msk [vmem:[#allocation5 + $0x230] sm:$0xff] %vm4025, %v4391
  %4414 = vst.msk [vmem:[#allocation5 + $0x258] sm:$0xff] %vm4025, %v4393
  %4415 = vst.msk [vmem:[#allocation5 + $0x280] sm:$0xff] %vm4025, %v4395
  %4416 = vst.msk [vmem:[#allocation5 + $0x2a8] sm:$0xf] %vm4048, %v4394
  %v4417 = vld [vmem:[#allocation4 + $0x5b] sm:$0xff]
  %v4418 = vld [vmem:[#allocation4 + $0x63] sm:$0xff]
  %v4419 = vld [vmem:[#allocation4 + $0x6b] sm:$0xff]
  %v4420 = vld [vmem:[#allocation4 + $0x73] sm:$0xff]
  %v4421 = vld [vmem:[#allocation4 + $0x7b] sm:$0xff]
  %v4422 = vld [vmem:[#allocation4 + $0x83] sm:$0xff]
  %v4423 = vld [vmem:[#allocation4 + $0x8b] sm:$0xff]
  %v4424 = vld [vmem:[#allocation4 + $0x93] sm:$0xff]
  %v4425 = vld [vmem:[#allocation4 + $0x9b] sm:$0x3f]
  %v4435 = vrot.slane %v4417, 2
  %v4436 = vrot.slane %v4418, 2
  %v4437 = vsel %vm4378, %v4435, %v4436
  %v4438 = vrot.slane %v4419, 2
  %v4439 = vsel %vm4378, %v4436, %v4438
  %v4440 = vrot.slane %v4420, 2
  %v4441 = vsel %vm4378, %v4438, %v4440
  %v4442 = vrot.slane %v4421, 2
  %v4443 = vsel %vm4378, %v4440, %v4442
  %v4444 = vrot.slane %v4422, 2
  %v4445 = vsel %vm4378, %v4442, %v4444
  %v4446 = vrot.slane %v4423, 2
  %v4447 = vsel %vm4378, %v4444, %v4446
  %v4448 = vrot.slane %v4424, 2
  %v4449 = vsel %vm4378, %v4446, %v4448
  %v4450 = vrot.slane %v4425, 2
  %v4451 = vsel %vm4378, %v4448, %v4450
  %4452 = vrot.lane.b32.xlu0 %v4435, 64
  %v4453 = vpop.permute.xlu0 %4452
  %4454 = vrot.lane.b32.xlu0 %v4437, 64
  %v4455 = vpop.permute.xlu0 %4454
  %4456 = vrot.lane.b32.xlu0 %v4439, 64
  %v4457 = vpop.permute.xlu0 %4456
  %4458 = vrot.lane.b32.xlu0 %v4441, 64
  %v4459 = vpop.permute.xlu0 %4458
  %4460 = vrot.lane.b32.xlu0 %v4443, 64
  %v4461 = vpop.permute.xlu0 %4460
  %4462 = vrot.lane.b32.xlu0 %v4445, 64
  %v4463 = vpop.permute.xlu0 %4462
  %4464 = vrot.lane.b32.xlu0 %v4447, 64
  %v4465 = vpop.permute.xlu0 %4464
  %4466 = vrot.lane.b32.xlu0 %v4449, 64
  %v4467 = vpop.permute.xlu0 %4466
  %4468 = vrot.lane.b32.xlu0 %v4451, 64
  %v4469 = vpop.permute.xlu0 %4468
  %4470 = vrot.lane.b32.xlu0 %v4450, 64
  %v4471 = vpop.permute.xlu0 %4470
  %vm4482 = vcmask 1048070
  %4483 = vst.msk [vmem:[#allocation5 + $0x140] sm:$0xc0] %vm4482, %v4453
  %4484 = vst.msk [vmem:[#allocation5 + $0x168] sm:$0xff] %vm4115, %v4455
  %4485 = vst.msk [vmem:[#allocation5 + $0x190] sm:$0xff] %vm4115, %v4457
  %4486 = vst.msk [vmem:[#allocation5 + $0x1b8] sm:$0xff] %vm4115, %v4459
  %4487 = vst.msk [vmem:[#allocation5 + $0x1e0] sm:$0xff] %vm4115, %v4461
  %4488 = vst.msk [vmem:[#allocation5 + $0x208] sm:$0xff] %vm4115, %v4463
  %4489 = vst.msk [vmem:[#allocation5 + $0x230] sm:$0xff] %vm4115, %v4465
  %4490 = vst.msk [vmem:[#allocation5 + $0x258] sm:$0xff] %vm4115, %v4467
  %4491 = vst.msk [vmem:[#allocation5 + $0x280] sm:$0xff] %vm4115, %v4469
  %vm4492 = vcmask 1043968
  %4493 = vst.msk [vmem:[#allocation5 + $0x2a8] sm:$0xf] %vm4492, %v4471
  %v4494 = vld [vmem:[#allocation4 + $0x5c] sm:$0xff]
  %v4495 = vld [vmem:[#allocation4 + $0x64] sm:$0xff]
  %v4496 = vld [vmem:[#allocation4 + $0x6c] sm:$0xff]
  %v4497 = vld [vmem:[#allocation4 + $0x74] sm:$0xff]
  %v4498 = vld [vmem:[#allocation4 + $0x7c] sm:$0xff]
  %v4499 = vld [vmem:[#allocation4 + $0x84] sm:$0xff]
  %v4500 = vld [vmem:[#allocation4 + $0x8c] sm:$0xff]
  %v4501 = vld [vmem:[#allocation4 + $0x94] sm:$0xff]
  %v4502 = vld [vmem:[#allocation4 + $0x9c] sm:$0x3f]
  %v4512 = vrot.slane %v4494, 2
  %v4513 = vrot.slane %v4495, 2
  %v4514 = vsel %vm4378, %v4512, %v4513
  %v4515 = vrot.slane %v4496, 2
  %v4516 = vsel %vm4378, %v4513, %v4515
  %v4517 = vrot.slane %v4497, 2
  %v4518 = vsel %vm4378, %v4515, %v4517
  %v4519 = vrot.slane %v4498, 2
  %v4520 = vsel %vm4378, %v4517, %v4519
  %v4521 = vrot.slane %v4499, 2
  %v4522 = vsel %vm4378, %v4519, %v4521
  %v4523 = vrot.slane %v4500, 2
  %v4524 = vsel %vm4378, %v4521, %v4523
  %v4525 = vrot.slane %v4501, 2
  %v4526 = vsel %vm4378, %v4523, %v4525
  %v4527 = vrot.slane %v4502, 2
  %v4528 = vsel %vm4378, %v4525, %v4527
  %4539 = vst.msk [vmem:[#allocation5 + $0x148] sm:$0xc0] %vm4406, %v4512
  %4540 = vst.msk [vmem:[#allocation5 + $0x170] sm:$0xff] %vm4025, %v4514
  %4541 = vst.msk [vmem:[#allocation5 + $0x198] sm:$0xff] %vm4025, %v4516
  %4542 = vst.msk [vmem:[#allocation5 + $0x1c0] sm:$0xff] %vm4025, %v4518
  %4543 = vst.msk [vmem:[#allocation5 + $0x1e8] sm:$0xff] %vm4025, %v4520
  %4544 = vst.msk [vmem:[#allocation5 + $0x210] sm:$0xff] %vm4025, %v4522
  %4545 = vst.msk [vmem:[#allocation5 + $0x238] sm:$0xff] %vm4025, %v4524
  %4546 = vst.msk [vmem:[#allocation5 + $0x260] sm:$0xff] %vm4025, %v4526
  %4547 = vst.msk [vmem:[#allocation5 + $0x288] sm:$0xff] %vm4025, %v4528
  %4548 = vst.msk [vmem:[#allocation5 + $0x2b0] sm:$0xf] %vm4048, %v4527
  %v4549 = vld [vmem:[#allocation4 + $0x64] sm:$0xff]
  %v4550 = vld [vmem:[#allocation4 + $0x6c] sm:$0xff]
  %v4551 = vld [vmem:[#allocation4 + $0x74] sm:$0xff]
  %v4552 = vld [vmem:[#allocation4 + $0x7c] sm:$0xff]
  %v4553 = vld [vmem:[#allocation4 + $0x84] sm:$0xff]
  %v4554 = vld [vmem:[#allocation4 + $0x8c] sm:$0xff]
  %v4555 = vld [vmem:[#allocation4 + $0x94] sm:$0xff]
  %v4556 = vld [vmem:[#allocation4 + $0x9c] sm:$0xff]
  %v4557 = vld [vmem:[#allocation4 + $0xa4] sm:$0x3f]
  %v4567 = vrot.slane %v4549, 2
  %v4568 = vrot.slane %v4550, 2
  %v4569 = vsel %vm4378, %v4567, %v4568
  %v4570 = vrot.slane %v4551, 2
  %v4571 = vsel %vm4378, %v4568, %v4570
  %v4572 = vrot.slane %v4552, 2
  %v4573 = vsel %vm4378, %v4570, %v4572
  %v4574 = vrot.slane %v4553, 2
  %v4575 = vsel %vm4378, %v4572, %v4574
  %v4576 = vrot.slane %v4554, 2
  %v4577 = vsel %vm4378, %v4574, %v4576
  %v4578 = vrot.slane %v4555, 2
  %v4579 = vsel %vm4378, %v4576, %v4578
  %v4580 = vrot.slane %v4556, 2
  %v4581 = vsel %vm4378, %v4578, %v4580
  %v4582 = vrot.slane %v4557, 2
  %v4583 = vsel %vm4378, %v4580, %v4582
  %4584 = vrot.lane.b32.xlu0 %v4567, 64
  %v4585 = vpop.permute.xlu0 %4584
  %4586 = vrot.lane.b32.xlu0 %v4569, 64
  %v4587 = vpop.permute.xlu0 %4586
  %4588 = vrot.lane.b32.xlu0 %v4571, 64
  %v4589 = vpop.permute.xlu0 %4588
  %4590 = vrot.lane.b32.xlu0 %v4573, 64
  %v4591 = vpop.permute.xlu0 %4590
  %4592 = vrot.lane.b32.xlu0 %v4575, 64
  %v4593 = vpop.permute.xlu0 %4592
  %4594 = vrot.lane.b32.xlu0 %v4577, 64
  %v4595 = vpop.permute.xlu0 %4594
  %4596 = vrot.lane.b32.xlu0 %v4579, 64
  %v4597 = vpop.permute.xlu0 %4596
  %4598 = vrot.lane.b32.xlu0 %v4581, 64
  %v4599 = vpop.permute.xlu0 %4598
  %4600 = vrot.lane.b32.xlu0 %v4583, 64
  %v4601 = vpop.permute.xlu0 %4600
  %4602 = vrot.lane.b32.xlu0 %v4582, 64
  %v4603 = vpop.permute.xlu0 %4602
  %4614 = vst.msk [vmem:[#allocation5 + $0x148] sm:$0xc0] %vm4482, %v4585
  %4615 = vst.msk [vmem:[#allocation5 + $0x170] sm:$0xff] %vm4115, %v4587
  %4616 = vst.msk [vmem:[#allocation5 + $0x198] sm:$0xff] %vm4115, %v4589
  %4617 = vst.msk [vmem:[#allocation5 + $0x1c0] sm:$0xff] %vm4115, %v4591
  %4618 = vst.msk [vmem:[#allocation5 + $0x1e8] sm:$0xff] %vm4115, %v4593
  %4619 = vst.msk [vmem:[#allocation5 + $0x210] sm:$0xff] %vm4115, %v4595
  %4620 = vst.msk [vmem:[#allocation5 + $0x238] sm:$0xff] %vm4115, %v4597
  %4621 = vst.msk [vmem:[#allocation5 + $0x260] sm:$0xff] %vm4115, %v4599
  %4622 = vst.msk [vmem:[#allocation5 + $0x288] sm:$0xff] %vm4115, %v4601
  %4623 = vst.msk [vmem:[#allocation5 + $0x2b0] sm:$0xf] %vm4492, %v4603
  %v4624 = vld [vmem:[#allocation4 + $0x65] sm:$0xff]
  %v4625 = vld [vmem:[#allocation4 + $0x6d] sm:$0xff]
  %v4626 = vld [vmem:[#allocation4 + $0x75] sm:$0xff]
  %v4627 = vld [vmem:[#allocation4 + $0x7d] sm:$0xff]
  %v4628 = vld [vmem:[#allocation4 + $0x85] sm:$0xff]
  %v4629 = vld [vmem:[#allocation4 + $0x8d] sm:$0xff]
  %v4630 = vld [vmem:[#allocation4 + $0x95] sm:$0xff]
  %v4631 = vld [vmem:[#allocation4 + $0x9d] sm:$0xff]
  %v4632 = vld [vmem:[#allocation4 + $0xa5] sm:$0x3f]
  %v4642 = vrot.slane %v4624, 2
  %v4643 = vrot.slane %v4625, 2
  %v4644 = vsel %vm4378, %v4642, %v4643
  %v4645 = vrot.slane %v4626, 2
  %v4646 = vsel %vm4378, %v4643, %v4645
  %v4647 = vrot.slane %v4627, 2
  %v4648 = vsel %vm4378, %v4645, %v4647
  %v4649 = vrot.slane %v4628, 2
  %v4650 = vsel %vm4378, %v4647, %v4649
  %v4651 = vrot.slane %v4629, 2
  %v4652 = vsel %vm4378, %v4649, %v4651
  %v4653 = vrot.slane %v4630, 2
  %v4654 = vsel %vm4378, %v4651, %v4653
  %v4655 = vrot.slane %v4631, 2
  %v4656 = vsel %vm4378, %v4653, %v4655
  %v4657 = vrot.slane %v4632, 2
  %v4658 = vsel %vm4378, %v4655, %v4657
  %4669 = vst.msk [vmem:[#allocation5 + $0x150] sm:$0xc0] %vm4406, %v4642
  %4670 = vst.msk [vmem:[#allocation5 + $0x178] sm:$0xff] %vm4025, %v4644
  %4671 = vst.msk [vmem:[#allocation5 + $0x1a0] sm:$0xff] %vm4025, %v4646
  %4672 = vst.msk [vmem:[#allocation5 + $0x1c8] sm:$0xff] %vm4025, %v4648
  %4673 = vst.msk [vmem:[#allocation5 + $0x1f0] sm:$0xff] %vm4025, %v4650
  %4674 = vst.msk [vmem:[#allocation5 + $0x218] sm:$0xff] %vm4025, %v4652
  %4675 = vst.msk [vmem:[#allocation5 + $0x240] sm:$0xff] %vm4025, %v4654
  %4676 = vst.msk [vmem:[#allocation5 + $0x268] sm:$0xff] %vm4025, %v4656
  %4677 = vst.msk [vmem:[#allocation5 + $0x290] sm:$0xff] %vm4025, %v4658
  %4678 = vst.msk [vmem:[#allocation5 + $0x2b8] sm:$0xf] %vm4048, %v4657
  %v4679 = vld [vmem:[#allocation4 + $0x66] sm:$0xff]
  %v4680 = vld [vmem:[#allocation4 + $0x6e] sm:$0xff]
  %v4681 = vld [vmem:[#allocation4 + $0x76] sm:$0xff]
  %v4682 = vld [vmem:[#allocation4 + $0x7e] sm:$0xff]
  %v4683 = vld [vmem:[#allocation4 + $0x86] sm:$0xff]
  %v4684 = vld [vmem:[#allocation4 + $0x8e] sm:$0xff]
  %v4685 = vld [vmem:[#allocation4 + $0x96] sm:$0xff]
  %v4686 = vld [vmem:[#allocation4 + $0x9e] sm:$0xff]
  %v4687 = vld [vmem:[#allocation4 + $0xa6] sm:$0x3f]
  %v4697 = vrot.slane %v4679, 2
  %v4698 = vrot.slane %v4680, 2
  %v4699 = vsel %vm4378, %v4697, %v4698
  %v4700 = vrot.slane %v4681, 2
  %v4701 = vsel %vm4378, %v4698, %v4700
  %v4702 = vrot.slane %v4682, 2
  %v4703 = vsel %vm4378, %v4700, %v4702
  %v4704 = vrot.slane %v4683, 2
  %v4705 = vsel %vm4378, %v4702, %v4704
  %v4706 = vrot.slane %v4684, 2
  %v4707 = vsel %vm4378, %v4704, %v4706
  %v4708 = vrot.slane %v4685, 2
  %v4709 = vsel %vm4378, %v4706, %v4708
  %v4710 = vrot.slane %v4686, 2
  %v4711 = vsel %vm4378, %v4708, %v4710
  %v4712 = vrot.slane %v4687, 2
  %v4713 = vsel %vm4378, %v4710, %v4712
  %4714 = vrot.lane.b32.xlu0 %v4697, 64
  %v4715 = vpop.permute.xlu0 %4714
  %4716 = vrot.lane.b32.xlu0 %v4699, 64
  %v4717 = vpop.permute.xlu0 %4716
  %4718 = vrot.lane.b32.xlu0 %v4701, 64
  %v4719 = vpop.permute.xlu0 %4718
  %4720 = vrot.lane.b32.xlu0 %v4703, 64
  %v4721 = vpop.permute.xlu0 %4720
  %4722 = vrot.lane.b32.xlu0 %v4705, 64
  %v4723 = vpop.permute.xlu0 %4722
  %4724 = vrot.lane.b32.xlu0 %v4707, 64
  %v4725 = vpop.permute.xlu0 %4724
  %4726 = vrot.lane.b32.xlu0 %v4709, 64
  %v4727 = vpop.permute.xlu0 %4726
  %4728 = vrot.lane.b32.xlu0 %v4711, 64
  %v4729 = vpop.permute.xlu0 %4728
  %4730 = vrot.lane.b32.xlu0 %v4713, 64
  %v4731 = vpop.permute.xlu0 %4730
  %4732 = vrot.lane.b32.xlu0 %v4712, 64
  %v4733 = vpop.permute.xlu0 %4732
  %4744 = vst.msk [vmem:[#allocation5 + $0x150] sm:$0xc0] %vm4482, %v4715
  %4745 = vst.msk [vmem:[#allocation5 + $0x178] sm:$0xff] %vm4115, %v4717
  %4746 = vst.msk [vmem:[#allocation5 + $0x1a0] sm:$0xff] %vm4115, %v4719
  %4747 = vst.msk [vmem:[#allocation5 + $0x1c8] sm:$0xff] %vm4115, %v4721
  %4748 = vst.msk [vmem:[#allocation5 + $0x1f0] sm:$0xff] %vm4115, %v4723
  %4749 = vst.msk [vmem:[#allocation5 + $0x218] sm:$0xff] %vm4115, %v4725
  %4750 = vst.msk [vmem:[#allocation5 + $0x240] sm:$0xff] %vm4115, %v4727
  %4751 = vst.msk [vmem:[#allocation5 + $0x268] sm:$0xff] %vm4115, %v4729
  %4752 = vst.msk [vmem:[#allocation5 + $0x290] sm:$0xff] %vm4115, %v4731
  %4753 = vst.msk [vmem:[#allocation5 + $0x2b8] sm:$0xf] %vm4492, %v4733
  %v4754 = vld [vmem:[#allocation4 + $0x6e] sm:$0xff]
  %v4755 = vld [vmem:[#allocation4 + $0x76] sm:$0xff]
  %v4756 = vld [vmem:[#allocation4 + $0x7e] sm:$0xff]
  %v4757 = vld [vmem:[#allocation4 + $0x86] sm:$0xff]
  %v4758 = vld [vmem:[#allocation4 + $0x8e] sm:$0xff]
  %v4759 = vld [vmem:[#allocation4 + $0x96] sm:$0xff]
  %v4760 = vld [vmem:[#allocation4 + $0x9e] sm:$0xff]
  %v4761 = vld [vmem:[#allocation4 + $0xa6] sm:$0xff]
  %v4762 = vld [vmem:[#allocation4 + $0xae] sm:$0x3f]
  %v4772 = vrot.slane %v4754, 2
  %v4773 = vrot.slane %v4755, 2
  %v4774 = vsel %vm4378, %v4772, %v4773
  %v4775 = vrot.slane %v4756, 2
  %v4776 = vsel %vm4378, %v4773, %v4775
  %v4777 = vrot.slane %v4757, 2
  %v4778 = vsel %vm4378, %v4775, %v4777
  %v4779 = vrot.slane %v4758, 2
  %v4780 = vsel %vm4378, %v4777, %v4779
  %v4781 = vrot.slane %v4759, 2
  %v4782 = vsel %vm4378, %v4779, %v4781
  %v4783 = vrot.slane %v4760, 2
  %v4784 = vsel %vm4378, %v4781, %v4783
  %v4785 = vrot.slane %v4761, 2
  %v4786 = vsel %vm4378, %v4783, %v4785
  %v4787 = vrot.slane %v4762, 2
  %v4788 = vsel %vm4378, %v4785, %v4787
  %4799 = vst.msk [vmem:[#allocation5 + $0x158] sm:$0xc0] %vm4406, %v4772
  %4800 = vst.msk [vmem:[#allocation5 + $0x180] sm:$0xff] %vm4025, %v4774
  %4801 = vst.msk [vmem:[#allocation5 + $0x1a8] sm:$0xff] %vm4025, %v4776
  %4802 = vst.msk [vmem:[#allocation5 + $0x1d0] sm:$0xff] %vm4025, %v4778
  %4803 = vst.msk [vmem:[#allocation5 + $0x1f8] sm:$0xff] %vm4025, %v4780
  %4804 = vst.msk [vmem:[#allocation5 + $0x220] sm:$0xff] %vm4025, %v4782
  %4805 = vst.msk [vmem:[#allocation5 + $0x248] sm:$0xff] %vm4025, %v4784
  %4806 = vst.msk [vmem:[#allocation5 + $0x270] sm:$0xff] %vm4025, %v4786
  %4807 = vst.msk [vmem:[#allocation5 + $0x298] sm:$0xff] %vm4025, %v4788
  %4808 = vst.msk [vmem:[#allocation5 + $0x2c0] sm:$0xf] %vm4048, %v4787
  %v4809 = vld [vmem:[#allocation4 + $0x6f] sm:$0xff]
  %v4810 = vld [vmem:[#allocation4 + $0x77] sm:$0xff]
  %v4811 = vld [vmem:[#allocation4 + $0x7f] sm:$0xff]
  %v4812 = vld [vmem:[#allocation4 + $0x87] sm:$0xff]
  %v4813 = vld [vmem:[#allocation4 + $0x8f] sm:$0xff]
  %v4814 = vld [vmem:[#allocation4 + $0x97] sm:$0xff]
  %v4815 = vld [vmem:[#allocation4 + $0x9f] sm:$0xff]
  %v4816 = vld [vmem:[#allocation4 + $0xa7] sm:$0xff]
  %v4817 = vld [vmem:[#allocation4 + $0xaf] sm:$0x3f]
  %v4827 = vrot.slane %v4809, 2
  %v4828 = vrot.slane %v4810, 2
  %v4829 = vsel %vm4378, %v4827, %v4828
  %v4830 = vrot.slane %v4811, 2
  %v4831 = vsel %vm4378, %v4828, %v4830
  %v4832 = vrot.slane %v4812, 2
  %v4833 = vsel %vm4378, %v4830, %v4832
  %v4834 = vrot.slane %v4813, 2
  %v4835 = vsel %vm4378, %v4832, %v4834
  %v4836 = vrot.slane %v4814, 2
  %v4837 = vsel %vm4378, %v4834, %v4836
  %v4838 = vrot.slane %v4815, 2
  %v4839 = vsel %vm4378, %v4836, %v4838
  %v4840 = vrot.slane %v4816, 2
  %v4841 = vsel %vm4378, %v4838, %v4840
  %v4842 = vrot.slane %v4817, 2
  %v4843 = vsel %vm4378, %v4840, %v4842
  %4844 = vrot.lane.b32.xlu0 %v4827, 64
  %v4845 = vpop.permute.xlu0 %4844
  %4846 = vrot.lane.b32.xlu0 %v4829, 64
  %v4847 = vpop.permute.xlu0 %4846
  %4848 = vrot.lane.b32.xlu0 %v4831, 64
  %v4849 = vpop.permute.xlu0 %4848
  %4850 = vrot.lane.b32.xlu0 %v4833, 64
  %v4851 = vpop.permute.xlu0 %4850
  %4852 = vrot.lane.b32.xlu0 %v4835, 64
  %v4853 = vpop.permute.xlu0 %4852
  %4854 = vrot.lane.b32.xlu0 %v4837, 64
  %v4855 = vpop.permute.xlu0 %4854
  %4856 = vrot.lane.b32.xlu0 %v4839, 64
  %v4857 = vpop.permute.xlu0 %4856
  %4858 = vrot.lane.b32.xlu0 %v4841, 64
  %v4859 = vpop.permute.xlu0 %4858
  %4860 = vrot.lane.b32.xlu0 %v4843, 64
  %v4861 = vpop.permute.xlu0 %4860
  %4862 = vrot.lane.b32.xlu0 %v4842, 64
  %v4863 = vpop.permute.xlu0 %4862
  %4874 = vst.msk [vmem:[#allocation5 + $0x158] sm:$0xc0] %vm4482, %v4845
  %4875 = vst.msk [vmem:[#allocation5 + $0x180] sm:$0xff] %vm4115, %v4847
  %4876 = vst.msk [vmem:[#allocation5 + $0x1a8] sm:$0xff] %vm4115, %v4849
  %4877 = vst.msk [vmem:[#allocation5 + $0x1d0] sm:$0xff] %vm4115, %v4851
  %4878 = vst.msk [vmem:[#allocation5 + $0x1f8] sm:$0xff] %vm4115, %v4853
  %4879 = vst.msk [vmem:[#allocation5 + $0x220] sm:$0xff] %vm4115, %v4855
  %4880 = vst.msk [vmem:[#allocation5 + $0x248] sm:$0xff] %vm4115, %v4857
  %4881 = vst.msk [vmem:[#allocation5 + $0x270] sm:$0xff] %vm4115, %v4859
  %4882 = vst.msk [vmem:[#allocation5 + $0x298] sm:$0xff] %vm4115, %v4861
  %4883 = vst.msk [vmem:[#allocation5 + $0x2c0] sm:$0xf] %vm4492, %v4863
  %v4884 = vld [vmem:[#allocation4 + $0x70] sm:$0xff]
  %v4885 = vld [vmem:[#allocation4 + $0x78] sm:$0xff]
  %v4886 = vld [vmem:[#allocation4 + $0x80] sm:$0xff]
  %v4887 = vld [vmem:[#allocation4 + $0x88] sm:$0xff]
  %v4888 = vld [vmem:[#allocation4 + $0x90] sm:$0xff]
  %v4889 = vld [vmem:[#allocation4 + $0x98] sm:$0xff]
  %v4890 = vld [vmem:[#allocation4 + $0xa0] sm:$0xff]
  %v4891 = vld [vmem:[#allocation4 + $0xa8] sm:$0xff]
  %v4892 = vld [vmem:[#allocation4 + $0xb0] sm:$0x3f]
  %v4902 = vrot.slane %v4884, 2
  %v4903 = vrot.slane %v4885, 2
  %v4904 = vsel %vm4378, %v4902, %v4903
  %v4905 = vrot.slane %v4886, 2
  %v4906 = vsel %vm4378, %v4903, %v4905
  %v4907 = vrot.slane %v4887, 2
  %v4908 = vsel %vm4378, %v4905, %v4907
  %v4909 = vrot.slane %v4888, 2
  %v4910 = vsel %vm4378, %v4907, %v4909
  %v4911 = vrot.slane %v4889, 2
  %v4912 = vsel %vm4378, %v4909, %v4911
  %v4913 = vrot.slane %v4890, 2
  %v4914 = vsel %vm4378, %v4911, %v4913
  %v4915 = vrot.slane %v4891, 2
  %v4916 = vsel %vm4378, %v4913, %v4915
  %v4917 = vrot.slane %v4892, 2
  %v4918 = vsel %vm4378, %v4915, %v4917
  %4929 = vst.msk [vmem:[#allocation5 + $0x160] sm:$0xc0] %vm4406, %v4902
  %4930 = vst.msk [vmem:[#allocation5 + $0x188] sm:$0xff] %vm4025, %v4904
  %4931 = vst.msk [vmem:[#allocation5 + $0x1b0] sm:$0xff] %vm4025, %v4906
  %4932 = vst.msk [vmem:[#allocation5 + $0x1d8] sm:$0xff] %vm4025, %v4908
  %4933 = vst.msk [vmem:[#allocation5 + $0x200] sm:$0xff] %vm4025, %v4910
  %4934 = vst.msk [vmem:[#allocation5 + $0x228] sm:$0xff] %vm4025, %v4912
  %4935 = vst.msk [vmem:[#allocation5 + $0x250] sm:$0xff] %vm4025, %v4914
  %4936 = vst.msk [vmem:[#allocation5 + $0x278] sm:$0xff] %vm4025, %v4916
  %4937 = vst.msk [vmem:[#allocation5 + $0x2a0] sm:$0xff] %vm4025, %v4918
  %4938 = vst.msk [vmem:[#allocation5 + $0x2c8] sm:$0xf] %vm4048, %v4917
  %v4939 = vld [vmem:[#allocation5] sm:$0xff]
  %v4940 = vld [vmem:[#allocation5 + $0x8] sm:$0xff]
  %v4941 = vld [vmem:[#allocation5 + $0x10] sm:$0xff]
  %v4942 = vld [vmem:[#allocation5 + $0x18] sm:$0xff]
  %v4943 = vld [vmem:[#allocation5 + $0x20] sm:$0xff]
  %v4944 = vld [vmem:[#allocation5 + $0x28] sm:$0xff]
  %v4945 = vld [vmem:[#allocation5 + $0x30] sm:$0xff]
  %v4946 = vld [vmem:[#allocation5 + $0x38] sm:$0xff]
  %v4947 = vld [vmem:[#allocation5 + $0x40] sm:$0xff]
  %v4948 = vld [vmem:[#allocation5 + $0x48] sm:$0xff]
  %v4949 = vld [vmem:[#allocation5 + $0x50] sm:$0xff]
  %v4950 = vld [vmem:[#allocation5 + $0x58] sm:$0xff]
  %v4951 = vld [vmem:[#allocation5 + $0x60] sm:$0xff]
  %v4952 = vld [vmem:[#allocation5 + $0x68] sm:$0xff]
  %v4953 = vld [vmem:[#allocation5 + $0x70] sm:$0xff]
  %v4954 = vld [vmem:[#allocation5 + $0x78] sm:$0xff]
  %v4955 = vld [vmem:[#allocation5 + $0x80] sm:$0xff]
  %v4956 = vld [vmem:[#allocation5 + $0x88] sm:$0xff]
  %v4957 = vld [vmem:[#allocation5 + $0x90] sm:$0xff]
  %v4958 = vld [vmem:[#allocation5 + $0x98] sm:$0xff]
  %v4959 = vld [vmem:[#allocation5 + $0xa0] sm:$0xff]
  %v4960 = vld [vmem:[#allocation5 + $0xa8] sm:$0xff]
  %v4961 = vld [vmem:[#allocation5 + $0xb0] sm:$0xff]
  %v4962 = vld [vmem:[#allocation5 + $0xb8] sm:$0xff]
  %v4963 = vld [vmem:[#allocation5 + $0xc0] sm:$0xff]
  %v4964 = vld [vmem:[#allocation5 + $0xc8] sm:$0xff]
  %v4965 = vld [vmem:[#allocation5 + $0xd0] sm:$0xff]
  %v4966 = vld [vmem:[#allocation5 + $0xd8] sm:$0xff]
  %v4967 = vld [vmem:[#allocation5 + $0xe0] sm:$0xff]
  %v4968 = vld [vmem:[#allocation5 + $0xe8] sm:$0xff]
  %v4969 = vld [vmem:[#allocation5 + $0xf0] sm:$0xff]
  %v4970 = vld [vmem:[#allocation5 + $0xf8] sm:$0xff]
  %v4971 = vld [vmem:[#allocation5 + $0x100] sm:$0xff]
  %v4972 = vld [vmem:[#allocation5 + $0x108] sm:$0xff]
  %v4973 = vld [vmem:[#allocation5 + $0x110] sm:$0xff]
  %v4974 = vld [vmem:[#allocation5 + $0x118] sm:$0xff]
  %v4975 = vld [vmem:[#allocation5 + $0x120] sm:$0xff]
  %v4976 = vld [vmem:[#allocation5 + $0x128] sm:$0xff]
  %v4977 = vld [vmem:[#allocation5 + $0x130] sm:$0xff]
  %v4978 = vld [vmem:[#allocation5 + $0x138] sm:$0xff]
  %v4979 = vld [vmem:[#allocation5 + $0x140] sm:$0xff]
  %v4980 = vld [vmem:[#allocation5 + $0x148] sm:$0xff]
  %v4981 = vld [vmem:[#allocation5 + $0x150] sm:$0xff]
  %v4982 = vld [vmem:[#allocation5 + $0x158] sm:$0xff]
  %v4983 = vld [vmem:[#allocation5 + $0x160] sm:$0xff]
  %v4984 = vld [vmem:[#allocation5 + $0x168] sm:$0xff]
  %v4985 = vld [vmem:[#allocation5 + $0x170] sm:$0xff]
  %v4986 = vld [vmem:[#allocation5 + $0x178] sm:$0xff]
  %v4987 = vld [vmem:[#allocation5 + $0x180] sm:$0xff]
  %v4988 = vld [vmem:[#allocation5 + $0x188] sm:$0xff]
  %v4989 = vld [vmem:[#allocation5 + $0x190] sm:$0xff]
  %v4990 = vld [vmem:[#allocation5 + $0x198] sm:$0xff]
  %v4991 = vld [vmem:[#allocation5 + $0x1a0] sm:$0xff]
  %v4992 = vld [vmem:[#allocation5 + $0x1a8] sm:$0xff]
  %v4993 = vld [vmem:[#allocation5 + $0x1b0] sm:$0xff]
  %v4994 = vld [vmem:[#allocation5 + $0x1b8] sm:$0xff]
  %v4995 = vld [vmem:[#allocation5 + $0x1c0] sm:$0xff]
  %v4996 = vld [vmem:[#allocation5 + $0x1c8] sm:$0xff]
  %v4997 = vld [vmem:[#allocation5 + $0x1d0] sm:$0xff]
  %v4998 = vld [vmem:[#allocation5 + $0x1d8] sm:$0xff]
  %v4999 = vld [vmem:[#allocation5 + $0x1e0] sm:$0xff]
  %v5000 = vld [vmem:[#allocation5 + $0x1e8] sm:$0xff]
  %v5001 = vld [vmem:[#allocation5 + $0x1f0] sm:$0xff]
  %v5002 = vld [vmem:[#allocation5 + $0x1f8] sm:$0xff]
  %v5003 = vld [vmem:[#allocation5 + $0x200] sm:$0xff]
  %v5004 = vld [vmem:[#allocation5 + $0x208] sm:$0xff]
  %v5005 = vld [vmem:[#allocation5 + $0x210] sm:$0xff]
  %v5006 = vld [vmem:[#allocation5 + $0x218] sm:$0xff]
  %v5007 = vld [vmem:[#allocation5 + $0x220] sm:$0xff]
  %v5008 = vld [vmem:[#allocation5 + $0x228] sm:$0xff]
  %v5009 = vld [vmem:[#allocation5 + $0x230] sm:$0xff]
  %v5010 = vld [vmem:[#allocation5 + $0x238] sm:$0xff]
  %v5011 = vld [vmem:[#allocation5 + $0x240] sm:$0xff]
  %v5012 = vld [vmem:[#allocation5 + $0x248] sm:$0xff]
  %v5013 = vld [vmem:[#allocation5 + $0x250] sm:$0xff]
  %v5014 = vld [vmem:[#allocation5 + $0x258] sm:$0xff]
  %v5015 = vld [vmem:[#allocation5 + $0x260] sm:$0xff]
  %v5016 = vld [vmem:[#allocation5 + $0x268] sm:$0xff]
  %v5017 = vld [vmem:[#allocation5 + $0x270] sm:$0xff]
  %v5018 = vld [vmem:[#allocation5 + $0x278] sm:$0xff]
  %v5019 = vld [vmem:[#allocation5 + $0x280] sm:$0xff]
  %v5020 = vld [vmem:[#allocation5 + $0x288] sm:$0xff]
  %v5021 = vld [vmem:[#allocation5 + $0x290] sm:$0xff]
  %v5022 = vld [vmem:[#allocation5 + $0x298] sm:$0xff]
  %v5023 = vld [vmem:[#allocation5 + $0x2a0] sm:$0xff]
  %v5024 = vld [vmem:[#allocation5 + $0x2a8] sm:$0xf]
  %v5025 = vld [vmem:[#allocation5 + $0x2b0] sm:$0xf]
  %v5026 = vld [vmem:[#allocation5 + $0x2b8] sm:$0xf]
  %v5027 = vld [vmem:[#allocation5 + $0x2c0] sm:$0xf]
  %v5028 = vld [vmem:[#allocation5 + $0x2c8] sm:$0xf]
  %v5029 = vld [vmem:[%s5] sm:$0xff]
  %v5030 = vld [vmem:[%s5 + $0x8] sm:$0xff]
  %v5031 = vld [vmem:[%s5 + $0x10] sm:$0xff]
  %v5032 = vld [vmem:[%s5 + $0x18] sm:$0xff]
  %v5033 = vld [vmem:[%s5 + $0x20] sm:$0xff]
  %v5034 = vld [vmem:[%s5 + $0x28] sm:$0xff]
  %v5035 = vld [vmem:[%s5 + $0x30] sm:$0xff]
  %v5036 = vld [vmem:[%s5 + $0x38] sm:$0xff]
  %v5037 = vld [vmem:[%s5 + $0x40] sm:$0xff]
  %v5038 = vld [vmem:[%s5 + $0x48] sm:$0xff]
  %v5039 = vld [vmem:[%s5 + $0x50] sm:$0xff]
  %v5040 = vld [vmem:[%s5 + $0x58] sm:$0xff]
  %v5041 = vld [vmem:[%s5 + $0x60] sm:$0xff]
  %v5042 = vld [vmem:[%s5 + $0x68] sm:$0xff]
  %v5043 = vld [vmem:[%s5 + $0x70] sm:$0xff]
  %v5044 = vld [vmem:[%s5 + $0x78] sm:$0xff]
  %v5045 = vld [vmem:[%s5 + $0x80] sm:$0xff]
  %v5046 = vld [vmem:[%s5 + $0x88] sm:$0xff]
  %v5047 = vld [vmem:[%s5 + $0x90] sm:$0xff]
  %v5048 = vld [vmem:[%s5 + $0x98] sm:$0xff]
  %v5049 = vld [vmem:[%s5 + $0xa0] sm:$0xff]
  %v5050 = vld [vmem:[%s5 + $0xa8] sm:$0xff]
  %v5051 = vld [vmem:[%s5 + $0xb0] sm:$0xff]
  %v5052 = vld [vmem:[%s5 + $0xb8] sm:$0xff]
  %v5053 = vld [vmem:[%s5 + $0xc0] sm:$0xff]
  %v5054 = vld [vmem:[%s5 + $0xc8] sm:$0xff]
  %v5055 = vld [vmem:[%s5 + $0xd0] sm:$0xff]
  %v5056 = vld [vmem:[%s5 + $0xd8] sm:$0xff]
  %v5057 = vld [vmem:[%s5 + $0xe0] sm:$0xff]
  %v5058 = vld [vmem:[%s5 + $0xe8] sm:$0xff]
  %v5059 = vld [vmem:[%s5 + $0xf0] sm:$0xff]
  %v5060 = vld [vmem:[%s5 + $0xf8] sm:$0xff]
  %v5061 = vld [vmem:[%s5 + $0x100] sm:$0xff]
  %v5062 = vld [vmem:[%s5 + $0x108] sm:$0xff]
  %v5063 = vld [vmem:[%s5 + $0x110] sm:$0xff]
  %v5064 = vld [vmem:[%s5 + $0x118] sm:$0xff]
  %v5065 = vld [vmem:[%s5 + $0x120] sm:$0xff]
  %v5066 = vld [vmem:[%s5 + $0x128] sm:$0xff]
  %v5067 = vld [vmem:[%s5 + $0x130] sm:$0xff]
  %v5068 = vld [vmem:[%s5 + $0x138] sm:$0xff]
  %v5069 = vld [vmem:[%s5 + $0x140] sm:$0xff]
  %v5070 = vld [vmem:[%s5 + $0x148] sm:$0xff]
  %v5071 = vld [vmem:[%s5 + $0x150] sm:$0xff]
  %v5072 = vld [vmem:[%s5 + $0x158] sm:$0xff]
  %v5073 = vld [vmem:[%s5 + $0x160] sm:$0xff]
  %v5074 = vld [vmem:[%s5 + $0x168] sm:$0xff]
  %v5075 = vld [vmem:[%s5 + $0x170] sm:$0xff]
  %v5076 = vld [vmem:[%s5 + $0x178] sm:$0xff]
  %v5077 = vld [vmem:[%s5 + $0x180] sm:$0xff]
  %v5078 = vld [vmem:[%s5 + $0x188] sm:$0xff]
  %v5079 = vld [vmem:[%s5 + $0x190] sm:$0xff]
  %v5080 = vld [vmem:[%s5 + $0x198] sm:$0xff]
  %v5081 = vld [vmem:[%s5 + $0x1a0] sm:$0xff]
  %v5082 = vld [vmem:[%s5 + $0x1a8] sm:$0xff]
  %v5083 = vld [vmem:[%s5 + $0x1b0] sm:$0xff]
  %v5084 = vld [vmem:[%s5 + $0x1b8] sm:$0xff]
  %v5085 = vld [vmem:[%s5 + $0x1c0] sm:$0xff]
  %v5086 = vld [vmem:[%s5 + $0x1c8] sm:$0xff]
  %v5087 = vld [vmem:[%s5 + $0x1d0] sm:$0xff]
  %v5088 = vld [vmem:[%s5 + $0x1d8] sm:$0xff]
  %v5089 = vld [vmem:[%s5 + $0x1e0] sm:$0xff]
  %v5090 = vld [vmem:[%s5 + $0x1e8] sm:$0xff]
  %v5091 = vld [vmem:[%s5 + $0x1f0] sm:$0xff]
  %v5092 = vld [vmem:[%s5 + $0x1f8] sm:$0xff]
  %v5093 = vld [vmem:[%s5 + $0x200] sm:$0xff]
  %v5094 = vld [vmem:[%s5 + $0x208] sm:$0xff]
  %v5095 = vld [vmem:[%s5 + $0x210] sm:$0xff]
  %v5096 = vld [vmem:[%s5 + $0x218] sm:$0xff]
  %v5097 = vld [vmem:[%s5 + $0x220] sm:$0xff]
  %v5098 = vld [vmem:[%s5 + $0x228] sm:$0xff]
  %v5099 = vld [vmem:[%s5 + $0x230] sm:$0xff]
  %v5100 = vld [vmem:[%s5 + $0x238] sm:$0xff]
  %v5101 = vld [vmem:[%s6] sm:$0x1]
  %v5103 = vperm.slane %v5101, 0
  %v5106 = vsel %vm4025, %v4943, 0
  %v5109 = vsel %vm4025, %v4948, 0
  %v5112 = vsel %vm4025, %v4953, 0
  %v5115 = vsel %vm4025, %v4958, 0
  %v5118 = vsel %vm4025, %v4963, 0
  %v5121 = vsel %vm4025, %v4968, 0
  %v5124 = vsel %vm4025, %v4973, 0
  %v5127 = vsel %vm4025, %v4978, 0
  %v5130 = vsel %vm4025, %v4983, 0
  %v5133 = vsel %vm4025, %v4988, 0
  %v5136 = vsel %vm4025, %v4993, 0
  %v5139 = vsel %vm4025, %v4998, 0
  %v5142 = vsel %vm4025, %v5003, 0
  %v5145 = vsel %vm4025, %v5008, 0
  %v5148 = vsel %vm4025, %v5013, 0
  %v5151 = vsel %vm4025, %v5018, 0
  %v5154 = vsel %vm4025, %v5023, 0
  %v5157 = vsel %vm4025, %v5028, 0
  %5159 = vmatpush.msra.mxu0 %v5044
  %5160 = vmatpush.msra.mxu0 %v5043
  %5161 = vmatpush.msra.mxu0 %v5042
  %5162 = vmatpush.msra.mxu0 %v5041
  %5163 = vmatpush.msra.mxu0 %v5040
  %5164 = vmatpush.msra.mxu0 %v5039
  %5165 = vmatpush.msra.mxu0 %v5038
  %5166 = vmatpush.msra.mxu0 %v5037
  %5167 = vmatpush.msra.mxu0 %v5036
  %5168 = vmatpush.msra.mxu0 %v5035
  %5169 = vmatpush.msra.mxu0 %v5034
  %5170 = vmatpush.msra.mxu0 %v5033
  %5171 = vmatpush.msra.mxu0 %v5032
  %5172 = vmatpush.msra.mxu0 %v5031
  %5173 = vmatpush.msra.mxu0 %v5030
  %5174 = vmatpush.msra.mxu0 %v5029
  %5175 = vmatmul.f32.gmra.mxu0 %v4939
  %v5176 = vpop.f32.mrf.mxu0
  %v5177 = vadd.f32 %v5103, %v5176
  %5178 = vmatmul.f32.gmra.mxu0 %v4944
  %v5179 = vpop.f32.mrf.mxu0
  %v5180 = vadd.f32 %v5103, %v5179
  %5181 = vmatmul.f32.gmra.mxu0 %v4949
  %v5182 = vpop.f32.mrf.mxu0
  %v5183 = vadd.f32 %v5103, %v5182
  %5184 = vmatmul.f32.gmra.mxu0 %v4954
  %v5185 = vpop.f32.mrf.mxu0
  %v5186 = vadd.f32 %v5103, %v5185
  %5187 = vmatmul.f32.gmra.mxu0 %v4959
  %v5188 = vpop.f32.mrf.mxu0
  %v5189 = vadd.f32 %v5103, %v5188
  %5190 = vmatmul.f32.gmra.mxu0 %v4964
  %v5191 = vpop.f32.mrf.mxu0
  %v5192 = vadd.f32 %v5103, %v5191
  %5193 = vmatmul.f32.gmra.mxu0 %v4969
  %v5194 = vpop.f32.mrf.mxu0
  %v5195 = vadd.f32 %v5103, %v5194
  %5196 = vmatmul.f32.gmra.mxu0 %v4974
  %v5197 = vpop.f32.mrf.mxu0
  %v5198 = vadd.f32 %v5103, %v5197
  %5199 = vmatmul.f32.gmra.mxu0 %v4979
  %v5200 = vpop.f32.mrf.mxu0
  %v5201 = vadd.f32 %v5103, %v5200
  %5202 = vmatmul.f32.gmra.mxu0 %v4984
  %v5203 = vpop.f32.mrf.mxu0
  %v5204 = vadd.f32 %v5103, %v5203
  %5205 = vmatmul.f32.gmra.mxu0 %v4989
  %v5206 = vpop.f32.mrf.mxu0
  %v5207 = vadd.f32 %v5103, %v5206
  %5208 = vmatmul.f32.gmra.mxu0 %v4994
  %v5209 = vpop.f32.mrf.mxu0
  %v5210 = vadd.f32 %v5103, %v5209
  %5211 = vmatmul.f32.gmra.mxu0 %v4999
  %v5212 = vpop.f32.mrf.mxu0
  %v5213 = vadd.f32 %v5103, %v5212
  %5214 = vmatmul.f32.gmra.mxu0 %v5004
  %v5215 = vpop.f32.mrf.mxu0
  %v5216 = vadd.f32 %v5103, %v5215
  %5217 = vmatmul.f32.gmra.mxu0 %v5009
  %v5218 = vpop.f32.mrf.mxu0
  %v5219 = vadd.f32 %v5103, %v5218
  %5220 = vmatmul.f32.gmra.mxu0 %v5014
  %v5221 = vpop.f32.mrf.mxu0
  %v5222 = vadd.f32 %v5103, %v5221
  %5223 = vmatmul.f32.gmra.mxu0 %v5019
  %v5224 = vpop.f32.mrf.mxu0
  %v5225 = vadd.f32 %v5103, %v5224
  %5226 = vmatmul.f32.gmra.mxu0 %v5024
  %v5227 = vpop.f32.mrf.mxu0
  %v5228 = vadd.f32 %v5103, %v5227
  %5229 = vdwg.mxu0
  %5230 = vmatpush.msra.mxu0 %v5060
  %5231 = vmatpush.msra.mxu0 %v5059
  %5232 = vmatpush.msra.mxu0 %v5058
  %5233 = vmatpush.msra.mxu0 %v5057
  %5234 = vmatpush.msra.mxu0 %v5056
  %5235 = vmatpush.msra.mxu0 %v5055
  %5236 = vmatpush.msra.mxu0 %v5054
  %5237 = vmatpush.msra.mxu0 %v5053
  %5238 = vmatpush.msra.mxu0 %v5052
  %5239 = vmatpush.msra.mxu0 %v5051
  %5240 = vmatpush.msra.mxu0 %v5050
  %5241 = vmatpush.msra.mxu0 %v5049
  %5242 = vmatpush.msra.mxu0 %v5048
  %5243 = vmatpush.msra.mxu0 %v5047
  %5244 = vmatpush.msra.mxu0 %v5046
  %5245 = vmatpush.msra.mxu0 %v5045
  %5246 = vmatmul.f32.gmra.mxu0 %v4940
  %v5247 = vpop.f32.mrf.mxu0
  %v5248 = vadd.f32 %v5177, %v5247
  %5249 = vmatmul.f32.gmra.mxu0 %v4945
  %v5250 = vpop.f32.mrf.mxu0
  %v5251 = vadd.f32 %v5180, %v5250
  %5252 = vmatmul.f32.gmra.mxu0 %v4950
  %v5253 = vpop.f32.mrf.mxu0
  %v5254 = vadd.f32 %v5183, %v5253
  %5255 = vmatmul.f32.gmra.mxu0 %v4955
  %v5256 = vpop.f32.mrf.mxu0
  %v5257 = vadd.f32 %v5186, %v5256
  %5258 = vmatmul.f32.gmra.mxu0 %v4960
  %v5259 = vpop.f32.mrf.mxu0
  %v5260 = vadd.f32 %v5189, %v5259
  %5261 = vmatmul.f32.gmra.mxu0 %v4965
  %v5262 = vpop.f32.mrf.mxu0
  %v5263 = vadd.f32 %v5192, %v5262
  %5264 = vmatmul.f32.gmra.mxu0 %v4970
  %v5265 = vpop.f32.mrf.mxu0
  %v5266 = vadd.f32 %v5195, %v5265
  %5267 = vmatmul.f32.gmra.mxu0 %v4975
  %v5268 = vpop.f32.mrf.mxu0
  %v5269 = vadd.f32 %v5198, %v5268
  %5270 = vmatmul.f32.gmra.mxu0 %v4980
  %v5271 = vpop.f32.mrf.mxu0
  %v5272 = vadd.f32 %v5201, %v5271
  %5273 = vmatmul.f32.gmra.mxu0 %v4985
  %v5274 = vpop.f32.mrf.mxu0
  %v5275 = vadd.f32 %v5204, %v5274
  %5276 = vmatmul.f32.gmra.mxu0 %v4990
  %v5277 = vpop.f32.mrf.mxu0
  %v5278 = vadd.f32 %v5207, %v5277
  %5279 = vmatmul.f32.gmra.mxu0 %v4995
  %v5280 = vpop.f32.mrf.mxu0
  %v5281 = vadd.f32 %v5210, %v5280
  %5282 = vmatmul.f32.gmra.mxu0 %v5000
  %v5283 = vpop.f32.mrf.mxu0
  %v5284 = vadd.f32 %v5213, %v5283
  %5285 = vmatmul.f32.gmra.mxu0 %v5005
  %v5286 = vpop.f32.mrf.mxu0
  %v5287 = vadd.f32 %v5216, %v5286
  %5288 = vmatmul.f32.gmra.mxu0 %v5010
  %v5289 = vpop.f32.mrf.mxu0
  %v5290 = vadd.f32 %v5219, %v5289
  %5291 = vmatmul.f32.gmra.mxu0 %v5015
  %v5292 = vpop.f32.mrf.mxu0
  %v5293 = vadd.f32 %v5222, %v5292
  %5294 = vmatmul.f32.gmra.mxu0 %v5020
  %v5295 = vpop.f32.mrf.mxu0
  %v5296 = vadd.f32 %v5225, %v5295
  %5297 = vmatmul.f32.gmra.mxu0 %v5025
  %v5298 = vpop.f32.mrf.mxu0
  %v5299 = vadd.f32 %v5228, %v5298
  %5300 = vdwg.mxu0
  %5301 = vmatpush.msra.mxu0 %v5076
  %5302 = vmatpush.msra.mxu0 %v5075
  %5303 = vmatpush.msra.mxu0 %v5074
  %5304 = vmatpush.msra.mxu0 %v5073
  %5305 = vmatpush.msra.mxu0 %v5072
  %5306 = vmatpush.msra.mxu0 %v5071
  %5307 = vmatpush.msra.mxu0 %v5070
  %5308 = vmatpush.msra.mxu0 %v5069
  %5309 = vmatpush.msra.mxu0 %v5068
  %5310 = vmatpush.msra.mxu0 %v5067
  %5311 = vmatpush.msra.mxu0 %v5066
  %5312 = vmatpush.msra.mxu0 %v5065
  %5313 = vmatpush.msra.mxu0 %v5064
  %5314 = vmatpush.msra.mxu0 %v5063
  %5315 = vmatpush.msra.mxu0 %v5062
  %5316 = vmatpush.msra.mxu0 %v5061
  %5317 = vmatmul.f32.gmra.mxu0 %v4941
  %v5318 = vpop.f32.mrf.mxu0
  %v5319 = vadd.f32 %v5248, %v5318
  %5320 = vmatmul.f32.gmra.mxu0 %v4946
  %v5321 = vpop.f32.mrf.mxu0
  %v5322 = vadd.f32 %v5251, %v5321
  %5323 = vmatmul.f32.gmra.mxu0 %v4951
  %v5324 = vpop.f32.mrf.mxu0
  %v5325 = vadd.f32 %v5254, %v5324
  %5326 = vmatmul.f32.gmra.mxu0 %v4956
  %v5327 = vpop.f32.mrf.mxu0
  %v5328 = vadd.f32 %v5257, %v5327
  %5329 = vmatmul.f32.gmra.mxu0 %v4961
  %v5330 = vpop.f32.mrf.mxu0
  %v5331 = vadd.f32 %v5260, %v5330
  %5332 = vmatmul.f32.gmra.mxu0 %v4966
  %v5333 = vpop.f32.mrf.mxu0
  %v5334 = vadd.f32 %v5263, %v5333
  %5335 = vmatmul.f32.gmra.mxu0 %v4971
  %v5336 = vpop.f32.mrf.mxu0
  %v5337 = vadd.f32 %v5266, %v5336
  %5338 = vmatmul.f32.gmra.mxu0 %v4976
  %v5339 = vpop.f32.mrf.mxu0
  %v5340 = vadd.f32 %v5269, %v5339
  %5341 = vmatmul.f32.gmra.mxu0 %v4981
  %v5342 = vpop.f32.mrf.mxu0
  %v5343 = vadd.f32 %v5272, %v5342
  %5344 = vmatmul.f32.gmra.mxu0 %v4986
  %v5345 = vpop.f32.mrf.mxu0
  %v5346 = vadd.f32 %v5275, %v5345
  %5347 = vmatmul.f32.gmra.mxu0 %v4991
  %v5348 = vpop.f32.mrf.mxu0
  %v5349 = vadd.f32 %v5278, %v5348
  %5350 = vmatmul.f32.gmra.mxu0 %v4996
  %v5351 = vpop.f32.mrf.mxu0
  %v5352 = vadd.f32 %v5281, %v5351
  %5353 = vmatmul.f32.gmra.mxu0 %v5001
  %v5354 = vpop.f32.mrf.mxu0
  %v5355 = vadd.f32 %v5284, %v5354
  %5356 = vmatmul.f32.gmra.mxu0 %v5006
  %v5357 = vpop.f32.mrf.mxu0
  %v5358 = vadd.f32 %v5287, %v5357
  %5359 = vmatmul.f32.gmra.mxu0 %v5011
  %v5360 = vpop.f32.mrf.mxu0
  %v5361 = vadd.f32 %v5290, %v5360
  %5362 = vmatmul.f32.gmra.mxu0 %v5016
  %v5363 = vpop.f32.mrf.mxu0
  %v5364 = vadd.f32 %v5293, %v5363
  %5365 = vmatmul.f32.gmra.mxu0 %v5021
  %v5366 = vpop.f32.mrf.mxu0
  %v5367 = vadd.f32 %v5296, %v5366
  %5368 = vmatmul.f32.gmra.mxu0 %v5026
  %v5369 = vpop.f32.mrf.mxu0
  %v5370 = vadd.f32 %v5299, %v5369
  %5371 = vdwg.mxu0
  %5372 = vmatpush.msra.mxu0 %v5092
  %5373 = vmatpush.msra.mxu0 %v5091
  %5374 = vmatpush.msra.mxu0 %v5090
  %5375 = vmatpush.msra.mxu0 %v5089
  %5376 = vmatpush.msra.mxu0 %v5088
  %5377 = vmatpush.msra.mxu0 %v5087
  %5378 = vmatpush.msra.mxu0 %v5086
  %5379 = vmatpush.msra.mxu0 %v5085
  %5380 = vmatpush.msra.mxu0 %v5084
  %5381 = vmatpush.msra.mxu0 %v5083
  %5382 = vmatpush.msra.mxu0 %v5082
  %5383 = vmatpush.msra.mxu0 %v5081
  %5384 = vmatpush.msra.mxu0 %v5080
  %5385 = vmatpush.msra.mxu0 %v5079
  %5386 = vmatpush.msra.mxu0 %v5078
  %5387 = vmatpush.msra.mxu0 %v5077
  %5388 = vmatmul.f32.gmra.mxu0 %v4942
  %v5389 = vpop.f32.mrf.mxu0
  %v5390 = vadd.f32 %v5319, %v5389
  %5391 = vmatmul.f32.gmra.mxu0 %v4947
  %v5392 = vpop.f32.mrf.mxu0
  %v5393 = vadd.f32 %v5322, %v5392
  %5394 = vmatmul.f32.gmra.mxu0 %v4952
  %v5395 = vpop.f32.mrf.mxu0
  %v5396 = vadd.f32 %v5325, %v5395
  %5397 = vmatmul.f32.gmra.mxu0 %v4957
  %v5398 = vpop.f32.mrf.mxu0
  %v5399 = vadd.f32 %v5328, %v5398
  %5400 = vmatmul.f32.gmra.mxu0 %v4962
  %v5401 = vpop.f32.mrf.mxu0
  %v5402 = vadd.f32 %v5331, %v5401
  %5403 = vmatmul.f32.gmra.mxu0 %v4967
  %v5404 = vpop.f32.mrf.mxu0
  %v5405 = vadd.f32 %v5334, %v5404
  %5406 = vmatmul.f32.gmra.mxu0 %v4972
  %v5407 = vpop.f32.mrf.mxu0
  %v5408 = vadd.f32 %v5337, %v5407
  %5409 = vmatmul.f32.gmra.mxu0 %v4977
  %v5410 = vpop.f32.mrf.mxu0
  %v5411 = vadd.f32 %v5340, %v5410
  %5412 = vmatmul.f32.gmra.mxu0 %v4982
  %v5413 = vpop.f32.mrf.mxu0
  %v5414 = vadd.f32 %v5343, %v5413
  %5415 = vmatmul.f32.gmra.mxu0 %v4987
  %v5416 = vpop.f32.mrf.mxu0
  %v5417 = vadd.f32 %v5346, %v5416
  %5418 = vmatmul.f32.gmra.mxu0 %v4992
  %v5419 = vpop.f32.mrf.mxu0
  %v5420 = vadd.f32 %v5349, %v5419
  %5421 = vmatmul.f32.gmra.mxu0 %v4997
  %v5422 = vpop.f32.mrf.mxu0
  %v5423 = vadd.f32 %v5352, %v5422
  %5424 = vmatmul.f32.gmra.mxu0 %v5002
  %v5425 = vpop.f32.mrf.mxu0
  %v5426 = vadd.f32 %v5355, %v5425
  %5427 = vmatmul.f32.gmra.mxu0 %v5007
  %v5428 = vpop.f32.mrf.mxu0
  %v5429 = vadd.f32 %v5358, %v5428
  %5430 = vmatmul.f32.gmra.mxu0 %v5012
  %v5431 = vpop.f32.mrf.mxu0
  %v5432 = vadd.f32 %v5361, %v5431
  %5433 = vmatmul.f32.gmra.mxu0 %v5017
  %v5434 = vpop.f32.mrf.mxu0
  %v5435 = vadd.f32 %v5364, %v5434
  %5436 = vmatmul.f32.gmra.mxu0 %v5022
  %v5437 = vpop.f32.mrf.mxu0
  %v5438 = vadd.f32 %v5367, %v5437
  %5439 = vmatmul.f32.gmra.mxu0 %v5027
  %v5440 = vpop.f32.mrf.mxu0
  %v5441 = vadd.f32 %v5370, %v5440
  %5442 = vdwg.mxu0
  %5443 = vmatpush.msra.mxu0 0.0
  %5444 = vmatpush.msra.mxu0 0.0
  %5445 = vmatpush.msra.mxu0 0.0
  %5446 = vmatpush.msra.mxu0 0.0
  %5447 = vmatpush.msra.mxu0 0.0
  %5448 = vmatpush.msra.mxu0 0.0
  %5449 = vmatpush.msra.mxu0 0.0
  %5450 = vmatpush.msra.mxu0 0.0
  %5451 = vmatpush.msra.mxu0 %v5100
  %5452 = vmatpush.msra.mxu0 %v5099
  %5453 = vmatpush.msra.mxu0 %v5098
  %5454 = vmatpush.msra.mxu0 %v5097
  %5455 = vmatpush.msra.mxu0 %v5096
  %5456 = vmatpush.msra.mxu0 %v5095
  %5457 = vmatpush.msra.mxu0 %v5094
  %5458 = vmatpush.msra.mxu0 %v5093
  %5459 = vmatmul.f32.gmra.mxu0 %v5106
  %v5460 = vpop.f32.mrf.mxu0
  %v5461 = vadd.f32 %v5390, %v5460
  %5462 = vmatmul.f32.gmra.mxu0 %v5109
  %v5463 = vpop.f32.mrf.mxu0
  %v5464 = vadd.f32 %v5393, %v5463
  %5465 = vmatmul.f32.gmra.mxu0 %v5112
  %v5466 = vpop.f32.mrf.mxu0
  %v5467 = vadd.f32 %v5396, %v5466
  %5468 = vmatmul.f32.gmra.mxu0 %v5115
  %v5469 = vpop.f32.mrf.mxu0
  %v5470 = vadd.f32 %v5399, %v5469
  %5471 = vmatmul.f32.gmra.mxu0 %v5118
  %v5472 = vpop.f32.mrf.mxu0
  %v5473 = vadd.f32 %v5402, %v5472
  %5474 = vmatmul.f32.gmra.mxu0 %v5121
  %v5475 = vpop.f32.mrf.mxu0
  %v5476 = vadd.f32 %v5405, %v5475
  %5477 = vmatmul.f32.gmra.mxu0 %v5124
  %v5478 = vpop.f32.mrf.mxu0
  %v5479 = vadd.f32 %v5408, %v5478
  %5480 = vmatmul.f32.gmra.mxu0 %v5127
  %v5481 = vpop.f32.mrf.mxu0
  %v5482 = vadd.f32 %v5411, %v5481
  %5483 = vmatmul.f32.gmra.mxu0 %v5130
  %v5484 = vpop.f32.mrf.mxu0
  %v5485 = vadd.f32 %v5414, %v5484
  %5486 = vmatmul.f32.gmra.mxu0 %v5133
  %v5487 = vpop.f32.mrf.mxu0
  %v5488 = vadd.f32 %v5417, %v5487
  %5489 = vmatmul.f32.gmra.mxu0 %v5136
  %v5490 = vpop.f32.mrf.mxu0
  %v5491 = vadd.f32 %v5420, %v5490
  %5492 = vmatmul.f32.gmra.mxu0 %v5139
  %v5493 = vpop.f32.mrf.mxu0
  %v5494 = vadd.f32 %v5423, %v5493
  %5495 = vmatmul.f32.gmra.mxu0 %v5142
  %v5496 = vpop.f32.mrf.mxu0
  %v5497 = vadd.f32 %v5426, %v5496
  %5498 = vmatmul.f32.gmra.mxu0 %v5145
  %v5499 = vpop.f32.mrf.mxu0
  %v5500 = vadd.f32 %v5429, %v5499
  %5501 = vmatmul.f32.gmra.mxu0 %v5148
  %v5502 = vpop.f32.mrf.mxu0
  %v5503 = vadd.f32 %v5432, %v5502
  %5504 = vmatmul.f32.gmra.mxu0 %v5151
  %v5505 = vpop.f32.mrf.mxu0
  %v5506 = vadd.f32 %v5435, %v5505
  %5507 = vmatmul.f32.gmra.mxu0 %v5154
  %v5508 = vpop.f32.mrf.mxu0
  %v5509 = vadd.f32 %v5438, %v5508
  %5510 = vmatmul.f32.gmra.mxu0 %v5157
  %v5511 = vpop.f32.mrf.mxu0
  %v5512 = vadd.f32 %v5441, %v5511
  %5513 = vdwg.mxu0
  %v5514 = vmax.f32 %v5461, 0.0
  %v5515 = vmax.f32 %v5464, 0.0
  %v5516 = vmax.f32 %v5467, 0.0
  %v5517 = vmax.f32 %v5470, 0.0
  %v5518 = vmax.f32 %v5473, 0.0
  %v5519 = vmax.f32 %v5476, 0.0
  %v5520 = vmax.f32 %v5479, 0.0
  %v5521 = vmax.f32 %v5482, 0.0
  %v5522 = vmax.f32 %v5485, 0.0
  %v5523 = vmax.f32 %v5488, 0.0
  %v5524 = vmax.f32 %v5491, 0.0
  %v5525 = vmax.f32 %v5494, 0.0
  %v5526 = vmax.f32 %v5497, 0.0
  %v5527 = vmax.f32 %v5500, 0.0
  %v5528 = vmax.f32 %v5503, 0.0
  %v5529 = vmax.f32 %v5506, 0.0
  %v5530 = vmax.f32 %v5509, 0.0
  %v5531 = vmax.f32 %v5512, 0.0
  %5532 = vst.msk [vmem:[%s7] sm:$0xff] %vm4025, %v5514
  %5533 = vst.msk [vmem:[%s7 + $0x8] sm:$0xff] %vm4025, %v5515
  %5534 = vst.msk [vmem:[%s7 + $0x10] sm:$0xff] %vm4025, %v5516
  %5535 = vst.msk [vmem:[%s7 + $0x18] sm:$0xff] %vm4025, %v5517
  %5536 = vst.msk [vmem:[%s7 + $0x20] sm:$0xff] %vm4025, %v5518
  %5537 = vst.msk [vmem:[%s7 + $0x28] sm:$0xff] %vm4025, %v5519
  %5538 = vst.msk [vmem:[%s7 + $0x30] sm:$0xff] %vm4025, %v5520
  %5539 = vst.msk [vmem:[%s7 + $0x38] sm:$0xff] %vm4025, %v5521
  %5540 = vst.msk [vmem:[%s7 + $0x40] sm:$0xff] %vm4025, %v5522
  %5541 = vst.msk [vmem:[%s7 + $0x48] sm:$0xff] %vm4025, %v5523
  %5542 = vst.msk [vmem:[%s7 + $0x50] sm:$0xff] %vm4025, %v5524
  %5543 = vst.msk [vmem:[%s7 + $0x58] sm:$0xff] %vm4025, %v5525
  %5544 = vst.msk [vmem:[%s7 + $0x60] sm:$0xff] %vm4025, %v5526
  %5545 = vst.msk [vmem:[%s7 + $0x68] sm:$0xff] %vm4025, %v5527
  %5546 = vst.msk [vmem:[%s7 + $0x70] sm:$0xff] %vm4025, %v5528
  %5547 = vst.msk [vmem:[%s7 + $0x78] sm:$0xff] %vm4025, %v5529
  %5548 = vst.msk [vmem:[%s7 + $0x80] sm:$0xff] %vm4025, %v5530
  %5549 = vst.msk [vmem:[%s7 + $0x88] sm:$0xf] %vm4048, %v5531
  // Predicated region
  $region30: #{mario_net_forward.2} parent=0 // pred_check
    _
  $region31: #{mario_net_forward.2} parent=0 // pred_check_branch
    %5551 = sbr.rel (0) target = $region33
  $region32: #{mario_net_forward.2} parent=0 // pred_region
    _
  $region33: #{mario_net_forward.2} parent=0 // pred_fallthru
    _
  // Predicated region
  $region34: #{mario_net_forward.2} parent=0 // pred_check
    _
  $region35: #{mario_net_forward.2} parent=0 // pred_check_branch
    %5553 = sbr.rel (0) target = $region37
  $region36: #{mario_net_forward.2} parent=0 // pred_region
    _
  $region37: #{mario_net_forward.2} parent=0 // pred_fallthru
    _

// kernel: mario_net_forward.3
$region0: #{mario_net_forward.3}
  #allocation0 [shape = 'u32[]', space=smem, size = 0x4, offset = 0x4, fixed_abs, tag = 'smem constant byte address 0x4 - core index']
  #allocation1 [shape = 'u32[72,128]{1,0:T(1,128)}', space=vmem, size = 0x9000, scoped, tag = 'internal scratch']
  %s0 = inlined_call_operand.vmem [shape: f32[2,3136], index: 0, kind: input, shape index: {}]
  %s1 = inlined_call_operand.vmem [shape: f32[3136,512], index: 1, kind: input, shape index: {}]
  %s2 = inlined_call_operand.vmem [shape: f32[1,512], index: 2, kind: input, shape index: {}]
  %s3 = inlined_call_operand.vmem [shape: f32[512,5], index: 3, kind: input, shape index: {}]
  %s4 = inlined_call_operand.vmem [shape: f32[1,5], index: 4, kind: input, shape index: {}]
  %s5 = inlined_call_operand.hbm [shape: f32[2,5], index: 5, kind: output, shape index: {}]
  %s6 = sld [smem:[#allocation0]]
  $region30: #{mario_net_forward.3} parent=0
    _
  %s8 = ssub.s32 1, %s6
  %s9 = scalar_select 0, %s8, %s6
  $region1: #{mario_net_forward.3} parent=0
    #allocation2 [shape = 'u8[1024]{0}', space=vmem, size = 0x400, scoped, tag = 'output window, operand 0, single buffered']
    #allocation3 [shape = 's32[1]{0}', space=sflag, size = 0x4, scoped, tag = 'scoped memory for mario_net_forward.3']
    %10 = vsyncpa [#allocation3], 0
    // Predicated region
    $region2: #{mario_net_forward.3} parent=1 // pred_check
      _
    $region3: #{mario_net_forward.3} parent=1 // pred_check_branch
      %12 = sbr.rel (0) target = $region5
    $region4: #{mario_net_forward.3} parent=1 // pred_region
      _
    $region5: #{mario_net_forward.3} parent=1 // pred_fallthru
      _
    // Predicated region
    $region6: #{mario_net_forward.3} parent=1 // pred_check
      _
    $region7: #{mario_net_forward.3} parent=1 // pred_check_branch
      %14 = sbr.rel (0) target = $region9
    $region8: #{mario_net_forward.3} parent=1 // pred_region
      _
    $region9: #{mario_net_forward.3} parent=1 // pred_fallthru
      _
    // Predicated region
    $region10: #{mario_net_forward.3} parent=1 // pred_check
      _
    $region11: #{mario_net_forward.3} parent=1 // pred_check_branch
      %16 = sbr.rel (0) target = $region13
    $region12: #{mario_net_forward.3} parent=1 // pred_region
      _
    $region13: #{mario_net_forward.3} parent=1 // pred_fallthru
      _
    // Predicated region
    $region14: #{mario_net_forward.3} parent=1 // pred_check
      _
    $region15: #{mario_net_forward.3} parent=1 // pred_check_branch
      %18 = sbr.rel (0) target = $region17
    $region16: #{mario_net_forward.3} parent=1 // pred_region
      _
    $region17: #{mario_net_forward.3} parent=1 // pred_fallthru
      _
    // Predicated region
    $region18: #{mario_net_forward.3} parent=1 // pred_check
      _
    $region19: #{mario_net_forward.3} parent=1 // pred_check_branch
      %20 = sbr.rel (0) target = $region21
    $region20: #{mario_net_forward.3} parent=1 // pred_region
      _
    $region21: #{mario_net_forward.3} parent=1 // pred_fallthru
      _
    %v21 = vld [vmem:[%s0] sm:$0xff]
    %v22 = vld [vmem:[%s0 + $0x8] sm:$0xff]
    %v23 = vld [vmem:[%s0 + $0x10] sm:$0xff]
    %v24 = vld [vmem:[%s0 + $0x18] sm:$0xff]
    %v25 = vld [vmem:[%s0 + $0x20] sm:$0xff]
    %v26 = vld [vmem:[%s0 + $0x28] sm:$0xff]
    %v27 = vld [vmem:[%s0 + $0x30] sm:$0x3]
    %v28 = vld [vmem:[%s1] sm:$0xff]
    %v29 = vld [vmem:[%s1 + $0x8] sm:$0xff]
    %v30 = vld [vmem:[%s1 + $0x10] sm:$0xff]
    %v31 = vld [vmem:[%s1 + $0x18] sm:$0xff]
    %v32 = vld [vmem:[%s1 + $0x20] sm:$0xff]
    %v33 = vld [vmem:[%s1 + $0x28] sm:$0xff]
    %v34 = vld [vmem:[%s1 + $0x30] sm:$0xff]
    %v35 = vld [vmem:[%s1 + $0x38] sm:$0xff]
    %v36 = vld [vmem:[%s1 + $0x40] sm:$0xff]
    %v37 = vld [vmem:[%s1 + $0x48] sm:$0xff]
    %v38 = vld [vmem:[%s1 + $0x50] sm:$0xff]
    %v39 = vld [vmem:[%s1 + $0x58] sm:$0xff]
    %v40 = vld [vmem:[%s1 + $0x60] sm:$0xff]
    %v41 = vld [vmem:[%s1 + $0x68] sm:$0xff]
    %v42 = vld [vmem:[%s1 + $0x70] sm:$0xff]
    %v43 = vld [vmem:[%s1 + $0x78] sm:$0xff]
    %v44 = vld [vmem:[%s1 + $0x80] sm:$0xff]
    %v45 = vld [vmem:[%s1 + $0x88] sm:$0xff]
    %v46 = vld [vmem:[%s1 + $0x90] sm:$0xff]
    %v47 = vld [vmem:[%s1 + $0x98] sm:$0xff]
    %v48 = vld [vmem:[%s1 + $0xa0] sm:$0xff]
    %v49 = vld [vmem:[%s1 + $0xa8] sm:$0xff]
    %v50 = vld [vmem:[%s1 + $0xb0] sm:$0xff]
    %v51 = vld [vmem:[%s1 + $0xb8] sm:$0xff]
    %v52 = vld [vmem:[%s1 + $0xc0] sm:$0xff]
    %v53 = vld [vmem:[%s1 + $0xc8] sm:$0xff]
    %v54 = vld [vmem:[%s1 + $0xd0] sm:$0xff]
    %v55 = vld [vmem:[%s1 + $0xd8] sm:$0xff]
    %v56 = vld [vmem:[%s1 + $0xe0] sm:$0xff]
    %v57 = vld [vmem:[%s1 + $0xe8] sm:$0xff]
    %v58 = vld [vmem:[%s1 + $0xf0] sm:$0xff]
    %v59 = vld [vmem:[%s1 + $0xf8] sm:$0xff]
    %v60 = vld [vmem:[%s1 + $0x100] sm:$0xff]
    %v61 = vld [vmem:[%s1 + $0x108] sm:$0xff]
    %v62 = vld [vmem:[%s1 + $0x110] sm:$0xff]
    %v63 = vld [vmem:[%s1 + $0x118] sm:$0xff]
    %v64 = vld [vmem:[%s1 + $0x120] sm:$0xff]
    %v65 = vld [vmem:[%s1 + $0x128] sm:$0xff]
    %v66 = vld [vmem:[%s1 + $0x130] sm:$0xff]
    %v67 = vld [vmem:[%s1 + $0x138] sm:$0xff]
    %v68 = vld [vmem:[%s1 + $0x140] sm:$0xff]
    %v69 = vld [vmem:[%s1 + $0x148] sm:$0xff]
    %v70 = vld [vmem:[%s1 + $0x150] sm:$0xff]
    %v71 = vld [vmem:[%s1 + $0x158] sm:$0xff]
    %v72 = vld [vmem:[%s1 + $0x160] sm:$0xff]
    %v73 = vld [vmem:[%s1 + $0x168] sm:$0xff]
    %v74 = vld [vmem:[%s1 + $0x170] sm:$0xff]
    %v75 = vld [vmem:[%s1 + $0x178] sm:$0xff]
    %v76 = vld [vmem:[%s1 + $0x180] sm:$0xff]
    %v77 = vld [vmem:[%s1 + $0x188] sm:$0xff]
    %v78 = vld [vmem:[%s1 + $0x190] sm:$0xff]
    %v79 = vld [vmem:[%s1 + $0x198] sm:$0xff]
    %v80 = vld [vmem:[%s1 + $0x1a0] sm:$0xff]
    %v81 = vld [vmem:[%s1 + $0x1a8] sm:$0xff]
    %v82 = vld [vmem:[%s1 + $0x1b0] sm:$0xff]
    %v83 = vld [vmem:[%s1 + $0x1b8] sm:$0xff]
    %v84 = vld [vmem:[%s1 + $0x1c0] sm:$0xff]
    %v85 = vld [vmem:[%s1 + $0x1c8] sm:$0xff]
    %v86 = vld [vmem:[%s1 + $0x1d0] sm:$0xff]
    %v87 = vld [vmem:[%s1 + $0x1d8] sm:$0xff]
    %v88 = vld [vmem:[%s1 + $0x1e0] sm:$0xff]
    %v89 = vld [vmem:[%s1 + $0x1e8] sm:$0xff]
    %v90 = vld [vmem:[%s1 + $0x1f0] sm:$0xff]
    %v91 = vld [vmem:[%s1 + $0x1f8] sm:$0xff]
    %v92 = vld [vmem:[%s1 + $0x200] sm:$0xff]
    %v93 = vld [vmem:[%s1 + $0x208] sm:$0xff]
    %v94 = vld [vmem:[%s1 + $0x210] sm:$0xff]
    %v95 = vld [vmem:[%s1 + $0x218] sm:$0xff]
    %v96 = vld [vmem:[%s1 + $0x220] sm:$0xff]
    %v97 = vld [vmem:[%s1 + $0x228] sm:$0xff]
    %v98 = vld [vmem:[%s1 + $0x230] sm:$0xff]
    %v99 = vld [vmem:[%s1 + $0x238] sm:$0xff]
    %v100 = vld [vmem:[%s1 + $0x240] sm:$0xff]
    %v101 = vld [vmem:[%s1 + $0x248] sm:$0xff]
    %v102 = vld [vmem:[%s1 + $0x250] sm:$0xff]
    %v103 = vld [vmem:[%s1 + $0x258] sm:$0xff]
    %v104 = vld [vmem:[%s1 + $0x260] sm:$0xff]
    %v105 = vld [vmem:[%s1 + $0x268] sm:$0xff]
    %v106 = vld [vmem:[%s1 + $0x270] sm:$0xff]
    %v107 = vld [vmem:[%s1 + $0x278] sm:$0xff]
    %v108 = vld [vmem:[%s1 + $0x280] sm:$0xff]
    %v109 = vld [vmem:[%s1 + $0x288] sm:$0xff]
    %v110 = vld [vmem:[%s1 + $0x290] sm:$0xff]
    %v111 = vld [vmem:[%s1 + $0x298] sm:$0xff]
    %v112 = vld [vmem:[%s1 + $0x2a0] sm:$0xff]
    %v113 = vld [vmem:[%s1 + $0x2a8] sm:$0xff]
    %v114 = vld [vmem:[%s1 + $0x2b0] sm:$0xff]
    %v115 = vld [vmem:[%s1 + $0x2b8] sm:$0xff]
    %v116 = vld [vmem:[%s1 + $0x2c0] sm:$0xff]
    %v117 = vld [vmem:[%s1 + $0x2c8] sm:$0xff]
    %v118 = vld [vmem:[%s1 + $0x2d0] sm:$0xff]
    %v119 = vld [vmem:[%s1 + $0x2d8] sm:$0xff]
    %v120 = vld [vmem:[%s1 + $0x2e0] sm:$0xff]
    %v121 = vld [vmem:[%s1 + $0x2e8] sm:$0xff]
    %v122 = vld [vmem:[%s1 + $0x2f0] sm:$0xff]
    %v123 = vld [vmem:[%s1 + $0x2f8] sm:$0xff]
    %v124 = vld [vmem:[%s1 + $0x300] sm:$0xff]
    %v125 = vld [vmem:[%s1 + $0x308] sm:$0xff]
    %v126 = vld [vmem:[%s1 + $0x310] sm:$0xff]
    %v127 = vld [vmem:[%s1 + $0x318] sm:$0xff]
    %v128 = vld [vmem:[%s1 + $0x320] sm:$0xff]
    %v129 = vld [vmem:[%s1 + $0x328] sm:$0xff]
    %v130 = vld [vmem:[%s1 + $0x330] sm:$0xff]
    %v131 = vld [vmem:[%s1 + $0x338] sm:$0xff]
    %v132 = vld [vmem:[%s1 + $0x340] sm:$0xff]
    %v133 = vld [vmem:[%s1 + $0x348] sm:$0xff]
    %v134 = vld [vmem:[%s1 + $0x350] sm:$0xff]
    %v135 = vld [vmem:[%s1 + $0x358] sm:$0xff]
    %v136 = vld [vmem:[%s1 + $0x360] sm:$0xff]
    %v137 = vld [vmem:[%s1 + $0x368] sm:$0xff]
    %v138 = vld [vmem:[%s1 + $0x370] sm:$0xff]
    %v139 = vld [vmem:[%s1 + $0x378] sm:$0xff]
    %v140 = vld [vmem:[%s1 + $0x380] sm:$0xff]
    %v141 = vld [vmem:[%s1 + $0x388] sm:$0xff]
    %v142 = vld [vmem:[%s1 + $0x390] sm:$0xff]
    %v143 = vld [vmem:[%s1 + $0x398] sm:$0xff]
    %v144 = vld [vmem:[%s1 + $0x3a0] sm:$0xff]
    %v145 = vld [vmem:[%s1 + $0x3a8] sm:$0xff]
    %v146 = vld [vmem:[%s1 + $0x3b0] sm:$0xff]
    %v147 = vld [vmem:[%s1 + $0x3b8] sm:$0xff]
    %v148 = vld [vmem:[%s1 + $0x3c0] sm:$0xff]
    %v149 = vld [vmem:[%s1 + $0x3c8] sm:$0xff]
    %v150 = vld [vmem:[%s1 + $0x3d0] sm:$0xff]
    %v151 = vld [vmem:[%s1 + $0x3d8] sm:$0xff]
    %v152 = vld [vmem:[%s1 + $0x3e0] sm:$0xff]
    %v153 = vld [vmem:[%s1 + $0x3e8] sm:$0xff]
    %v154 = vld [vmem:[%s1 + $0x3f0] sm:$0xff]
    %v155 = vld [vmem:[%s1 + $0x3f8] sm:$0xff]
    %v156 = vld [vmem:[%s1 + $0x400] sm:$0xff]
    %v157 = vld [vmem:[%s1 + $0x408] sm:$0xff]
    %v158 = vld [vmem:[%s1 + $0x410] sm:$0xff]
    %v159 = vld [vmem:[%s1 + $0x418] sm:$0xff]
    %v160 = vld [vmem:[%s1 + $0x420] sm:$0xff]
    %v161 = vld [vmem:[%s1 + $0x428] sm:$0xff]
    %v162 = vld [vmem:[%s1 + $0x430] sm:$0xff]
    %v163 = vld [vmem:[%s1 + $0x438] sm:$0xff]
    %v164 = vld [vmem:[%s1 + $0x440] sm:$0xff]
    %v165 = vld [vmem:[%s1 + $0x448] sm:$0xff]
    %v166 = vld [vmem:[%s1 + $0x450] sm:$0xff]
    %v167 = vld [vmem:[%s1 + $0x458] sm:$0xff]
    %v168 = vld [vmem:[%s1 + $0x460] sm:$0xff]
    %v169 = vld [vmem:[%s1 + $0x468] sm:$0xff]
    %v170 = vld [vmem:[%s1 + $0x470] sm:$0xff]
    %v171 = vld [vmem:[%s1 + $0x478] sm:$0xff]
    %v172 = vld [vmem:[%s1 + $0x480] sm:$0xff]
    %v173 = vld [vmem:[%s1 + $0x488] sm:$0xff]
    %v174 = vld [vmem:[%s1 + $0x490] sm:$0xff]
    %v175 = vld [vmem:[%s1 + $0x498] sm:$0xff]
    %v176 = vld [vmem:[%s1 + $0x4a0] sm:$0xff]
    %v177 = vld [vmem:[%s1 + $0x4a8] sm:$0xff]
    %v178 = vld [vmem:[%s1 + $0x4b0] sm:$0xff]
    %v179 = vld [vmem:[%s1 + $0x4b8] sm:$0xff]
    %v180 = vld [vmem:[%s1 + $0x4c0] sm:$0xff]
    %v181 = vld [vmem:[%s1 + $0x4c8] sm:$0xff]
    %v182 = vld [vmem:[%s1 + $0x4d0] sm:$0xff]
    %v183 = vld [vmem:[%s1 + $0x4d8] sm:$0xff]
    %v184 = vld [vmem:[%s1 + $0x4e0] sm:$0xff]
    %v185 = vld [vmem:[%s1 + $0x4e8] sm:$0xff]
    %v186 = vld [vmem:[%s1 + $0x4f0] sm:$0xff]
    %v187 = vld [vmem:[%s1 + $0x4f8] sm:$0xff]
    %v188 = vld [vmem:[%s1 + $0x500] sm:$0xff]
    %v189 = vld [vmem:[%s1 + $0x508] sm:$0xff]
    %v190 = vld [vmem:[%s1 + $0x510] sm:$0xff]
    %v191 = vld [vmem:[%s1 + $0x518] sm:$0xff]
    %v192 = vld [vmem:[%s1 + $0x520] sm:$0xff]
    %v193 = vld [vmem:[%s1 + $0x528] sm:$0xff]
    %v194 = vld [vmem:[%s1 + $0x530] sm:$0xff]
    %v195 = vld [vmem:[%s1 + $0x538] sm:$0xff]
    %v196 = vld [vmem:[%s1 + $0x540] sm:$0xff]
    %v197 = vld [vmem:[%s1 + $0x548] sm:$0xff]
    %v198 = vld [vmem:[%s1 + $0x550] sm:$0xff]
    %v199 = vld [vmem:[%s1 + $0x558] sm:$0xff]
    %v200 = vld [vmem:[%s1 + $0x560] sm:$0xff]
    %v201 = vld [vmem:[%s1 + $0x568] sm:$0xff]
    %v202 = vld [vmem:[%s1 + $0x570] sm:$0xff]
    %v203 = vld [vmem:[%s1 + $0x578] sm:$0xff]
    %v204 = vld [vmem:[%s1 + $0x580] sm:$0xff]
    %v205 = vld [vmem:[%s1 + $0x588] sm:$0xff]
    %v206 = vld [vmem:[%s1 + $0x590] sm:$0xff]
    %v207 = vld [vmem:[%s1 + $0x598] sm:$0xff]
    %v208 = vld [vmem:[%s1 + $0x5a0] sm:$0xff]
    %v209 = vld [vmem:[%s1 + $0x5a8] sm:$0xff]
    %v210 = vld [vmem:[%s1 + $0x5b0] sm:$0xff]
    %v211 = vld [vmem:[%s1 + $0x5b8] sm:$0xff]
    %v212 = vld [vmem:[%s1 + $0x5c0] sm:$0xff]
    %v213 = vld [vmem:[%s1 + $0x5c8] sm:$0xff]
    %v214 = vld [vmem:[%s1 + $0x5d0] sm:$0xff]
    %v215 = vld [vmem:[%s1 + $0x5d8] sm:$0xff]
    %v216 = vld [vmem:[%s1 + $0x5e0] sm:$0xff]
    %v217 = vld [vmem:[%s1 + $0x5e8] sm:$0xff]
    %v218 = vld [vmem:[%s1 + $0x5f0] sm:$0xff]
    %v219 = vld [vmem:[%s1 + $0x5f8] sm:$0xff]
    %v220 = vld [vmem:[%s1 + $0x600] sm:$0xff]
    %v221 = vld [vmem:[%s1 + $0x608] sm:$0xff]
    %v222 = vld [vmem:[%s1 + $0x610] sm:$0xff]
    %v223 = vld [vmem:[%s1 + $0x618] sm:$0xff]
    %v224 = vld [vmem:[%s1 + $0x620] sm:$0xff]
    %v225 = vld [vmem:[%s1 + $0x628] sm:$0xff]
    %v226 = vld [vmem:[%s1 + $0x630] sm:$0xff]
    %v227 = vld [vmem:[%s1 + $0x638] sm:$0xff]
    %v228 = vld [vmem:[%s1 + $0x640] sm:$0xff]
    %v229 = vld [vmem:[%s1 + $0x648] sm:$0xff]
    %v230 = vld [vmem:[%s1 + $0x650] sm:$0xff]
    %v231 = vld [vmem:[%s1 + $0x658] sm:$0xff]
    %v232 = vld [vmem:[%s1 + $0x660] sm:$0xff]
    %v233 = vld [vmem:[%s1 + $0x668] sm:$0xff]
    %v234 = vld [vmem:[%s1 + $0x670] sm:$0xff]
    %v235 = vld [vmem:[%s1 + $0x678] sm:$0xff]
    %v236 = vld [vmem:[%s1 + $0x680] sm:$0xff]
    %v237 = vld [vmem:[%s1 + $0x688] sm:$0xff]
    %v238 = vld [vmem:[%s1 + $0x690] sm:$0xff]
    %v239 = vld [vmem:[%s1 + $0x698] sm:$0xff]
    %v240 = vld [vmem:[%s1 + $0x6a0] sm:$0xff]
    %v241 = vld [vmem:[%s1 + $0x6a8] sm:$0xff]
    %v242 = vld [vmem:[%s1 + $0x6b0] sm:$0xff]
    %v243 = vld [vmem:[%s1 + $0x6b8] sm:$0xff]
    %v244 = vld [vmem:[%s1 + $0x6c0] sm:$0xff]
    %v245 = vld [vmem:[%s1 + $0x6c8] sm:$0xff]
    %v246 = vld [vmem:[%s1 + $0x6d0] sm:$0xff]
    %v247 = vld [vmem:[%s1 + $0x6d8] sm:$0xff]
    %v248 = vld [vmem:[%s1 + $0x6e0] sm:$0xff]
    %v249 = vld [vmem:[%s1 + $0x6e8] sm:$0xff]
    %v250 = vld [vmem:[%s1 + $0x6f0] sm:$0xff]
    %v251 = vld [vmem:[%s1 + $0x6f8] sm:$0xff]
    %v252 = vld [vmem:[%s1 + $0x700] sm:$0xff]
    %v253 = vld [vmem:[%s1 + $0x708] sm:$0xff]
    %v254 = vld [vmem:[%s1 + $0x710] sm:$0xff]
    %v255 = vld [vmem:[%s1 + $0x718] sm:$0xff]
    %v256 = vld [vmem:[%s1 + $0x720] sm:$0xff]
    %v257 = vld [vmem:[%s1 + $0x728] sm:$0xff]
    %v258 = vld [vmem:[%s1 + $0x730] sm:$0xff]
    %v259 = vld [vmem:[%s1 + $0x738] sm:$0xff]
    %v260 = vld [vmem:[%s1 + $0x740] sm:$0xff]
    %v261 = vld [vmem:[%s1 + $0x748] sm:$0xff]
    %v262 = vld [vmem:[%s1 + $0x750] sm:$0xff]
    %v263 = vld [vmem:[%s1 + $0x758] sm:$0xff]
    %v264 = vld [vmem:[%s1 + $0x760] sm:$0xff]
    %v265 = vld [vmem:[%s1 + $0x768] sm:$0xff]
    %v266 = vld [vmem:[%s1 + $0x770] sm:$0xff]
    %v267 = vld [vmem:[%s1 + $0x778] sm:$0xff]
    %v268 = vld [vmem:[%s1 + $0x780] sm:$0xff]
    %v269 = vld [vmem:[%s1 + $0x788] sm:$0xff]
    %v270 = vld [vmem:[%s1 + $0x790] sm:$0xff]
    %v271 = vld [vmem:[%s1 + $0x798] sm:$0xff]
    %v272 = vld [vmem:[%s1 + $0x7a0] sm:$0xff]
    %v273 = vld [vmem:[%s1 + $0x7a8] sm:$0xff]
    %v274 = vld [vmem:[%s1 + $0x7b0] sm:$0xff]
    %v275 = vld [vmem:[%s1 + $0x7b8] sm:$0xff]
    %v276 = vld [vmem:[%s1 + $0x7c0] sm:$0xff]
    %v277 = vld [vmem:[%s1 + $0x7c8] sm:$0xff]
    %v278 = vld [vmem:[%s1 + $0x7d0] sm:$0xff]
    %v279 = vld [vmem:[%s1 + $0x7d8] sm:$0xff]
    %v280 = vld [vmem:[%s1 + $0x7e0] sm:$0xff]
    %v281 = vld [vmem:[%s1 + $0x7e8] sm:$0xff]
    %v282 = vld [vmem:[%s1 + $0x7f0] sm:$0xff]
    %v283 = vld [vmem:[%s1 + $0x7f8] sm:$0xff]
    %v284 = vld [vmem:[%s1 + $0x800] sm:$0xff]
    %v285 = vld [vmem:[%s1 + $0x808] sm:$0xff]
    %v286 = vld [vmem:[%s1 + $0x810] sm:$0xff]
    %v287 = vld [vmem:[%s1 + $0x818] sm:$0xff]
    %v288 = vld [vmem:[%s1 + $0x820] sm:$0xff]
    %v289 = vld [vmem:[%s1 + $0x828] sm:$0xff]
    %v290 = vld [vmem:[%s1 + $0x830] sm:$0xff]
    %v291 = vld [vmem:[%s1 + $0x838] sm:$0xff]
    %v292 = vld [vmem:[%s1 + $0x840] sm:$0xff]
    %v293 = vld [vmem:[%s1 + $0x848] sm:$0xff]
    %v294 = vld [vmem:[%s1 + $0x850] sm:$0xff]
    %v295 = vld [vmem:[%s1 + $0x858] sm:$0xff]
    %v296 = vld [vmem:[%s1 + $0x860] sm:$0xff]
    %v297 = vld [vmem:[%s1 + $0x868] sm:$0xff]
    %v298 = vld [vmem:[%s1 + $0x870] sm:$0xff]
    %v299 = vld [vmem:[%s1 + $0x878] sm:$0xff]
    %v300 = vld [vmem:[%s1 + $0x880] sm:$0xff]
    %v301 = vld [vmem:[%s1 + $0x888] sm:$0xff]
    %v302 = vld [vmem:[%s1 + $0x890] sm:$0xff]
    %v303 = vld [vmem:[%s1 + $0x898] sm:$0xff]
    %v304 = vld [vmem:[%s1 + $0x8a0] sm:$0xff]
    %v305 = vld [vmem:[%s1 + $0x8a8] sm:$0xff]
    %v306 = vld [vmem:[%s1 + $0x8b0] sm:$0xff]
    %v307 = vld [vmem:[%s1 + $0x8b8] sm:$0xff]
    %v308 = vld [vmem:[%s1 + $0x8c0] sm:$0xff]
    %v309 = vld [vmem:[%s1 + $0x8c8] sm:$0xff]
    %v310 = vld [vmem:[%s1 + $0x8d0] sm:$0xff]
    %v311 = vld [vmem:[%s1 + $0x8d8] sm:$0xff]
    %v312 = vld [vmem:[%s1 + $0x8e0] sm:$0xff]
    %v313 = vld [vmem:[%s1 + $0x8e8] sm:$0xff]
    %v314 = vld [vmem:[%s1 + $0x8f0] sm:$0xff]
    %v315 = vld [vmem:[%s1 + $0x8f8] sm:$0xff]
    %v316 = vld [vmem:[%s1 + $0x900] sm:$0xff]
    %v317 = vld [vmem:[%s1 + $0x908] sm:$0xff]
    %v318 = vld [vmem:[%s1 + $0x910] sm:$0xff]
    %v319 = vld [vmem:[%s1 + $0x918] sm:$0xff]
    %v320 = vld [vmem:[%s1 + $0x920] sm:$0xff]
    %v321 = vld [vmem:[%s1 + $0x928] sm:$0xff]
    %v322 = vld [vmem:[%s1 + $0x930] sm:$0xff]
    %v323 = vld [vmem:[%s1 + $0x938] sm:$0xff]
    %v324 = vld [vmem:[%s1 + $0x940] sm:$0xff]
    %v325 = vld [vmem:[%s1 + $0x948] sm:$0xff]
    %v326 = vld [vmem:[%s1 + $0x950] sm:$0xff]
    %v327 = vld [vmem:[%s1 + $0x958] sm:$0xff]
    %v328 = vld [vmem:[%s1 + $0x960] sm:$0xff]
    %v329 = vld [vmem:[%s1 + $0x968] sm:$0xff]
    %v330 = vld [vmem:[%s1 + $0x970] sm:$0xff]
    %v331 = vld [vmem:[%s1 + $0x978] sm:$0xff]
    %v332 = vld [vmem:[%s1 + $0x980] sm:$0xff]
    %v333 = vld [vmem:[%s1 + $0x988] sm:$0xff]
    %v334 = vld [vmem:[%s1 + $0x990] sm:$0xff]
    %v335 = vld [vmem:[%s1 + $0x998] sm:$0xff]
    %v336 = vld [vmem:[%s1 + $0x9a0] sm:$0xff]
    %v337 = vld [vmem:[%s1 + $0x9a8] sm:$0xff]
    %v338 = vld [vmem:[%s1 + $0x9b0] sm:$0xff]
    %v339 = vld [vmem:[%s1 + $0x9b8] sm:$0xff]
    %v340 = vld [vmem:[%s1 + $0x9c0] sm:$0xff]
    %v341 = vld [vmem:[%s1 + $0x9c8] sm:$0xff]
    %v342 = vld [vmem:[%s1 + $0x9d0] sm:$0xff]
    %v343 = vld [vmem:[%s1 + $0x9d8] sm:$0xff]
    %v344 = vld [vmem:[%s1 + $0x9e0] sm:$0xff]
    %v345 = vld [vmem:[%s1 + $0x9e8] sm:$0xff]
    %v346 = vld [vmem:[%s1 + $0x9f0] sm:$0xff]
    %v347 = vld [vmem:[%s1 + $0x9f8] sm:$0xff]
    %v348 = vld [vmem:[%s1 + $0xa00] sm:$0xff]
    %v349 = vld [vmem:[%s1 + $0xa08] sm:$0xff]
    %v350 = vld [vmem:[%s1 + $0xa10] sm:$0xff]
    %v351 = vld [vmem:[%s1 + $0xa18] sm:$0xff]
    %v352 = vld [vmem:[%s1 + $0xa20] sm:$0xff]
    %v353 = vld [vmem:[%s1 + $0xa28] sm:$0xff]
    %v354 = vld [vmem:[%s1 + $0xa30] sm:$0xff]
    %v355 = vld [vmem:[%s1 + $0xa38] sm:$0xff]
    %v356 = vld [vmem:[%s1 + $0xa40] sm:$0xff]
    %v357 = vld [vmem:[%s1 + $0xa48] sm:$0xff]
    %v358 = vld [vmem:[%s1 + $0xa50] sm:$0xff]
    %v359 = vld [vmem:[%s1 + $0xa58] sm:$0xff]
    %v360 = vld [vmem:[%s1 + $0xa60] sm:$0xff]
    %v361 = vld [vmem:[%s1 + $0xa68] sm:$0xff]
    %v362 = vld [vmem:[%s1 + $0xa70] sm:$0xff]
    %v363 = vld [vmem:[%s1 + $0xa78] sm:$0xff]
    %v364 = vld [vmem:[%s1 + $0xa80] sm:$0xff]
    %v365 = vld [vmem:[%s1 + $0xa88] sm:$0xff]
    %v366 = vld [vmem:[%s1 + $0xa90] sm:$0xff]
    %v367 = vld [vmem:[%s1 + $0xa98] sm:$0xff]
    %v368 = vld [vmem:[%s1 + $0xaa0] sm:$0xff]
    %v369 = vld [vmem:[%s1 + $0xaa8] sm:$0xff]
    %v370 = vld [vmem:[%s1 + $0xab0] sm:$0xff]
    %v371 = vld [vmem:[%s1 + $0xab8] sm:$0xff]
    %v372 = vld [vmem:[%s1 + $0xac0] sm:$0xff]
    %v373 = vld [vmem:[%s1 + $0xac8] sm:$0xff]
    %v374 = vld [vmem:[%s1 + $0xad0] sm:$0xff]
    %v375 = vld [vmem:[%s1 + $0xad8] sm:$0xff]
    %v376 = vld [vmem:[%s1 + $0xae0] sm:$0xff]
    %v377 = vld [vmem:[%s1 + $0xae8] sm:$0xff]
    %v378 = vld [vmem:[%s1 + $0xaf0] sm:$0xff]
    %v379 = vld [vmem:[%s1 + $0xaf8] sm:$0xff]
    %v380 = vld [vmem:[%s1 + $0xb00] sm:$0xff]
    %v381 = vld [vmem:[%s1 + $0xb08] sm:$0xff]
    %v382 = vld [vmem:[%s1 + $0xb10] sm:$0xff]
    %v383 = vld [vmem:[%s1 + $0xb18] sm:$0xff]
    %v384 = vld [vmem:[%s1 + $0xb20] sm:$0xff]
    %v385 = vld [vmem:[%s1 + $0xb28] sm:$0xff]
    %v386 = vld [vmem:[%s1 + $0xb30] sm:$0xff]
    %v387 = vld [vmem:[%s1 + $0xb38] sm:$0xff]
    %v388 = vld [vmem:[%s1 + $0xb40] sm:$0xff]
    %v389 = vld [vmem:[%s1 + $0xb48] sm:$0xff]
    %v390 = vld [vmem:[%s1 + $0xb50] sm:$0xff]
    %v391 = vld [vmem:[%s1 + $0xb58] sm:$0xff]
    %v392 = vld [vmem:[%s1 + $0xb60] sm:$0xff]
    %v393 = vld [vmem:[%s1 + $0xb68] sm:$0xff]
    %v394 = vld [vmem:[%s1 + $0xb70] sm:$0xff]
    %v395 = vld [vmem:[%s1 + $0xb78] sm:$0xff]
    %v396 = vld [vmem:[%s1 + $0xb80] sm:$0xff]
    %v397 = vld [vmem:[%s1 + $0xb88] sm:$0xff]
    %v398 = vld [vmem:[%s1 + $0xb90] sm:$0xff]
    %v399 = vld [vmem:[%s1 + $0xb98] sm:$0xff]
    %v400 = vld [vmem:[%s1 + $0xba0] sm:$0xff]
    %v401 = vld [vmem:[%s1 + $0xba8] sm:$0xff]
    %v402 = vld [vmem:[%s1 + $0xbb0] sm:$0xff]
    %v403 = vld [vmem:[%s1 + $0xbb8] sm:$0xff]
    %v404 = vld [vmem:[%s1 + $0xbc0] sm:$0xff]
    %v405 = vld [vmem:[%s1 + $0xbc8] sm:$0xff]
    %v406 = vld [vmem:[%s1 + $0xbd0] sm:$0xff]
    %v407 = vld [vmem:[%s1 + $0xbd8] sm:$0xff]
    %v408 = vld [vmem:[%s1 + $0xbe0] sm:$0xff]
    %v409 = vld [vmem:[%s1 + $0xbe8] sm:$0xff]
    %v410 = vld [vmem:[%s1 + $0xbf0] sm:$0xff]
    %v411 = vld [vmem:[%s1 + $0xbf8] sm:$0xff]
    %v412 = vld [vmem:[%s1 + $0xc00] sm:$0xff]
    %v413 = vld [vmem:[%s1 + $0xc08] sm:$0xff]
    %v414 = vld [vmem:[%s1 + $0xc10] sm:$0xff]
    %v415 = vld [vmem:[%s1 + $0xc18] sm:$0xff]
    %v416 = vld [vmem:[%s1 + $0xc20] sm:$0xff]
    %v417 = vld [vmem:[%s1 + $0xc28] sm:$0xff]
    %v418 = vld [vmem:[%s1 + $0xc30] sm:$0xff]
    %v419 = vld [vmem:[%s1 + $0xc38] sm:$0xff]
    %v420 = vld [vmem:[%s1 + $0xc40] sm:$0xff]
    %v421 = vld [vmem:[%s1 + $0xc48] sm:$0xff]
    %v422 = vld [vmem:[%s1 + $0xc50] sm:$0xff]
    %v423 = vld [vmem:[%s1 + $0xc58] sm:$0xff]
    %v424 = vld [vmem:[%s1 + $0xc60] sm:$0xff]
    %v425 = vld [vmem:[%s1 + $0xc68] sm:$0xff]
    %v426 = vld [vmem:[%s1 + $0xc70] sm:$0xff]
    %v427 = vld [vmem:[%s1 + $0xc78] sm:$0xff]
    %v428 = vld [vmem:[%s1 + $0xc80] sm:$0xff]
    %v429 = vld [vmem:[%s1 + $0xc88] sm:$0xff]
    %v430 = vld [vmem:[%s1 + $0xc90] sm:$0xff]
    %v431 = vld [vmem:[%s1 + $0xc98] sm:$0xff]
    %v432 = vld [vmem:[%s1 + $0xca0] sm:$0xff]
    %v433 = vld [vmem:[%s1 + $0xca8] sm:$0xff]
    %v434 = vld [vmem:[%s1 + $0xcb0] sm:$0xff]
    %v435 = vld [vmem:[%s1 + $0xcb8] sm:$0xff]
    %v436 = vld [vmem:[%s1 + $0xcc0] sm:$0xff]
    %v437 = vld [vmem:[%s1 + $0xcc8] sm:$0xff]
    %v438 = vld [vmem:[%s1 + $0xcd0] sm:$0xff]
    %v439 = vld [vmem:[%s1 + $0xcd8] sm:$0xff]
    %v440 = vld [vmem:[%s1 + $0xce0] sm:$0xff]
    %v441 = vld [vmem:[%s1 + $0xce8] sm:$0xff]
    %v442 = vld [vmem:[%s1 + $0xcf0] sm:$0xff]
    %v443 = vld [vmem:[%s1 + $0xcf8] sm:$0xff]
    %v444 = vld [vmem:[%s1 + $0xd00] sm:$0xff]
    %v445 = vld [vmem:[%s1 + $0xd08] sm:$0xff]
    %v446 = vld [vmem:[%s1 + $0xd10] sm:$0xff]
    %v447 = vld [vmem:[%s1 + $0xd18] sm:$0xff]
    %v448 = vld [vmem:[%s1 + $0xd20] sm:$0xff]
    %v449 = vld [vmem:[%s1 + $0xd28] sm:$0xff]
    %v450 = vld [vmem:[%s1 + $0xd30] sm:$0xff]
    %v451 = vld [vmem:[%s1 + $0xd38] sm:$0xff]
    %v452 = vld [vmem:[%s1 + $0xd40] sm:$0xff]
    %v453 = vld [vmem:[%s1 + $0xd48] sm:$0xff]
    %v454 = vld [vmem:[%s1 + $0xd50] sm:$0xff]
    %v455 = vld [vmem:[%s1 + $0xd58] sm:$0xff]
    %v456 = vld [vmem:[%s1 + $0xd60] sm:$0xff]
    %v457 = vld [vmem:[%s1 + $0xd68] sm:$0xff]
    %v458 = vld [vmem:[%s1 + $0xd70] sm:$0xff]
    %v459 = vld [vmem:[%s1 + $0xd78] sm:$0xff]
    %v460 = vld [vmem:[%s1 + $0xd80] sm:$0xff]
    %v461 = vld [vmem:[%s1 + $0xd88] sm:$0xff]
    %v462 = vld [vmem:[%s1 + $0xd90] sm:$0xff]
    %v463 = vld [vmem:[%s1 + $0xd98] sm:$0xff]
    %v464 = vld [vmem:[%s1 + $0xda0] sm:$0xff]
    %v465 = vld [vmem:[%s1 + $0xda8] sm:$0xff]
    %v466 = vld [vmem:[%s1 + $0xdb0] sm:$0xff]
    %v467 = vld [vmem:[%s1 + $0xdb8] sm:$0xff]
    %v468 = vld [vmem:[%s1 + $0xdc0] sm:$0xff]
    %v469 = vld [vmem:[%s1 + $0xdc8] sm:$0xff]
    %v470 = vld [vmem:[%s1 + $0xdd0] sm:$0xff]
    %v471 = vld [vmem:[%s1 + $0xdd8] sm:$0xff]
    %v472 = vld [vmem:[%s1 + $0xde0] sm:$0xff]
    %v473 = vld [vmem:[%s1 + $0xde8] sm:$0xff]
    %v474 = vld [vmem:[%s1 + $0xdf0] sm:$0xff]
    %v475 = vld [vmem:[%s1 + $0xdf8] sm:$0xff]
    %v476 = vld [vmem:[%s1 + $0xe00] sm:$0xff]
    %v477 = vld [vmem:[%s1 + $0xe08] sm:$0xff]
    %v478 = vld [vmem:[%s1 + $0xe10] sm:$0xff]
    %v479 = vld [vmem:[%s1 + $0xe18] sm:$0xff]
    %v480 = vld [vmem:[%s1 + $0xe20] sm:$0xff]
    %v481 = vld [vmem:[%s1 + $0xe28] sm:$0xff]
    %v482 = vld [vmem:[%s1 + $0xe30] sm:$0xff]
    %v483 = vld [vmem:[%s1 + $0xe38] sm:$0xff]
    %v484 = vld [vmem:[%s1 + $0xe40] sm:$0xff]
    %v485 = vld [vmem:[%s1 + $0xe48] sm:$0xff]
    %v486 = vld [vmem:[%s1 + $0xe50] sm:$0xff]
    %v487 = vld [vmem:[%s1 + $0xe58] sm:$0xff]
    %v488 = vld [vmem:[%s1 + $0xe60] sm:$0xff]
    %v489 = vld [vmem:[%s1 + $0xe68] sm:$0xff]
    %v490 = vld [vmem:[%s1 + $0xe70] sm:$0xff]
    %v491 = vld [vmem:[%s1 + $0xe78] sm:$0xff]
    %v492 = vld [vmem:[%s1 + $0xe80] sm:$0xff]
    %v493 = vld [vmem:[%s1 + $0xe88] sm:$0xff]
    %v494 = vld [vmem:[%s1 + $0xe90] sm:$0xff]
    %v495 = vld [vmem:[%s1 + $0xe98] sm:$0xff]
    %v496 = vld [vmem:[%s1 + $0xea0] sm:$0xff]
    %v497 = vld [vmem:[%s1 + $0xea8] sm:$0xff]
    %v498 = vld [vmem:[%s1 + $0xeb0] sm:$0xff]
    %v499 = vld [vmem:[%s1 + $0xeb8] sm:$0xff]
    %v500 = vld [vmem:[%s1 + $0xec0] sm:$0xff]
    %v501 = vld [vmem:[%s1 + $0xec8] sm:$0xff]
    %v502 = vld [vmem:[%s1 + $0xed0] sm:$0xff]
    %v503 = vld [vmem:[%s1 + $0xed8] sm:$0xff]
    %v504 = vld [vmem:[%s1 + $0xee0] sm:$0xff]
    %v505 = vld [vmem:[%s1 + $0xee8] sm:$0xff]
    %v506 = vld [vmem:[%s1 + $0xef0] sm:$0xff]
    %v507 = vld [vmem:[%s1 + $0xef8] sm:$0xff]
    %v508 = vld [vmem:[%s1 + $0xf00] sm:$0xff]
    %v509 = vld [vmem:[%s1 + $0xf08] sm:$0xff]
    %v510 = vld [vmem:[%s1 + $0xf10] sm:$0xff]
    %v511 = vld [vmem:[%s1 + $0xf18] sm:$0xff]
    %v512 = vld [vmem:[%s1 + $0xf20] sm:$0xff]
    %v513 = vld [vmem:[%s1 + $0xf28] sm:$0xff]
    %v514 = vld [vmem:[%s1 + $0xf30] sm:$0xff]
    %v515 = vld [vmem:[%s1 + $0xf38] sm:$0xff]
    %v516 = vld [vmem:[%s1 + $0xf40] sm:$0xff]
    %v517 = vld [vmem:[%s1 + $0xf48] sm:$0xff]
    %v518 = vld [vmem:[%s1 + $0xf50] sm:$0xff]
    %v519 = vld [vmem:[%s1 + $0xf58] sm:$0xff]
    %v520 = vld [vmem:[%s1 + $0xf60] sm:$0xff]
    %v521 = vld [vmem:[%s1 + $0xf68] sm:$0xff]
    %v522 = vld [vmem:[%s1 + $0xf70] sm:$0xff]
    %v523 = vld [vmem:[%s1 + $0xf78] sm:$0xff]
    %v524 = vld [vmem:[%s1 + $0xf80] sm:$0xff]
    %v525 = vld [vmem:[%s1 + $0xf88] sm:$0xff]
    %v526 = vld [vmem:[%s1 + $0xf90] sm:$0xff]
    %v527 = vld [vmem:[%s1 + $0xf98] sm:$0xff]
    %v528 = vld [vmem:[%s1 + $0xfa0] sm:$0xff]
    %v529 = vld [vmem:[%s1 + $0xfa8] sm:$0xff]
    %v530 = vld [vmem:[%s1 + $0xfb0] sm:$0xff]
    %v531 = vld [vmem:[%s1 + $0xfb8] sm:$0xff]
    %v532 = vld [vmem:[%s1 + $0xfc0] sm:$0xff]
    %v533 = vld [vmem:[%s1 + $0xfc8] sm:$0xff]
    %v534 = vld [vmem:[%s1 + $0xfd0] sm:$0xff]
    %v535 = vld [vmem:[%s1 + $0xfd8] sm:$0xff]
    %v536 = vld [vmem:[%s1 + $0xfe0] sm:$0xff]
    %v537 = vld [vmem:[%s1 + $0xfe8] sm:$0xff]
    %v538 = vld [vmem:[%s1 + $0xff0] sm:$0xff]
    %v539 = vld [vmem:[%s1 + $0xff8] sm:$0xff]
    %v540 = vld [vmem:[%s1 + $0x1000] sm:$0xff]
    %v541 = vld [vmem:[%s1 + $0x1008] sm:$0xff]
    %v542 = vld [vmem:[%s1 + $0x1010] sm:$0xff]
    %v543 = vld [vmem:[%s1 + $0x1018] sm:$0xff]
    %v544 = vld [vmem:[%s1 + $0x1020] sm:$0xff]
    %v545 = vld [vmem:[%s1 + $0x1028] sm:$0xff]
    %v546 = vld [vmem:[%s1 + $0x1030] sm:$0xff]
    %v547 = vld [vmem:[%s1 + $0x1038] sm:$0xff]
    %v548 = vld [vmem:[%s1 + $0x1040] sm:$0xff]
    %v549 = vld [vmem:[%s1 + $0x1048] sm:$0xff]
    %v550 = vld [vmem:[%s1 + $0x1050] sm:$0xff]
    %v551 = vld [vmem:[%s1 + $0x1058] sm:$0xff]
    %v552 = vld [vmem:[%s1 + $0x1060] sm:$0xff]
    %v553 = vld [vmem:[%s1 + $0x1068] sm:$0xff]
    %v554 = vld [vmem:[%s1 + $0x1070] sm:$0xff]
    %v555 = vld [vmem:[%s1 + $0x1078] sm:$0xff]
    %v556 = vld [vmem:[%s1 + $0x1080] sm:$0xff]
    %v557 = vld [vmem:[%s1 + $0x1088] sm:$0xff]
    %v558 = vld [vmem:[%s1 + $0x1090] sm:$0xff]
    %v559 = vld [vmem:[%s1 + $0x1098] sm:$0xff]
    %v560 = vld [vmem:[%s1 + $0x10a0] sm:$0xff]
    %v561 = vld [vmem:[%s1 + $0x10a8] sm:$0xff]
    %v562 = vld [vmem:[%s1 + $0x10b0] sm:$0xff]
    %v563 = vld [vmem:[%s1 + $0x10b8] sm:$0xff]
    %v564 = vld [vmem:[%s1 + $0x10c0] sm:$0xff]
    %v565 = vld [vmem:[%s1 + $0x10c8] sm:$0xff]
    %v566 = vld [vmem:[%s1 + $0x10d0] sm:$0xff]
    %v567 = vld [vmem:[%s1 + $0x10d8] sm:$0xff]
    %v568 = vld [vmem:[%s1 + $0x10e0] sm:$0xff]
    %v569 = vld [vmem:[%s1 + $0x10e8] sm:$0xff]
    %v570 = vld [vmem:[%s1 + $0x10f0] sm:$0xff]
    %v571 = vld [vmem:[%s1 + $0x10f8] sm:$0xff]
    %v572 = vld [vmem:[%s1 + $0x1100] sm:$0xff]
    %v573 = vld [vmem:[%s1 + $0x1108] sm:$0xff]
    %v574 = vld [vmem:[%s1 + $0x1110] sm:$0xff]
    %v575 = vld [vmem:[%s1 + $0x1118] sm:$0xff]
    %v576 = vld [vmem:[%s1 + $0x1120] sm:$0xff]
    %v577 = vld [vmem:[%s1 + $0x1128] sm:$0xff]
    %v578 = vld [vmem:[%s1 + $0x1130] sm:$0xff]
    %v579 = vld [vmem:[%s1 + $0x1138] sm:$0xff]
    %v580 = vld [vmem:[%s1 + $0x1140] sm:$0xff]
    %v581 = vld [vmem:[%s1 + $0x1148] sm:$0xff]
    %v582 = vld [vmem:[%s1 + $0x1150] sm:$0xff]
    %v583 = vld [vmem:[%s1 + $0x1158] sm:$0xff]
    %v584 = vld [vmem:[%s1 + $0x1160] sm:$0xff]
    %v585 = vld [vmem:[%s1 + $0x1168] sm:$0xff]
    %v586 = vld [vmem:[%s1 + $0x1170] sm:$0xff]
    %v587 = vld [vmem:[%s1 + $0x1178] sm:$0xff]
    %v588 = vld [vmem:[%s1 + $0x1180] sm:$0xff]
    %v589 = vld [vmem:[%s1 + $0x1188] sm:$0xff]
    %v590 = vld [vmem:[%s1 + $0x1190] sm:$0xff]
    %v591 = vld [vmem:[%s1 + $0x1198] sm:$0xff]
    %v592 = vld [vmem:[%s1 + $0x11a0] sm:$0xff]
    %v593 = vld [vmem:[%s1 + $0x11a8] sm:$0xff]
    %v594 = vld [vmem:[%s1 + $0x11b0] sm:$0xff]
    %v595 = vld [vmem:[%s1 + $0x11b8] sm:$0xff]
    %v596 = vld [vmem:[%s1 + $0x11c0] sm:$0xff]
    %v597 = vld [vmem:[%s1 + $0x11c8] sm:$0xff]
    %v598 = vld [vmem:[%s1 + $0x11d0] sm:$0xff]
    %v599 = vld [vmem:[%s1 + $0x11d8] sm:$0xff]
    %v600 = vld [vmem:[%s1 + $0x11e0] sm:$0xff]
    %v601 = vld [vmem:[%s1 + $0x11e8] sm:$0xff]
    %v602 = vld [vmem:[%s1 + $0x11f0] sm:$0xff]
    %v603 = vld [vmem:[%s1 + $0x11f8] sm:$0xff]
    %v604 = vld [vmem:[%s1 + $0x1200] sm:$0xff]
    %v605 = vld [vmem:[%s1 + $0x1208] sm:$0xff]
    %v606 = vld [vmem:[%s1 + $0x1210] sm:$0xff]
    %v607 = vld [vmem:[%s1 + $0x1218] sm:$0xff]
    %v608 = vld [vmem:[%s1 + $0x1220] sm:$0xff]
    %v609 = vld [vmem:[%s1 + $0x1228] sm:$0xff]
    %v610 = vld [vmem:[%s1 + $0x1230] sm:$0xff]
    %v611 = vld [vmem:[%s1 + $0x1238] sm:$0xff]
    %v612 = vld [vmem:[%s1 + $0x1240] sm:$0xff]
    %v613 = vld [vmem:[%s1 + $0x1248] sm:$0xff]
    %v614 = vld [vmem:[%s1 + $0x1250] sm:$0xff]
    %v615 = vld [vmem:[%s1 + $0x1258] sm:$0xff]
    %v616 = vld [vmem:[%s1 + $0x1260] sm:$0xff]
    %v617 = vld [vmem:[%s1 + $0x1268] sm:$0xff]
    %v618 = vld [vmem:[%s1 + $0x1270] sm:$0xff]
    %v619 = vld [vmem:[%s1 + $0x1278] sm:$0xff]
    %v620 = vld [vmem:[%s1 + $0x1280] sm:$0xff]
    %v621 = vld [vmem:[%s1 + $0x1288] sm:$0xff]
    %v622 = vld [vmem:[%s1 + $0x1290] sm:$0xff]
    %v623 = vld [vmem:[%s1 + $0x1298] sm:$0xff]
    %v624 = vld [vmem:[%s1 + $0x12a0] sm:$0xff]
    %v625 = vld [vmem:[%s1 + $0x12a8] sm:$0xff]
    %v626 = vld [vmem:[%s1 + $0x12b0] sm:$0xff]
    %v627 = vld [vmem:[%s1 + $0x12b8] sm:$0xff]
    %v628 = vld [vmem:[%s1 + $0x12c0] sm:$0xff]
    %v629 = vld [vmem:[%s1 + $0x12c8] sm:$0xff]
    %v630 = vld [vmem:[%s1 + $0x12d0] sm:$0xff]
    %v631 = vld [vmem:[%s1 + $0x12d8] sm:$0xff]
    %v632 = vld [vmem:[%s1 + $0x12e0] sm:$0xff]
    %v633 = vld [vmem:[%s1 + $0x12e8] sm:$0xff]
    %v634 = vld [vmem:[%s1 + $0x12f0] sm:$0xff]
    %v635 = vld [vmem:[%s1 + $0x12f8] sm:$0xff]
    %v636 = vld [vmem:[%s1 + $0x1300] sm:$0xff]
    %v637 = vld [vmem:[%s1 + $0x1308] sm:$0xff]
    %v638 = vld [vmem:[%s1 + $0x1310] sm:$0xff]
    %v639 = vld [vmem:[%s1 + $0x1318] sm:$0xff]
    %v640 = vld [vmem:[%s1 + $0x1320] sm:$0xff]
    %v641 = vld [vmem:[%s1 + $0x1328] sm:$0xff]
    %v642 = vld [vmem:[%s1 + $0x1330] sm:$0xff]
    %v643 = vld [vmem:[%s1 + $0x1338] sm:$0xff]
    %v644 = vld [vmem:[%s1 + $0x1340] sm:$0xff]
    %v645 = vld [vmem:[%s1 + $0x1348] sm:$0xff]
    %v646 = vld [vmem:[%s1 + $0x1350] sm:$0xff]
    %v647 = vld [vmem:[%s1 + $0x1358] sm:$0xff]
    %v648 = vld [vmem:[%s1 + $0x1360] sm:$0xff]
    %v649 = vld [vmem:[%s1 + $0x1368] sm:$0xff]
    %v650 = vld [vmem:[%s1 + $0x1370] sm:$0xff]
    %v651 = vld [vmem:[%s1 + $0x1378] sm:$0xff]
    %v652 = vld [vmem:[%s1 + $0x1380] sm:$0xff]
    %v653 = vld [vmem:[%s1 + $0x1388] sm:$0xff]
    %v654 = vld [vmem:[%s1 + $0x1390] sm:$0xff]
    %v655 = vld [vmem:[%s1 + $0x1398] sm:$0xff]
    %v656 = vld [vmem:[%s1 + $0x13a0] sm:$0xff]
    %v657 = vld [vmem:[%s1 + $0x13a8] sm:$0xff]
    %v658 = vld [vmem:[%s1 + $0x13b0] sm:$0xff]
    %v659 = vld [vmem:[%s1 + $0x13b8] sm:$0xff]
    %v660 = vld [vmem:[%s1 + $0x13c0] sm:$0xff]
    %v661 = vld [vmem:[%s1 + $0x13c8] sm:$0xff]
    %v662 = vld [vmem:[%s1 + $0x13d0] sm:$0xff]
    %v663 = vld [vmem:[%s1 + $0x13d8] sm:$0xff]
    %v664 = vld [vmem:[%s1 + $0x13e0] sm:$0xff]
    %v665 = vld [vmem:[%s1 + $0x13e8] sm:$0xff]
    %v666 = vld [vmem:[%s1 + $0x13f0] sm:$0xff]
    %v667 = vld [vmem:[%s1 + $0x13f8] sm:$0xff]
    %v668 = vld [vmem:[%s1 + $0x1400] sm:$0xff]
    %v669 = vld [vmem:[%s1 + $0x1408] sm:$0xff]
    %v670 = vld [vmem:[%s1 + $0x1410] sm:$0xff]
    %v671 = vld [vmem:[%s1 + $0x1418] sm:$0xff]
    %v672 = vld [vmem:[%s1 + $0x1420] sm:$0xff]
    %v673 = vld [vmem:[%s1 + $0x1428] sm:$0xff]
    %v674 = vld [vmem:[%s1 + $0x1430] sm:$0xff]
    %v675 = vld [vmem:[%s1 + $0x1438] sm:$0xff]
    %v676 = vld [vmem:[%s1 + $0x1440] sm:$0xff]
    %v677 = vld [vmem:[%s1 + $0x1448] sm:$0xff]
    %v678 = vld [vmem:[%s1 + $0x1450] sm:$0xff]
    %v679 = vld [vmem:[%s1 + $0x1458] sm:$0xff]
    %v680 = vld [vmem:[%s1 + $0x1460] sm:$0xff]
    %v681 = vld [vmem:[%s1 + $0x1468] sm:$0xff]
    %v682 = vld [vmem:[%s1 + $0x1470] sm:$0xff]
    %v683 = vld [vmem:[%s1 + $0x1478] sm:$0xff]
    %v684 = vld [vmem:[%s1 + $0x1480] sm:$0xff]
    %v685 = vld [vmem:[%s1 + $0x1488] sm:$0xff]
    %v686 = vld [vmem:[%s1 + $0x1490] sm:$0xff]
    %v687 = vld [vmem:[%s1 + $0x1498] sm:$0xff]
    %v688 = vld [vmem:[%s1 + $0x14a0] sm:$0xff]
    %v689 = vld [vmem:[%s1 + $0x14a8] sm:$0xff]
    %v690 = vld [vmem:[%s1 + $0x14b0] sm:$0xff]
    %v691 = vld [vmem:[%s1 + $0x14b8] sm:$0xff]
    %v692 = vld [vmem:[%s1 + $0x14c0] sm:$0xff]
    %v693 = vld [vmem:[%s1 + $0x14c8] sm:$0xff]
    %v694 = vld [vmem:[%s1 + $0x14d0] sm:$0xff]
    %v695 = vld [vmem:[%s1 + $0x14d8] sm:$0xff]
    %v696 = vld [vmem:[%s1 + $0x14e0] sm:$0xff]
    %v697 = vld [vmem:[%s1 + $0x14e8] sm:$0xff]
    %v698 = vld [vmem:[%s1 + $0x14f0] sm:$0xff]
    %v699 = vld [vmem:[%s1 + $0x14f8] sm:$0xff]
    %v700 = vld [vmem:[%s1 + $0x1500] sm:$0xff]
    %v701 = vld [vmem:[%s1 + $0x1508] sm:$0xff]
    %v702 = vld [vmem:[%s1 + $0x1510] sm:$0xff]
    %v703 = vld [vmem:[%s1 + $0x1518] sm:$0xff]
    %v704 = vld [vmem:[%s1 + $0x1520] sm:$0xff]
    %v705 = vld [vmem:[%s1 + $0x1528] sm:$0xff]
    %v706 = vld [vmem:[%s1 + $0x1530] sm:$0xff]
    %v707 = vld [vmem:[%s1 + $0x1538] sm:$0xff]
    %v708 = vld [vmem:[%s1 + $0x1540] sm:$0xff]
    %v709 = vld [vmem:[%s1 + $0x1548] sm:$0xff]
    %v710 = vld [vmem:[%s1 + $0x1550] sm:$0xff]
    %v711 = vld [vmem:[%s1 + $0x1558] sm:$0xff]
    %v712 = vld [vmem:[%s1 + $0x1560] sm:$0xff]
    %v713 = vld [vmem:[%s1 + $0x1568] sm:$0xff]
    %v714 = vld [vmem:[%s1 + $0x1570] sm:$0xff]
    %v715 = vld [vmem:[%s1 + $0x1578] sm:$0xff]
    %v716 = vld [vmem:[%s1 + $0x1580] sm:$0xff]
    %v717 = vld [vmem:[%s1 + $0x1588] sm:$0xff]
    %v718 = vld [vmem:[%s1 + $0x1590] sm:$0xff]
    %v719 = vld [vmem:[%s1 + $0x1598] sm:$0xff]
    %v720 = vld [vmem:[%s1 + $0x15a0] sm:$0xff]
    %v721 = vld [vmem:[%s1 + $0x15a8] sm:$0xff]
    %v722 = vld [vmem:[%s1 + $0x15b0] sm:$0xff]
    %v723 = vld [vmem:[%s1 + $0x15b8] sm:$0xff]
    %v724 = vld [vmem:[%s1 + $0x15c0] sm:$0xff]
    %v725 = vld [vmem:[%s1 + $0x15c8] sm:$0xff]
    %v726 = vld [vmem:[%s1 + $0x15d0] sm:$0xff]
    %v727 = vld [vmem:[%s1 + $0x15d8] sm:$0xff]
    %v728 = vld [vmem:[%s1 + $0x15e0] sm:$0xff]
    %v729 = vld [vmem:[%s1 + $0x15e8] sm:$0xff]
    %v730 = vld [vmem:[%s1 + $0x15f0] sm:$0xff]
    %v731 = vld [vmem:[%s1 + $0x15f8] sm:$0xff]
    %v732 = vld [vmem:[%s1 + $0x1600] sm:$0xff]
    %v733 = vld [vmem:[%s1 + $0x1608] sm:$0xff]
    %v734 = vld [vmem:[%s1 + $0x1610] sm:$0xff]
    %v735 = vld [vmem:[%s1 + $0x1618] sm:$0xff]
    %v736 = vld [vmem:[%s1 + $0x1620] sm:$0xff]
    %v737 = vld [vmem:[%s1 + $0x1628] sm:$0xff]
    %v738 = vld [vmem:[%s1 + $0x1630] sm:$0xff]
    %v739 = vld [vmem:[%s1 + $0x1638] sm:$0xff]
    %v740 = vld [vmem:[%s1 + $0x1640] sm:$0xff]
    %v741 = vld [vmem:[%s1 + $0x1648] sm:$0xff]
    %v742 = vld [vmem:[%s1 + $0x1650] sm:$0xff]
    %v743 = vld [vmem:[%s1 + $0x1658] sm:$0xff]
    %v744 = vld [vmem:[%s1 + $0x1660] sm:$0xff]
    %v745 = vld [vmem:[%s1 + $0x1668] sm:$0xff]
    %v746 = vld [vmem:[%s1 + $0x1670] sm:$0xff]
    %v747 = vld [vmem:[%s1 + $0x1678] sm:$0xff]
    %v748 = vld [vmem:[%s1 + $0x1680] sm:$0xff]
    %v749 = vld [vmem:[%s1 + $0x1688] sm:$0xff]
    %v750 = vld [vmem:[%s1 + $0x1690] sm:$0xff]
    %v751 = vld [vmem:[%s1 + $0x1698] sm:$0xff]
    %v752 = vld [vmem:[%s1 + $0x16a0] sm:$0xff]
    %v753 = vld [vmem:[%s1 + $0x16a8] sm:$0xff]
    %v754 = vld [vmem:[%s1 + $0x16b0] sm:$0xff]
    %v755 = vld [vmem:[%s1 + $0x16b8] sm:$0xff]
    %v756 = vld [vmem:[%s1 + $0x16c0] sm:$0xff]
    %v757 = vld [vmem:[%s1 + $0x16c8] sm:$0xff]
    %v758 = vld [vmem:[%s1 + $0x16d0] sm:$0xff]
    %v759 = vld [vmem:[%s1 + $0x16d8] sm:$0xff]
    %v760 = vld [vmem:[%s1 + $0x16e0] sm:$0xff]
    %v761 = vld [vmem:[%s1 + $0x16e8] sm:$0xff]
    %v762 = vld [vmem:[%s1 + $0x16f0] sm:$0xff]
    %v763 = vld [vmem:[%s1 + $0x16f8] sm:$0xff]
    %v764 = vld [vmem:[%s1 + $0x1700] sm:$0xff]
    %v765 = vld [vmem:[%s1 + $0x1708] sm:$0xff]
    %v766 = vld [vmem:[%s1 + $0x1710] sm:$0xff]
    %v767 = vld [vmem:[%s1 + $0x1718] sm:$0xff]
    %v768 = vld [vmem:[%s1 + $0x1720] sm:$0xff]
    %v769 = vld [vmem:[%s1 + $0x1728] sm:$0xff]
    %v770 = vld [vmem:[%s1 + $0x1730] sm:$0xff]
    %v771 = vld [vmem:[%s1 + $0x1738] sm:$0xff]
    %v772 = vld [vmem:[%s1 + $0x1740] sm:$0xff]
    %v773 = vld [vmem:[%s1 + $0x1748] sm:$0xff]
    %v774 = vld [vmem:[%s1 + $0x1750] sm:$0xff]
    %v775 = vld [vmem:[%s1 + $0x1758] sm:$0xff]
    %v776 = vld [vmem:[%s1 + $0x1760] sm:$0xff]
    %v777 = vld [vmem:[%s1 + $0x1768] sm:$0xff]
    %v778 = vld [vmem:[%s1 + $0x1770] sm:$0xff]
    %v779 = vld [vmem:[%s1 + $0x1778] sm:$0xff]
    %v780 = vld [vmem:[%s1 + $0x1780] sm:$0xff]
    %v781 = vld [vmem:[%s1 + $0x1788] sm:$0xff]
    %v782 = vld [vmem:[%s1 + $0x1790] sm:$0xff]
    %v783 = vld [vmem:[%s1 + $0x1798] sm:$0xff]
    %v784 = vld [vmem:[%s1 + $0x17a0] sm:$0xff]
    %v785 = vld [vmem:[%s1 + $0x17a8] sm:$0xff]
    %v786 = vld [vmem:[%s1 + $0x17b0] sm:$0xff]
    %v787 = vld [vmem:[%s1 + $0x17b8] sm:$0xff]
    %v788 = vld [vmem:[%s1 + $0x17c0] sm:$0xff]
    %v789 = vld [vmem:[%s1 + $0x17c8] sm:$0xff]
    %v790 = vld [vmem:[%s1 + $0x17d0] sm:$0xff]
    %v791 = vld [vmem:[%s1 + $0x17d8] sm:$0xff]
    %v792 = vld [vmem:[%s1 + $0x17e0] sm:$0xff]
    %v793 = vld [vmem:[%s1 + $0x17e8] sm:$0xff]
    %v794 = vld [vmem:[%s1 + $0x17f0] sm:$0xff]
    %v795 = vld [vmem:[%s1 + $0x17f8] sm:$0xff]
    %v796 = vld [vmem:[%s1 + $0x1800] sm:$0xff]
    %v797 = vld [vmem:[%s1 + $0x1808] sm:$0xff]
    %v798 = vld [vmem:[%s1 + $0x1810] sm:$0xff]
    %v799 = vld [vmem:[%s1 + $0x1818] sm:$0xff]
    %v800 = vld [vmem:[%s1 + $0x1820] sm:$0xff]
    %v801 = vld [vmem:[%s1 + $0x1828] sm:$0xff]
    %v802 = vld [vmem:[%s1 + $0x1830] sm:$0xff]
    %v803 = vld [vmem:[%s1 + $0x1838] sm:$0xff]
    %v804 = vld [vmem:[%s1 + $0x1840] sm:$0xff]
    %v805 = vld [vmem:[%s1 + $0x1848] sm:$0xff]
    %v806 = vld [vmem:[%s1 + $0x1850] sm:$0xff]
    %v807 = vld [vmem:[%s1 + $0x1858] sm:$0xff]
    %v808 = vld [vmem:[%s1 + $0x1860] sm:$0xff]
    %v809 = vld [vmem:[%s1 + $0x1868] sm:$0xff]
    %v810 = vld [vmem:[%s1 + $0x1870] sm:$0xff]
    %v811 = vld [vmem:[%s1 + $0x1878] sm:$0xff]
    %v812 = vld [vmem:[%s1 + $0x1880] sm:$0xff]
    %v813 = vld [vmem:[%s1 + $0x1888] sm:$0xff]
    %v814 = vld [vmem:[%s1 + $0x1890] sm:$0xff]
    %v815 = vld [vmem:[%s1 + $0x1898] sm:$0xff]
    %v816 = vld [vmem:[%s1 + $0x18a0] sm:$0xff]
    %v817 = vld [vmem:[%s1 + $0x18a8] sm:$0xff]
    %v818 = vld [vmem:[%s1 + $0x18b0] sm:$0xff]
    %v819 = vld [vmem:[%s1 + $0x18b8] sm:$0xff]
    %v820 = vld [vmem:[%s1 + $0x18c0] sm:$0xff]
    %v821 = vld [vmem:[%s1 + $0x18c8] sm:$0xff]
    %v822 = vld [vmem:[%s1 + $0x18d0] sm:$0xff]
    %v823 = vld [vmem:[%s1 + $0x18d8] sm:$0xff]
    %v824 = vld [vmem:[%s1 + $0x18e0] sm:$0xff]
    %v825 = vld [vmem:[%s1 + $0x18e8] sm:$0xff]
    %v826 = vld [vmem:[%s1 + $0x18f0] sm:$0xff]
    %v827 = vld [vmem:[%s1 + $0x18f8] sm:$0xff]
    %v828 = vld [vmem:[%s1 + $0x1900] sm:$0xff]
    %v829 = vld [vmem:[%s1 + $0x1908] sm:$0xff]
    %v830 = vld [vmem:[%s1 + $0x1910] sm:$0xff]
    %v831 = vld [vmem:[%s1 + $0x1918] sm:$0xff]
    %v832 = vld [vmem:[%s1 + $0x1920] sm:$0xff]
    %v833 = vld [vmem:[%s1 + $0x1928] sm:$0xff]
    %v834 = vld [vmem:[%s1 + $0x1930] sm:$0xff]
    %v835 = vld [vmem:[%s1 + $0x1938] sm:$0xff]
    %v836 = vld [vmem:[%s1 + $0x1940] sm:$0xff]
    %v837 = vld [vmem:[%s1 + $0x1948] sm:$0xff]
    %v838 = vld [vmem:[%s1 + $0x1950] sm:$0xff]
    %v839 = vld [vmem:[%s1 + $0x1958] sm:$0xff]
    %v840 = vld [vmem:[%s1 + $0x1960] sm:$0xff]
    %v841 = vld [vmem:[%s1 + $0x1968] sm:$0xff]
    %v842 = vld [vmem:[%s1 + $0x1970] sm:$0xff]
    %v843 = vld [vmem:[%s1 + $0x1978] sm:$0xff]
    %v844 = vld [vmem:[%s1 + $0x1980] sm:$0xff]
    %v845 = vld [vmem:[%s1 + $0x1988] sm:$0xff]
    %v846 = vld [vmem:[%s1 + $0x1990] sm:$0xff]
    %v847 = vld [vmem:[%s1 + $0x1998] sm:$0xff]
    %v848 = vld [vmem:[%s1 + $0x19a0] sm:$0xff]
    %v849 = vld [vmem:[%s1 + $0x19a8] sm:$0xff]
    %v850 = vld [vmem:[%s1 + $0x19b0] sm:$0xff]
    %v851 = vld [vmem:[%s1 + $0x19b8] sm:$0xff]
    %v852 = vld [vmem:[%s1 + $0x19c0] sm:$0xff]
    %v853 = vld [vmem:[%s1 + $0x19c8] sm:$0xff]
    %v854 = vld [vmem:[%s1 + $0x19d0] sm:$0xff]
    %v855 = vld [vmem:[%s1 + $0x19d8] sm:$0xff]
    %v856 = vld [vmem:[%s1 + $0x19e0] sm:$0xff]
    %v857 = vld [vmem:[%s1 + $0x19e8] sm:$0xff]
    %v858 = vld [vmem:[%s1 + $0x19f0] sm:$0xff]
    %v859 = vld [vmem:[%s1 + $0x19f8] sm:$0xff]
    %v860 = vld [vmem:[%s1 + $0x1a00] sm:$0xff]
    %v861 = vld [vmem:[%s1 + $0x1a08] sm:$0xff]
    %v862 = vld [vmem:[%s1 + $0x1a10] sm:$0xff]
    %v863 = vld [vmem:[%s1 + $0x1a18] sm:$0xff]
    %v864 = vld [vmem:[%s1 + $0x1a20] sm:$0xff]
    %v865 = vld [vmem:[%s1 + $0x1a28] sm:$0xff]
    %v866 = vld [vmem:[%s1 + $0x1a30] sm:$0xff]
    %v867 = vld [vmem:[%s1 + $0x1a38] sm:$0xff]
    %v868 = vld [vmem:[%s1 + $0x1a40] sm:$0xff]
    %v869 = vld [vmem:[%s1 + $0x1a48] sm:$0xff]
    %v870 = vld [vmem:[%s1 + $0x1a50] sm:$0xff]
    %v871 = vld [vmem:[%s1 + $0x1a58] sm:$0xff]
    %v872 = vld [vmem:[%s1 + $0x1a60] sm:$0xff]
    %v873 = vld [vmem:[%s1 + $0x1a68] sm:$0xff]
    %v874 = vld [vmem:[%s1 + $0x1a70] sm:$0xff]
    %v875 = vld [vmem:[%s1 + $0x1a78] sm:$0xff]
    %v876 = vld [vmem:[%s1 + $0x1a80] sm:$0xff]
    %v877 = vld [vmem:[%s1 + $0x1a88] sm:$0xff]
    %v878 = vld [vmem:[%s1 + $0x1a90] sm:$0xff]
    %v879 = vld [vmem:[%s1 + $0x1a98] sm:$0xff]
    %v880 = vld [vmem:[%s1 + $0x1aa0] sm:$0xff]
    %v881 = vld [vmem:[%s1 + $0x1aa8] sm:$0xff]
    %v882 = vld [vmem:[%s1 + $0x1ab0] sm:$0xff]
    %v883 = vld [vmem:[%s1 + $0x1ab8] sm:$0xff]
    %v884 = vld [vmem:[%s1 + $0x1ac0] sm:$0xff]
    %v885 = vld [vmem:[%s1 + $0x1ac8] sm:$0xff]
    %v886 = vld [vmem:[%s1 + $0x1ad0] sm:$0xff]
    %v887 = vld [vmem:[%s1 + $0x1ad8] sm:$0xff]
    %v888 = vld [vmem:[%s1 + $0x1ae0] sm:$0xff]
    %v889 = vld [vmem:[%s1 + $0x1ae8] sm:$0xff]
    %v890 = vld [vmem:[%s1 + $0x1af0] sm:$0xff]
    %v891 = vld [vmem:[%s1 + $0x1af8] sm:$0xff]
    %v892 = vld [vmem:[%s1 + $0x1b00] sm:$0xff]
    %v893 = vld [vmem:[%s1 + $0x1b08] sm:$0xff]
    %v894 = vld [vmem:[%s1 + $0x1b10] sm:$0xff]
    %v895 = vld [vmem:[%s1 + $0x1b18] sm:$0xff]
    %v896 = vld [vmem:[%s1 + $0x1b20] sm:$0xff]
    %v897 = vld [vmem:[%s1 + $0x1b28] sm:$0xff]
    %v898 = vld [vmem:[%s1 + $0x1b30] sm:$0xff]
    %v899 = vld [vmem:[%s1 + $0x1b38] sm:$0xff]
    %v900 = vld [vmem:[%s1 + $0x1b40] sm:$0xff]
    %v901 = vld [vmem:[%s1 + $0x1b48] sm:$0xff]
    %v902 = vld [vmem:[%s1 + $0x1b50] sm:$0xff]
    %v903 = vld [vmem:[%s1 + $0x1b58] sm:$0xff]
    %v904 = vld [vmem:[%s1 + $0x1b60] sm:$0xff]
    %v905 = vld [vmem:[%s1 + $0x1b68] sm:$0xff]
    %v906 = vld [vmem:[%s1 + $0x1b70] sm:$0xff]
    %v907 = vld [vmem:[%s1 + $0x1b78] sm:$0xff]
    %v908 = vld [vmem:[%s1 + $0x1b80] sm:$0xff]
    %v909 = vld [vmem:[%s1 + $0x1b88] sm:$0xff]
    %v910 = vld [vmem:[%s1 + $0x1b90] sm:$0xff]
    %v911 = vld [vmem:[%s1 + $0x1b98] sm:$0xff]
    %v912 = vld [vmem:[%s1 + $0x1ba0] sm:$0xff]
    %v913 = vld [vmem:[%s1 + $0x1ba8] sm:$0xff]
    %v914 = vld [vmem:[%s1 + $0x1bb0] sm:$0xff]
    %v915 = vld [vmem:[%s1 + $0x1bb8] sm:$0xff]
    %v916 = vld [vmem:[%s1 + $0x1bc0] sm:$0xff]
    %v917 = vld [vmem:[%s1 + $0x1bc8] sm:$0xff]
    %v918 = vld [vmem:[%s1 + $0x1bd0] sm:$0xff]
    %v919 = vld [vmem:[%s1 + $0x1bd8] sm:$0xff]
    %v920 = vld [vmem:[%s1 + $0x1be0] sm:$0xff]
    %v921 = vld [vmem:[%s1 + $0x1be8] sm:$0xff]
    %v922 = vld [vmem:[%s1 + $0x1bf0] sm:$0xff]
    %v923 = vld [vmem:[%s1 + $0x1bf8] sm:$0xff]
    %v924 = vld [vmem:[%s1 + $0x1c00] sm:$0xff]
    %v925 = vld [vmem:[%s1 + $0x1c08] sm:$0xff]
    %v926 = vld [vmem:[%s1 + $0x1c10] sm:$0xff]
    %v927 = vld [vmem:[%s1 + $0x1c18] sm:$0xff]
    %v928 = vld [vmem:[%s1 + $0x1c20] sm:$0xff]
    %v929 = vld [vmem:[%s1 + $0x1c28] sm:$0xff]
    %v930 = vld [vmem:[%s1 + $0x1c30] sm:$0xff]
    %v931 = vld [vmem:[%s1 + $0x1c38] sm:$0xff]
    %v932 = vld [vmem:[%s1 + $0x1c40] sm:$0xff]
    %v933 = vld [vmem:[%s1 + $0x1c48] sm:$0xff]
    %v934 = vld [vmem:[%s1 + $0x1c50] sm:$0xff]
    %v935 = vld [vmem:[%s1 + $0x1c58] sm:$0xff]
    %v936 = vld [vmem:[%s1 + $0x1c60] sm:$0xff]
    %v937 = vld [vmem:[%s1 + $0x1c68] sm:$0xff]
    %v938 = vld [vmem:[%s1 + $0x1c70] sm:$0xff]
    %v939 = vld [vmem:[%s1 + $0x1c78] sm:$0xff]
    %v940 = vld [vmem:[%s1 + $0x1c80] sm:$0xff]
    %v941 = vld [vmem:[%s1 + $0x1c88] sm:$0xff]
    %v942 = vld [vmem:[%s1 + $0x1c90] sm:$0xff]
    %v943 = vld [vmem:[%s1 + $0x1c98] sm:$0xff]
    %v944 = vld [vmem:[%s1 + $0x1ca0] sm:$0xff]
    %v945 = vld [vmem:[%s1 + $0x1ca8] sm:$0xff]
    %v946 = vld [vmem:[%s1 + $0x1cb0] sm:$0xff]
    %v947 = vld [vmem:[%s1 + $0x1cb8] sm:$0xff]
    %v948 = vld [vmem:[%s1 + $0x1cc0] sm:$0xff]
    %v949 = vld [vmem:[%s1 + $0x1cc8] sm:$0xff]
    %v950 = vld [vmem:[%s1 + $0x1cd0] sm:$0xff]
    %v951 = vld [vmem:[%s1 + $0x1cd8] sm:$0xff]
    %v952 = vld [vmem:[%s1 + $0x1ce0] sm:$0xff]
    %v953 = vld [vmem:[%s1 + $0x1ce8] sm:$0xff]
    %v954 = vld [vmem:[%s1 + $0x1cf0] sm:$0xff]
    %v955 = vld [vmem:[%s1 + $0x1cf8] sm:$0xff]
    %v956 = vld [vmem:[%s1 + $0x1d00] sm:$0xff]
    %v957 = vld [vmem:[%s1 + $0x1d08] sm:$0xff]
    %v958 = vld [vmem:[%s1 + $0x1d10] sm:$0xff]
    %v959 = vld [vmem:[%s1 + $0x1d18] sm:$0xff]
    %v960 = vld [vmem:[%s1 + $0x1d20] sm:$0xff]
    %v961 = vld [vmem:[%s1 + $0x1d28] sm:$0xff]
    %v962 = vld [vmem:[%s1 + $0x1d30] sm:$0xff]
    %v963 = vld [vmem:[%s1 + $0x1d38] sm:$0xff]
    %v964 = vld [vmem:[%s1 + $0x1d40] sm:$0xff]
    %v965 = vld [vmem:[%s1 + $0x1d48] sm:$0xff]
    %v966 = vld [vmem:[%s1 + $0x1d50] sm:$0xff]
    %v967 = vld [vmem:[%s1 + $0x1d58] sm:$0xff]
    %v968 = vld [vmem:[%s1 + $0x1d60] sm:$0xff]
    %v969 = vld [vmem:[%s1 + $0x1d68] sm:$0xff]
    %v970 = vld [vmem:[%s1 + $0x1d70] sm:$0xff]
    %v971 = vld [vmem:[%s1 + $0x1d78] sm:$0xff]
    %v972 = vld [vmem:[%s1 + $0x1d80] sm:$0xff]
    %v973 = vld [vmem:[%s1 + $0x1d88] sm:$0xff]
    %v974 = vld [vmem:[%s1 + $0x1d90] sm:$0xff]
    %v975 = vld [vmem:[%s1 + $0x1d98] sm:$0xff]
    %v976 = vld [vmem:[%s1 + $0x1da0] sm:$0xff]
    %v977 = vld [vmem:[%s1 + $0x1da8] sm:$0xff]
    %v978 = vld [vmem:[%s1 + $0x1db0] sm:$0xff]
    %v979 = vld [vmem:[%s1 + $0x1db8] sm:$0xff]
    %v980 = vld [vmem:[%s1 + $0x1dc0] sm:$0xff]
    %v981 = vld [vmem:[%s1 + $0x1dc8] sm:$0xff]
    %v982 = vld [vmem:[%s1 + $0x1dd0] sm:$0xff]
    %v983 = vld [vmem:[%s1 + $0x1dd8] sm:$0xff]
    %v984 = vld [vmem:[%s1 + $0x1de0] sm:$0xff]
    %v985 = vld [vmem:[%s1 + $0x1de8] sm:$0xff]
    %v986 = vld [vmem:[%s1 + $0x1df0] sm:$0xff]
    %v987 = vld [vmem:[%s1 + $0x1df8] sm:$0xff]
    %v988 = vld [vmem:[%s1 + $0x1e00] sm:$0xff]
    %v989 = vld [vmem:[%s1 + $0x1e08] sm:$0xff]
    %v990 = vld [vmem:[%s1 + $0x1e10] sm:$0xff]
    %v991 = vld [vmem:[%s1 + $0x1e18] sm:$0xff]
    %v992 = vld [vmem:[%s1 + $0x1e20] sm:$0xff]
    %v993 = vld [vmem:[%s1 + $0x1e28] sm:$0xff]
    %v994 = vld [vmem:[%s1 + $0x1e30] sm:$0xff]
    %v995 = vld [vmem:[%s1 + $0x1e38] sm:$0xff]
    %v996 = vld [vmem:[%s1 + $0x1e40] sm:$0xff]
    %v997 = vld [vmem:[%s1 + $0x1e48] sm:$0xff]
    %v998 = vld [vmem:[%s1 + $0x1e50] sm:$0xff]
    %v999 = vld [vmem:[%s1 + $0x1e58] sm:$0xff]
    %v1000 = vld [vmem:[%s1 + $0x1e60] sm:$0xff]
    %v1001 = vld [vmem:[%s1 + $0x1e68] sm:$0xff]
    %v1002 = vld [vmem:[%s1 + $0x1e70] sm:$0xff]
    %v1003 = vld [vmem:[%s1 + $0x1e78] sm:$0xff]
    %v1004 = vld [vmem:[%s1 + $0x1e80] sm:$0xff]
    %v1005 = vld [vmem:[%s1 + $0x1e88] sm:$0xff]
    %v1006 = vld [vmem:[%s1 + $0x1e90] sm:$0xff]
    %v1007 = vld [vmem:[%s1 + $0x1e98] sm:$0xff]
    %v1008 = vld [vmem:[%s1 + $0x1ea0] sm:$0xff]
    %v1009 = vld [vmem:[%s1 + $0x1ea8] sm:$0xff]
    %v1010 = vld [vmem:[%s1 + $0x1eb0] sm:$0xff]
    %v1011 = vld [vmem:[%s1 + $0x1eb8] sm:$0xff]
    %v1012 = vld [vmem:[%s1 + $0x1ec0] sm:$0xff]
    %v1013 = vld [vmem:[%s1 + $0x1ec8] sm:$0xff]
    %v1014 = vld [vmem:[%s1 + $0x1ed0] sm:$0xff]
    %v1015 = vld [vmem:[%s1 + $0x1ed8] sm:$0xff]
    %v1016 = vld [vmem:[%s1 + $0x1ee0] sm:$0xff]
    %v1017 = vld [vmem:[%s1 + $0x1ee8] sm:$0xff]
    %v1018 = vld [vmem:[%s1 + $0x1ef0] sm:$0xff]
    %v1019 = vld [vmem:[%s1 + $0x1ef8] sm:$0xff]
    %v1020 = vld [vmem:[%s1 + $0x1f00] sm:$0xff]
    %v1021 = vld [vmem:[%s1 + $0x1f08] sm:$0xff]
    %v1022 = vld [vmem:[%s1 + $0x1f10] sm:$0xff]
    %v1023 = vld [vmem:[%s1 + $0x1f18] sm:$0xff]
    %v1024 = vld [vmem:[%s1 + $0x1f20] sm:$0xff]
    %v1025 = vld [vmem:[%s1 + $0x1f28] sm:$0xff]
    %v1026 = vld [vmem:[%s1 + $0x1f30] sm:$0xff]
    %v1027 = vld [vmem:[%s1 + $0x1f38] sm:$0xff]
    %v1028 = vld [vmem:[%s1 + $0x1f40] sm:$0xff]
    %v1029 = vld [vmem:[%s1 + $0x1f48] sm:$0xff]
    %v1030 = vld [vmem:[%s1 + $0x1f50] sm:$0xff]
    %v1031 = vld [vmem:[%s1 + $0x1f58] sm:$0xff]
    %v1032 = vld [vmem:[%s1 + $0x1f60] sm:$0xff]
    %v1033 = vld [vmem:[%s1 + $0x1f68] sm:$0xff]
    %v1034 = vld [vmem:[%s1 + $0x1f70] sm:$0xff]
    %v1035 = vld [vmem:[%s1 + $0x1f78] sm:$0xff]
    %v1036 = vld [vmem:[%s1 + $0x1f80] sm:$0xff]
    %v1037 = vld [vmem:[%s1 + $0x1f88] sm:$0xff]
    %v1038 = vld [vmem:[%s1 + $0x1f90] sm:$0xff]
    %v1039 = vld [vmem:[%s1 + $0x1f98] sm:$0xff]
    %v1040 = vld [vmem:[%s1 + $0x1fa0] sm:$0xff]
    %v1041 = vld [vmem:[%s1 + $0x1fa8] sm:$0xff]
    %v1042 = vld [vmem:[%s1 + $0x1fb0] sm:$0xff]
    %v1043 = vld [vmem:[%s1 + $0x1fb8] sm:$0xff]
    %v1044 = vld [vmem:[%s1 + $0x1fc0] sm:$0xff]
    %v1045 = vld [vmem:[%s1 + $0x1fc8] sm:$0xff]
    %v1046 = vld [vmem:[%s1 + $0x1fd0] sm:$0xff]
    %v1047 = vld [vmem:[%s1 + $0x1fd8] sm:$0xff]
    %v1048 = vld [vmem:[%s1 + $0x1fe0] sm:$0xff]
    %v1049 = vld [vmem:[%s1 + $0x1fe8] sm:$0xff]
    %v1050 = vld [vmem:[%s1 + $0x1ff0] sm:$0xff]
    %v1051 = vld [vmem:[%s1 + $0x1ff8] sm:$0xff]
    %v1052 = vld [vmem:[%s1 + $0x2000] sm:$0xff]
    %v1053 = vld [vmem:[%s1 + $0x2008] sm:$0xff]
    %v1054 = vld [vmem:[%s1 + $0x2010] sm:$0xff]
    %v1055 = vld [vmem:[%s1 + $0x2018] sm:$0xff]
    %v1056 = vld [vmem:[%s1 + $0x2020] sm:$0xff]
    %v1057 = vld [vmem:[%s1 + $0x2028] sm:$0xff]
    %v1058 = vld [vmem:[%s1 + $0x2030] sm:$0xff]
    %v1059 = vld [vmem:[%s1 + $0x2038] sm:$0xff]
    %v1060 = vld [vmem:[%s1 + $0x2040] sm:$0xff]
    %v1061 = vld [vmem:[%s1 + $0x2048] sm:$0xff]
    %v1062 = vld [vmem:[%s1 + $0x2050] sm:$0xff]
    %v1063 = vld [vmem:[%s1 + $0x2058] sm:$0xff]
    %v1064 = vld [vmem:[%s1 + $0x2060] sm:$0xff]
    %v1065 = vld [vmem:[%s1 + $0x2068] sm:$0xff]
    %v1066 = vld [vmem:[%s1 + $0x2070] sm:$0xff]
    %v1067 = vld [vmem:[%s1 + $0x2078] sm:$0xff]
    %v1068 = vld [vmem:[%s1 + $0x2080] sm:$0xff]
    %v1069 = vld [vmem:[%s1 + $0x2088] sm:$0xff]
    %v1070 = vld [vmem:[%s1 + $0x2090] sm:$0xff]
    %v1071 = vld [vmem:[%s1 + $0x2098] sm:$0xff]
    %v1072 = vld [vmem:[%s1 + $0x20a0] sm:$0xff]
    %v1073 = vld [vmem:[%s1 + $0x20a8] sm:$0xff]
    %v1074 = vld [vmem:[%s1 + $0x20b0] sm:$0xff]
    %v1075 = vld [vmem:[%s1 + $0x20b8] sm:$0xff]
    %v1076 = vld [vmem:[%s1 + $0x20c0] sm:$0xff]
    %v1077 = vld [vmem:[%s1 + $0x20c8] sm:$0xff]
    %v1078 = vld [vmem:[%s1 + $0x20d0] sm:$0xff]
    %v1079 = vld [vmem:[%s1 + $0x20d8] sm:$0xff]
    %v1080 = vld [vmem:[%s1 + $0x20e0] sm:$0xff]
    %v1081 = vld [vmem:[%s1 + $0x20e8] sm:$0xff]
    %v1082 = vld [vmem:[%s1 + $0x20f0] sm:$0xff]
    %v1083 = vld [vmem:[%s1 + $0x20f8] sm:$0xff]
    %v1084 = vld [vmem:[%s1 + $0x2100] sm:$0xff]
    %v1085 = vld [vmem:[%s1 + $0x2108] sm:$0xff]
    %v1086 = vld [vmem:[%s1 + $0x2110] sm:$0xff]
    %v1087 = vld [vmem:[%s1 + $0x2118] sm:$0xff]
    %v1088 = vld [vmem:[%s1 + $0x2120] sm:$0xff]
    %v1089 = vld [vmem:[%s1 + $0x2128] sm:$0xff]
    %v1090 = vld [vmem:[%s1 + $0x2130] sm:$0xff]
    %v1091 = vld [vmem:[%s1 + $0x2138] sm:$0xff]
    %v1092 = vld [vmem:[%s1 + $0x2140] sm:$0xff]
    %v1093 = vld [vmem:[%s1 + $0x2148] sm:$0xff]
    %v1094 = vld [vmem:[%s1 + $0x2150] sm:$0xff]
    %v1095 = vld [vmem:[%s1 + $0x2158] sm:$0xff]
    %v1096 = vld [vmem:[%s1 + $0x2160] sm:$0xff]
    %v1097 = vld [vmem:[%s1 + $0x2168] sm:$0xff]
    %v1098 = vld [vmem:[%s1 + $0x2170] sm:$0xff]
    %v1099 = vld [vmem:[%s1 + $0x2178] sm:$0xff]
    %v1100 = vld [vmem:[%s1 + $0x2180] sm:$0xff]
    %v1101 = vld [vmem:[%s1 + $0x2188] sm:$0xff]
    %v1102 = vld [vmem:[%s1 + $0x2190] sm:$0xff]
    %v1103 = vld [vmem:[%s1 + $0x2198] sm:$0xff]
    %v1104 = vld [vmem:[%s1 + $0x21a0] sm:$0xff]
    %v1105 = vld [vmem:[%s1 + $0x21a8] sm:$0xff]
    %v1106 = vld [vmem:[%s1 + $0x21b0] sm:$0xff]
    %v1107 = vld [vmem:[%s1 + $0x21b8] sm:$0xff]
    %v1108 = vld [vmem:[%s1 + $0x21c0] sm:$0xff]
    %v1109 = vld [vmem:[%s1 + $0x21c8] sm:$0xff]
    %v1110 = vld [vmem:[%s1 + $0x21d0] sm:$0xff]
    %v1111 = vld [vmem:[%s1 + $0x21d8] sm:$0xff]
    %v1112 = vld [vmem:[%s1 + $0x21e0] sm:$0xff]
    %v1113 = vld [vmem:[%s1 + $0x21e8] sm:$0xff]
    %v1114 = vld [vmem:[%s1 + $0x21f0] sm:$0xff]
    %v1115 = vld [vmem:[%s1 + $0x21f8] sm:$0xff]
    %v1116 = vld [vmem:[%s1 + $0x2200] sm:$0xff]
    %v1117 = vld [vmem:[%s1 + $0x2208] sm:$0xff]
    %v1118 = vld [vmem:[%s1 + $0x2210] sm:$0xff]
    %v1119 = vld [vmem:[%s1 + $0x2218] sm:$0xff]
    %v1120 = vld [vmem:[%s1 + $0x2220] sm:$0xff]
    %v1121 = vld [vmem:[%s1 + $0x2228] sm:$0xff]
    %v1122 = vld [vmem:[%s1 + $0x2230] sm:$0xff]
    %v1123 = vld [vmem:[%s1 + $0x2238] sm:$0xff]
    %v1124 = vld [vmem:[%s1 + $0x2240] sm:$0xff]
    %v1125 = vld [vmem:[%s1 + $0x2248] sm:$0xff]
    %v1126 = vld [vmem:[%s1 + $0x2250] sm:$0xff]
    %v1127 = vld [vmem:[%s1 + $0x2258] sm:$0xff]
    %v1128 = vld [vmem:[%s1 + $0x2260] sm:$0xff]
    %v1129 = vld [vmem:[%s1 + $0x2268] sm:$0xff]
    %v1130 = vld [vmem:[%s1 + $0x2270] sm:$0xff]
    %v1131 = vld [vmem:[%s1 + $0x2278] sm:$0xff]
    %v1132 = vld [vmem:[%s1 + $0x2280] sm:$0xff]
    %v1133 = vld [vmem:[%s1 + $0x2288] sm:$0xff]
    %v1134 = vld [vmem:[%s1 + $0x2290] sm:$0xff]
    %v1135 = vld [vmem:[%s1 + $0x2298] sm:$0xff]
    %v1136 = vld [vmem:[%s1 + $0x22a0] sm:$0xff]
    %v1137 = vld [vmem:[%s1 + $0x22a8] sm:$0xff]
    %v1138 = vld [vmem:[%s1 + $0x22b0] sm:$0xff]
    %v1139 = vld [vmem:[%s1 + $0x22b8] sm:$0xff]
    %v1140 = vld [vmem:[%s1 + $0x22c0] sm:$0xff]
    %v1141 = vld [vmem:[%s1 + $0x22c8] sm:$0xff]
    %v1142 = vld [vmem:[%s1 + $0x22d0] sm:$0xff]
    %v1143 = vld [vmem:[%s1 + $0x22d8] sm:$0xff]
    %v1144 = vld [vmem:[%s1 + $0x22e0] sm:$0xff]
    %v1145 = vld [vmem:[%s1 + $0x22e8] sm:$0xff]
    %v1146 = vld [vmem:[%s1 + $0x22f0] sm:$0xff]
    %v1147 = vld [vmem:[%s1 + $0x22f8] sm:$0xff]
    %v1148 = vld [vmem:[%s1 + $0x2300] sm:$0xff]
    %v1149 = vld [vmem:[%s1 + $0x2308] sm:$0xff]
    %v1150 = vld [vmem:[%s1 + $0x2310] sm:$0xff]
    %v1151 = vld [vmem:[%s1 + $0x2318] sm:$0xff]
    %v1152 = vld [vmem:[%s1 + $0x2320] sm:$0xff]
    %v1153 = vld [vmem:[%s1 + $0x2328] sm:$0xff]
    %v1154 = vld [vmem:[%s1 + $0x2330] sm:$0xff]
    %v1155 = vld [vmem:[%s1 + $0x2338] sm:$0xff]
    %v1156 = vld [vmem:[%s1 + $0x2340] sm:$0xff]
    %v1157 = vld [vmem:[%s1 + $0x2348] sm:$0xff]
    %v1158 = vld [vmem:[%s1 + $0x2350] sm:$0xff]
    %v1159 = vld [vmem:[%s1 + $0x2358] sm:$0xff]
    %v1160 = vld [vmem:[%s1 + $0x2360] sm:$0xff]
    %v1161 = vld [vmem:[%s1 + $0x2368] sm:$0xff]
    %v1162 = vld [vmem:[%s1 + $0x2370] sm:$0xff]
    %v1163 = vld [vmem:[%s1 + $0x2378] sm:$0xff]
    %v1164 = vld [vmem:[%s1 + $0x2380] sm:$0xff]
    %v1165 = vld [vmem:[%s1 + $0x2388] sm:$0xff]
    %v1166 = vld [vmem:[%s1 + $0x2390] sm:$0xff]
    %v1167 = vld [vmem:[%s1 + $0x2398] sm:$0xff]
    %v1168 = vld [vmem:[%s1 + $0x23a0] sm:$0xff]
    %v1169 = vld [vmem:[%s1 + $0x23a8] sm:$0xff]
    %v1170 = vld [vmem:[%s1 + $0x23b0] sm:$0xff]
    %v1171 = vld [vmem:[%s1 + $0x23b8] sm:$0xff]
    %v1172 = vld [vmem:[%s1 + $0x23c0] sm:$0xff]
    %v1173 = vld [vmem:[%s1 + $0x23c8] sm:$0xff]
    %v1174 = vld [vmem:[%s1 + $0x23d0] sm:$0xff]
    %v1175 = vld [vmem:[%s1 + $0x23d8] sm:$0xff]
    %v1176 = vld [vmem:[%s1 + $0x23e0] sm:$0xff]
    %v1177 = vld [vmem:[%s1 + $0x23e8] sm:$0xff]
    %v1178 = vld [vmem:[%s1 + $0x23f0] sm:$0xff]
    %v1179 = vld [vmem:[%s1 + $0x23f8] sm:$0xff]
    %v1180 = vld [vmem:[%s1 + $0x2400] sm:$0xff]
    %v1181 = vld [vmem:[%s1 + $0x2408] sm:$0xff]
    %v1182 = vld [vmem:[%s1 + $0x2410] sm:$0xff]
    %v1183 = vld [vmem:[%s1 + $0x2418] sm:$0xff]
    %v1184 = vld [vmem:[%s1 + $0x2420] sm:$0xff]
    %v1185 = vld [vmem:[%s1 + $0x2428] sm:$0xff]
    %v1186 = vld [vmem:[%s1 + $0x2430] sm:$0xff]
    %v1187 = vld [vmem:[%s1 + $0x2438] sm:$0xff]
    %v1188 = vld [vmem:[%s1 + $0x2440] sm:$0xff]
    %v1189 = vld [vmem:[%s1 + $0x2448] sm:$0xff]
    %v1190 = vld [vmem:[%s1 + $0x2450] sm:$0xff]
    %v1191 = vld [vmem:[%s1 + $0x2458] sm:$0xff]
    %v1192 = vld [vmem:[%s1 + $0x2460] sm:$0xff]
    %v1193 = vld [vmem:[%s1 + $0x2468] sm:$0xff]
    %v1194 = vld [vmem:[%s1 + $0x2470] sm:$0xff]
    %v1195 = vld [vmem:[%s1 + $0x2478] sm:$0xff]
    %v1196 = vld [vmem:[%s1 + $0x2480] sm:$0xff]
    %v1197 = vld [vmem:[%s1 + $0x2488] sm:$0xff]
    %v1198 = vld [vmem:[%s1 + $0x2490] sm:$0xff]
    %v1199 = vld [vmem:[%s1 + $0x2498] sm:$0xff]
    %v1200 = vld [vmem:[%s1 + $0x24a0] sm:$0xff]
    %v1201 = vld [vmem:[%s1 + $0x24a8] sm:$0xff]
    %v1202 = vld [vmem:[%s1 + $0x24b0] sm:$0xff]
    %v1203 = vld [vmem:[%s1 + $0x24b8] sm:$0xff]
    %v1204 = vld [vmem:[%s1 + $0x24c0] sm:$0xff]
    %v1205 = vld [vmem:[%s1 + $0x24c8] sm:$0xff]
    %v1206 = vld [vmem:[%s1 + $0x24d0] sm:$0xff]
    %v1207 = vld [vmem:[%s1 + $0x24d8] sm:$0xff]
    %v1208 = vld [vmem:[%s1 + $0x24e0] sm:$0xff]
    %v1209 = vld [vmem:[%s1 + $0x24e8] sm:$0xff]
    %v1210 = vld [vmem:[%s1 + $0x24f0] sm:$0xff]
    %v1211 = vld [vmem:[%s1 + $0x24f8] sm:$0xff]
    %v1212 = vld [vmem:[%s1 + $0x2500] sm:$0xff]
    %v1213 = vld [vmem:[%s1 + $0x2508] sm:$0xff]
    %v1214 = vld [vmem:[%s1 + $0x2510] sm:$0xff]
    %v1215 = vld [vmem:[%s1 + $0x2518] sm:$0xff]
    %v1216 = vld [vmem:[%s1 + $0x2520] sm:$0xff]
    %v1217 = vld [vmem:[%s1 + $0x2528] sm:$0xff]
    %v1218 = vld [vmem:[%s1 + $0x2530] sm:$0xff]
    %v1219 = vld [vmem:[%s1 + $0x2538] sm:$0xff]
    %v1220 = vld [vmem:[%s1 + $0x2540] sm:$0xff]
    %v1221 = vld [vmem:[%s1 + $0x2548] sm:$0xff]
    %v1222 = vld [vmem:[%s1 + $0x2550] sm:$0xff]
    %v1223 = vld [vmem:[%s1 + $0x2558] sm:$0xff]
    %v1224 = vld [vmem:[%s1 + $0x2560] sm:$0xff]
    %v1225 = vld [vmem:[%s1 + $0x2568] sm:$0xff]
    %v1226 = vld [vmem:[%s1 + $0x2570] sm:$0xff]
    %v1227 = vld [vmem:[%s1 + $0x2578] sm:$0xff]
    %v1228 = vld [vmem:[%s1 + $0x2580] sm:$0xff]
    %v1229 = vld [vmem:[%s1 + $0x2588] sm:$0xff]
    %v1230 = vld [vmem:[%s1 + $0x2590] sm:$0xff]
    %v1231 = vld [vmem:[%s1 + $0x2598] sm:$0xff]
    %v1232 = vld [vmem:[%s1 + $0x25a0] sm:$0xff]
    %v1233 = vld [vmem:[%s1 + $0x25a8] sm:$0xff]
    %v1234 = vld [vmem:[%s1 + $0x25b0] sm:$0xff]
    %v1235 = vld [vmem:[%s1 + $0x25b8] sm:$0xff]
    %v1236 = vld [vmem:[%s1 + $0x25c0] sm:$0xff]
    %v1237 = vld [vmem:[%s1 + $0x25c8] sm:$0xff]
    %v1238 = vld [vmem:[%s1 + $0x25d0] sm:$0xff]
    %v1239 = vld [vmem:[%s1 + $0x25d8] sm:$0xff]
    %v1240 = vld [vmem:[%s1 + $0x25e0] sm:$0xff]
    %v1241 = vld [vmem:[%s1 + $0x25e8] sm:$0xff]
    %v1242 = vld [vmem:[%s1 + $0x25f0] sm:$0xff]
    %v1243 = vld [vmem:[%s1 + $0x25f8] sm:$0xff]
    %v1244 = vld [vmem:[%s1 + $0x2600] sm:$0xff]
    %v1245 = vld [vmem:[%s1 + $0x2608] sm:$0xff]
    %v1246 = vld [vmem:[%s1 + $0x2610] sm:$0xff]
    %v1247 = vld [vmem:[%s1 + $0x2618] sm:$0xff]
    %v1248 = vld [vmem:[%s1 + $0x2620] sm:$0xff]
    %v1249 = vld [vmem:[%s1 + $0x2628] sm:$0xff]
    %v1250 = vld [vmem:[%s1 + $0x2630] sm:$0xff]
    %v1251 = vld [vmem:[%s1 + $0x2638] sm:$0xff]
    %v1252 = vld [vmem:[%s1 + $0x2640] sm:$0xff]
    %v1253 = vld [vmem:[%s1 + $0x2648] sm:$0xff]
    %v1254 = vld [vmem:[%s1 + $0x2650] sm:$0xff]
    %v1255 = vld [vmem:[%s1 + $0x2658] sm:$0xff]
    %v1256 = vld [vmem:[%s1 + $0x2660] sm:$0xff]
    %v1257 = vld [vmem:[%s1 + $0x2668] sm:$0xff]
    %v1258 = vld [vmem:[%s1 + $0x2670] sm:$0xff]
    %v1259 = vld [vmem:[%s1 + $0x2678] sm:$0xff]
    %v1260 = vld [vmem:[%s1 + $0x2680] sm:$0xff]
    %v1261 = vld [vmem:[%s1 + $0x2688] sm:$0xff]
    %v1262 = vld [vmem:[%s1 + $0x2690] sm:$0xff]
    %v1263 = vld [vmem:[%s1 + $0x2698] sm:$0xff]
    %v1264 = vld [vmem:[%s1 + $0x26a0] sm:$0xff]
    %v1265 = vld [vmem:[%s1 + $0x26a8] sm:$0xff]
    %v1266 = vld [vmem:[%s1 + $0x26b0] sm:$0xff]
    %v1267 = vld [vmem:[%s1 + $0x26b8] sm:$0xff]
    %v1268 = vld [vmem:[%s1 + $0x26c0] sm:$0xff]
    %v1269 = vld [vmem:[%s1 + $0x26c8] sm:$0xff]
    %v1270 = vld [vmem:[%s1 + $0x26d0] sm:$0xff]
    %v1271 = vld [vmem:[%s1 + $0x26d8] sm:$0xff]
    %v1272 = vld [vmem:[%s1 + $0x26e0] sm:$0xff]
    %v1273 = vld [vmem:[%s1 + $0x26e8] sm:$0xff]
    %v1274 = vld [vmem:[%s1 + $0x26f0] sm:$0xff]
    %v1275 = vld [vmem:[%s1 + $0x26f8] sm:$0xff]
    %v1276 = vld [vmem:[%s1 + $0x2700] sm:$0xff]
    %v1277 = vld [vmem:[%s1 + $0x2708] sm:$0xff]
    %v1278 = vld [vmem:[%s1 + $0x2710] sm:$0xff]
    %v1279 = vld [vmem:[%s1 + $0x2718] sm:$0xff]
    %v1280 = vld [vmem:[%s1 + $0x2720] sm:$0xff]
    %v1281 = vld [vmem:[%s1 + $0x2728] sm:$0xff]
    %v1282 = vld [vmem:[%s1 + $0x2730] sm:$0xff]
    %v1283 = vld [vmem:[%s1 + $0x2738] sm:$0xff]
    %v1284 = vld [vmem:[%s1 + $0x2740] sm:$0xff]
    %v1285 = vld [vmem:[%s1 + $0x2748] sm:$0xff]
    %v1286 = vld [vmem:[%s1 + $0x2750] sm:$0xff]
    %v1287 = vld [vmem:[%s1 + $0x2758] sm:$0xff]
    %v1288 = vld [vmem:[%s1 + $0x2760] sm:$0xff]
    %v1289 = vld [vmem:[%s1 + $0x2768] sm:$0xff]
    %v1290 = vld [vmem:[%s1 + $0x2770] sm:$0xff]
    %v1291 = vld [vmem:[%s1 + $0x2778] sm:$0xff]
    %v1292 = vld [vmem:[%s1 + $0x2780] sm:$0xff]
    %v1293 = vld [vmem:[%s1 + $0x2788] sm:$0xff]
    %v1294 = vld [vmem:[%s1 + $0x2790] sm:$0xff]
    %v1295 = vld [vmem:[%s1 + $0x2798] sm:$0xff]
    %v1296 = vld [vmem:[%s1 + $0x27a0] sm:$0xff]
    %v1297 = vld [vmem:[%s1 + $0x27a8] sm:$0xff]
    %v1298 = vld [vmem:[%s1 + $0x27b0] sm:$0xff]
    %v1299 = vld [vmem:[%s1 + $0x27b8] sm:$0xff]
    %v1300 = vld [vmem:[%s1 + $0x27c0] sm:$0xff]
    %v1301 = vld [vmem:[%s1 + $0x27c8] sm:$0xff]
    %v1302 = vld [vmem:[%s1 + $0x27d0] sm:$0xff]
    %v1303 = vld [vmem:[%s1 + $0x27d8] sm:$0xff]
    %v1304 = vld [vmem:[%s1 + $0x27e0] sm:$0xff]
    %v1305 = vld [vmem:[%s1 + $0x27e8] sm:$0xff]
    %v1306 = vld [vmem:[%s1 + $0x27f0] sm:$0xff]
    %v1307 = vld [vmem:[%s1 + $0x27f8] sm:$0xff]
    %v1308 = vld [vmem:[%s1 + $0x2800] sm:$0xff]
    %v1309 = vld [vmem:[%s1 + $0x2808] sm:$0xff]
    %v1310 = vld [vmem:[%s1 + $0x2810] sm:$0xff]
    %v1311 = vld [vmem:[%s1 + $0x2818] sm:$0xff]
    %v1312 = vld [vmem:[%s1 + $0x2820] sm:$0xff]
    %v1313 = vld [vmem:[%s1 + $0x2828] sm:$0xff]
    %v1314 = vld [vmem:[%s1 + $0x2830] sm:$0xff]
    %v1315 = vld [vmem:[%s1 + $0x2838] sm:$0xff]
    %v1316 = vld [vmem:[%s1 + $0x2840] sm:$0xff]
    %v1317 = vld [vmem:[%s1 + $0x2848] sm:$0xff]
    %v1318 = vld [vmem:[%s1 + $0x2850] sm:$0xff]
    %v1319 = vld [vmem:[%s1 + $0x2858] sm:$0xff]
    %v1320 = vld [vmem:[%s1 + $0x2860] sm:$0xff]
    %v1321 = vld [vmem:[%s1 + $0x2868] sm:$0xff]
    %v1322 = vld [vmem:[%s1 + $0x2870] sm:$0xff]
    %v1323 = vld [vmem:[%s1 + $0x2878] sm:$0xff]
    %v1324 = vld [vmem:[%s1 + $0x2880] sm:$0xff]
    %v1325 = vld [vmem:[%s1 + $0x2888] sm:$0xff]
    %v1326 = vld [vmem:[%s1 + $0x2890] sm:$0xff]
    %v1327 = vld [vmem:[%s1 + $0x2898] sm:$0xff]
    %v1328 = vld [vmem:[%s1 + $0x28a0] sm:$0xff]
    %v1329 = vld [vmem:[%s1 + $0x28a8] sm:$0xff]
    %v1330 = vld [vmem:[%s1 + $0x28b0] sm:$0xff]
    %v1331 = vld [vmem:[%s1 + $0x28b8] sm:$0xff]
    %v1332 = vld [vmem:[%s1 + $0x28c0] sm:$0xff]
    %v1333 = vld [vmem:[%s1 + $0x28c8] sm:$0xff]
    %v1334 = vld [vmem:[%s1 + $0x28d0] sm:$0xff]
    %v1335 = vld [vmem:[%s1 + $0x28d8] sm:$0xff]
    %v1336 = vld [vmem:[%s1 + $0x28e0] sm:$0xff]
    %v1337 = vld [vmem:[%s1 + $0x28e8] sm:$0xff]
    %v1338 = vld [vmem:[%s1 + $0x28f0] sm:$0xff]
    %v1339 = vld [vmem:[%s1 + $0x28f8] sm:$0xff]
    %v1340 = vld [vmem:[%s1 + $0x2900] sm:$0xff]
    %v1341 = vld [vmem:[%s1 + $0x2908] sm:$0xff]
    %v1342 = vld [vmem:[%s1 + $0x2910] sm:$0xff]
    %v1343 = vld [vmem:[%s1 + $0x2918] sm:$0xff]
    %v1344 = vld [vmem:[%s1 + $0x2920] sm:$0xff]
    %v1345 = vld [vmem:[%s1 + $0x2928] sm:$0xff]
    %v1346 = vld [vmem:[%s1 + $0x2930] sm:$0xff]
    %v1347 = vld [vmem:[%s1 + $0x2938] sm:$0xff]
    %v1348 = vld [vmem:[%s1 + $0x2940] sm:$0xff]
    %v1349 = vld [vmem:[%s1 + $0x2948] sm:$0xff]
    %v1350 = vld [vmem:[%s1 + $0x2950] sm:$0xff]
    %v1351 = vld [vmem:[%s1 + $0x2958] sm:$0xff]
    %v1352 = vld [vmem:[%s1 + $0x2960] sm:$0xff]
    %v1353 = vld [vmem:[%s1 + $0x2968] sm:$0xff]
    %v1354 = vld [vmem:[%s1 + $0x2970] sm:$0xff]
    %v1355 = vld [vmem:[%s1 + $0x2978] sm:$0xff]
    %v1356 = vld [vmem:[%s1 + $0x2980] sm:$0xff]
    %v1357 = vld [vmem:[%s1 + $0x2988] sm:$0xff]
    %v1358 = vld [vmem:[%s1 + $0x2990] sm:$0xff]
    %v1359 = vld [vmem:[%s1 + $0x2998] sm:$0xff]
    %v1360 = vld [vmem:[%s1 + $0x29a0] sm:$0xff]
    %v1361 = vld [vmem:[%s1 + $0x29a8] sm:$0xff]
    %v1362 = vld [vmem:[%s1 + $0x29b0] sm:$0xff]
    %v1363 = vld [vmem:[%s1 + $0x29b8] sm:$0xff]
    %v1364 = vld [vmem:[%s1 + $0x29c0] sm:$0xff]
    %v1365 = vld [vmem:[%s1 + $0x29c8] sm:$0xff]
    %v1366 = vld [vmem:[%s1 + $0x29d0] sm:$0xff]
    %v1367 = vld [vmem:[%s1 + $0x29d8] sm:$0xff]
    %v1368 = vld [vmem:[%s1 + $0x29e0] sm:$0xff]
    %v1369 = vld [vmem:[%s1 + $0x29e8] sm:$0xff]
    %v1370 = vld [vmem:[%s1 + $0x29f0] sm:$0xff]
    %v1371 = vld [vmem:[%s1 + $0x29f8] sm:$0xff]
    %v1372 = vld [vmem:[%s1 + $0x2a00] sm:$0xff]
    %v1373 = vld [vmem:[%s1 + $0x2a08] sm:$0xff]
    %v1374 = vld [vmem:[%s1 + $0x2a10] sm:$0xff]
    %v1375 = vld [vmem:[%s1 + $0x2a18] sm:$0xff]
    %v1376 = vld [vmem:[%s1 + $0x2a20] sm:$0xff]
    %v1377 = vld [vmem:[%s1 + $0x2a28] sm:$0xff]
    %v1378 = vld [vmem:[%s1 + $0x2a30] sm:$0xff]
    %v1379 = vld [vmem:[%s1 + $0x2a38] sm:$0xff]
    %v1380 = vld [vmem:[%s1 + $0x2a40] sm:$0xff]
    %v1381 = vld [vmem:[%s1 + $0x2a48] sm:$0xff]
    %v1382 = vld [vmem:[%s1 + $0x2a50] sm:$0xff]
    %v1383 = vld [vmem:[%s1 + $0x2a58] sm:$0xff]
    %v1384 = vld [vmem:[%s1 + $0x2a60] sm:$0xff]
    %v1385 = vld [vmem:[%s1 + $0x2a68] sm:$0xff]
    %v1386 = vld [vmem:[%s1 + $0x2a70] sm:$0xff]
    %v1387 = vld [vmem:[%s1 + $0x2a78] sm:$0xff]
    %v1388 = vld [vmem:[%s1 + $0x2a80] sm:$0xff]
    %v1389 = vld [vmem:[%s1 + $0x2a88] sm:$0xff]
    %v1390 = vld [vmem:[%s1 + $0x2a90] sm:$0xff]
    %v1391 = vld [vmem:[%s1 + $0x2a98] sm:$0xff]
    %v1392 = vld [vmem:[%s1 + $0x2aa0] sm:$0xff]
    %v1393 = vld [vmem:[%s1 + $0x2aa8] sm:$0xff]
    %v1394 = vld [vmem:[%s1 + $0x2ab0] sm:$0xff]
    %v1395 = vld [vmem:[%s1 + $0x2ab8] sm:$0xff]
    %v1396 = vld [vmem:[%s1 + $0x2ac0] sm:$0xff]
    %v1397 = vld [vmem:[%s1 + $0x2ac8] sm:$0xff]
    %v1398 = vld [vmem:[%s1 + $0x2ad0] sm:$0xff]
    %v1399 = vld [vmem:[%s1 + $0x2ad8] sm:$0xff]
    %v1400 = vld [vmem:[%s1 + $0x2ae0] sm:$0xff]
    %v1401 = vld [vmem:[%s1 + $0x2ae8] sm:$0xff]
    %v1402 = vld [vmem:[%s1 + $0x2af0] sm:$0xff]
    %v1403 = vld [vmem:[%s1 + $0x2af8] sm:$0xff]
    %v1404 = vld [vmem:[%s1 + $0x2b00] sm:$0xff]
    %v1405 = vld [vmem:[%s1 + $0x2b08] sm:$0xff]
    %v1406 = vld [vmem:[%s1 + $0x2b10] sm:$0xff]
    %v1407 = vld [vmem:[%s1 + $0x2b18] sm:$0xff]
    %v1408 = vld [vmem:[%s1 + $0x2b20] sm:$0xff]
    %v1409 = vld [vmem:[%s1 + $0x2b28] sm:$0xff]
    %v1410 = vld [vmem:[%s1 + $0x2b30] sm:$0xff]
    %v1411 = vld [vmem:[%s1 + $0x2b38] sm:$0xff]
    %v1412 = vld [vmem:[%s1 + $0x2b40] sm:$0xff]
    %v1413 = vld [vmem:[%s1 + $0x2b48] sm:$0xff]
    %v1414 = vld [vmem:[%s1 + $0x2b50] sm:$0xff]
    %v1415 = vld [vmem:[%s1 + $0x2b58] sm:$0xff]
    %v1416 = vld [vmem:[%s1 + $0x2b60] sm:$0xff]
    %v1417 = vld [vmem:[%s1 + $0x2b68] sm:$0xff]
    %v1418 = vld [vmem:[%s1 + $0x2b70] sm:$0xff]
    %v1419 = vld [vmem:[%s1 + $0x2b78] sm:$0xff]
    %v1420 = vld [vmem:[%s1 + $0x2b80] sm:$0xff]
    %v1421 = vld [vmem:[%s1 + $0x2b88] sm:$0xff]
    %v1422 = vld [vmem:[%s1 + $0x2b90] sm:$0xff]
    %v1423 = vld [vmem:[%s1 + $0x2b98] sm:$0xff]
    %v1424 = vld [vmem:[%s1 + $0x2ba0] sm:$0xff]
    %v1425 = vld [vmem:[%s1 + $0x2ba8] sm:$0xff]
    %v1426 = vld [vmem:[%s1 + $0x2bb0] sm:$0xff]
    %v1427 = vld [vmem:[%s1 + $0x2bb8] sm:$0xff]
    %v1428 = vld [vmem:[%s1 + $0x2bc0] sm:$0xff]
    %v1429 = vld [vmem:[%s1 + $0x2bc8] sm:$0xff]
    %v1430 = vld [vmem:[%s1 + $0x2bd0] sm:$0xff]
    %v1431 = vld [vmem:[%s1 + $0x2bd8] sm:$0xff]
    %v1432 = vld [vmem:[%s1 + $0x2be0] sm:$0xff]
    %v1433 = vld [vmem:[%s1 + $0x2be8] sm:$0xff]
    %v1434 = vld [vmem:[%s1 + $0x2bf0] sm:$0xff]
    %v1435 = vld [vmem:[%s1 + $0x2bf8] sm:$0xff]
    %v1436 = vld [vmem:[%s1 + $0x2c00] sm:$0xff]
    %v1437 = vld [vmem:[%s1 + $0x2c08] sm:$0xff]
    %v1438 = vld [vmem:[%s1 + $0x2c10] sm:$0xff]
    %v1439 = vld [vmem:[%s1 + $0x2c18] sm:$0xff]
    %v1440 = vld [vmem:[%s1 + $0x2c20] sm:$0xff]
    %v1441 = vld [vmem:[%s1 + $0x2c28] sm:$0xff]
    %v1442 = vld [vmem:[%s1 + $0x2c30] sm:$0xff]
    %v1443 = vld [vmem:[%s1 + $0x2c38] sm:$0xff]
    %v1444 = vld [vmem:[%s1 + $0x2c40] sm:$0xff]
    %v1445 = vld [vmem:[%s1 + $0x2c48] sm:$0xff]
    %v1446 = vld [vmem:[%s1 + $0x2c50] sm:$0xff]
    %v1447 = vld [vmem:[%s1 + $0x2c58] sm:$0xff]
    %v1448 = vld [vmem:[%s1 + $0x2c60] sm:$0xff]
    %v1449 = vld [vmem:[%s1 + $0x2c68] sm:$0xff]
    %v1450 = vld [vmem:[%s1 + $0x2c70] sm:$0xff]
    %v1451 = vld [vmem:[%s1 + $0x2c78] sm:$0xff]
    %v1452 = vld [vmem:[%s1 + $0x2c80] sm:$0xff]
    %v1453 = vld [vmem:[%s1 + $0x2c88] sm:$0xff]
    %v1454 = vld [vmem:[%s1 + $0x2c90] sm:$0xff]
    %v1455 = vld [vmem:[%s1 + $0x2c98] sm:$0xff]
    %v1456 = vld [vmem:[%s1 + $0x2ca0] sm:$0xff]
    %v1457 = vld [vmem:[%s1 + $0x2ca8] sm:$0xff]
    %v1458 = vld [vmem:[%s1 + $0x2cb0] sm:$0xff]
    %v1459 = vld [vmem:[%s1 + $0x2cb8] sm:$0xff]
    %v1460 = vld [vmem:[%s1 + $0x2cc0] sm:$0xff]
    %v1461 = vld [vmem:[%s1 + $0x2cc8] sm:$0xff]
    %v1462 = vld [vmem:[%s1 + $0x2cd0] sm:$0xff]
    %v1463 = vld [vmem:[%s1 + $0x2cd8] sm:$0xff]
    %v1464 = vld [vmem:[%s1 + $0x2ce0] sm:$0xff]
    %v1465 = vld [vmem:[%s1 + $0x2ce8] sm:$0xff]
    %v1466 = vld [vmem:[%s1 + $0x2cf0] sm:$0xff]
    %v1467 = vld [vmem:[%s1 + $0x2cf8] sm:$0xff]
    %v1468 = vld [vmem:[%s1 + $0x2d00] sm:$0xff]
    %v1469 = vld [vmem:[%s1 + $0x2d08] sm:$0xff]
    %v1470 = vld [vmem:[%s1 + $0x2d10] sm:$0xff]
    %v1471 = vld [vmem:[%s1 + $0x2d18] sm:$0xff]
    %v1472 = vld [vmem:[%s1 + $0x2d20] sm:$0xff]
    %v1473 = vld [vmem:[%s1 + $0x2d28] sm:$0xff]
    %v1474 = vld [vmem:[%s1 + $0x2d30] sm:$0xff]
    %v1475 = vld [vmem:[%s1 + $0x2d38] sm:$0xff]
    %v1476 = vld [vmem:[%s1 + $0x2d40] sm:$0xff]
    %v1477 = vld [vmem:[%s1 + $0x2d48] sm:$0xff]
    %v1478 = vld [vmem:[%s1 + $0x2d50] sm:$0xff]
    %v1479 = vld [vmem:[%s1 + $0x2d58] sm:$0xff]
    %v1480 = vld [vmem:[%s1 + $0x2d60] sm:$0xff]
    %v1481 = vld [vmem:[%s1 + $0x2d68] sm:$0xff]
    %v1482 = vld [vmem:[%s1 + $0x2d70] sm:$0xff]
    %v1483 = vld [vmem:[%s1 + $0x2d78] sm:$0xff]
    %v1484 = vld [vmem:[%s1 + $0x2d80] sm:$0xff]
    %v1485 = vld [vmem:[%s1 + $0x2d88] sm:$0xff]
    %v1486 = vld [vmem:[%s1 + $0x2d90] sm:$0xff]
    %v1487 = vld [vmem:[%s1 + $0x2d98] sm:$0xff]
    %v1488 = vld [vmem:[%s1 + $0x2da0] sm:$0xff]
    %v1489 = vld [vmem:[%s1 + $0x2da8] sm:$0xff]
    %v1490 = vld [vmem:[%s1 + $0x2db0] sm:$0xff]
    %v1491 = vld [vmem:[%s1 + $0x2db8] sm:$0xff]
    %v1492 = vld [vmem:[%s1 + $0x2dc0] sm:$0xff]
    %v1493 = vld [vmem:[%s1 + $0x2dc8] sm:$0xff]
    %v1494 = vld [vmem:[%s1 + $0x2dd0] sm:$0xff]
    %v1495 = vld [vmem:[%s1 + $0x2dd8] sm:$0xff]
    %v1496 = vld [vmem:[%s1 + $0x2de0] sm:$0xff]
    %v1497 = vld [vmem:[%s1 + $0x2de8] sm:$0xff]
    %v1498 = vld [vmem:[%s1 + $0x2df0] sm:$0xff]
    %v1499 = vld [vmem:[%s1 + $0x2df8] sm:$0xff]
    %v1500 = vld [vmem:[%s1 + $0x2e00] sm:$0xff]
    %v1501 = vld [vmem:[%s1 + $0x2e08] sm:$0xff]
    %v1502 = vld [vmem:[%s1 + $0x2e10] sm:$0xff]
    %v1503 = vld [vmem:[%s1 + $0x2e18] sm:$0xff]
    %v1504 = vld [vmem:[%s1 + $0x2e20] sm:$0xff]
    %v1505 = vld [vmem:[%s1 + $0x2e28] sm:$0xff]
    %v1506 = vld [vmem:[%s1 + $0x2e30] sm:$0xff]
    %v1507 = vld [vmem:[%s1 + $0x2e38] sm:$0xff]
    %v1508 = vld [vmem:[%s1 + $0x2e40] sm:$0xff]
    %v1509 = vld [vmem:[%s1 + $0x2e48] sm:$0xff]
    %v1510 = vld [vmem:[%s1 + $0x2e50] sm:$0xff]
    %v1511 = vld [vmem:[%s1 + $0x2e58] sm:$0xff]
    %v1512 = vld [vmem:[%s1 + $0x2e60] sm:$0xff]
    %v1513 = vld [vmem:[%s1 + $0x2e68] sm:$0xff]
    %v1514 = vld [vmem:[%s1 + $0x2e70] sm:$0xff]
    %v1515 = vld [vmem:[%s1 + $0x2e78] sm:$0xff]
    %v1516 = vld [vmem:[%s1 + $0x2e80] sm:$0xff]
    %v1517 = vld [vmem:[%s1 + $0x2e88] sm:$0xff]
    %v1518 = vld [vmem:[%s1 + $0x2e90] sm:$0xff]
    %v1519 = vld [vmem:[%s1 + $0x2e98] sm:$0xff]
    %v1520 = vld [vmem:[%s1 + $0x2ea0] sm:$0xff]
    %v1521 = vld [vmem:[%s1 + $0x2ea8] sm:$0xff]
    %v1522 = vld [vmem:[%s1 + $0x2eb0] sm:$0xff]
    %v1523 = vld [vmem:[%s1 + $0x2eb8] sm:$0xff]
    %v1524 = vld [vmem:[%s1 + $0x2ec0] sm:$0xff]
    %v1525 = vld [vmem:[%s1 + $0x2ec8] sm:$0xff]
    %v1526 = vld [vmem:[%s1 + $0x2ed0] sm:$0xff]
    %v1527 = vld [vmem:[%s1 + $0x2ed8] sm:$0xff]
    %v1528 = vld [vmem:[%s1 + $0x2ee0] sm:$0xff]
    %v1529 = vld [vmem:[%s1 + $0x2ee8] sm:$0xff]
    %v1530 = vld [vmem:[%s1 + $0x2ef0] sm:$0xff]
    %v1531 = vld [vmem:[%s1 + $0x2ef8] sm:$0xff]
    %v1532 = vld [vmem:[%s1 + $0x2f00] sm:$0xff]
    %v1533 = vld [vmem:[%s1 + $0x2f08] sm:$0xff]
    %v1534 = vld [vmem:[%s1 + $0x2f10] sm:$0xff]
    %v1535 = vld [vmem:[%s1 + $0x2f18] sm:$0xff]
    %v1536 = vld [vmem:[%s1 + $0x2f20] sm:$0xff]
    %v1537 = vld [vmem:[%s1 + $0x2f28] sm:$0xff]
    %v1538 = vld [vmem:[%s1 + $0x2f30] sm:$0xff]
    %v1539 = vld [vmem:[%s1 + $0x2f38] sm:$0xff]
    %v1540 = vld [vmem:[%s1 + $0x2f40] sm:$0xff]
    %v1541 = vld [vmem:[%s1 + $0x2f48] sm:$0xff]
    %v1542 = vld [vmem:[%s1 + $0x2f50] sm:$0xff]
    %v1543 = vld [vmem:[%s1 + $0x2f58] sm:$0xff]
    %v1544 = vld [vmem:[%s1 + $0x2f60] sm:$0xff]
    %v1545 = vld [vmem:[%s1 + $0x2f68] sm:$0xff]
    %v1546 = vld [vmem:[%s1 + $0x2f70] sm:$0xff]
    %v1547 = vld [vmem:[%s1 + $0x2f78] sm:$0xff]
    %v1548 = vld [vmem:[%s1 + $0x2f80] sm:$0xff]
    %v1549 = vld [vmem:[%s1 + $0x2f88] sm:$0xff]
    %v1550 = vld [vmem:[%s1 + $0x2f90] sm:$0xff]
    %v1551 = vld [vmem:[%s1 + $0x2f98] sm:$0xff]
    %v1552 = vld [vmem:[%s1 + $0x2fa0] sm:$0xff]
    %v1553 = vld [vmem:[%s1 + $0x2fa8] sm:$0xff]
    %v1554 = vld [vmem:[%s1 + $0x2fb0] sm:$0xff]
    %v1555 = vld [vmem:[%s1 + $0x2fb8] sm:$0xff]
    %v1556 = vld [vmem:[%s1 + $0x2fc0] sm:$0xff]
    %v1557 = vld [vmem:[%s1 + $0x2fc8] sm:$0xff]
    %v1558 = vld [vmem:[%s1 + $0x2fd0] sm:$0xff]
    %v1559 = vld [vmem:[%s1 + $0x2fd8] sm:$0xff]
    %v1560 = vld [vmem:[%s1 + $0x2fe0] sm:$0xff]
    %v1561 = vld [vmem:[%s1 + $0x2fe8] sm:$0xff]
    %v1562 = vld [vmem:[%s1 + $0x2ff0] sm:$0xff]
    %v1563 = vld [vmem:[%s1 + $0x2ff8] sm:$0xff]
    %v1564 = vld [vmem:[%s1 + $0x3000] sm:$0xff]
    %v1565 = vld [vmem:[%s1 + $0x3008] sm:$0xff]
    %v1566 = vld [vmem:[%s1 + $0x3010] sm:$0xff]
    %v1567 = vld [vmem:[%s1 + $0x3018] sm:$0xff]
    %v1568 = vld [vmem:[%s1 + $0x3020] sm:$0xff]
    %v1569 = vld [vmem:[%s1 + $0x3028] sm:$0xff]
    %v1570 = vld [vmem:[%s1 + $0x3030] sm:$0xff]
    %v1571 = vld [vmem:[%s1 + $0x3038] sm:$0xff]
    %v1572 = vld [vmem:[%s1 + $0x3040] sm:$0xff]
    %v1573 = vld [vmem:[%s1 + $0x3048] sm:$0xff]
    %v1574 = vld [vmem:[%s1 + $0x3050] sm:$0xff]
    %v1575 = vld [vmem:[%s1 + $0x3058] sm:$0xff]
    %v1576 = vld [vmem:[%s1 + $0x3060] sm:$0xff]
    %v1577 = vld [vmem:[%s1 + $0x3068] sm:$0xff]
    %v1578 = vld [vmem:[%s1 + $0x3070] sm:$0xff]
    %v1579 = vld [vmem:[%s1 + $0x3078] sm:$0xff]
    %v1580 = vld [vmem:[%s1 + $0x3080] sm:$0xff]
    %v1581 = vld [vmem:[%s1 + $0x3088] sm:$0xff]
    %v1582 = vld [vmem:[%s1 + $0x3090] sm:$0xff]
    %v1583 = vld [vmem:[%s1 + $0x3098] sm:$0xff]
    %v1584 = vld [vmem:[%s1 + $0x30a0] sm:$0xff]
    %v1585 = vld [vmem:[%s1 + $0x30a8] sm:$0xff]
    %v1586 = vld [vmem:[%s1 + $0x30b0] sm:$0xff]
    %v1587 = vld [vmem:[%s1 + $0x30b8] sm:$0xff]
    %v1588 = vld [vmem:[%s1 + $0x30c0] sm:$0xff]
    %v1589 = vld [vmem:[%s1 + $0x30c8] sm:$0xff]
    %v1590 = vld [vmem:[%s1 + $0x30d0] sm:$0xff]
    %v1591 = vld [vmem:[%s1 + $0x30d8] sm:$0xff]
    %v1592 = vld [vmem:[%s1 + $0x30e0] sm:$0xff]
    %v1593 = vld [vmem:[%s1 + $0x30e8] sm:$0xff]
    %v1594 = vld [vmem:[%s1 + $0x30f0] sm:$0xff]
    %v1595 = vld [vmem:[%s1 + $0x30f8] sm:$0xff]
    %v1596 = vld [vmem:[%s2] sm:$0xf]
    %v1598 = vperm.slane %v1596, 0
    %v1599 = vperm.slane %v1596, 1
    %v1600 = vperm.slane %v1596, 2
    %v1601 = vperm.slane %v1596, 3
    %1613 = vst [vmem:[#allocation1] ss:$4 sm:$0xff] %v21
    %s1614 = scalar_lea.vmem [#allocation1], 32
    %1615 = vst [vmem:[%s1614] ss:$4 sm:$0xff] %v22
    %v1616 = vld.sshfl [vmem:[#allocation1] sm:$0xff pattern:$0x73625140]
    %v1617 = vld.sshfl [vmem:[#allocation1 + $0x8] sm:$0xff pattern:$0x73625140]
    %v1618 = vld.sshfl [vmem:[#allocation1 + $0x10] sm:$0xff pattern:$0x73625140]
    %v1619 = vld.sshfl [vmem:[#allocation1 + $0x18] sm:$0xff pattern:$0x73625140]
    %v1620 = vld.sshfl [vmem:[#allocation1 + $0x20] sm:$0xff pattern:$0x73625140]
    %v1621 = vld.sshfl [vmem:[#allocation1 + $0x28] sm:$0xff pattern:$0x73625140]
    %v1622 = vld.sshfl [vmem:[#allocation1 + $0x30] sm:$0xff pattern:$0x73625140]
    %v1623 = vld.sshfl [vmem:[#allocation1 + $0x38] sm:$0xff pattern:$0x73625140]
    %1624 = vst [vmem:[#allocation1] ss:$4 sm:$0xff] %v23
    %1625 = vst [vmem:[%s1614] ss:$4 sm:$0xff] %v24
    %v1626 = vld.sshfl [vmem:[#allocation1] sm:$0xff pattern:$0x73625140]
    %v1627 = vld.sshfl [vmem:[#allocation1 + $0x8] sm:$0xff pattern:$0x73625140]
    %v1628 = vld.sshfl [vmem:[#allocation1 + $0x10] sm:$0xff pattern:$0x73625140]
    %v1629 = vld.sshfl [vmem:[#allocation1 + $0x18] sm:$0xff pattern:$0x73625140]
    %v1630 = vld.sshfl [vmem:[#allocation1 + $0x20] sm:$0xff pattern:$0x73625140]
    %v1631 = vld.sshfl [vmem:[#allocation1 + $0x28] sm:$0xff pattern:$0x73625140]
    %v1632 = vld.sshfl [vmem:[#allocation1 + $0x30] sm:$0xff pattern:$0x73625140]
    %v1633 = vld.sshfl [vmem:[#allocation1 + $0x38] sm:$0xff pattern:$0x73625140]
    %1634 = vst [vmem:[#allocation1] ss:$4 sm:$0xff] %v25
    %1635 = vst [vmem:[%s1614] ss:$4 sm:$0xff] %v26
    %v1636 = vld.sshfl [vmem:[#allocation1] sm:$0xff pattern:$0x73625140]
    %v1637 = vld.sshfl [vmem:[#allocation1 + $0x8] sm:$0xff pattern:$0x73625140]
    %v1638 = vld.sshfl [vmem:[#allocation1 + $0x10] sm:$0xff pattern:$0x73625140]
    %v1639 = vld.sshfl [vmem:[#allocation1 + $0x18] sm:$0xff pattern:$0x73625140]
    %v1640 = vld.sshfl [vmem:[#allocation1 + $0x20] sm:$0xff pattern:$0x73625140]
    %v1641 = vld.sshfl [vmem:[#allocation1 + $0x28] sm:$0xff pattern:$0x73625140]
    %v1642 = vld.sshfl [vmem:[#allocation1 + $0x30] sm:$0xff pattern:$0x73625140]
    %v1643 = vld.sshfl [vmem:[#allocation1 + $0x38] sm:$0xff pattern:$0x73625140]
    %1644 = vst [vmem:[#allocation1] ss:$4 sm:$0xff] %v27
    %v1645 = vld.sshfl [vmem:[#allocation1] sm:$0xff pattern:$0x73625140]
    %vm1670 = vcmask 523264
    %v1671 = vsel %vm1670, %v1645, 0
    %1673 = vmatpush.msra.mxu0 %v88
    %1674 = vmatpush.msra.mxu0 %v84
    %1675 = vmatpush.msra.mxu0 %v80
    %1676 = vmatpush.msra.mxu0 %v76
    %1677 = vmatpush.msra.mxu0 %v72
    %1678 = vmatpush.msra.mxu0 %v68
    %1679 = vmatpush.msra.mxu0 %v64
    %1680 = vmatpush.msra.mxu0 %v60
    %1681 = vmatpush.msra.mxu0 %v56
    %1682 = vmatpush.msra.mxu0 %v52
    %1683 = vmatpush.msra.mxu0 %v48
    %1684 = vmatpush.msra.mxu0 %v44
    %1685 = vmatpush.msra.mxu0 %v40
    %1686 = vmatpush.msra.mxu0 %v36
    %1687 = vmatpush.msra.mxu0 %v32
    %1688 = vmatpush.msra.mxu0 %v28
    %1689 = vmatmul.f32.gmra.mxu0 %v1616
    %v1690 = vpop.f32.mrf.mxu0
    %v1691 = vadd.f32 %v1598, %v1690
    %1692 = vdwg.mxu0
    %1693 = vmatpush.msra.mxu0 %v152
    %1694 = vmatpush.msra.mxu0 %v148
    %1695 = vmatpush.msra.mxu0 %v144
    %1696 = vmatpush.msra.mxu0 %v140
    %1697 = vmatpush.msra.mxu0 %v136
    %1698 = vmatpush.msra.mxu0 %v132
    %1699 = vmatpush.msra.mxu0 %v128
    %1700 = vmatpush.msra.mxu0 %v124
    %1701 = vmatpush.msra.mxu0 %v120
    %1702 = vmatpush.msra.mxu0 %v116
    %1703 = vmatpush.msra.mxu0 %v112
    %1704 = vmatpush.msra.mxu0 %v108
    %1705 = vmatpush.msra.mxu0 %v104
    %1706 = vmatpush.msra.mxu0 %v100
    %1707 = vmatpush.msra.mxu0 %v96
    %1708 = vmatpush.msra.mxu0 %v92
    %1709 = vmatmul.f32.gmra.mxu0 %v1617
    %v1710 = vpop.f32.mrf.mxu0
    %v1711 = vadd.f32 %v1691, %v1710
    %1712 = vdwg.mxu0
    %1713 = vmatpush.msra.mxu0 %v216
    %1714 = vmatpush.msra.mxu0 %v212
    %1715 = vmatpush.msra.mxu0 %v208
    %1716 = vmatpush.msra.mxu0 %v204
    %1717 = vmatpush.msra.mxu0 %v200
    %1718 = vmatpush.msra.mxu0 %v196
    %1719 = vmatpush.msra.mxu0 %v192
    %1720 = vmatpush.msra.mxu0 %v188
    %1721 = vmatpush.msra.mxu0 %v184
    %1722 = vmatpush.msra.mxu0 %v180
    %1723 = vmatpush.msra.mxu0 %v176
    %1724 = vmatpush.msra.mxu0 %v172
    %1725 = vmatpush.msra.mxu0 %v168
    %1726 = vmatpush.msra.mxu0 %v164
    %1727 = vmatpush.msra.mxu0 %v160
    %1728 = vmatpush.msra.mxu0 %v156
    %1729 = vmatmul.f32.gmra.mxu0 %v1618
    %v1730 = vpop.f32.mrf.mxu0
    %v1731 = vadd.f32 %v1711, %v1730
    %1732 = vdwg.mxu0
    %1733 = vmatpush.msra.mxu0 %v280
    %1734 = vmatpush.msra.mxu0 %v276
    %1735 = vmatpush.msra.mxu0 %v272
    %1736 = vmatpush.msra.mxu0 %v268
    %1737 = vmatpush.msra.mxu0 %v264
    %1738 = vmatpush.msra.mxu0 %v260
    %1739 = vmatpush.msra.mxu0 %v256
    %1740 = vmatpush.msra.mxu0 %v252
    %1741 = vmatpush.msra.mxu0 %v248
    %1742 = vmatpush.msra.mxu0 %v244
    %1743 = vmatpush.msra.mxu0 %v240
    %1744 = vmatpush.msra.mxu0 %v236
    %1745 = vmatpush.msra.mxu0 %v232
    %1746 = vmatpush.msra.mxu0 %v228
    %1747 = vmatpush.msra.mxu0 %v224
    %1748 = vmatpush.msra.mxu0 %v220
    %1749 = vmatmul.f32.gmra.mxu0 %v1619
    %v1750 = vpop.f32.mrf.mxu0
    %v1751 = vadd.f32 %v1731, %v1750
    %1752 = vdwg.mxu0
    %1753 = vmatpush.msra.mxu0 %v344
    %1754 = vmatpush.msra.mxu0 %v340
    %1755 = vmatpush.msra.mxu0 %v336
    %1756 = vmatpush.msra.mxu0 %v332
    %1757 = vmatpush.msra.mxu0 %v328
    %1758 = vmatpush.msra.mxu0 %v324
    %1759 = vmatpush.msra.mxu0 %v320
    %1760 = vmatpush.msra.mxu0 %v316
    %1761 = vmatpush.msra.mxu0 %v312
    %1762 = vmatpush.msra.mxu0 %v308
    %1763 = vmatpush.msra.mxu0 %v304
    %1764 = vmatpush.msra.mxu0 %v300
    %1765 = vmatpush.msra.mxu0 %v296
    %1766 = vmatpush.msra.mxu0 %v292
    %1767 = vmatpush.msra.mxu0 %v288
    %1768 = vmatpush.msra.mxu0 %v284
    %1769 = vmatmul.f32.gmra.mxu0 %v1620
    %v1770 = vpop.f32.mrf.mxu0
    %v1771 = vadd.f32 %v1751, %v1770
    %1772 = vdwg.mxu0
    %1773 = vmatpush.msra.mxu0 %v408
    %1774 = vmatpush.msra.mxu0 %v404
    %1775 = vmatpush.msra.mxu0 %v400
    %1776 = vmatpush.msra.mxu0 %v396
    %1777 = vmatpush.msra.mxu0 %v392
    %1778 = vmatpush.msra.mxu0 %v388
    %1779 = vmatpush.msra.mxu0 %v384
    %1780 = vmatpush.msra.mxu0 %v380
    %1781 = vmatpush.msra.mxu0 %v376
    %1782 = vmatpush.msra.mxu0 %v372
    %1783 = vmatpush.msra.mxu0 %v368
    %1784 = vmatpush.msra.mxu0 %v364
    %1785 = vmatpush.msra.mxu0 %v360
    %1786 = vmatpush.msra.mxu0 %v356
    %1787 = vmatpush.msra.mxu0 %v352
    %1788 = vmatpush.msra.mxu0 %v348
    %1789 = vmatmul.f32.gmra.mxu0 %v1621
    %v1790 = vpop.f32.mrf.mxu0
    %v1791 = vadd.f32 %v1771, %v1790
    %1792 = vdwg.mxu0
    %1793 = vmatpush.msra.mxu0 %v472
    %1794 = vmatpush.msra.mxu0 %v468
    %1795 = vmatpush.msra.mxu0 %v464
    %1796 = vmatpush.msra.mxu0 %v460
    %1797 = vmatpush.msra.mxu0 %v456
    %1798 = vmatpush.msra.mxu0 %v452
    %1799 = vmatpush.msra.mxu0 %v448
    %1800 = vmatpush.msra.mxu0 %v444
    %1801 = vmatpush.msra.mxu0 %v440
    %1802 = vmatpush.msra.mxu0 %v436
    %1803 = vmatpush.msra.mxu0 %v432
    %1804 = vmatpush.msra.mxu0 %v428
    %1805 = vmatpush.msra.mxu0 %v424
    %1806 = vmatpush.msra.mxu0 %v420
    %1807 = vmatpush.msra.mxu0 %v416
    %1808 = vmatpush.msra.mxu0 %v412
    %1809 = vmatmul.f32.gmra.mxu0 %v1622
    %v1810 = vpop.f32.mrf.mxu0
    %v1811 = vadd.f32 %v1791, %v1810
    %1812 = vdwg.mxu0
    %1813 = vmatpush.msra.mxu0 %v536
    %1814 = vmatpush.msra.mxu0 %v532
    %1815 = vmatpush.msra.mxu0 %v528
    %1816 = vmatpush.msra.mxu0 %v524
    %1817 = vmatpush.msra.mxu0 %v520
    %1818 = vmatpush.msra.mxu0 %v516
    %1819 = vmatpush.msra.mxu0 %v512
    %1820 = vmatpush.msra.mxu0 %v508
    %1821 = vmatpush.msra.mxu0 %v504
    %1822 = vmatpush.msra.mxu0 %v500
    %1823 = vmatpush.msra.mxu0 %v496
    %1824 = vmatpush.msra.mxu0 %v492
    %1825 = vmatpush.msra.mxu0 %v488
    %1826 = vmatpush.msra.mxu0 %v484
    %1827 = vmatpush.msra.mxu0 %v480
    %1828 = vmatpush.msra.mxu0 %v476
    %1829 = vmatmul.f32.gmra.mxu0 %v1623
    %v1830 = vpop.f32.mrf.mxu0
    %v1831 = vadd.f32 %v1811, %v1830
    %1832 = vdwg.mxu0
    %1833 = vmatpush.msra.mxu0 %v600
    %1834 = vmatpush.msra.mxu0 %v596
    %1835 = vmatpush.msra.mxu0 %v592
    %1836 = vmatpush.msra.mxu0 %v588
    %1837 = vmatpush.msra.mxu0 %v584
    %1838 = vmatpush.msra.mxu0 %v580
    %1839 = vmatpush.msra.mxu0 %v576
    %1840 = vmatpush.msra.mxu0 %v572
    %1841 = vmatpush.msra.mxu0 %v568
    %1842 = vmatpush.msra.mxu0 %v564
    %1843 = vmatpush.msra.mxu0 %v560
    %1844 = vmatpush.msra.mxu0 %v556
    %1845 = vmatpush.msra.mxu0 %v552
    %1846 = vmatpush.msra.mxu0 %v548
    %1847 = vmatpush.msra.mxu0 %v544
    %1848 = vmatpush.msra.mxu0 %v540
    %1849 = vmatmul.f32.gmra.mxu0 %v1626
    %v1850 = vpop.f32.mrf.mxu0
    %v1851 = vadd.f32 %v1831, %v1850
    %1852 = vdwg.mxu0
    %1853 = vmatpush.msra.mxu0 %v664
    %1854 = vmatpush.msra.mxu0 %v660
    %1855 = vmatpush.msra.mxu0 %v656
    %1856 = vmatpush.msra.mxu0 %v652
    %1857 = vmatpush.msra.mxu0 %v648
    %1858 = vmatpush.msra.mxu0 %v644
    %1859 = vmatpush.msra.mxu0 %v640
    %1860 = vmatpush.msra.mxu0 %v636
    %1861 = vmatpush.msra.mxu0 %v632
    %1862 = vmatpush.msra.mxu0 %v628
    %1863 = vmatpush.msra.mxu0 %v624
    %1864 = vmatpush.msra.mxu0 %v620
    %1865 = vmatpush.msra.mxu0 %v616
    %1866 = vmatpush.msra.mxu0 %v612
    %1867 = vmatpush.msra.mxu0 %v608
    %1868 = vmatpush.msra.mxu0 %v604
    %1869 = vmatmul.f32.gmra.mxu0 %v1627
    %v1870 = vpop.f32.mrf.mxu0
    %v1871 = vadd.f32 %v1851, %v1870
    %1872 = vdwg.mxu0
    %1873 = vmatpush.msra.mxu0 %v728
    %1874 = vmatpush.msra.mxu0 %v724
    %1875 = vmatpush.msra.mxu0 %v720
    %1876 = vmatpush.msra.mxu0 %v716
    %1877 = vmatpush.msra.mxu0 %v712
    %1878 = vmatpush.msra.mxu0 %v708
    %1879 = vmatpush.msra.mxu0 %v704
    %1880 = vmatpush.msra.mxu0 %v700
    %1881 = vmatpush.msra.mxu0 %v696
    %1882 = vmatpush.msra.mxu0 %v692
    %1883 = vmatpush.msra.mxu0 %v688
    %1884 = vmatpush.msra.mxu0 %v684
    %1885 = vmatpush.msra.mxu0 %v680
    %1886 = vmatpush.msra.mxu0 %v676
    %1887 = vmatpush.msra.mxu0 %v672
    %1888 = vmatpush.msra.mxu0 %v668
    %1889 = vmatmul.f32.gmra.mxu0 %v1628
    %v1890 = vpop.f32.mrf.mxu0
    %v1891 = vadd.f32 %v1871, %v1890
    %1892 = vdwg.mxu0
    %1893 = vmatpush.msra.mxu0 %v792
    %1894 = vmatpush.msra.mxu0 %v788
    %1895 = vmatpush.msra.mxu0 %v784
    %1896 = vmatpush.msra.mxu0 %v780
    %1897 = vmatpush.msra.mxu0 %v776
    %1898 = vmatpush.msra.mxu0 %v772
    %1899 = vmatpush.msra.mxu0 %v768
    %1900 = vmatpush.msra.mxu0 %v764
    %1901 = vmatpush.msra.mxu0 %v760
    %1902 = vmatpush.msra.mxu0 %v756
    %1903 = vmatpush.msra.mxu0 %v752
    %1904 = vmatpush.msra.mxu0 %v748
    %1905 = vmatpush.msra.mxu0 %v744
    %1906 = vmatpush.msra.mxu0 %v740
    %1907 = vmatpush.msra.mxu0 %v736
    %1908 = vmatpush.msra.mxu0 %v732
    %1909 = vmatmul.f32.gmra.mxu0 %v1629
    %v1910 = vpop.f32.mrf.mxu0
    %v1911 = vadd.f32 %v1891, %v1910
    %1912 = vdwg.mxu0
    %1913 = vmatpush.msra.mxu0 %v856
    %1914 = vmatpush.msra.mxu0 %v852
    %1915 = vmatpush.msra.mxu0 %v848
    %1916 = vmatpush.msra.mxu0 %v844
    %1917 = vmatpush.msra.mxu0 %v840
    %1918 = vmatpush.msra.mxu0 %v836
    %1919 = vmatpush.msra.mxu0 %v832
    %1920 = vmatpush.msra.mxu0 %v828
    %1921 = vmatpush.msra.mxu0 %v824
    %1922 = vmatpush.msra.mxu0 %v820
    %1923 = vmatpush.msra.mxu0 %v816
    %1924 = vmatpush.msra.mxu0 %v812
    %1925 = vmatpush.msra.mxu0 %v808
    %1926 = vmatpush.msra.mxu0 %v804
    %1927 = vmatpush.msra.mxu0 %v800
    %1928 = vmatpush.msra.mxu0 %v796
    %1929 = vmatmul.f32.gmra.mxu0 %v1630
    %v1930 = vpop.f32.mrf.mxu0
    %v1931 = vadd.f32 %v1911, %v1930
    %1932 = vdwg.mxu0
    %1933 = vmatpush.msra.mxu0 %v920
    %1934 = vmatpush.msra.mxu0 %v916
    %1935 = vmatpush.msra.mxu0 %v912
    %1936 = vmatpush.msra.mxu0 %v908
    %1937 = vmatpush.msra.mxu0 %v904
    %1938 = vmatpush.msra.mxu0 %v900
    %1939 = vmatpush.msra.mxu0 %v896
    %1940 = vmatpush.msra.mxu0 %v892
    %1941 = vmatpush.msra.mxu0 %v888
    %1942 = vmatpush.msra.mxu0 %v884
    %1943 = vmatpush.msra.mxu0 %v880
    %1944 = vmatpush.msra.mxu0 %v876
    %1945 = vmatpush.msra.mxu0 %v872
    %1946 = vmatpush.msra.mxu0 %v868
    %1947 = vmatpush.msra.mxu0 %v864
    %1948 = vmatpush.msra.mxu0 %v860
    %1949 = vmatmul.f32.gmra.mxu0 %v1631
    %v1950 = vpop.f32.mrf.mxu0
    %v1951 = vadd.f32 %v1931, %v1950
    %1952 = vdwg.mxu0
    %1953 = vmatpush.msra.mxu0 %v984
    %1954 = vmatpush.msra.mxu0 %v980
    %1955 = vmatpush.msra.mxu0 %v976
    %1956 = vmatpush.msra.mxu0 %v972
    %1957 = vmatpush.msra.mxu0 %v968
    %1958 = vmatpush.msra.mxu0 %v964
    %1959 = vmatpush.msra.mxu0 %v960
    %1960 = vmatpush.msra.mxu0 %v956
    %1961 = vmatpush.msra.mxu0 %v952
    %1962 = vmatpush.msra.mxu0 %v948
    %1963 = vmatpush.msra.mxu0 %v944
    %1964 = vmatpush.msra.mxu0 %v940
    %1965 = vmatpush.msra.mxu0 %v936
    %1966 = vmatpush.msra.mxu0 %v932
    %1967 = vmatpush.msra.mxu0 %v928
    %1968 = vmatpush.msra.mxu0 %v924
    %1969 = vmatmul.f32.gmra.mxu0 %v1632
    %v1970 = vpop.f32.mrf.mxu0
    %v1971 = vadd.f32 %v1951, %v1970
    %1972 = vdwg.mxu0
    %1973 = vmatpush.msra.mxu0 %v1048
    %1974 = vmatpush.msra.mxu0 %v1044
    %1975 = vmatpush.msra.mxu0 %v1040
    %1976 = vmatpush.msra.mxu0 %v1036
    %1977 = vmatpush.msra.mxu0 %v1032
    %1978 = vmatpush.msra.mxu0 %v1028
    %1979 = vmatpush.msra.mxu0 %v1024
    %1980 = vmatpush.msra.mxu0 %v1020
    %1981 = vmatpush.msra.mxu0 %v1016
    %1982 = vmatpush.msra.mxu0 %v1012
    %1983 = vmatpush.msra.mxu0 %v1008
    %1984 = vmatpush.msra.mxu0 %v1004
    %1985 = vmatpush.msra.mxu0 %v1000
    %1986 = vmatpush.msra.mxu0 %v996
    %1987 = vmatpush.msra.mxu0 %v992
    %1988 = vmatpush.msra.mxu0 %v988
    %1989 = vmatmul.f32.gmra.mxu0 %v1633
    %v1990 = vpop.f32.mrf.mxu0
    %v1991 = vadd.f32 %v1971, %v1990
    %1992 = vdwg.mxu0
    %1993 = vmatpush.msra.mxu0 %v1112
    %1994 = vmatpush.msra.mxu0 %v1108
    %1995 = vmatpush.msra.mxu0 %v1104
    %1996 = vmatpush.msra.mxu0 %v1100
    %1997 = vmatpush.msra.mxu0 %v1096
    %1998 = vmatpush.msra.mxu0 %v1092
    %1999 = vmatpush.msra.mxu0 %v1088
    %2000 = vmatpush.msra.mxu0 %v1084
    %2001 = vmatpush.msra.mxu0 %v1080
    %2002 = vmatpush.msra.mxu0 %v1076
    %2003 = vmatpush.msra.mxu0 %v1072
    %2004 = vmatpush.msra.mxu0 %v1068
    %2005 = vmatpush.msra.mxu0 %v1064
    %2006 = vmatpush.msra.mxu0 %v1060
    %2007 = vmatpush.msra.mxu0 %v1056
    %2008 = vmatpush.msra.mxu0 %v1052
    %2009 = vmatmul.f32.gmra.mxu0 %v1636
    %v2010 = vpop.f32.mrf.mxu0
    %v2011 = vadd.f32 %v1991, %v2010
    %2012 = vdwg.mxu0
    %2013 = vmatpush.msra.mxu0 %v1176
    %2014 = vmatpush.msra.mxu0 %v1172
    %2015 = vmatpush.msra.mxu0 %v1168
    %2016 = vmatpush.msra.mxu0 %v1164
    %2017 = vmatpush.msra.mxu0 %v1160
    %2018 = vmatpush.msra.mxu0 %v1156
    %2019 = vmatpush.msra.mxu0 %v1152
    %2020 = vmatpush.msra.mxu0 %v1148
    %2021 = vmatpush.msra.mxu0 %v1144
    %2022 = vmatpush.msra.mxu0 %v1140
    %2023 = vmatpush.msra.mxu0 %v1136
    %2024 = vmatpush.msra.mxu0 %v1132
    %2025 = vmatpush.msra.mxu0 %v1128
    %2026 = vmatpush.msra.mxu0 %v1124
    %2027 = vmatpush.msra.mxu0 %v1120
    %2028 = vmatpush.msra.mxu0 %v1116
    %2029 = vmatmul.f32.gmra.mxu0 %v1637
    %v2030 = vpop.f32.mrf.mxu0
    %v2031 = vadd.f32 %v2011, %v2030
    %2032 = vdwg.mxu0
    %2033 = vmatpush.msra.mxu0 %v1240
    %2034 = vmatpush.msra.mxu0 %v1236
    %2035 = vmatpush.msra.mxu0 %v1232
    %2036 = vmatpush.msra.mxu0 %v1228
    %2037 = vmatpush.msra.mxu0 %v1224
    %2038 = vmatpush.msra.mxu0 %v1220
    %2039 = vmatpush.msra.mxu0 %v1216
    %2040 = vmatpush.msra.mxu0 %v1212
    %2041 = vmatpush.msra.mxu0 %v1208
    %2042 = vmatpush.msra.mxu0 %v1204
    %2043 = vmatpush.msra.mxu0 %v1200
    %2044 = vmatpush.msra.mxu0 %v1196
    %2045 = vmatpush.msra.mxu0 %v1192
    %2046 = vmatpush.msra.mxu0 %v1188
    %2047 = vmatpush.msra.mxu0 %v1184
    %2048 = vmatpush.msra.mxu0 %v1180
    %2049 = vmatmul.f32.gmra.mxu0 %v1638
    %v2050 = vpop.f32.mrf.mxu0
    %v2051 = vadd.f32 %v2031, %v2050
    %2052 = vdwg.mxu0
    %2053 = vmatpush.msra.mxu0 %v1304
    %2054 = vmatpush.msra.mxu0 %v1300
    %2055 = vmatpush.msra.mxu0 %v1296
    %2056 = vmatpush.msra.mxu0 %v1292
    %2057 = vmatpush.msra.mxu0 %v1288
    %2058 = vmatpush.msra.mxu0 %v1284
    %2059 = vmatpush.msra.mxu0 %v1280
    %2060 = vmatpush.msra.mxu0 %v1276
    %2061 = vmatpush.msra.mxu0 %v1272
    %2062 = vmatpush.msra.mxu0 %v1268
    %2063 = vmatpush.msra.mxu0 %v1264
    %2064 = vmatpush.msra.mxu0 %v1260
    %2065 = vmatpush.msra.mxu0 %v1256
    %2066 = vmatpush.msra.mxu0 %v1252
    %2067 = vmatpush.msra.mxu0 %v1248
    %2068 = vmatpush.msra.mxu0 %v1244
    %2069 = vmatmul.f32.gmra.mxu0 %v1639
    %v2070 = vpop.f32.mrf.mxu0
    %v2071 = vadd.f32 %v2051, %v2070
    %2072 = vdwg.mxu0
    %2073 = vmatpush.msra.mxu0 %v1368
    %2074 = vmatpush.msra.mxu0 %v1364
    %2075 = vmatpush.msra.mxu0 %v1360
    %2076 = vmatpush.msra.mxu0 %v1356
    %2077 = vmatpush.msra.mxu0 %v1352
    %2078 = vmatpush.msra.mxu0 %v1348
    %2079 = vmatpush.msra.mxu0 %v1344
    %2080 = vmatpush.msra.mxu0 %v1340
    %2081 = vmatpush.msra.mxu0 %v1336
    %2082 = vmatpush.msra.mxu0 %v1332
    %2083 = vmatpush.msra.mxu0 %v1328
    %2084 = vmatpush.msra.mxu0 %v1324
    %2085 = vmatpush.msra.mxu0 %v1320
    %2086 = vmatpush.msra.mxu0 %v1316
    %2087 = vmatpush.msra.mxu0 %v1312
    %2088 = vmatpush.msra.mxu0 %v1308
    %2089 = vmatmul.f32.gmra.mxu0 %v1640
    %v2090 = vpop.f32.mrf.mxu0
    %v2091 = vadd.f32 %v2071, %v2090
    %2092 = vdwg.mxu0
    %2093 = vmatpush.msra.mxu0 %v1432
    %2094 = vmatpush.msra.mxu0 %v1428
    %2095 = vmatpush.msra.mxu0 %v1424
    %2096 = vmatpush.msra.mxu0 %v1420
    %2097 = vmatpush.msra.mxu0 %v1416
    %2098 = vmatpush.msra.mxu0 %v1412
    %2099 = vmatpush.msra.mxu0 %v1408
    %2100 = vmatpush.msra.mxu0 %v1404
    %2101 = vmatpush.msra.mxu0 %v1400
    %2102 = vmatpush.msra.mxu0 %v1396
    %2103 = vmatpush.msra.mxu0 %v1392
    %2104 = vmatpush.msra.mxu0 %v1388
    %2105 = vmatpush.msra.mxu0 %v1384
    %2106 = vmatpush.msra.mxu0 %v1380
    %2107 = vmatpush.msra.mxu0 %v1376
    %2108 = vmatpush.msra.mxu0 %v1372
    %2109 = vmatmul.f32.gmra.mxu0 %v1641
    %v2110 = vpop.f32.mrf.mxu0
    %v2111 = vadd.f32 %v2091, %v2110
    %2112 = vdwg.mxu0
    %2113 = vmatpush.msra.mxu0 %v1496
    %2114 = vmatpush.msra.mxu0 %v1492
    %2115 = vmatpush.msra.mxu0 %v1488
    %2116 = vmatpush.msra.mxu0 %v1484
    %2117 = vmatpush.msra.mxu0 %v1480
    %2118 = vmatpush.msra.mxu0 %v1476
    %2119 = vmatpush.msra.mxu0 %v1472
    %2120 = vmatpush.msra.mxu0 %v1468
    %2121 = vmatpush.msra.mxu0 %v1464
    %2122 = vmatpush.msra.mxu0 %v1460
    %2123 = vmatpush.msra.mxu0 %v1456
    %2124 = vmatpush.msra.mxu0 %v1452
    %2125 = vmatpush.msra.mxu0 %v1448
    %2126 = vmatpush.msra.mxu0 %v1444
    %2127 = vmatpush.msra.mxu0 %v1440
    %2128 = vmatpush.msra.mxu0 %v1436
    %2129 = vmatmul.f32.gmra.mxu0 %v1642
    %v2130 = vpop.f32.mrf.mxu0
    %v2131 = vadd.f32 %v2111, %v2130
    %2132 = vdwg.mxu0
    %2133 = vmatpush.msra.mxu0 %v1560
    %2134 = vmatpush.msra.mxu0 %v1556
    %2135 = vmatpush.msra.mxu0 %v1552
    %2136 = vmatpush.msra.mxu0 %v1548
    %2137 = vmatpush.msra.mxu0 %v1544
    %2138 = vmatpush.msra.mxu0 %v1540
    %2139 = vmatpush.msra.mxu0 %v1536
    %2140 = vmatpush.msra.mxu0 %v1532
    %2141 = vmatpush.msra.mxu0 %v1528
    %2142 = vmatpush.msra.mxu0 %v1524
    %2143 = vmatpush.msra.mxu0 %v1520
    %2144 = vmatpush.msra.mxu0 %v1516
    %2145 = vmatpush.msra.mxu0 %v1512
    %2146 = vmatpush.msra.mxu0 %v1508
    %2147 = vmatpush.msra.mxu0 %v1504
    %2148 = vmatpush.msra.mxu0 %v1500
    %2149 = vmatmul.f32.gmra.mxu0 %v1643
    %v2150 = vpop.f32.mrf.mxu0
    %v2151 = vadd.f32 %v2131, %v2150
    %2152 = vdwg.mxu0
    %2153 = vmatpush.msra.mxu0 0.0
    %2154 = vmatpush.msra.mxu0 0.0
    %2155 = vmatpush.msra.mxu0 0.0
    %2156 = vmatpush.msra.mxu0 0.0
    %2157 = vmatpush.msra.mxu0 0.0
    %2158 = vmatpush.msra.mxu0 0.0
    %2159 = vmatpush.msra.mxu0 0.0
    %2160 = vmatpush.msra.mxu0 0.0
    %2161 = vmatpush.msra.mxu0 %v1592
    %2162 = vmatpush.msra.mxu0 %v1588
    %2163 = vmatpush.msra.mxu0 %v1584
    %2164 = vmatpush.msra.mxu0 %v1580
    %2165 = vmatpush.msra.mxu0 %v1576
    %2166 = vmatpush.msra.mxu0 %v1572
    %2167 = vmatpush.msra.mxu0 %v1568
    %2168 = vmatpush.msra.mxu0 %v1564
    %2169 = vmatmul.f32.gmra.mxu0 %v1671
    %v2170 = vpop.f32.mrf.mxu0
    %v2171 = vadd.f32 %v2151, %v2170
    %2172 = vdwg.mxu0
    %2173 = vmatpush.msra.mxu0 %v89
    %2174 = vmatpush.msra.mxu0 %v85
    %2175 = vmatpush.msra.mxu0 %v81
    %2176 = vmatpush.msra.mxu0 %v77
    %2177 = vmatpush.msra.mxu0 %v73
    %2178 = vmatpush.msra.mxu0 %v69
    %2179 = vmatpush.msra.mxu0 %v65
    %2180 = vmatpush.msra.mxu0 %v61
    %2181 = vmatpush.msra.mxu0 %v57
    %2182 = vmatpush.msra.mxu0 %v53
    %2183 = vmatpush.msra.mxu0 %v49
    %2184 = vmatpush.msra.mxu0 %v45
    %2185 = vmatpush.msra.mxu0 %v41
    %2186 = vmatpush.msra.mxu0 %v37
    %2187 = vmatpush.msra.mxu0 %v33
    %2188 = vmatpush.msra.mxu0 %v29
    %2189 = vmatmul.f32.gmra.mxu0 %v1616
    %v2190 = vpop.f32.mrf.mxu0
    %v2191 = vadd.f32 %v1599, %v2190
    %2192 = vdwg.mxu0
    %2193 = vmatpush.msra.mxu0 %v153
    %2194 = vmatpush.msra.mxu0 %v149
    %2195 = vmatpush.msra.mxu0 %v145
    %2196 = vmatpush.msra.mxu0 %v141
    %2197 = vmatpush.msra.mxu0 %v137
    %2198 = vmatpush.msra.mxu0 %v133
    %2199 = vmatpush.msra.mxu0 %v129
    %2200 = vmatpush.msra.mxu0 %v125
    %2201 = vmatpush.msra.mxu0 %v121
    %2202 = vmatpush.msra.mxu0 %v117
    %2203 = vmatpush.msra.mxu0 %v113
    %2204 = vmatpush.msra.mxu0 %v109
    %2205 = vmatpush.msra.mxu0 %v105
    %2206 = vmatpush.msra.mxu0 %v101
    %2207 = vmatpush.msra.mxu0 %v97
    %2208 = vmatpush.msra.mxu0 %v93
    %2209 = vmatmul.f32.gmra.mxu0 %v1617
    %v2210 = vpop.f32.mrf.mxu0
    %v2211 = vadd.f32 %v2191, %v2210
    %2212 = vdwg.mxu0
    %2213 = vmatpush.msra.mxu0 %v217
    %2214 = vmatpush.msra.mxu0 %v213
    %2215 = vmatpush.msra.mxu0 %v209
    %2216 = vmatpush.msra.mxu0 %v205
    %2217 = vmatpush.msra.mxu0 %v201
    %2218 = vmatpush.msra.mxu0 %v197
    %2219 = vmatpush.msra.mxu0 %v193
    %2220 = vmatpush.msra.mxu0 %v189
    %2221 = vmatpush.msra.mxu0 %v185
    %2222 = vmatpush.msra.mxu0 %v181
    %2223 = vmatpush.msra.mxu0 %v177
    %2224 = vmatpush.msra.mxu0 %v173
    %2225 = vmatpush.msra.mxu0 %v169
    %2226 = vmatpush.msra.mxu0 %v165
    %2227 = vmatpush.msra.mxu0 %v161
    %2228 = vmatpush.msra.mxu0 %v157
    %2229 = vmatmul.f32.gmra.mxu0 %v1618
    %v2230 = vpop.f32.mrf.mxu0
    %v2231 = vadd.f32 %v2211, %v2230
    %2232 = vdwg.mxu0
    %2233 = vmatpush.msra.mxu0 %v281
    %2234 = vmatpush.msra.mxu0 %v277
    %2235 = vmatpush.msra.mxu0 %v273
    %2236 = vmatpush.msra.mxu0 %v269
    %2237 = vmatpush.msra.mxu0 %v265
    %2238 = vmatpush.msra.mxu0 %v261
    %2239 = vmatpush.msra.mxu0 %v257
    %2240 = vmatpush.msra.mxu0 %v253
    %2241 = vmatpush.msra.mxu0 %v249
    %2242 = vmatpush.msra.mxu0 %v245
    %2243 = vmatpush.msra.mxu0 %v241
    %2244 = vmatpush.msra.mxu0 %v237
    %2245 = vmatpush.msra.mxu0 %v233
    %2246 = vmatpush.msra.mxu0 %v229
    %2247 = vmatpush.msra.mxu0 %v225
    %2248 = vmatpush.msra.mxu0 %v221
    %2249 = vmatmul.f32.gmra.mxu0 %v1619
    %v2250 = vpop.f32.mrf.mxu0
    %v2251 = vadd.f32 %v2231, %v2250
    %2252 = vdwg.mxu0
    %2253 = vmatpush.msra.mxu0 %v345
    %2254 = vmatpush.msra.mxu0 %v341
    %2255 = vmatpush.msra.mxu0 %v337
    %2256 = vmatpush.msra.mxu0 %v333
    %2257 = vmatpush.msra.mxu0 %v329
    %2258 = vmatpush.msra.mxu0 %v325
    %2259 = vmatpush.msra.mxu0 %v321
    %2260 = vmatpush.msra.mxu0 %v317
    %2261 = vmatpush.msra.mxu0 %v313
    %2262 = vmatpush.msra.mxu0 %v309
    %2263 = vmatpush.msra.mxu0 %v305
    %2264 = vmatpush.msra.mxu0 %v301
    %2265 = vmatpush.msra.mxu0 %v297
    %2266 = vmatpush.msra.mxu0 %v293
    %2267 = vmatpush.msra.mxu0 %v289
    %2268 = vmatpush.msra.mxu0 %v285
    %2269 = vmatmul.f32.gmra.mxu0 %v1620
    %v2270 = vpop.f32.mrf.mxu0
    %v2271 = vadd.f32 %v2251, %v2270
    %2272 = vdwg.mxu0
    %2273 = vmatpush.msra.mxu0 %v409
    %2274 = vmatpush.msra.mxu0 %v405
    %2275 = vmatpush.msra.mxu0 %v401
    %2276 = vmatpush.msra.mxu0 %v397
    %2277 = vmatpush.msra.mxu0 %v393
    %2278 = vmatpush.msra.mxu0 %v389
    %2279 = vmatpush.msra.mxu0 %v385
    %2280 = vmatpush.msra.mxu0 %v381
    %2281 = vmatpush.msra.mxu0 %v377
    %2282 = vmatpush.msra.mxu0 %v373
    %2283 = vmatpush.msra.mxu0 %v369
    %2284 = vmatpush.msra.mxu0 %v365
    %2285 = vmatpush.msra.mxu0 %v361
    %2286 = vmatpush.msra.mxu0 %v357
    %2287 = vmatpush.msra.mxu0 %v353
    %2288 = vmatpush.msra.mxu0 %v349
    %2289 = vmatmul.f32.gmra.mxu0 %v1621
    %v2290 = vpop.f32.mrf.mxu0
    %v2291 = vadd.f32 %v2271, %v2290
    %2292 = vdwg.mxu0
    %2293 = vmatpush.msra.mxu0 %v473
    %2294 = vmatpush.msra.mxu0 %v469
    %2295 = vmatpush.msra.mxu0 %v465
    %2296 = vmatpush.msra.mxu0 %v461
    %2297 = vmatpush.msra.mxu0 %v457
    %2298 = vmatpush.msra.mxu0 %v453
    %2299 = vmatpush.msra.mxu0 %v449
    %2300 = vmatpush.msra.mxu0 %v445
    %2301 = vmatpush.msra.mxu0 %v441
    %2302 = vmatpush.msra.mxu0 %v437
    %2303 = vmatpush.msra.mxu0 %v433
    %2304 = vmatpush.msra.mxu0 %v429
    %2305 = vmatpush.msra.mxu0 %v425
    %2306 = vmatpush.msra.mxu0 %v421
    %2307 = vmatpush.msra.mxu0 %v417
    %2308 = vmatpush.msra.mxu0 %v413
    %2309 = vmatmul.f32.gmra.mxu0 %v1622
    %v2310 = vpop.f32.mrf.mxu0
    %v2311 = vadd.f32 %v2291, %v2310
    %2312 = vdwg.mxu0
    %2313 = vmatpush.msra.mxu0 %v537
    %2314 = vmatpush.msra.mxu0 %v533
    %2315 = vmatpush.msra.mxu0 %v529
    %2316 = vmatpush.msra.mxu0 %v525
    %2317 = vmatpush.msra.mxu0 %v521
    %2318 = vmatpush.msra.mxu0 %v517
    %2319 = vmatpush.msra.mxu0 %v513
    %2320 = vmatpush.msra.mxu0 %v509
    %2321 = vmatpush.msra.mxu0 %v505
    %2322 = vmatpush.msra.mxu0 %v501
    %2323 = vmatpush.msra.mxu0 %v497
    %2324 = vmatpush.msra.mxu0 %v493
    %2325 = vmatpush.msra.mxu0 %v489
    %2326 = vmatpush.msra.mxu0 %v485
    %2327 = vmatpush.msra.mxu0 %v481
    %2328 = vmatpush.msra.mxu0 %v477
    %2329 = vmatmul.f32.gmra.mxu0 %v1623
    %v2330 = vpop.f32.mrf.mxu0
    %v2331 = vadd.f32 %v2311, %v2330
    %2332 = vdwg.mxu0
    %2333 = vmatpush.msra.mxu0 %v601
    %2334 = vmatpush.msra.mxu0 %v597
    %2335 = vmatpush.msra.mxu0 %v593
    %2336 = vmatpush.msra.mxu0 %v589
    %2337 = vmatpush.msra.mxu0 %v585
    %2338 = vmatpush.msra.mxu0 %v581
    %2339 = vmatpush.msra.mxu0 %v577
    %2340 = vmatpush.msra.mxu0 %v573
    %2341 = vmatpush.msra.mxu0 %v569
    %2342 = vmatpush.msra.mxu0 %v565
    %2343 = vmatpush.msra.mxu0 %v561
    %2344 = vmatpush.msra.mxu0 %v557
    %2345 = vmatpush.msra.mxu0 %v553
    %2346 = vmatpush.msra.mxu0 %v549
    %2347 = vmatpush.msra.mxu0 %v545
    %2348 = vmatpush.msra.mxu0 %v541
    %2349 = vmatmul.f32.gmra.mxu0 %v1626
    %v2350 = vpop.f32.mrf.mxu0
    %v2351 = vadd.f32 %v2331, %v2350
    %2352 = vdwg.mxu0
    %2353 = vmatpush.msra.mxu0 %v665
    %2354 = vmatpush.msra.mxu0 %v661
    %2355 = vmatpush.msra.mxu0 %v657
    %2356 = vmatpush.msra.mxu0 %v653
    %2357 = vmatpush.msra.mxu0 %v649
    %2358 = vmatpush.msra.mxu0 %v645
    %2359 = vmatpush.msra.mxu0 %v641
    %2360 = vmatpush.msra.mxu0 %v637
    %2361 = vmatpush.msra.mxu0 %v633
    %2362 = vmatpush.msra.mxu0 %v629
    %2363 = vmatpush.msra.mxu0 %v625
    %2364 = vmatpush.msra.mxu0 %v621
    %2365 = vmatpush.msra.mxu0 %v617
    %2366 = vmatpush.msra.mxu0 %v613
    %2367 = vmatpush.msra.mxu0 %v609
    %2368 = vmatpush.msra.mxu0 %v605
    %2369 = vmatmul.f32.gmra.mxu0 %v1627
    %v2370 = vpop.f32.mrf.mxu0
    %v2371 = vadd.f32 %v2351, %v2370
    %2372 = vdwg.mxu0
    %2373 = vmatpush.msra.mxu0 %v729
    %2374 = vmatpush.msra.mxu0 %v725
    %2375 = vmatpush.msra.mxu0 %v721
    %2376 = vmatpush.msra.mxu0 %v717
    %2377 = vmatpush.msra.mxu0 %v713
    %2378 = vmatpush.msra.mxu0 %v709
    %2379 = vmatpush.msra.mxu0 %v705
    %2380 = vmatpush.msra.mxu0 %v701
    %2381 = vmatpush.msra.mxu0 %v697
    %2382 = vmatpush.msra.mxu0 %v693
    %2383 = vmatpush.msra.mxu0 %v689
    %2384 = vmatpush.msra.mxu0 %v685
    %2385 = vmatpush.msra.mxu0 %v681
    %2386 = vmatpush.msra.mxu0 %v677
    %2387 = vmatpush.msra.mxu0 %v673
    %2388 = vmatpush.msra.mxu0 %v669
    %2389 = vmatmul.f32.gmra.mxu0 %v1628
    %v2390 = vpop.f32.mrf.mxu0
    %v2391 = vadd.f32 %v2371, %v2390
    %2392 = vdwg.mxu0
    %2393 = vmatpush.msra.mxu0 %v793
    %2394 = vmatpush.msra.mxu0 %v789
    %2395 = vmatpush.msra.mxu0 %v785
    %2396 = vmatpush.msra.mxu0 %v781
    %2397 = vmatpush.msra.mxu0 %v777
    %2398 = vmatpush.msra.mxu0 %v773
    %2399 = vmatpush.msra.mxu0 %v769
    %2400 = vmatpush.msra.mxu0 %v765
    %2401 = vmatpush.msra.mxu0 %v761
    %2402 = vmatpush.msra.mxu0 %v757
    %2403 = vmatpush.msra.mxu0 %v753
    %2404 = vmatpush.msra.mxu0 %v749
    %2405 = vmatpush.msra.mxu0 %v745
    %2406 = vmatpush.msra.mxu0 %v741
    %2407 = vmatpush.msra.mxu0 %v737
    %2408 = vmatpush.msra.mxu0 %v733
    %2409 = vmatmul.f32.gmra.mxu0 %v1629
    %v2410 = vpop.f32.mrf.mxu0
    %v2411 = vadd.f32 %v2391, %v2410
    %2412 = vdwg.mxu0
    %2413 = vmatpush.msra.mxu0 %v857
    %2414 = vmatpush.msra.mxu0 %v853
    %2415 = vmatpush.msra.mxu0 %v849
    %2416 = vmatpush.msra.mxu0 %v845
    %2417 = vmatpush.msra.mxu0 %v841
    %2418 = vmatpush.msra.mxu0 %v837
    %2419 = vmatpush.msra.mxu0 %v833
    %2420 = vmatpush.msra.mxu0 %v829
    %2421 = vmatpush.msra.mxu0 %v825
    %2422 = vmatpush.msra.mxu0 %v821
    %2423 = vmatpush.msra.mxu0 %v817
    %2424 = vmatpush.msra.mxu0 %v813
    %2425 = vmatpush.msra.mxu0 %v809
    %2426 = vmatpush.msra.mxu0 %v805
    %2427 = vmatpush.msra.mxu0 %v801
    %2428 = vmatpush.msra.mxu0 %v797
    %2429 = vmatmul.f32.gmra.mxu0 %v1630
    %v2430 = vpop.f32.mrf.mxu0
    %v2431 = vadd.f32 %v2411, %v2430
    %2432 = vdwg.mxu0
    %2433 = vmatpush.msra.mxu0 %v921
    %2434 = vmatpush.msra.mxu0 %v917
    %2435 = vmatpush.msra.mxu0 %v913
    %2436 = vmatpush.msra.mxu0 %v909
    %2437 = vmatpush.msra.mxu0 %v905
    %2438 = vmatpush.msra.mxu0 %v901
    %2439 = vmatpush.msra.mxu0 %v897
    %2440 = vmatpush.msra.mxu0 %v893
    %2441 = vmatpush.msra.mxu0 %v889
    %2442 = vmatpush.msra.mxu0 %v885
    %2443 = vmatpush.msra.mxu0 %v881
    %2444 = vmatpush.msra.mxu0 %v877
    %2445 = vmatpush.msra.mxu0 %v873
    %2446 = vmatpush.msra.mxu0 %v869
    %2447 = vmatpush.msra.mxu0 %v865
    %2448 = vmatpush.msra.mxu0 %v861
    %2449 = vmatmul.f32.gmra.mxu0 %v1631
    %v2450 = vpop.f32.mrf.mxu0
    %v2451 = vadd.f32 %v2431, %v2450
    %2452 = vdwg.mxu0
    %2453 = vmatpush.msra.mxu0 %v985
    %2454 = vmatpush.msra.mxu0 %v981
    %2455 = vmatpush.msra.mxu0 %v977
    %2456 = vmatpush.msra.mxu0 %v973
    %2457 = vmatpush.msra.mxu0 %v969
    %2458 = vmatpush.msra.mxu0 %v965
    %2459 = vmatpush.msra.mxu0 %v961
    %2460 = vmatpush.msra.mxu0 %v957
    %2461 = vmatpush.msra.mxu0 %v953
    %2462 = vmatpush.msra.mxu0 %v949
    %2463 = vmatpush.msra.mxu0 %v945
    %2464 = vmatpush.msra.mxu0 %v941
    %2465 = vmatpush.msra.mxu0 %v937
    %2466 = vmatpush.msra.mxu0 %v933
    %2467 = vmatpush.msra.mxu0 %v929
    %2468 = vmatpush.msra.mxu0 %v925
    %2469 = vmatmul.f32.gmra.mxu0 %v1632
    %v2470 = vpop.f32.mrf.mxu0
    %v2471 = vadd.f32 %v2451, %v2470
    %2472 = vdwg.mxu0
    %2473 = vmatpush.msra.mxu0 %v1049
    %2474 = vmatpush.msra.mxu0 %v1045
    %2475 = vmatpush.msra.mxu0 %v1041
    %2476 = vmatpush.msra.mxu0 %v1037
    %2477 = vmatpush.msra.mxu0 %v1033
    %2478 = vmatpush.msra.mxu0 %v1029
    %2479 = vmatpush.msra.mxu0 %v1025
    %2480 = vmatpush.msra.mxu0 %v1021
    %2481 = vmatpush.msra.mxu0 %v1017
    %2482 = vmatpush.msra.mxu0 %v1013
    %2483 = vmatpush.msra.mxu0 %v1009
    %2484 = vmatpush.msra.mxu0 %v1005
    %2485 = vmatpush.msra.mxu0 %v1001
    %2486 = vmatpush.msra.mxu0 %v997
    %2487 = vmatpush.msra.mxu0 %v993
    %2488 = vmatpush.msra.mxu0 %v989
    %2489 = vmatmul.f32.gmra.mxu0 %v1633
    %v2490 = vpop.f32.mrf.mxu0
    %v2491 = vadd.f32 %v2471, %v2490
    %2492 = vdwg.mxu0
    %2493 = vmatpush.msra.mxu0 %v1113
    %2494 = vmatpush.msra.mxu0 %v1109
    %2495 = vmatpush.msra.mxu0 %v1105
    %2496 = vmatpush.msra.mxu0 %v1101
    %2497 = vmatpush.msra.mxu0 %v1097
    %2498 = vmatpush.msra.mxu0 %v1093
    %2499 = vmatpush.msra.mxu0 %v1089
    %2500 = vmatpush.msra.mxu0 %v1085
    %2501 = vmatpush.msra.mxu0 %v1081
    %2502 = vmatpush.msra.mxu0 %v1077
    %2503 = vmatpush.msra.mxu0 %v1073
    %2504 = vmatpush.msra.mxu0 %v1069
    %2505 = vmatpush.msra.mxu0 %v1065
    %2506 = vmatpush.msra.mxu0 %v1061
    %2507 = vmatpush.msra.mxu0 %v1057
    %2508 = vmatpush.msra.mxu0 %v1053
    %2509 = vmatmul.f32.gmra.mxu0 %v1636
    %v2510 = vpop.f32.mrf.mxu0
    %v2511 = vadd.f32 %v2491, %v2510
    %2512 = vdwg.mxu0
    %2513 = vmatpush.msra.mxu0 %v1177
    %2514 = vmatpush.msra.mxu0 %v1173
    %2515 = vmatpush.msra.mxu0 %v1169
    %2516 = vmatpush.msra.mxu0 %v1165
    %2517 = vmatpush.msra.mxu0 %v1161
    %2518 = vmatpush.msra.mxu0 %v1157
    %2519 = vmatpush.msra.mxu0 %v1153
    %2520 = vmatpush.msra.mxu0 %v1149
    %2521 = vmatpush.msra.mxu0 %v1145
    %2522 = vmatpush.msra.mxu0 %v1141
    %2523 = vmatpush.msra.mxu0 %v1137
    %2524 = vmatpush.msra.mxu0 %v1133
    %2525 = vmatpush.msra.mxu0 %v1129
    %2526 = vmatpush.msra.mxu0 %v1125
    %2527 = vmatpush.msra.mxu0 %v1121
    %2528 = vmatpush.msra.mxu0 %v1117
    %2529 = vmatmul.f32.gmra.mxu0 %v1637
    %v2530 = vpop.f32.mrf.mxu0
    %v2531 = vadd.f32 %v2511, %v2530
    %2532 = vdwg.mxu0
    %2533 = vmatpush.msra.mxu0 %v1241
    %2534 = vmatpush.msra.mxu0 %v1237
    %2535 = vmatpush.msra.mxu0 %v1233
    %2536 = vmatpush.msra.mxu0 %v1229
    %2537 = vmatpush.msra.mxu0 %v1225
    %2538 = vmatpush.msra.mxu0 %v1221
    %2539 = vmatpush.msra.mxu0 %v1217
    %2540 = vmatpush.msra.mxu0 %v1213
    %2541 = vmatpush.msra.mxu0 %v1209
    %2542 = vmatpush.msra.mxu0 %v1205
    %2543 = vmatpush.msra.mxu0 %v1201
    %2544 = vmatpush.msra.mxu0 %v1197
    %2545 = vmatpush.msra.mxu0 %v1193
    %2546 = vmatpush.msra.mxu0 %v1189
    %2547 = vmatpush.msra.mxu0 %v1185
    %2548 = vmatpush.msra.mxu0 %v1181
    %2549 = vmatmul.f32.gmra.mxu0 %v1638
    %v2550 = vpop.f32.mrf.mxu0
    %v2551 = vadd.f32 %v2531, %v2550
    %2552 = vdwg.mxu0
    %2553 = vmatpush.msra.mxu0 %v1305
    %2554 = vmatpush.msra.mxu0 %v1301
    %2555 = vmatpush.msra.mxu0 %v1297
    %2556 = vmatpush.msra.mxu0 %v1293
    %2557 = vmatpush.msra.mxu0 %v1289
    %2558 = vmatpush.msra.mxu0 %v1285
    %2559 = vmatpush.msra.mxu0 %v1281
    %2560 = vmatpush.msra.mxu0 %v1277
    %2561 = vmatpush.msra.mxu0 %v1273
    %2562 = vmatpush.msra.mxu0 %v1269
    %2563 = vmatpush.msra.mxu0 %v1265
    %2564 = vmatpush.msra.mxu0 %v1261
    %2565 = vmatpush.msra.mxu0 %v1257
    %2566 = vmatpush.msra.mxu0 %v1253
    %2567 = vmatpush.msra.mxu0 %v1249
    %2568 = vmatpush.msra.mxu0 %v1245
    %2569 = vmatmul.f32.gmra.mxu0 %v1639
    %v2570 = vpop.f32.mrf.mxu0
    %v2571 = vadd.f32 %v2551, %v2570
    %2572 = vdwg.mxu0
    %2573 = vmatpush.msra.mxu0 %v1369
    %2574 = vmatpush.msra.mxu0 %v1365
    %2575 = vmatpush.msra.mxu0 %v1361
    %2576 = vmatpush.msra.mxu0 %v1357
    %2577 = vmatpush.msra.mxu0 %v1353
    %2578 = vmatpush.msra.mxu0 %v1349
    %2579 = vmatpush.msra.mxu0 %v1345
    %2580 = vmatpush.msra.mxu0 %v1341
    %2581 = vmatpush.msra.mxu0 %v1337
    %2582 = vmatpush.msra.mxu0 %v1333
    %2583 = vmatpush.msra.mxu0 %v1329
    %2584 = vmatpush.msra.mxu0 %v1325
    %2585 = vmatpush.msra.mxu0 %v1321
    %2586 = vmatpush.msra.mxu0 %v1317
    %2587 = vmatpush.msra.mxu0 %v1313
    %2588 = vmatpush.msra.mxu0 %v1309
    %2589 = vmatmul.f32.gmra.mxu0 %v1640
    %v2590 = vpop.f32.mrf.mxu0
    %v2591 = vadd.f32 %v2571, %v2590
    %2592 = vdwg.mxu0
    %2593 = vmatpush.msra.mxu0 %v1433
    %2594 = vmatpush.msra.mxu0 %v1429
    %2595 = vmatpush.msra.mxu0 %v1425
    %2596 = vmatpush.msra.mxu0 %v1421
    %2597 = vmatpush.msra.mxu0 %v1417
    %2598 = vmatpush.msra.mxu0 %v1413
    %2599 = vmatpush.msra.mxu0 %v1409
    %2600 = vmatpush.msra.mxu0 %v1405
    %2601 = vmatpush.msra.mxu0 %v1401
    %2602 = vmatpush.msra.mxu0 %v1397
    %2603 = vmatpush.msra.mxu0 %v1393
    %2604 = vmatpush.msra.mxu0 %v1389
    %2605 = vmatpush.msra.mxu0 %v1385
    %2606 = vmatpush.msra.mxu0 %v1381
    %2607 = vmatpush.msra.mxu0 %v1377
    %2608 = vmatpush.msra.mxu0 %v1373
    %2609 = vmatmul.f32.gmra.mxu0 %v1641
    %v2610 = vpop.f32.mrf.mxu0
    %v2611 = vadd.f32 %v2591, %v2610
    %2612 = vdwg.mxu0
    %2613 = vmatpush.msra.mxu0 %v1497
    %2614 = vmatpush.msra.mxu0 %v1493
    %2615 = vmatpush.msra.mxu0 %v1489
    %2616 = vmatpush.msra.mxu0 %v1485
    %2617 = vmatpush.msra.mxu0 %v1481
    %2618 = vmatpush.msra.mxu0 %v1477
    %2619 = vmatpush.msra.mxu0 %v1473
    %2620 = vmatpush.msra.mxu0 %v1469
    %2621 = vmatpush.msra.mxu0 %v1465
    %2622 = vmatpush.msra.mxu0 %v1461
    %2623 = vmatpush.msra.mxu0 %v1457
    %2624 = vmatpush.msra.mxu0 %v1453
    %2625 = vmatpush.msra.mxu0 %v1449
    %2626 = vmatpush.msra.mxu0 %v1445
    %2627 = vmatpush.msra.mxu0 %v1441
    %2628 = vmatpush.msra.mxu0 %v1437
    %2629 = vmatmul.f32.gmra.mxu0 %v1642
    %v2630 = vpop.f32.mrf.mxu0
    %v2631 = vadd.f32 %v2611, %v2630
    %2632 = vdwg.mxu0
    %2633 = vmatpush.msra.mxu0 %v1561
    %2634 = vmatpush.msra.mxu0 %v1557
    %2635 = vmatpush.msra.mxu0 %v1553
    %2636 = vmatpush.msra.mxu0 %v1549
    %2637 = vmatpush.msra.mxu0 %v1545
    %2638 = vmatpush.msra.mxu0 %v1541
    %2639 = vmatpush.msra.mxu0 %v1537
    %2640 = vmatpush.msra.mxu0 %v1533
    %2641 = vmatpush.msra.mxu0 %v1529
    %2642 = vmatpush.msra.mxu0 %v1525
    %2643 = vmatpush.msra.mxu0 %v1521
    %2644 = vmatpush.msra.mxu0 %v1517
    %2645 = vmatpush.msra.mxu0 %v1513
    %2646 = vmatpush.msra.mxu0 %v1509
    %2647 = vmatpush.msra.mxu0 %v1505
    %2648 = vmatpush.msra.mxu0 %v1501
    %2649 = vmatmul.f32.gmra.mxu0 %v1643
    %v2650 = vpop.f32.mrf.mxu0
    %v2651 = vadd.f32 %v2631, %v2650
    %2652 = vdwg.mxu0
    %2653 = vmatpush.msra.mxu0 0.0
    %2654 = vmatpush.msra.mxu0 0.0
    %2655 = vmatpush.msra.mxu0 0.0
    %2656 = vmatpush.msra.mxu0 0.0
    %2657 = vmatpush.msra.mxu0 0.0
    %2658 = vmatpush.msra.mxu0 0.0
    %2659 = vmatpush.msra.mxu0 0.0
    %2660 = vmatpush.msra.mxu0 0.0
    %2661 = vmatpush.msra.mxu0 %v1593
    %2662 = vmatpush.msra.mxu0 %v1589
    %2663 = vmatpush.msra.mxu0 %v1585
    %2664 = vmatpush.msra.mxu0 %v1581
    %2665 = vmatpush.msra.mxu0 %v1577
    %2666 = vmatpush.msra.mxu0 %v1573
    %2667 = vmatpush.msra.mxu0 %v1569
    %2668 = vmatpush.msra.mxu0 %v1565
    %2669 = vmatmul.f32.gmra.mxu0 %v1671
    %v2670 = vpop.f32.mrf.mxu0
    %v2671 = vadd.f32 %v2651, %v2670
    %2672 = vdwg.mxu0
    %2673 = vmatpush.msra.mxu0 %v90
    %2674 = vmatpush.msra.mxu0 %v86
    %2675 = vmatpush.msra.mxu0 %v82
    %2676 = vmatpush.msra.mxu0 %v78
    %2677 = vmatpush.msra.mxu0 %v74
    %2678 = vmatpush.msra.mxu0 %v70
    %2679 = vmatpush.msra.mxu0 %v66
    %2680 = vmatpush.msra.mxu0 %v62
    %2681 = vmatpush.msra.mxu0 %v58
    %2682 = vmatpush.msra.mxu0 %v54
    %2683 = vmatpush.msra.mxu0 %v50
    %2684 = vmatpush.msra.mxu0 %v46
    %2685 = vmatpush.msra.mxu0 %v42
    %2686 = vmatpush.msra.mxu0 %v38
    %2687 = vmatpush.msra.mxu0 %v34
    %2688 = vmatpush.msra.mxu0 %v30
    %2689 = vmatmul.f32.gmra.mxu0 %v1616
    %v2690 = vpop.f32.mrf.mxu0
    %v2691 = vadd.f32 %v1600, %v2690
    %2692 = vdwg.mxu0
    %2693 = vmatpush.msra.mxu0 %v154
    %2694 = vmatpush.msra.mxu0 %v150
    %2695 = vmatpush.msra.mxu0 %v146
    %2696 = vmatpush.msra.mxu0 %v142
    %2697 = vmatpush.msra.mxu0 %v138
    %2698 = vmatpush.msra.mxu0 %v134
    %2699 = vmatpush.msra.mxu0 %v130
    %2700 = vmatpush.msra.mxu0 %v126
    %2701 = vmatpush.msra.mxu0 %v122
    %2702 = vmatpush.msra.mxu0 %v118
    %2703 = vmatpush.msra.mxu0 %v114
    %2704 = vmatpush.msra.mxu0 %v110
    %2705 = vmatpush.msra.mxu0 %v106
    %2706 = vmatpush.msra.mxu0 %v102
    %2707 = vmatpush.msra.mxu0 %v98
    %2708 = vmatpush.msra.mxu0 %v94
    %2709 = vmatmul.f32.gmra.mxu0 %v1617
    %v2710 = vpop.f32.mrf.mxu0
    %v2711 = vadd.f32 %v2691, %v2710
    %2712 = vdwg.mxu0
    %2713 = vmatpush.msra.mxu0 %v218
    %2714 = vmatpush.msra.mxu0 %v214
    %2715 = vmatpush.msra.mxu0 %v210
    %2716 = vmatpush.msra.mxu0 %v206
    %2717 = vmatpush.msra.mxu0 %v202
    %2718 = vmatpush.msra.mxu0 %v198
    %2719 = vmatpush.msra.mxu0 %v194
    %2720 = vmatpush.msra.mxu0 %v190
    %2721 = vmatpush.msra.mxu0 %v186
    %2722 = vmatpush.msra.mxu0 %v182
    %2723 = vmatpush.msra.mxu0 %v178
    %2724 = vmatpush.msra.mxu0 %v174
    %2725 = vmatpush.msra.mxu0 %v170
    %2726 = vmatpush.msra.mxu0 %v166
    %2727 = vmatpush.msra.mxu0 %v162
    %2728 = vmatpush.msra.mxu0 %v158
    %2729 = vmatmul.f32.gmra.mxu0 %v1618
    %v2730 = vpop.f32.mrf.mxu0
    %v2731 = vadd.f32 %v2711, %v2730
    %2732 = vdwg.mxu0
    %2733 = vmatpush.msra.mxu0 %v282
    %2734 = vmatpush.msra.mxu0 %v278
    %2735 = vmatpush.msra.mxu0 %v274
    %2736 = vmatpush.msra.mxu0 %v270
    %2737 = vmatpush.msra.mxu0 %v266
    %2738 = vmatpush.msra.mxu0 %v262
    %2739 = vmatpush.msra.mxu0 %v258
    %2740 = vmatpush.msra.mxu0 %v254
    %2741 = vmatpush.msra.mxu0 %v250
    %2742 = vmatpush.msra.mxu0 %v246
    %2743 = vmatpush.msra.mxu0 %v242
    %2744 = vmatpush.msra.mxu0 %v238
    %2745 = vmatpush.msra.mxu0 %v234
    %2746 = vmatpush.msra.mxu0 %v230
    %2747 = vmatpush.msra.mxu0 %v226
    %2748 = vmatpush.msra.mxu0 %v222
    %2749 = vmatmul.f32.gmra.mxu0 %v1619
    %v2750 = vpop.f32.mrf.mxu0
    %v2751 = vadd.f32 %v2731, %v2750
    %2752 = vdwg.mxu0
    %2753 = vmatpush.msra.mxu0 %v346
    %2754 = vmatpush.msra.mxu0 %v342
    %2755 = vmatpush.msra.mxu0 %v338
    %2756 = vmatpush.msra.mxu0 %v334
    %2757 = vmatpush.msra.mxu0 %v330
    %2758 = vmatpush.msra.mxu0 %v326
    %2759 = vmatpush.msra.mxu0 %v322
    %2760 = vmatpush.msra.mxu0 %v318
    %2761 = vmatpush.msra.mxu0 %v314
    %2762 = vmatpush.msra.mxu0 %v310
    %2763 = vmatpush.msra.mxu0 %v306
    %2764 = vmatpush.msra.mxu0 %v302
    %2765 = vmatpush.msra.mxu0 %v298
    %2766 = vmatpush.msra.mxu0 %v294
    %2767 = vmatpush.msra.mxu0 %v290
    %2768 = vmatpush.msra.mxu0 %v286
    %2769 = vmatmul.f32.gmra.mxu0 %v1620
    %v2770 = vpop.f32.mrf.mxu0
    %v2771 = vadd.f32 %v2751, %v2770
    %2772 = vdwg.mxu0
    %2773 = vmatpush.msra.mxu0 %v410
    %2774 = vmatpush.msra.mxu0 %v406
    %2775 = vmatpush.msra.mxu0 %v402
    %2776 = vmatpush.msra.mxu0 %v398
    %2777 = vmatpush.msra.mxu0 %v394
    %2778 = vmatpush.msra.mxu0 %v390
    %2779 = vmatpush.msra.mxu0 %v386
    %2780 = vmatpush.msra.mxu0 %v382
    %2781 = vmatpush.msra.mxu0 %v378
    %2782 = vmatpush.msra.mxu0 %v374
    %2783 = vmatpush.msra.mxu0 %v370
    %2784 = vmatpush.msra.mxu0 %v366
    %2785 = vmatpush.msra.mxu0 %v362
    %2786 = vmatpush.msra.mxu0 %v358
    %2787 = vmatpush.msra.mxu0 %v354
    %2788 = vmatpush.msra.mxu0 %v350
    %2789 = vmatmul.f32.gmra.mxu0 %v1621
    %v2790 = vpop.f32.mrf.mxu0
    %v2791 = vadd.f32 %v2771, %v2790
    %2792 = vdwg.mxu0
    %2793 = vmatpush.msra.mxu0 %v474
    %2794 = vmatpush.msra.mxu0 %v470
    %2795 = vmatpush.msra.mxu0 %v466
    %2796 = vmatpush.msra.mxu0 %v462
    %2797 = vmatpush.msra.mxu0 %v458
    %2798 = vmatpush.msra.mxu0 %v454
    %2799 = vmatpush.msra.mxu0 %v450
    %2800 = vmatpush.msra.mxu0 %v446
    %2801 = vmatpush.msra.mxu0 %v442
    %2802 = vmatpush.msra.mxu0 %v438
    %2803 = vmatpush.msra.mxu0 %v434
    %2804 = vmatpush.msra.mxu0 %v430
    %2805 = vmatpush.msra.mxu0 %v426
    %2806 = vmatpush.msra.mxu0 %v422
    %2807 = vmatpush.msra.mxu0 %v418
    %2808 = vmatpush.msra.mxu0 %v414
    %2809 = vmatmul.f32.gmra.mxu0 %v1622
    %v2810 = vpop.f32.mrf.mxu0
    %v2811 = vadd.f32 %v2791, %v2810
    %2812 = vdwg.mxu0
    %2813 = vmatpush.msra.mxu0 %v538
    %2814 = vmatpush.msra.mxu0 %v534
    %2815 = vmatpush.msra.mxu0 %v530
    %2816 = vmatpush.msra.mxu0 %v526
    %2817 = vmatpush.msra.mxu0 %v522
    %2818 = vmatpush.msra.mxu0 %v518
    %2819 = vmatpush.msra.mxu0 %v514
    %2820 = vmatpush.msra.mxu0 %v510
    %2821 = vmatpush.msra.mxu0 %v506
    %2822 = vmatpush.msra.mxu0 %v502
    %2823 = vmatpush.msra.mxu0 %v498
    %2824 = vmatpush.msra.mxu0 %v494
    %2825 = vmatpush.msra.mxu0 %v490
    %2826 = vmatpush.msra.mxu0 %v486
    %2827 = vmatpush.msra.mxu0 %v482
    %2828 = vmatpush.msra.mxu0 %v478
    %2829 = vmatmul.f32.gmra.mxu0 %v1623
    %v2830 = vpop.f32.mrf.mxu0
    %v2831 = vadd.f32 %v2811, %v2830
    %2832 = vdwg.mxu0
    %2833 = vmatpush.msra.mxu0 %v602
    %2834 = vmatpush.msra.mxu0 %v598
    %2835 = vmatpush.msra.mxu0 %v594
    %2836 = vmatpush.msra.mxu0 %v590
    %2837 = vmatpush.msra.mxu0 %v586
    %2838 = vmatpush.msra.mxu0 %v582
    %2839 = vmatpush.msra.mxu0 %v578
    %2840 = vmatpush.msra.mxu0 %v574
    %2841 = vmatpush.msra.mxu0 %v570
    %2842 = vmatpush.msra.mxu0 %v566
    %2843 = vmatpush.msra.mxu0 %v562
    %2844 = vmatpush.msra.mxu0 %v558
    %2845 = vmatpush.msra.mxu0 %v554
    %2846 = vmatpush.msra.mxu0 %v550
    %2847 = vmatpush.msra.mxu0 %v546
    %2848 = vmatpush.msra.mxu0 %v542
    %2849 = vmatmul.f32.gmra.mxu0 %v1626
    %v2850 = vpop.f32.mrf.mxu0
    %v2851 = vadd.f32 %v2831, %v2850
    %2852 = vdwg.mxu0
    %2853 = vmatpush.msra.mxu0 %v666
    %2854 = vmatpush.msra.mxu0 %v662
    %2855 = vmatpush.msra.mxu0 %v658
    %2856 = vmatpush.msra.mxu0 %v654
    %2857 = vmatpush.msra.mxu0 %v650
    %2858 = vmatpush.msra.mxu0 %v646
    %2859 = vmatpush.msra.mxu0 %v642
    %2860 = vmatpush.msra.mxu0 %v638
    %2861 = vmatpush.msra.mxu0 %v634
    %2862 = vmatpush.msra.mxu0 %v630
    %2863 = vmatpush.msra.mxu0 %v626
    %2864 = vmatpush.msra.mxu0 %v622
    %2865 = vmatpush.msra.mxu0 %v618
    %2866 = vmatpush.msra.mxu0 %v614
    %2867 = vmatpush.msra.mxu0 %v610
    %2868 = vmatpush.msra.mxu0 %v606
    %2869 = vmatmul.f32.gmra.mxu0 %v1627
    %v2870 = vpop.f32.mrf.mxu0
    %v2871 = vadd.f32 %v2851, %v2870
    %2872 = vdwg.mxu0
    %2873 = vmatpush.msra.mxu0 %v730
    %2874 = vmatpush.msra.mxu0 %v726
    %2875 = vmatpush.msra.mxu0 %v722
    %2876 = vmatpush.msra.mxu0 %v718
    %2877 = vmatpush.msra.mxu0 %v714
    %2878 = vmatpush.msra.mxu0 %v710
    %2879 = vmatpush.msra.mxu0 %v706
    %2880 = vmatpush.msra.mxu0 %v702
    %2881 = vmatpush.msra.mxu0 %v698
    %2882 = vmatpush.msra.mxu0 %v694
    %2883 = vmatpush.msra.mxu0 %v690
    %2884 = vmatpush.msra.mxu0 %v686
    %2885 = vmatpush.msra.mxu0 %v682
    %2886 = vmatpush.msra.mxu0 %v678
    %2887 = vmatpush.msra.mxu0 %v674
    %2888 = vmatpush.msra.mxu0 %v670
    %2889 = vmatmul.f32.gmra.mxu0 %v1628
    %v2890 = vpop.f32.mrf.mxu0
    %v2891 = vadd.f32 %v2871, %v2890
    %2892 = vdwg.mxu0
    %2893 = vmatpush.msra.mxu0 %v794
    %2894 = vmatpush.msra.mxu0 %v790
    %2895 = vmatpush.msra.mxu0 %v786
    %2896 = vmatpush.msra.mxu0 %v782
    %2897 = vmatpush.msra.mxu0 %v778
    %2898 = vmatpush.msra.mxu0 %v774
    %2899 = vmatpush.msra.mxu0 %v770
    %2900 = vmatpush.msra.mxu0 %v766
    %2901 = vmatpush.msra.mxu0 %v762
    %2902 = vmatpush.msra.mxu0 %v758
    %2903 = vmatpush.msra.mxu0 %v754
    %2904 = vmatpush.msra.mxu0 %v750
    %2905 = vmatpush.msra.mxu0 %v746
    %2906 = vmatpush.msra.mxu0 %v742
    %2907 = vmatpush.msra.mxu0 %v738
    %2908 = vmatpush.msra.mxu0 %v734
    %2909 = vmatmul.f32.gmra.mxu0 %v1629
    %v2910 = vpop.f32.mrf.mxu0
    %v2911 = vadd.f32 %v2891, %v2910
    %2912 = vdwg.mxu0
    %2913 = vmatpush.msra.mxu0 %v858
    %2914 = vmatpush.msra.mxu0 %v854
    %2915 = vmatpush.msra.mxu0 %v850
    %2916 = vmatpush.msra.mxu0 %v846
    %2917 = vmatpush.msra.mxu0 %v842
    %2918 = vmatpush.msra.mxu0 %v838
    %2919 = vmatpush.msra.mxu0 %v834
    %2920 = vmatpush.msra.mxu0 %v830
    %2921 = vmatpush.msra.mxu0 %v826
    %2922 = vmatpush.msra.mxu0 %v822
    %2923 = vmatpush.msra.mxu0 %v818
    %2924 = vmatpush.msra.mxu0 %v814
    %2925 = vmatpush.msra.mxu0 %v810
    %2926 = vmatpush.msra.mxu0 %v806
    %2927 = vmatpush.msra.mxu0 %v802
    %2928 = vmatpush.msra.mxu0 %v798
    %2929 = vmatmul.f32.gmra.mxu0 %v1630
    %v2930 = vpop.f32.mrf.mxu0
    %v2931 = vadd.f32 %v2911, %v2930
    %2932 = vdwg.mxu0
    %2933 = vmatpush.msra.mxu0 %v922
    %2934 = vmatpush.msra.mxu0 %v918
    %2935 = vmatpush.msra.mxu0 %v914
    %2936 = vmatpush.msra.mxu0 %v910
    %2937 = vmatpush.msra.mxu0 %v906
    %2938 = vmatpush.msra.mxu0 %v902
    %2939 = vmatpush.msra.mxu0 %v898
    %2940 = vmatpush.msra.mxu0 %v894
    %2941 = vmatpush.msra.mxu0 %v890
    %2942 = vmatpush.msra.mxu0 %v886
    %2943 = vmatpush.msra.mxu0 %v882
    %2944 = vmatpush.msra.mxu0 %v878
    %2945 = vmatpush.msra.mxu0 %v874
    %2946 = vmatpush.msra.mxu0 %v870
    %2947 = vmatpush.msra.mxu0 %v866
    %2948 = vmatpush.msra.mxu0 %v862
    %2949 = vmatmul.f32.gmra.mxu0 %v1631
    %v2950 = vpop.f32.mrf.mxu0
    %v2951 = vadd.f32 %v2931, %v2950
    %2952 = vdwg.mxu0
    %2953 = vmatpush.msra.mxu0 %v986
    %2954 = vmatpush.msra.mxu0 %v982
    %2955 = vmatpush.msra.mxu0 %v978
    %2956 = vmatpush.msra.mxu0 %v974
    %2957 = vmatpush.msra.mxu0 %v970
    %2958 = vmatpush.msra.mxu0 %v966
    %2959 = vmatpush.msra.mxu0 %v962
    %2960 = vmatpush.msra.mxu0 %v958
    %2961 = vmatpush.msra.mxu0 %v954
    %2962 = vmatpush.msra.mxu0 %v950
    %2963 = vmatpush.msra.mxu0 %v946
    %2964 = vmatpush.msra.mxu0 %v942
    %2965 = vmatpush.msra.mxu0 %v938
    %2966 = vmatpush.msra.mxu0 %v934
    %2967 = vmatpush.msra.mxu0 %v930
    %2968 = vmatpush.msra.mxu0 %v926
    %2969 = vmatmul.f32.gmra.mxu0 %v1632
    %v2970 = vpop.f32.mrf.mxu0
    %v2971 = vadd.f32 %v2951, %v2970
    %2972 = vdwg.mxu0
    %2973 = vmatpush.msra.mxu0 %v1050
    %2974 = vmatpush.msra.mxu0 %v1046
    %2975 = vmatpush.msra.mxu0 %v1042
    %2976 = vmatpush.msra.mxu0 %v1038
    %2977 = vmatpush.msra.mxu0 %v1034
    %2978 = vmatpush.msra.mxu0 %v1030
    %2979 = vmatpush.msra.mxu0 %v1026
    %2980 = vmatpush.msra.mxu0 %v1022
    %2981 = vmatpush.msra.mxu0 %v1018
    %2982 = vmatpush.msra.mxu0 %v1014
    %2983 = vmatpush.msra.mxu0 %v1010
    %2984 = vmatpush.msra.mxu0 %v1006
    %2985 = vmatpush.msra.mxu0 %v1002
    %2986 = vmatpush.msra.mxu0 %v998
    %2987 = vmatpush.msra.mxu0 %v994
    %2988 = vmatpush.msra.mxu0 %v990
    %2989 = vmatmul.f32.gmra.mxu0 %v1633
    %v2990 = vpop.f32.mrf.mxu0
    %v2991 = vadd.f32 %v2971, %v2990
    %2992 = vdwg.mxu0
    %2993 = vmatpush.msra.mxu0 %v1114
    %2994 = vmatpush.msra.mxu0 %v1110
    %2995 = vmatpush.msra.mxu0 %v1106
    %2996 = vmatpush.msra.mxu0 %v1102
    %2997 = vmatpush.msra.mxu0 %v1098
    %2998 = vmatpush.msra.mxu0 %v1094
    %2999 = vmatpush.msra.mxu0 %v1090
    %3000 = vmatpush.msra.mxu0 %v1086
    %3001 = vmatpush.msra.mxu0 %v1082
    %3002 = vmatpush.msra.mxu0 %v1078
    %3003 = vmatpush.msra.mxu0 %v1074
    %3004 = vmatpush.msra.mxu0 %v1070
    %3005 = vmatpush.msra.mxu0 %v1066
    %3006 = vmatpush.msra.mxu0 %v1062
    %3007 = vmatpush.msra.mxu0 %v1058
    %3008 = vmatpush.msra.mxu0 %v1054
    %3009 = vmatmul.f32.gmra.mxu0 %v1636
    %v3010 = vpop.f32.mrf.mxu0
    %v3011 = vadd.f32 %v2991, %v3010
    %3012 = vdwg.mxu0
    %3013 = vmatpush.msra.mxu0 %v1178
    %3014 = vmatpush.msra.mxu0 %v1174
    %3015 = vmatpush.msra.mxu0 %v1170
    %3016 = vmatpush.msra.mxu0 %v1166
    %3017 = vmatpush.msra.mxu0 %v1162
    %3018 = vmatpush.msra.mxu0 %v1158
    %3019 = vmatpush.msra.mxu0 %v1154
    %3020 = vmatpush.msra.mxu0 %v1150
    %3021 = vmatpush.msra.mxu0 %v1146
    %3022 = vmatpush.msra.mxu0 %v1142
    %3023 = vmatpush.msra.mxu0 %v1138
    %3024 = vmatpush.msra.mxu0 %v1134
    %3025 = vmatpush.msra.mxu0 %v1130
    %3026 = vmatpush.msra.mxu0 %v1126
    %3027 = vmatpush.msra.mxu0 %v1122
    %3028 = vmatpush.msra.mxu0 %v1118
    %3029 = vmatmul.f32.gmra.mxu0 %v1637
    %v3030 = vpop.f32.mrf.mxu0
    %v3031 = vadd.f32 %v3011, %v3030
    %3032 = vdwg.mxu0
    %3033 = vmatpush.msra.mxu0 %v1242
    %3034 = vmatpush.msra.mxu0 %v1238
    %3035 = vmatpush.msra.mxu0 %v1234
    %3036 = vmatpush.msra.mxu0 %v1230
    %3037 = vmatpush.msra.mxu0 %v1226
    %3038 = vmatpush.msra.mxu0 %v1222
    %3039 = vmatpush.msra.mxu0 %v1218
    %3040 = vmatpush.msra.mxu0 %v1214
    %3041 = vmatpush.msra.mxu0 %v1210
    %3042 = vmatpush.msra.mxu0 %v1206
    %3043 = vmatpush.msra.mxu0 %v1202
    %3044 = vmatpush.msra.mxu0 %v1198
    %3045 = vmatpush.msra.mxu0 %v1194
    %3046 = vmatpush.msra.mxu0 %v1190
    %3047 = vmatpush.msra.mxu0 %v1186
    %3048 = vmatpush.msra.mxu0 %v1182
    %3049 = vmatmul.f32.gmra.mxu0 %v1638
    %v3050 = vpop.f32.mrf.mxu0
    %v3051 = vadd.f32 %v3031, %v3050
    %3052 = vdwg.mxu0
    %3053 = vmatpush.msra.mxu0 %v1306
    %3054 = vmatpush.msra.mxu0 %v1302
    %3055 = vmatpush.msra.mxu0 %v1298
    %3056 = vmatpush.msra.mxu0 %v1294
    %3057 = vmatpush.msra.mxu0 %v1290
    %3058 = vmatpush.msra.mxu0 %v1286
    %3059 = vmatpush.msra.mxu0 %v1282
    %3060 = vmatpush.msra.mxu0 %v1278
    %3061 = vmatpush.msra.mxu0 %v1274
    %3062 = vmatpush.msra.mxu0 %v1270
    %3063 = vmatpush.msra.mxu0 %v1266
    %3064 = vmatpush.msra.mxu0 %v1262
    %3065 = vmatpush.msra.mxu0 %v1258
    %3066 = vmatpush.msra.mxu0 %v1254
    %3067 = vmatpush.msra.mxu0 %v1250
    %3068 = vmatpush.msra.mxu0 %v1246
    %3069 = vmatmul.f32.gmra.mxu0 %v1639
    %v3070 = vpop.f32.mrf.mxu0
    %v3071 = vadd.f32 %v3051, %v3070
    %3072 = vdwg.mxu0
    %3073 = vmatpush.msra.mxu0 %v1370
    %3074 = vmatpush.msra.mxu0 %v1366
    %3075 = vmatpush.msra.mxu0 %v1362
    %3076 = vmatpush.msra.mxu0 %v1358
    %3077 = vmatpush.msra.mxu0 %v1354
    %3078 = vmatpush.msra.mxu0 %v1350
    %3079 = vmatpush.msra.mxu0 %v1346
    %3080 = vmatpush.msra.mxu0 %v1342
    %3081 = vmatpush.msra.mxu0 %v1338
    %3082 = vmatpush.msra.mxu0 %v1334
    %3083 = vmatpush.msra.mxu0 %v1330
    %3084 = vmatpush.msra.mxu0 %v1326
    %3085 = vmatpush.msra.mxu0 %v1322
    %3086 = vmatpush.msra.mxu0 %v1318
    %3087 = vmatpush.msra.mxu0 %v1314
    %3088 = vmatpush.msra.mxu0 %v1310
    %3089 = vmatmul.f32.gmra.mxu0 %v1640
    %v3090 = vpop.f32.mrf.mxu0
    %v3091 = vadd.f32 %v3071, %v3090
    %3092 = vdwg.mxu0
    %3093 = vmatpush.msra.mxu0 %v1434
    %3094 = vmatpush.msra.mxu0 %v1430
    %3095 = vmatpush.msra.mxu0 %v1426
    %3096 = vmatpush.msra.mxu0 %v1422
    %3097 = vmatpush.msra.mxu0 %v1418
    %3098 = vmatpush.msra.mxu0 %v1414
    %3099 = vmatpush.msra.mxu0 %v1410
    %3100 = vmatpush.msra.mxu0 %v1406
    %3101 = vmatpush.msra.mxu0 %v1402
    %3102 = vmatpush.msra.mxu0 %v1398
    %3103 = vmatpush.msra.mxu0 %v1394
    %3104 = vmatpush.msra.mxu0 %v1390
    %3105 = vmatpush.msra.mxu0 %v1386
    %3106 = vmatpush.msra.mxu0 %v1382
    %3107 = vmatpush.msra.mxu0 %v1378
    %3108 = vmatpush.msra.mxu0 %v1374
    %3109 = vmatmul.f32.gmra.mxu0 %v1641
    %v3110 = vpop.f32.mrf.mxu0
    %v3111 = vadd.f32 %v3091, %v3110
    %3112 = vdwg.mxu0
    %3113 = vmatpush.msra.mxu0 %v1498
    %3114 = vmatpush.msra.mxu0 %v1494
    %3115 = vmatpush.msra.mxu0 %v1490
    %3116 = vmatpush.msra.mxu0 %v1486
    %3117 = vmatpush.msra.mxu0 %v1482
    %3118 = vmatpush.msra.mxu0 %v1478
    %3119 = vmatpush.msra.mxu0 %v1474
    %3120 = vmatpush.msra.mxu0 %v1470
    %3121 = vmatpush.msra.mxu0 %v1466
    %3122 = vmatpush.msra.mxu0 %v1462
    %3123 = vmatpush.msra.mxu0 %v1458
    %3124 = vmatpush.msra.mxu0 %v1454
    %3125 = vmatpush.msra.mxu0 %v1450
    %3126 = vmatpush.msra.mxu0 %v1446
    %3127 = vmatpush.msra.mxu0 %v1442
    %3128 = vmatpush.msra.mxu0 %v1438
    %3129 = vmatmul.f32.gmra.mxu0 %v1642
    %v3130 = vpop.f32.mrf.mxu0
    %v3131 = vadd.f32 %v3111, %v3130
    %3132 = vdwg.mxu0
    %3133 = vmatpush.msra.mxu0 %v1562
    %3134 = vmatpush.msra.mxu0 %v1558
    %3135 = vmatpush.msra.mxu0 %v1554
    %3136 = vmatpush.msra.mxu0 %v1550
    %3137 = vmatpush.msra.mxu0 %v1546
    %3138 = vmatpush.msra.mxu0 %v1542
    %3139 = vmatpush.msra.mxu0 %v1538
    %3140 = vmatpush.msra.mxu0 %v1534
    %3141 = vmatpush.msra.mxu0 %v1530
    %3142 = vmatpush.msra.mxu0 %v1526
    %3143 = vmatpush.msra.mxu0 %v1522
    %3144 = vmatpush.msra.mxu0 %v1518
    %3145 = vmatpush.msra.mxu0 %v1514
    %3146 = vmatpush.msra.mxu0 %v1510
    %3147 = vmatpush.msra.mxu0 %v1506
    %3148 = vmatpush.msra.mxu0 %v1502
    %3149 = vmatmul.f32.gmra.mxu0 %v1643
    %v3150 = vpop.f32.mrf.mxu0
    %v3151 = vadd.f32 %v3131, %v3150
    %3152 = vdwg.mxu0
    %3153 = vmatpush.msra.mxu0 0.0
    %3154 = vmatpush.msra.mxu0 0.0
    %3155 = vmatpush.msra.mxu0 0.0
    %3156 = vmatpush.msra.mxu0 0.0
    %3157 = vmatpush.msra.mxu0 0.0
    %3158 = vmatpush.msra.mxu0 0.0
    %3159 = vmatpush.msra.mxu0 0.0
    %3160 = vmatpush.msra.mxu0 0.0
    %3161 = vmatpush.msra.mxu0 %v1594
    %3162 = vmatpush.msra.mxu0 %v1590
    %3163 = vmatpush.msra.mxu0 %v1586
    %3164 = vmatpush.msra.mxu0 %v1582
    %3165 = vmatpush.msra.mxu0 %v1578
    %3166 = vmatpush.msra.mxu0 %v1574
    %3167 = vmatpush.msra.mxu0 %v1570
    %3168 = vmatpush.msra.mxu0 %v1566
    %3169 = vmatmul.f32.gmra.mxu0 %v1671
    %v3170 = vpop.f32.mrf.mxu0
    %v3171 = vadd.f32 %v3151, %v3170
    %3172 = vdwg.mxu0
    %3173 = vmatpush.msra.mxu0 %v91
    %3174 = vmatpush.msra.mxu0 %v87
    %3175 = vmatpush.msra.mxu0 %v83
    %3176 = vmatpush.msra.mxu0 %v79
    %3177 = vmatpush.msra.mxu0 %v75
    %3178 = vmatpush.msra.mxu0 %v71
    %3179 = vmatpush.msra.mxu0 %v67
    %3180 = vmatpush.msra.mxu0 %v63
    %3181 = vmatpush.msra.mxu0 %v59
    %3182 = vmatpush.msra.mxu0 %v55
    %3183 = vmatpush.msra.mxu0 %v51
    %3184 = vmatpush.msra.mxu0 %v47
    %3185 = vmatpush.msra.mxu0 %v43
    %3186 = vmatpush.msra.mxu0 %v39
    %3187 = vmatpush.msra.mxu0 %v35
    %3188 = vmatpush.msra.mxu0 %v31
    %3189 = vmatmul.f32.gmra.mxu0 %v1616
    %v3190 = vpop.f32.mrf.mxu0
    %v3191 = vadd.f32 %v1601, %v3190
    %3192 = vdwg.mxu0
    %3193 = vmatpush.msra.mxu0 %v155
    %3194 = vmatpush.msra.mxu0 %v151
    %3195 = vmatpush.msra.mxu0 %v147
    %3196 = vmatpush.msra.mxu0 %v143
    %3197 = vmatpush.msra.mxu0 %v139
    %3198 = vmatpush.msra.mxu0 %v135
    %3199 = vmatpush.msra.mxu0 %v131
    %3200 = vmatpush.msra.mxu0 %v127
    %3201 = vmatpush.msra.mxu0 %v123
    %3202 = vmatpush.msra.mxu0 %v119
    %3203 = vmatpush.msra.mxu0 %v115
    %3204 = vmatpush.msra.mxu0 %v111
    %3205 = vmatpush.msra.mxu0 %v107
    %3206 = vmatpush.msra.mxu0 %v103
    %3207 = vmatpush.msra.mxu0 %v99
    %3208 = vmatpush.msra.mxu0 %v95
    %3209 = vmatmul.f32.gmra.mxu0 %v1617
    %v3210 = vpop.f32.mrf.mxu0
    %v3211 = vadd.f32 %v3191, %v3210
    %3212 = vdwg.mxu0
    %3213 = vmatpush.msra.mxu0 %v219
    %3214 = vmatpush.msra.mxu0 %v215
    %3215 = vmatpush.msra.mxu0 %v211
    %3216 = vmatpush.msra.mxu0 %v207
    %3217 = vmatpush.msra.mxu0 %v203
    %3218 = vmatpush.msra.mxu0 %v199
    %3219 = vmatpush.msra.mxu0 %v195
    %3220 = vmatpush.msra.mxu0 %v191
    %3221 = vmatpush.msra.mxu0 %v187
    %3222 = vmatpush.msra.mxu0 %v183
    %3223 = vmatpush.msra.mxu0 %v179
    %3224 = vmatpush.msra.mxu0 %v175
    %3225 = vmatpush.msra.mxu0 %v171
    %3226 = vmatpush.msra.mxu0 %v167
    %3227 = vmatpush.msra.mxu0 %v163
    %3228 = vmatpush.msra.mxu0 %v159
    %3229 = vmatmul.f32.gmra.mxu0 %v1618
    %v3230 = vpop.f32.mrf.mxu0
    %v3231 = vadd.f32 %v3211, %v3230
    %3232 = vdwg.mxu0
    %3233 = vmatpush.msra.mxu0 %v283
    %3234 = vmatpush.msra.mxu0 %v279
    %3235 = vmatpush.msra.mxu0 %v275
    %3236 = vmatpush.msra.mxu0 %v271
    %3237 = vmatpush.msra.mxu0 %v267
    %3238 = vmatpush.msra.mxu0 %v263
    %3239 = vmatpush.msra.mxu0 %v259
    %3240 = vmatpush.msra.mxu0 %v255
    %3241 = vmatpush.msra.mxu0 %v251
    %3242 = vmatpush.msra.mxu0 %v247
    %3243 = vmatpush.msra.mxu0 %v243
    %3244 = vmatpush.msra.mxu0 %v239
    %3245 = vmatpush.msra.mxu0 %v235
    %3246 = vmatpush.msra.mxu0 %v231
    %3247 = vmatpush.msra.mxu0 %v227
    %3248 = vmatpush.msra.mxu0 %v223
    %3249 = vmatmul.f32.gmra.mxu0 %v1619
    %v3250 = vpop.f32.mrf.mxu0
    %v3251 = vadd.f32 %v3231, %v3250
    %3252 = vdwg.mxu0
    %3253 = vmatpush.msra.mxu0 %v347
    %3254 = vmatpush.msra.mxu0 %v343
    %3255 = vmatpush.msra.mxu0 %v339
    %3256 = vmatpush.msra.mxu0 %v335
    %3257 = vmatpush.msra.mxu0 %v331
    %3258 = vmatpush.msra.mxu0 %v327
    %3259 = vmatpush.msra.mxu0 %v323
    %3260 = vmatpush.msra.mxu0 %v319
    %3261 = vmatpush.msra.mxu0 %v315
    %3262 = vmatpush.msra.mxu0 %v311
    %3263 = vmatpush.msra.mxu0 %v307
    %3264 = vmatpush.msra.mxu0 %v303
    %3265 = vmatpush.msra.mxu0 %v299
    %3266 = vmatpush.msra.mxu0 %v295
    %3267 = vmatpush.msra.mxu0 %v291
    %3268 = vmatpush.msra.mxu0 %v287
    %3269 = vmatmul.f32.gmra.mxu0 %v1620
    %v3270 = vpop.f32.mrf.mxu0
    %v3271 = vadd.f32 %v3251, %v3270
    %3272 = vdwg.mxu0
    %3273 = vmatpush.msra.mxu0 %v411
    %3274 = vmatpush.msra.mxu0 %v407
    %3275 = vmatpush.msra.mxu0 %v403
    %3276 = vmatpush.msra.mxu0 %v399
    %3277 = vmatpush.msra.mxu0 %v395
    %3278 = vmatpush.msra.mxu0 %v391
    %3279 = vmatpush.msra.mxu0 %v387
    %3280 = vmatpush.msra.mxu0 %v383
    %3281 = vmatpush.msra.mxu0 %v379
    %3282 = vmatpush.msra.mxu0 %v375
    %3283 = vmatpush.msra.mxu0 %v371
    %3284 = vmatpush.msra.mxu0 %v367
    %3285 = vmatpush.msra.mxu0 %v363
    %3286 = vmatpush.msra.mxu0 %v359
    %3287 = vmatpush.msra.mxu0 %v355
    %3288 = vmatpush.msra.mxu0 %v351
    %3289 = vmatmul.f32.gmra.mxu0 %v1621
    %v3290 = vpop.f32.mrf.mxu0
    %v3291 = vadd.f32 %v3271, %v3290
    %3292 = vdwg.mxu0
    %3293 = vmatpush.msra.mxu0 %v475
    %3294 = vmatpush.msra.mxu0 %v471
    %3295 = vmatpush.msra.mxu0 %v467
    %3296 = vmatpush.msra.mxu0 %v463
    %3297 = vmatpush.msra.mxu0 %v459
    %3298 = vmatpush.msra.mxu0 %v455
    %3299 = vmatpush.msra.mxu0 %v451
    %3300 = vmatpush.msra.mxu0 %v447
    %3301 = vmatpush.msra.mxu0 %v443
    %3302 = vmatpush.msra.mxu0 %v439
    %3303 = vmatpush.msra.mxu0 %v435
    %3304 = vmatpush.msra.mxu0 %v431
    %3305 = vmatpush.msra.mxu0 %v427
    %3306 = vmatpush.msra.mxu0 %v423
    %3307 = vmatpush.msra.mxu0 %v419
    %3308 = vmatpush.msra.mxu0 %v415
    %3309 = vmatmul.f32.gmra.mxu0 %v1622
    %v3310 = vpop.f32.mrf.mxu0
    %v3311 = vadd.f32 %v3291, %v3310
    %3312 = vdwg.mxu0
    %3313 = vmatpush.msra.mxu0 %v539
    %3314 = vmatpush.msra.mxu0 %v535
    %3315 = vmatpush.msra.mxu0 %v531
    %3316 = vmatpush.msra.mxu0 %v527
    %3317 = vmatpush.msra.mxu0 %v523
    %3318 = vmatpush.msra.mxu0 %v519
    %3319 = vmatpush.msra.mxu0 %v515
    %3320 = vmatpush.msra.mxu0 %v511
    %3321 = vmatpush.msra.mxu0 %v507
    %3322 = vmatpush.msra.mxu0 %v503
    %3323 = vmatpush.msra.mxu0 %v499
    %3324 = vmatpush.msra.mxu0 %v495
    %3325 = vmatpush.msra.mxu0 %v491
    %3326 = vmatpush.msra.mxu0 %v487
    %3327 = vmatpush.msra.mxu0 %v483
    %3328 = vmatpush.msra.mxu0 %v479
    %3329 = vmatmul.f32.gmra.mxu0 %v1623
    %v3330 = vpop.f32.mrf.mxu0
    %v3331 = vadd.f32 %v3311, %v3330
    %3332 = vdwg.mxu0
    %3333 = vmatpush.msra.mxu0 %v603
    %3334 = vmatpush.msra.mxu0 %v599
    %3335 = vmatpush.msra.mxu0 %v595
    %3336 = vmatpush.msra.mxu0 %v591
    %3337 = vmatpush.msra.mxu0 %v587
    %3338 = vmatpush.msra.mxu0 %v583
    %3339 = vmatpush.msra.mxu0 %v579
    %3340 = vmatpush.msra.mxu0 %v575
    %3341 = vmatpush.msra.mxu0 %v571
    %3342 = vmatpush.msra.mxu0 %v567
    %3343 = vmatpush.msra.mxu0 %v563
    %3344 = vmatpush.msra.mxu0 %v559
    %3345 = vmatpush.msra.mxu0 %v555
    %3346 = vmatpush.msra.mxu0 %v551
    %3347 = vmatpush.msra.mxu0 %v547
    %3348 = vmatpush.msra.mxu0 %v543
    %3349 = vmatmul.f32.gmra.mxu0 %v1626
    %v3350 = vpop.f32.mrf.mxu0
    %v3351 = vadd.f32 %v3331, %v3350
    %3352 = vdwg.mxu0
    %3353 = vmatpush.msra.mxu0 %v667
    %3354 = vmatpush.msra.mxu0 %v663
    %3355 = vmatpush.msra.mxu0 %v659
    %3356 = vmatpush.msra.mxu0 %v655
    %3357 = vmatpush.msra.mxu0 %v651
    %3358 = vmatpush.msra.mxu0 %v647
    %3359 = vmatpush.msra.mxu0 %v643
    %3360 = vmatpush.msra.mxu0 %v639
    %3361 = vmatpush.msra.mxu0 %v635
    %3362 = vmatpush.msra.mxu0 %v631
    %3363 = vmatpush.msra.mxu0 %v627
    %3364 = vmatpush.msra.mxu0 %v623
    %3365 = vmatpush.msra.mxu0 %v619
    %3366 = vmatpush.msra.mxu0 %v615
    %3367 = vmatpush.msra.mxu0 %v611
    %3368 = vmatpush.msra.mxu0 %v607
    %3369 = vmatmul.f32.gmra.mxu0 %v1627
    %v3370 = vpop.f32.mrf.mxu0
    %v3371 = vadd.f32 %v3351, %v3370
    %3372 = vdwg.mxu0
    %3373 = vmatpush.msra.mxu0 %v731
    %3374 = vmatpush.msra.mxu0 %v727
    %3375 = vmatpush.msra.mxu0 %v723
    %3376 = vmatpush.msra.mxu0 %v719
    %3377 = vmatpush.msra.mxu0 %v715
    %3378 = vmatpush.msra.mxu0 %v711
    %3379 = vmatpush.msra.mxu0 %v707
    %3380 = vmatpush.msra.mxu0 %v703
    %3381 = vmatpush.msra.mxu0 %v699
    %3382 = vmatpush.msra.mxu0 %v695
    %3383 = vmatpush.msra.mxu0 %v691
    %3384 = vmatpush.msra.mxu0 %v687
    %3385 = vmatpush.msra.mxu0 %v683
    %3386 = vmatpush.msra.mxu0 %v679
    %3387 = vmatpush.msra.mxu0 %v675
    %3388 = vmatpush.msra.mxu0 %v671
    %3389 = vmatmul.f32.gmra.mxu0 %v1628
    %v3390 = vpop.f32.mrf.mxu0
    %v3391 = vadd.f32 %v3371, %v3390
    %3392 = vdwg.mxu0
    %3393 = vmatpush.msra.mxu0 %v795
    %3394 = vmatpush.msra.mxu0 %v791
    %3395 = vmatpush.msra.mxu0 %v787
    %3396 = vmatpush.msra.mxu0 %v783
    %3397 = vmatpush.msra.mxu0 %v779
    %3398 = vmatpush.msra.mxu0 %v775
    %3399 = vmatpush.msra.mxu0 %v771
    %3400 = vmatpush.msra.mxu0 %v767
    %3401 = vmatpush.msra.mxu0 %v763
    %3402 = vmatpush.msra.mxu0 %v759
    %3403 = vmatpush.msra.mxu0 %v755
    %3404 = vmatpush.msra.mxu0 %v751
    %3405 = vmatpush.msra.mxu0 %v747
    %3406 = vmatpush.msra.mxu0 %v743
    %3407 = vmatpush.msra.mxu0 %v739
    %3408 = vmatpush.msra.mxu0 %v735
    %3409 = vmatmul.f32.gmra.mxu0 %v1629
    %v3410 = vpop.f32.mrf.mxu0
    %v3411 = vadd.f32 %v3391, %v3410
    %3412 = vdwg.mxu0
    %3413 = vmatpush.msra.mxu0 %v859
    %3414 = vmatpush.msra.mxu0 %v855
    %3415 = vmatpush.msra.mxu0 %v851
    %3416 = vmatpush.msra.mxu0 %v847
    %3417 = vmatpush.msra.mxu0 %v843
    %3418 = vmatpush.msra.mxu0 %v839
    %3419 = vmatpush.msra.mxu0 %v835
    %3420 = vmatpush.msra.mxu0 %v831
    %3421 = vmatpush.msra.mxu0 %v827
    %3422 = vmatpush.msra.mxu0 %v823
    %3423 = vmatpush.msra.mxu0 %v819
    %3424 = vmatpush.msra.mxu0 %v815
    %3425 = vmatpush.msra.mxu0 %v811
    %3426 = vmatpush.msra.mxu0 %v807
    %3427 = vmatpush.msra.mxu0 %v803
    %3428 = vmatpush.msra.mxu0 %v799
    %3429 = vmatmul.f32.gmra.mxu0 %v1630
    %v3430 = vpop.f32.mrf.mxu0
    %v3431 = vadd.f32 %v3411, %v3430
    %3432 = vdwg.mxu0
    %3433 = vmatpush.msra.mxu0 %v923
    %3434 = vmatpush.msra.mxu0 %v919
    %3435 = vmatpush.msra.mxu0 %v915
    %3436 = vmatpush.msra.mxu0 %v911
    %3437 = vmatpush.msra.mxu0 %v907
    %3438 = vmatpush.msra.mxu0 %v903
    %3439 = vmatpush.msra.mxu0 %v899
    %3440 = vmatpush.msra.mxu0 %v895
    %3441 = vmatpush.msra.mxu0 %v891
    %3442 = vmatpush.msra.mxu0 %v887
    %3443 = vmatpush.msra.mxu0 %v883
    %3444 = vmatpush.msra.mxu0 %v879
    %3445 = vmatpush.msra.mxu0 %v875
    %3446 = vmatpush.msra.mxu0 %v871
    %3447 = vmatpush.msra.mxu0 %v867
    %3448 = vmatpush.msra.mxu0 %v863
    %3449 = vmatmul.f32.gmra.mxu0 %v1631
    %v3450 = vpop.f32.mrf.mxu0
    %v3451 = vadd.f32 %v3431, %v3450
    %3452 = vdwg.mxu0
    %3453 = vmatpush.msra.mxu0 %v987
    %3454 = vmatpush.msra.mxu0 %v983
    %3455 = vmatpush.msra.mxu0 %v979
    %3456 = vmatpush.msra.mxu0 %v975
    %3457 = vmatpush.msra.mxu0 %v971
    %3458 = vmatpush.msra.mxu0 %v967
    %3459 = vmatpush.msra.mxu0 %v963
    %3460 = vmatpush.msra.mxu0 %v959
    %3461 = vmatpush.msra.mxu0 %v955
    %3462 = vmatpush.msra.mxu0 %v951
    %3463 = vmatpush.msra.mxu0 %v947
    %3464 = vmatpush.msra.mxu0 %v943
    %3465 = vmatpush.msra.mxu0 %v939
    %3466 = vmatpush.msra.mxu0 %v935
    %3467 = vmatpush.msra.mxu0 %v931
    %3468 = vmatpush.msra.mxu0 %v927
    %3469 = vmatmul.f32.gmra.mxu0 %v1632
    %v3470 = vpop.f32.mrf.mxu0
    %v3471 = vadd.f32 %v3451, %v3470
    %3472 = vdwg.mxu0
    %3473 = vmatpush.msra.mxu0 %v1051
    %3474 = vmatpush.msra.mxu0 %v1047
    %3475 = vmatpush.msra.mxu0 %v1043
    %3476 = vmatpush.msra.mxu0 %v1039
    %3477 = vmatpush.msra.mxu0 %v1035
    %3478 = vmatpush.msra.mxu0 %v1031
    %3479 = vmatpush.msra.mxu0 %v1027
    %3480 = vmatpush.msra.mxu0 %v1023
    %3481 = vmatpush.msra.mxu0 %v1019
    %3482 = vmatpush.msra.mxu0 %v1015
    %3483 = vmatpush.msra.mxu0 %v1011
    %3484 = vmatpush.msra.mxu0 %v1007
    %3485 = vmatpush.msra.mxu0 %v1003
    %3486 = vmatpush.msra.mxu0 %v999
    %3487 = vmatpush.msra.mxu0 %v995
    %3488 = vmatpush.msra.mxu0 %v991
    %3489 = vmatmul.f32.gmra.mxu0 %v1633
    %v3490 = vpop.f32.mrf.mxu0
    %v3491 = vadd.f32 %v3471, %v3490
    %3492 = vdwg.mxu0
    %3493 = vmatpush.msra.mxu0 %v1115
    %3494 = vmatpush.msra.mxu0 %v1111
    %3495 = vmatpush.msra.mxu0 %v1107
    %3496 = vmatpush.msra.mxu0 %v1103
    %3497 = vmatpush.msra.mxu0 %v1099
    %3498 = vmatpush.msra.mxu0 %v1095
    %3499 = vmatpush.msra.mxu0 %v1091
    %3500 = vmatpush.msra.mxu0 %v1087
    %3501 = vmatpush.msra.mxu0 %v1083
    %3502 = vmatpush.msra.mxu0 %v1079
    %3503 = vmatpush.msra.mxu0 %v1075
    %3504 = vmatpush.msra.mxu0 %v1071
    %3505 = vmatpush.msra.mxu0 %v1067
    %3506 = vmatpush.msra.mxu0 %v1063
    %3507 = vmatpush.msra.mxu0 %v1059
    %3508 = vmatpush.msra.mxu0 %v1055
    %3509 = vmatmul.f32.gmra.mxu0 %v1636
    %v3510 = vpop.f32.mrf.mxu0
    %v3511 = vadd.f32 %v3491, %v3510
    %3512 = vdwg.mxu0
    %3513 = vmatpush.msra.mxu0 %v1179
    %3514 = vmatpush.msra.mxu0 %v1175
    %3515 = vmatpush.msra.mxu0 %v1171
    %3516 = vmatpush.msra.mxu0 %v1167
    %3517 = vmatpush.msra.mxu0 %v1163
    %3518 = vmatpush.msra.mxu0 %v1159
    %3519 = vmatpush.msra.mxu0 %v1155
    %3520 = vmatpush.msra.mxu0 %v1151
    %3521 = vmatpush.msra.mxu0 %v1147
    %3522 = vmatpush.msra.mxu0 %v1143
    %3523 = vmatpush.msra.mxu0 %v1139
    %3524 = vmatpush.msra.mxu0 %v1135
    %3525 = vmatpush.msra.mxu0 %v1131
    %3526 = vmatpush.msra.mxu0 %v1127
    %3527 = vmatpush.msra.mxu0 %v1123
    %3528 = vmatpush.msra.mxu0 %v1119
    %3529 = vmatmul.f32.gmra.mxu0 %v1637
    %v3530 = vpop.f32.mrf.mxu0
    %v3531 = vadd.f32 %v3511, %v3530
    %3532 = vdwg.mxu0
    %3533 = vmatpush.msra.mxu0 %v1243
    %3534 = vmatpush.msra.mxu0 %v1239
    %3535 = vmatpush.msra.mxu0 %v1235
    %3536 = vmatpush.msra.mxu0 %v1231
    %3537 = vmatpush.msra.mxu0 %v1227
    %3538 = vmatpush.msra.mxu0 %v1223
    %3539 = vmatpush.msra.mxu0 %v1219
    %3540 = vmatpush.msra.mxu0 %v1215
    %3541 = vmatpush.msra.mxu0 %v1211
    %3542 = vmatpush.msra.mxu0 %v1207
    %3543 = vmatpush.msra.mxu0 %v1203
    %3544 = vmatpush.msra.mxu0 %v1199
    %3545 = vmatpush.msra.mxu0 %v1195
    %3546 = vmatpush.msra.mxu0 %v1191
    %3547 = vmatpush.msra.mxu0 %v1187
    %3548 = vmatpush.msra.mxu0 %v1183
    %3549 = vmatmul.f32.gmra.mxu0 %v1638
    %v3550 = vpop.f32.mrf.mxu0
    %v3551 = vadd.f32 %v3531, %v3550
    %3552 = vdwg.mxu0
    %3553 = vmatpush.msra.mxu0 %v1307
    %3554 = vmatpush.msra.mxu0 %v1303
    %3555 = vmatpush.msra.mxu0 %v1299
    %3556 = vmatpush.msra.mxu0 %v1295
    %3557 = vmatpush.msra.mxu0 %v1291
    %3558 = vmatpush.msra.mxu0 %v1287
    %3559 = vmatpush.msra.mxu0 %v1283
    %3560 = vmatpush.msra.mxu0 %v1279
    %3561 = vmatpush.msra.mxu0 %v1275
    %3562 = vmatpush.msra.mxu0 %v1271
    %3563 = vmatpush.msra.mxu0 %v1267
    %3564 = vmatpush.msra.mxu0 %v1263
    %3565 = vmatpush.msra.mxu0 %v1259
    %3566 = vmatpush.msra.mxu0 %v1255
    %3567 = vmatpush.msra.mxu0 %v1251
    %3568 = vmatpush.msra.mxu0 %v1247
    %3569 = vmatmul.f32.gmra.mxu0 %v1639
    %v3570 = vpop.f32.mrf.mxu0
    %v3571 = vadd.f32 %v3551, %v3570
    %3572 = vdwg.mxu0
    %3573 = vmatpush.msra.mxu0 %v1371
    %3574 = vmatpush.msra.mxu0 %v1367
    %3575 = vmatpush.msra.mxu0 %v1363
    %3576 = vmatpush.msra.mxu0 %v1359
    %3577 = vmatpush.msra.mxu0 %v1355
    %3578 = vmatpush.msra.mxu0 %v1351
    %3579 = vmatpush.msra.mxu0 %v1347
    %3580 = vmatpush.msra.mxu0 %v1343
    %3581 = vmatpush.msra.mxu0 %v1339
    %3582 = vmatpush.msra.mxu0 %v1335
    %3583 = vmatpush.msra.mxu0 %v1331
    %3584 = vmatpush.msra.mxu0 %v1327
    %3585 = vmatpush.msra.mxu0 %v1323
    %3586 = vmatpush.msra.mxu0 %v1319
    %3587 = vmatpush.msra.mxu0 %v1315
    %3588 = vmatpush.msra.mxu0 %v1311
    %3589 = vmatmul.f32.gmra.mxu0 %v1640
    %v3590 = vpop.f32.mrf.mxu0
    %v3591 = vadd.f32 %v3571, %v3590
    %3592 = vdwg.mxu0
    %3593 = vmatpush.msra.mxu0 %v1435
    %3594 = vmatpush.msra.mxu0 %v1431
    %3595 = vmatpush.msra.mxu0 %v1427
    %3596 = vmatpush.msra.mxu0 %v1423
    %3597 = vmatpush.msra.mxu0 %v1419
    %3598 = vmatpush.msra.mxu0 %v1415
    %3599 = vmatpush.msra.mxu0 %v1411
    %3600 = vmatpush.msra.mxu0 %v1407
    %3601 = vmatpush.msra.mxu0 %v1403
    %3602 = vmatpush.msra.mxu0 %v1399
    %3603 = vmatpush.msra.mxu0 %v1395
    %3604 = vmatpush.msra.mxu0 %v1391
    %3605 = vmatpush.msra.mxu0 %v1387
    %3606 = vmatpush.msra.mxu0 %v1383
    %3607 = vmatpush.msra.mxu0 %v1379
    %3608 = vmatpush.msra.mxu0 %v1375
    %3609 = vmatmul.f32.gmra.mxu0 %v1641
    %v3610 = vpop.f32.mrf.mxu0
    %v3611 = vadd.f32 %v3591, %v3610
    %3612 = vdwg.mxu0
    %3613 = vmatpush.msra.mxu0 %v1499
    %3614 = vmatpush.msra.mxu0 %v1495
    %3615 = vmatpush.msra.mxu0 %v1491
    %3616 = vmatpush.msra.mxu0 %v1487
    %3617 = vmatpush.msra.mxu0 %v1483
    %3618 = vmatpush.msra.mxu0 %v1479
    %3619 = vmatpush.msra.mxu0 %v1475
    %3620 = vmatpush.msra.mxu0 %v1471
    %3621 = vmatpush.msra.mxu0 %v1467
    %3622 = vmatpush.msra.mxu0 %v1463
    %3623 = vmatpush.msra.mxu0 %v1459
    %3624 = vmatpush.msra.mxu0 %v1455
    %3625 = vmatpush.msra.mxu0 %v1451
    %3626 = vmatpush.msra.mxu0 %v1447
    %3627 = vmatpush.msra.mxu0 %v1443
    %3628 = vmatpush.msra.mxu0 %v1439
    %3629 = vmatmul.f32.gmra.mxu0 %v1642
    %v3630 = vpop.f32.mrf.mxu0
    %v3631 = vadd.f32 %v3611, %v3630
    %3632 = vdwg.mxu0
    %3633 = vmatpush.msra.mxu0 %v1563
    %3634 = vmatpush.msra.mxu0 %v1559
    %3635 = vmatpush.msra.mxu0 %v1555
    %3636 = vmatpush.msra.mxu0 %v1551
    %3637 = vmatpush.msra.mxu0 %v1547
    %3638 = vmatpush.msra.mxu0 %v1543
    %3639 = vmatpush.msra.mxu0 %v1539
    %3640 = vmatpush.msra.mxu0 %v1535
    %3641 = vmatpush.msra.mxu0 %v1531
    %3642 = vmatpush.msra.mxu0 %v1527
    %3643 = vmatpush.msra.mxu0 %v1523
    %3644 = vmatpush.msra.mxu0 %v1519
    %3645 = vmatpush.msra.mxu0 %v1515
    %3646 = vmatpush.msra.mxu0 %v1511
    %3647 = vmatpush.msra.mxu0 %v1507
    %3648 = vmatpush.msra.mxu0 %v1503
    %3649 = vmatmul.f32.gmra.mxu0 %v1643
    %v3650 = vpop.f32.mrf.mxu0
    %v3651 = vadd.f32 %v3631, %v3650
    %3652 = vdwg.mxu0
    %3653 = vmatpush.msra.mxu0 0.0
    %3654 = vmatpush.msra.mxu0 0.0
    %3655 = vmatpush.msra.mxu0 0.0
    %3656 = vmatpush.msra.mxu0 0.0
    %3657 = vmatpush.msra.mxu0 0.0
    %3658 = vmatpush.msra.mxu0 0.0
    %3659 = vmatpush.msra.mxu0 0.0
    %3660 = vmatpush.msra.mxu0 0.0
    %3661 = vmatpush.msra.mxu0 %v1595
    %3662 = vmatpush.msra.mxu0 %v1591
    %3663 = vmatpush.msra.mxu0 %v1587
    %3664 = vmatpush.msra.mxu0 %v1583
    %3665 = vmatpush.msra.mxu0 %v1579
    %3666 = vmatpush.msra.mxu0 %v1575
    %3667 = vmatpush.msra.mxu0 %v1571
    %3668 = vmatpush.msra.mxu0 %v1567
    %3669 = vmatmul.f32.gmra.mxu0 %v1671
    %v3670 = vpop.f32.mrf.mxu0
    %v3671 = vadd.f32 %v3651, %v3670
    %3672 = vdwg.mxu0
    %v3673 = vmax.f32 %v2171, 0.0
    %v3674 = vmax.f32 %v2671, 0.0
    %v3675 = vmax.f32 %v3171, 0.0
    %v3676 = vmax.f32 %v3671, 0.0
    %v3677 = vld [vmem:[%s3] sm:$0xff]
    %v3678 = vld [vmem:[%s3 + $0x8] sm:$0xff]
    %v3679 = vld [vmem:[%s3 + $0x10] sm:$0xff]
    %v3680 = vld [vmem:[%s3 + $0x18] sm:$0xff]
    %v3681 = vld [vmem:[%s3 + $0x20] sm:$0xff]
    %v3682 = vld [vmem:[%s3 + $0x28] sm:$0xff]
    %v3683 = vld [vmem:[%s3 + $0x30] sm:$0xff]
    %v3684 = vld [vmem:[%s3 + $0x38] sm:$0xff]
    %v3685 = vld [vmem:[%s3 + $0x40] sm:$0xff]
    %v3686 = vld [vmem:[%s3 + $0x48] sm:$0xff]
    %v3687 = vld [vmem:[%s3 + $0x50] sm:$0xff]
    %v3688 = vld [vmem:[%s3 + $0x58] sm:$0xff]
    %v3689 = vld [vmem:[%s3 + $0x60] sm:$0xff]
    %v3690 = vld [vmem:[%s3 + $0x68] sm:$0xff]
    %v3691 = vld [vmem:[%s3 + $0x70] sm:$0xff]
    %v3692 = vld [vmem:[%s3 + $0x78] sm:$0xff]
    %v3693 = vld [vmem:[%s3 + $0x80] sm:$0xff]
    %v3694 = vld [vmem:[%s3 + $0x88] sm:$0xff]
    %v3695 = vld [vmem:[%s3 + $0x90] sm:$0xff]
    %v3696 = vld [vmem:[%s3 + $0x98] sm:$0xff]
    %v3697 = vld [vmem:[%s3 + $0xa0] sm:$0xff]
    %v3698 = vld [vmem:[%s3 + $0xa8] sm:$0xff]
    %v3699 = vld [vmem:[%s3 + $0xb0] sm:$0xff]
    %v3700 = vld [vmem:[%s3 + $0xb8] sm:$0xff]
    %v3701 = vld [vmem:[%s3 + $0xc0] sm:$0xff]
    %v3702 = vld [vmem:[%s3 + $0xc8] sm:$0xff]
    %v3703 = vld [vmem:[%s3 + $0xd0] sm:$0xff]
    %v3704 = vld [vmem:[%s3 + $0xd8] sm:$0xff]
    %v3705 = vld [vmem:[%s3 + $0xe0] sm:$0xff]
    %v3706 = vld [vmem:[%s3 + $0xe8] sm:$0xff]
    %v3707 = vld [vmem:[%s3 + $0xf0] sm:$0xff]
    %v3708 = vld [vmem:[%s3 + $0xf8] sm:$0xff]
    %v3709 = vld [vmem:[%s3 + $0x100] sm:$0xff]
    %v3710 = vld [vmem:[%s3 + $0x108] sm:$0xff]
    %v3711 = vld [vmem:[%s3 + $0x110] sm:$0xff]
    %v3712 = vld [vmem:[%s3 + $0x118] sm:$0xff]
    %v3713 = vld [vmem:[%s3 + $0x120] sm:$0xff]
    %v3714 = vld [vmem:[%s3 + $0x128] sm:$0xff]
    %v3715 = vld [vmem:[%s3 + $0x130] sm:$0xff]
    %v3716 = vld [vmem:[%s3 + $0x138] sm:$0xff]
    %v3717 = vld [vmem:[%s3 + $0x140] sm:$0xff]
    %v3718 = vld [vmem:[%s3 + $0x148] sm:$0xff]
    %v3719 = vld [vmem:[%s3 + $0x150] sm:$0xff]
    %v3720 = vld [vmem:[%s3 + $0x158] sm:$0xff]
    %v3721 = vld [vmem:[%s3 + $0x160] sm:$0xff]
    %v3722 = vld [vmem:[%s3 + $0x168] sm:$0xff]
    %v3723 = vld [vmem:[%s3 + $0x170] sm:$0xff]
    %v3724 = vld [vmem:[%s3 + $0x178] sm:$0xff]
    %v3725 = vld [vmem:[%s3 + $0x180] sm:$0xff]
    %v3726 = vld [vmem:[%s3 + $0x188] sm:$0xff]
    %v3727 = vld [vmem:[%s3 + $0x190] sm:$0xff]
    %v3728 = vld [vmem:[%s3 + $0x198] sm:$0xff]
    %v3729 = vld [vmem:[%s3 + $0x1a0] sm:$0xff]
    %v3730 = vld [vmem:[%s3 + $0x1a8] sm:$0xff]
    %v3731 = vld [vmem:[%s3 + $0x1b0] sm:$0xff]
    %v3732 = vld [vmem:[%s3 + $0x1b8] sm:$0xff]
    %v3733 = vld [vmem:[%s3 + $0x1c0] sm:$0xff]
    %v3734 = vld [vmem:[%s3 + $0x1c8] sm:$0xff]
    %v3735 = vld [vmem:[%s3 + $0x1d0] sm:$0xff]
    %v3736 = vld [vmem:[%s3 + $0x1d8] sm:$0xff]
    %v3737 = vld [vmem:[%s3 + $0x1e0] sm:$0xff]
    %v3738 = vld [vmem:[%s3 + $0x1e8] sm:$0xff]
    %v3739 = vld [vmem:[%s3 + $0x1f0] sm:$0xff]
    %v3740 = vld [vmem:[%s3 + $0x1f8] sm:$0xff]
    %v3741 = vld [vmem:[%s4] sm:$0x1]
    %v3743 = vperm.slane %v3741, 0
    %3745 = vmatpush.msra.mxu0 %v3692
    %3746 = vmatpush.msra.mxu0 %v3691
    %3747 = vmatpush.msra.mxu0 %v3690
    %3748 = vmatpush.msra.mxu0 %v3689
    %3749 = vmatpush.msra.mxu0 %v3688
    %3750 = vmatpush.msra.mxu0 %v3687
    %3751 = vmatpush.msra.mxu0 %v3686
    %3752 = vmatpush.msra.mxu0 %v3685
    %3753 = vmatpush.msra.mxu0 %v3684
    %3754 = vmatpush.msra.mxu0 %v3683
    %3755 = vmatpush.msra.mxu0 %v3682
    %3756 = vmatpush.msra.mxu0 %v3681
    %3757 = vmatpush.msra.mxu0 %v3680
    %3758 = vmatpush.msra.mxu0 %v3679
    %3759 = vmatpush.msra.mxu0 %v3678
    %3760 = vmatpush.msra.mxu0 %v3677
    %3761 = vmatmul.f32.gmra.mxu0 %v3673
    %v3762 = vpop.f32.mrf.mxu0
    %v3763 = vadd.f32 %v3743, %v3762
    %3764 = vdwg.mxu0
    %3765 = vmatpush.msra.mxu0 %v3708
    %3766 = vmatpush.msra.mxu0 %v3707
    %3767 = vmatpush.msra.mxu0 %v3706
    %3768 = vmatpush.msra.mxu0 %v3705
    %3769 = vmatpush.msra.mxu0 %v3704
    %3770 = vmatpush.msra.mxu0 %v3703
    %3771 = vmatpush.msra.mxu0 %v3702
    %3772 = vmatpush.msra.mxu0 %v3701
    %3773 = vmatpush.msra.mxu0 %v3700
    %3774 = vmatpush.msra.mxu0 %v3699
    %3775 = vmatpush.msra.mxu0 %v3698
    %3776 = vmatpush.msra.mxu0 %v3697
    %3777 = vmatpush.msra.mxu0 %v3696
    %3778 = vmatpush.msra.mxu0 %v3695
    %3779 = vmatpush.msra.mxu0 %v3694
    %3780 = vmatpush.msra.mxu0 %v3693
    %3781 = vmatmul.f32.gmra.mxu0 %v3674
    %v3782 = vpop.f32.mrf.mxu0
    %v3783 = vadd.f32 %v3763, %v3782
    %3784 = vdwg.mxu0
    %3785 = vmatpush.msra.mxu0 %v3724
    %3786 = vmatpush.msra.mxu0 %v3723
    %3787 = vmatpush.msra.mxu0 %v3722
    %3788 = vmatpush.msra.mxu0 %v3721
    %3789 = vmatpush.msra.mxu0 %v3720
    %3790 = vmatpush.msra.mxu0 %v3719
    %3791 = vmatpush.msra.mxu0 %v3718
    %3792 = vmatpush.msra.mxu0 %v3717
    %3793 = vmatpush.msra.mxu0 %v3716
    %3794 = vmatpush.msra.mxu0 %v3715
    %3795 = vmatpush.msra.mxu0 %v3714
    %3796 = vmatpush.msra.mxu0 %v3713
    %3797 = vmatpush.msra.mxu0 %v3712
    %3798 = vmatpush.msra.mxu0 %v3711
    %3799 = vmatpush.msra.mxu0 %v3710
    %3800 = vmatpush.msra.mxu0 %v3709
    %3801 = vmatmul.f32.gmra.mxu0 %v3675
    %v3802 = vpop.f32.mrf.mxu0
    %v3803 = vadd.f32 %v3783, %v3802
    %3804 = vdwg.mxu0
    %3805 = vmatpush.msra.mxu0 %v3740
    %3806 = vmatpush.msra.mxu0 %v3739
    %3807 = vmatpush.msra.mxu0 %v3738
    %3808 = vmatpush.msra.mxu0 %v3737
    %3809 = vmatpush.msra.mxu0 %v3736
    %3810 = vmatpush.msra.mxu0 %v3735
    %3811 = vmatpush.msra.mxu0 %v3734
    %3812 = vmatpush.msra.mxu0 %v3733
    %3813 = vmatpush.msra.mxu0 %v3732
    %3814 = vmatpush.msra.mxu0 %v3731
    %3815 = vmatpush.msra.mxu0 %v3730
    %3816 = vmatpush.msra.mxu0 %v3729
    %3817 = vmatpush.msra.mxu0 %v3728
    %3818 = vmatpush.msra.mxu0 %v3727
    %3819 = vmatpush.msra.mxu0 %v3726
    %3820 = vmatpush.msra.mxu0 %v3725
    %3821 = vmatmul.f32.gmra.mxu0 %v3676
    %v3822 = vpop.f32.mrf.mxu0
    %v3823 = vadd.f32 %v3803, %v3822
    %3824 = vdwg.mxu0
    %vm3825 = vcmask 33792
    %3826 = vst.msk [vmem:[#allocation2] sm:$0x3] %vm3825, %v3823
    // Predicated region
    $region22: #{mario_net_forward.3} parent=1 // pred_check
      _
    $region23: #{mario_net_forward.3} parent=1 // pred_check_branch
      %3828 = sbr.rel (0) target = $region25
    $region24: #{mario_net_forward.3} parent=1 // pred_region
      %3830 = vsyncadd [#allocation3], 0
      %s3832 = sshll.u32 [#allocation2], 4
      %s3833 = int_to_ptr.vmem [resolvable:$true] %s3832
      %s3834 = sshll.u32 %s5, 4
      %s3835 = int_to_ptr.hbm [resolvable:$true] %s3834
      %3837 = dma.vmem_to_hbm [thread:$0]  %s3833, 32, %s3835, [#allocation3]
    $region25: #{mario_net_forward.3} parent=1 // pred_fallthru
      _
    // Predicated region
    $region26: #{mario_net_forward.3} parent=1 // pred_check
      _
    $region27: #{mario_net_forward.3} parent=1 // pred_check_branch
      %3839 = sbr.rel (0) target = $region29
    $region28: #{mario_net_forward.3} parent=1 // pred_region
      %3841 = dma.done [#allocation3], 32
    $region29: #{mario_net_forward.3} parent=1 // pred_fallthru
      _
    %3842 = vsyncpa [#allocation3], 1

</llo_original>
